<compile_context>
chip_gen: v7x
topology: tpu7x:2x2x1
jax: 0.10.0
libtpu: 0.0.40
codegen_flags: <defaults>
</compile_context>

<pallas_src>
import functools

import jax
import jax.numpy as jnp
from jax import lax
from jax.experimental import pallas as pl
from jax.experimental.pallas import tpu as pltpu

EPS = 1e-5


def _conv_bn_add_relu_kernel(x_ref, w_ref, gamma_ref, beta_ref, res_ref, o_ref,
                             *, m_real, m_pad):
    # x_ref:     (Mp, Cin)    bf16   (Mp = M rounded up to 16, padded rows = 0)
    # w_ref:     (TCout, Cin) bf16   (conv weight, native (Cout, Cin) layout)
    # gamma/beta:(1, TCout)   f32    (padded channels = 0)
    # res_ref:   (Mp, TCout)  f32
    # o_ref:     (Mp, TCout)  f32
    x = x_ref[...]
    w = w_ref[...]

    # 1x1 conv == matmul; contract Cin of both operands, accumulate in f32.
    conv = lax.dot_general(
        x, w,
        dimension_numbers=(((1,), (1,)), ((), ())),
        preferred_element_type=jnp.float32,
    )                                                     # (Mp, TCout) f32

    inv_m = 1.0 / m_real
    # Padded x rows are exactly zero, so they add nothing to the sum.
    mean = jnp.sum(conv, axis=0, keepdims=True) * inv_m
    centered = conv - mean
    # Each zero-padded row contributes exactly mean^2 to sum((conv-mean)^2);
    # subtract that algebraically instead of masking (saves two full-tile
    # VPU passes per block).
    sumsq = jnp.sum(centered * centered, axis=0, keepdims=True)
    var = (sumsq - float(m_pad - m_real) * mean * mean) * inv_m

    # Fold gamma into inv_std: one (1, TCout) multiply instead of a full-tile one.
    scale = lax.rsqrt(var + EPS) * gamma_ref[...]
    y = centered * scale + beta_ref[...] + res_ref[...]
    o_ref[...] = jnp.maximum(y, 0.0)


def _round_up(x, n):
    return (x + n - 1) // n * n


@functools.partial(jax.jit, static_argnames=("stride",))
def conv_bn_add_relu(x, w, gamma, beta, residual, *, stride=2):
    """Fused Conv2d(1x1, stride) -> BatchNorm2d (batch stats) -> add -> ReLU.

    x:        (N, Cin, H, W)
    w:        conv weight, (Cout, Cin) or (Cout, Cin, 1, 1); bf16 preferred
              (pre-cast once at parameter-setup time), any float dtype accepted.
    gamma:    (Cout,)  BN weight
    beta:     (Cout,)  BN bias
    residual: (N, Cout, Ho, Wo)
    returns:  (N, Cout, Ho, Wo) float32
    """
    n, cin, _, _ = x.shape
    cout = gamma.shape[0]

    # --- Cout padding / tiling: lane-dense, evenly divisible blocks ---------
    cout_p = _round_up(cout, 128)
    tcout = min(1280, cout_p)           # 1280 -> grid=2 for Cout=2520->2560
    cout_p = _round_up(cout_p, tcout)
    grid = (cout_p // tcout,)

    # Conv weight in native (Cout, Cin) layout, zero-padded rows, bf16.
    w2 = w.reshape(w.shape[0], cin)
    w2 = jnp.pad(w2, ((0, cout_p - cout), (0, 0))).astype(jnp.bfloat16)

    # 1x1 conv with stride == channel matmul on the strided spatial samples.
    xs = x[:, :, ::stride, ::stride]
    ho, wo = xs.shape[2], xs.shape[3]
    m = n * ho * wo
    mp = _round_up(m, 16)               # bf16 packs 16 rows / sublane group

    # Cast to bf16 BEFORE the transpose so it moves half the bytes.
    x_mat = jnp.transpose(xs.astype(jnp.bfloat16), (0, 2, 3, 1)).reshape(m, cin)
    x_mat = jnp.pad(x_mat, ((0, mp - m), (0, 0)))

    res_mat = jnp.transpose(residual, (0, 2, 3, 1)).reshape(m, cout)
    res_mat = jnp.pad(res_mat,
                      ((0, mp - m), (0, cout_p - cout))).astype(jnp.float32)

    # Pad gamma/beta with zeros so padded channels produce scale=0 -> finite.
    gamma2 = jnp.pad(gamma.astype(jnp.float32),
                     (0, cout_p - cout)).reshape(1, cout_p)
    beta2 = jnp.pad(beta.astype(jnp.float32),
                    (0, cout_p - cout)).reshape(1, cout_p)

    kernel = functools.partial(_conv_bn_add_relu_kernel, m_real=m, m_pad=mp)

    cost = pl.CostEstimate(
        flops=2 * mp * cin * cout_p,
        transcendentals=0,
        bytes_accessed=(w2.size * 2 + x_mat.size * 2 + res_mat.size * 4
                        + mp * cout_p * 4 + gamma2.size * 4 + beta2.size * 4),
    )

    out_mat = pl.pallas_call(
        kernel,
        out_shape=jax.ShapeDtypeStruct((mp, cout_p), jnp.float32),
        grid=grid,
        in_specs=[
            pl.BlockSpec((mp, cin), lambda j: (0, 0)),     # activations (reused)
            pl.BlockSpec((tcout, cin), lambda j: (j, 0)),  # streamed weight slab
            pl.BlockSpec((1, tcout), lambda j: (0, j)),    # gamma
            pl.BlockSpec((1, tcout), lambda j: (0, j)),    # beta
            pl.BlockSpec((mp, tcout), lambda j: (0, j)),   # residual
        ],
        out_specs=pl.BlockSpec((mp, tcout), lambda j: (0, j)),
        compiler_params=pltpu.CompilerParams(
            dimension_semantics=("parallel",),
        ),
        cost_estimate=cost,
    )(x_mat, w2, gamma2, beta2, res_mat)

    out = out_mat[:m, :cout].reshape(n, ho, wo, cout)
    return jnp.transpose(out, (0, 3, 1, 2))


if __name__ == "__main__":
    key = jax.random.PRNGKey(0)
    k1, k2, k3, k4, k5 = jax.random.split(key, 5)

    # Shapes implied by the module's forward.
    N, CIN, H, W = 1, 1344, 14, 14
    COUT = 2520
    HO, WO = H // 2, W // 2

    x229 = jax.random.normal(k1, (N, CIN, H, W), dtype=jnp.float32)
    x239 = jax.random.normal(k2, (N, COUT, HO, WO), dtype=jnp.float32)
    w_conv = 0.02 * jax.random.normal(k3, (COUT, CIN, 1, 1), dtype=jnp.float32)
    gamma = 1.0 + 0.1 * jax.random.normal(k4, (COUT,), dtype=jnp.float32)
    beta = 0.1 * jax.random.normal(k5, (COUT,), dtype=jnp.float32)

    # Parameter setup (once, outside the per-call path): drop the trailing 1x1
    # dims and store the conv weight in bf16 so each call streams half the bytes.
    w_prepared = w_conv.reshape(COUT, CIN).astype(jnp.bfloat16)

    out = conv_bn_add_relu(x229, w_prepared, gamma, beta, x239)
    out = jax.block_until_ready(out)

    assert out.shape == (N, COUT, HO, WO)
    assert out.dtype == jnp.float32
    assert bool(jnp.all(jnp.isfinite(out)))
    assert bool(jnp.all(out >= 0.0))  # post-ReLU
    print("KERNEL_OK")
</pallas_src>

<mosaic_0001>
module attributes {stable_mosaic.version = 11 : i64} {
  func.func @_conv_bn_add_relu_kernel(%arg0: i32, %arg1: memref<64x1344xbf16, #tpu.memory_space<vmem>>, %arg2: memref<1280x1344xbf16, #tpu.memory_space<vmem>>, %arg3: memref<1x1280xf32, #tpu.memory_space<vmem>>, %arg4: memref<1x1280xf32, #tpu.memory_space<vmem>>, %arg5: memref<64x1280xf32, #tpu.memory_space<vmem>>, %arg6: memref<64x1280xf32, #tpu.memory_space<vmem>>) attributes {dimension_semantics = [#tpu.dimension_semantics<parallel>], iteration_bounds = array<i64: 2>, scalar_prefetch = 0 : i64, scratch_operands = 0 : i64, tpu.core_type = #tpu.core_type<tc>, window_params = [{pipeline_mode = #tpu.pipeline_mode<synchronous>, transform_indices = @transform_0, window_bounds = array<i64: 64, 1344>}, {transform_indices = @transform_1, window_bounds = array<i64: 1280, 1344>}, {transform_indices = @transform_2, window_bounds = array<i64: 1, 1280>}, {transform_indices = @transform_3, window_bounds = array<i64: 1, 1280>}, {transform_indices = @transform_4, window_bounds = array<i64: 64, 1280>}, {transform_indices = @transform_5, window_bounds = array<i64: 64, 1280>}]} {
    %c0 = arith.constant 0 : index
    %c0_0 = arith.constant 0 : index
    %0 = vector.load %arg1[%c0, %c0_0] : memref<64x1344xbf16, #tpu.memory_space<vmem>>, vector<64x1344xbf16>
    %c0_1 = arith.constant 0 : index
    %c0_2 = arith.constant 0 : index
    %1 = vector.load %arg2[%c0_1, %c0_2] : memref<1280x1344xbf16, #tpu.memory_space<vmem>>, vector<1280x1344xbf16>
    %cst = arith.constant dense<0.000000e+00> : vector<64x1280xf32>
    %2 = tpu.matmul %0, %1, %cst {dimension_numbers = #tpu.dot_dimension_numbers<[1], [1], [0], [0], [0, 0, 1, 0], [], []>} : vector<64x1344xbf16>, vector<1280x1344xbf16>, vector<64x1280xf32> -> vector<64x1280xf32>
    %cst_3 = arith.constant dense<0.000000e+00> : vector<1280xf32>
    %3 = vector.multi_reduction <add>, %2, %cst_3 [0] : vector<64x1280xf32> to vector<1280xf32>
    %4 = vector.shape_cast %3 : vector<1280xf32> to vector<1x1280xf32>
    %cst_4 = arith.constant 0.0204081628 : f32
    %5 = vector.broadcast %cst_4 : f32 to vector<1x1280xf32>
    %6 = arith.mulf %4, %5 : vector<1x1280xf32>
    %7 = vector.broadcast %6 : vector<1x1280xf32> to vector<64x1280xf32>
    %8 = arith.subf %2, %7 : vector<64x1280xf32>
    %9 = arith.mulf %8, %8 : vector<64x1280xf32>
    %cst_5 = arith.constant dense<0.000000e+00> : vector<1280xf32>
    %10 = vector.multi_reduction <add>, %9, %cst_5 [0] : vector<64x1280xf32> to vector<1280xf32>
    %11 = vector.shape_cast %10 : vector<1280xf32> to vector<1x1280xf32>
    %cst_6 = arith.constant 1.500000e+01 : f32
    %12 = vector.broadcast %cst_6 : f32 to vector<1x1280xf32>
    %13 = arith.mulf %12, %6 : vector<1x1280xf32>
    %14 = arith.mulf %13, %6 : vector<1x1280xf32>
    %15 = arith.subf %11, %14 : vector<1x1280xf32>
    %cst_7 = arith.constant 0.0204081628 : f32
    %16 = vector.broadcast %cst_7 : f32 to vector<1x1280xf32>
    %17 = arith.mulf %15, %16 : vector<1x1280xf32>
    %cst_8 = arith.constant 9.99999974E-6 : f32
    %18 = vector.broadcast %cst_8 : f32 to vector<1x1280xf32>
    %19 = arith.addf %17, %18 : vector<1x1280xf32>
    %20 = math.rsqrt %19 : vector<1x1280xf32>
    %c0_9 = arith.constant 0 : index
    %c0_10 = arith.constant 0 : index
    %21 = vector.load %arg3[%c0_9, %c0_10] : memref<1x1280xf32, #tpu.memory_space<vmem>>, vector<1x1280xf32>
    %22 = arith.mulf %20, %21 : vector<1x1280xf32>
    %23 = vector.broadcast %22 : vector<1x1280xf32> to vector<64x1280xf32>
    %24 = arith.mulf %8, %23 : vector<64x1280xf32>
    %c0_11 = arith.constant 0 : index
    %c0_12 = arith.constant 0 : index
    %25 = vector.load %arg4[%c0_11, %c0_12] : memref<1x1280xf32, #tpu.memory_space<vmem>>, vector<1x1280xf32>
    %26 = vector.broadcast %25 : vector<1x1280xf32> to vector<64x1280xf32>
    %27 = arith.addf %24, %26 : vector<64x1280xf32>
    %c0_13 = arith.constant 0 : index
    %c0_14 = arith.constant 0 : index
    %28 = vector.load %arg5[%c0_13, %c0_14] : memref<64x1280xf32, #tpu.memory_space<vmem>>, vector<64x1280xf32>
    %29 = arith.addf %27, %28 : vector<64x1280xf32>
    %cst_15 = arith.constant 0.000000e+00 : f32
    %30 = vector.broadcast %cst_15 : f32 to vector<64x1280xf32>
    %31 = arith.maximumf %29, %30 : vector<64x1280xf32>
    %c0_16 = arith.constant 0 : index
    %c0_17 = arith.constant 0 : index
    %32 = vector.load %arg6[%c0_16, %c0_17] : memref<64x1280xf32, #tpu.memory_space<vmem>>, vector<64x1280xf32>
    tpu.vector_store %arg6[%c0_16, %c0_17], %31 {strides = array<i32>} : memref<64x1280xf32, #tpu.memory_space<vmem>>, vector<64x1280xf32>,
    return
  }
  func.func @transform_0(%arg0: i32) -> (i32, i32) {
    %c0_i32 = arith.constant 0 : i32
    %c0_i32_0 = arith.constant 0 : i32
    %c0_i32_1 = arith.constant 0 : i32
    return %c0_i32, %c0_i32_0 : i32, i32
  }
  func.func @transform_1(%arg0: i32) -> (i32, i32) {
    %c0_i32 = arith.constant 0 : i32
    %c0_i32_0 = arith.constant 0 : i32
    return %arg0, %c0_i32 : i32, i32
  }
  func.func @transform_2(%arg0: i32) -> (i32, i32) {
    %c0_i32 = arith.constant 0 : i32
    %c0_i32_0 = arith.constant 0 : i32
    return %c0_i32, %arg0 : i32, i32
  }
  func.func @transform_3(%arg0: i32) -> (i32, i32) {
    %c0_i32 = arith.constant 0 : i32
    %c0_i32_0 = arith.constant 0 : i32
    return %c0_i32, %arg0 : i32, i32
  }
  func.func @transform_4(%arg0: i32) -> (i32, i32) {
    %c0_i32 = arith.constant 0 : i32
    %c0_i32_0 = arith.constant 0 : i32
    return %c0_i32, %arg0 : i32, i32
  }
  func.func @transform_5(%arg0: i32) -> (i32, i32) {
    %c0_i32 = arith.constant 0 : i32
    %c0_i32_0 = arith.constant 0 : i32
    return %c0_i32, %arg0 : i32, i32
  }
}

</mosaic_0001>

<llo_original>
// kernel: conv_bn_add_relu.1
$region0: #{conv_bn_add_relu.1}
  #allocation0 [shape = 'u32[]', space=smem, size = 0x4, offset = 0x4, fixed_abs, tag = 'smem constant byte address 0x4 - core index']
  #allocation1 [shape = 'u32[144,128]{1,0:T(1,128)}', space=vmem, size = 0x12000, scoped, tag = 'internal scratch']
  %s0 = inlined_call_operand.vmem [shape: bf16[64,1344], index: 0, kind: input, shape index: {}]
  %s1 = inlined_call_operand.vmem [shape: bf16[2560,1344], index: 1, kind: input, shape index: {}]
  %s2 = inlined_call_operand.vmem [shape: f32[1,2560], index: 2, kind: input, shape index: {}]
  %s3 = inlined_call_operand.vmem [shape: f32[1,2560], index: 3, kind: input, shape index: {}]
  %s4 = inlined_call_operand.vmem [shape: f32[64,2560], index: 4, kind: input, shape index: {}]
  %s5 = inlined_call_operand.vmem [shape: f32[64,2560], index: 5, kind: output, shape index: {}]
  %s6 = sld [smem:[#allocation0]]
  $region95: #{conv_bn_add_relu.1} parent=0
    _
  %s8 = ssub.s32 1, %s6
  %s9 = scalar_select 0, %s8, %s6
  $region1: #{conv_bn_add_relu.1} parent=0
    #allocation2 [shape = 'u8[655360]{0}', space=vmem, size = 0xa0000, scoped, tag = 'input window, operand 4']
    #allocation3 [shape = 'u8[655360]{0}', space=vmem, size = 0xa0000, scoped, tag = 'output window, operand 0']
    loop: start=0, step=1, limit=4
    $region2: #{conv_bn_add_relu.1} parent=1 // loop_pre_header
      _
    $region3: #{conv_bn_add_relu.1} parent=1 // loop_header
      %s11 = sphi 0, %s15
      %p12 = scmp.ge.s32.totalorder %s11, 4
      %s19 = sphi 0, %s19
      %s21 = sphi 0, %s19
      %s22 = sphi 0, %s21
      %s36 = sphi 0, %s22
      %s42 = sphi 0, %s44
      %s45 = sphi 0, %s42
      %s46 = sphi 0, %s45
      %s62 = sphi 0, %s46
      %s68 = sphi 0, %s70
      %s71 = sphi 0, %s68
      %s72 = sphi 0, %s71
      %s88 = sphi 0, %s72
      %s94 = sphi 0, %s96
      %s97 = sphi 0, %s94
      %s98 = sphi 0, %s97
      %s114 = sphi 0, %s98
      %s120 = sphi 0, %s122
      %s123 = sphi 0, %s120
      %s124 = sphi 0, %s123
      %s140 = sphi 0, %s124
      %s146 = sphi 0, %s148
      %s149 = sphi 0, %s146
      %s150 = sphi 0, %s149
      %s166 = sphi 0, %s150
    $region4: #{conv_bn_add_relu.1} parent=1 // loop_header_branch
      %14 = sbr.rel (%p12) target = $region8
    $region5: #{conv_bn_add_relu.1} parent=1 // loop_body
      %s16 = ssub.s32 %s11, 1
      %s17 = ssub.s32 %s11, 2
      %s18 = sadd.s32 %s11, 1
      %s20 = sadd.s32 %s19, 1
      %p23 = scmp.eq.s32.totalorder %s11, 1
      %p24 = scmp.ne.s32.totalorder %s19, %s21
      %p25 = scmp.eq.s32.totalorder %s11, 0
      %p26 = por %p24, %p25
      %p27 = scmp.ne.s32.totalorder %s19, %s21
      %p28 = scmp.eq.s32.totalorder %s16, 1
      %p29 = por %p27, %p28
      %p30 = scmp.ne.s32.totalorder %s21, %s22
      %p31 = scmp.eq.s32.totalorder %s16, 0
      %p32 = por %p30, %p31
      %p33 = scmp.ne.s32.totalorder %s21, %s22
      %p34 = scmp.eq.s32.totalorder %s17, 1
      %p35 = por %p33, %p34
      %p37 = scmp.ne.s32.totalorder %s22, %s36
      %p38 = scmp.eq.s32.totalorder %s17, 0
      %p39 = por %p37, %p38
      %s40 = ssub.s32 %s11, %s18
      %p41 = scmp.eq.s32.totalorder %s40, 0
      %s43 = sadd.s32 %s42, 1
      %s44 = scalar_select %p41, %s42, %s43
      %p47 = pneg %p41
      %p48 = scmp.eq.s32.totalorder %s11, 1
      %p49 = por %p47, %p48
      %p50 = scmp.ne.s32.totalorder %s42, %s45
      %p51 = scmp.eq.s32.totalorder %s11, 0
      %p52 = por %p50, %p51
      %p53 = scmp.ne.s32.totalorder %s42, %s45
      %p54 = scmp.eq.s32.totalorder %s16, 1
      %p55 = por %p53, %p54
      %p56 = scmp.ne.s32.totalorder %s45, %s46
      %p57 = scmp.eq.s32.totalorder %s16, 0
      %p58 = por %p56, %p57
      %p59 = scmp.ne.s32.totalorder %s45, %s46
      %p60 = scmp.eq.s32.totalorder %s17, 1
      %p61 = por %p59, %p60
      %p63 = scmp.ne.s32.totalorder %s46, %s62
      %p64 = scmp.eq.s32.totalorder %s17, 0
      %p65 = por %p63, %p64
      %s66 = ssub.s32 %s11, %s18
      %p67 = scmp.eq.s32.totalorder %s66, 0
      %s69 = sadd.s32 %s68, 1
      %s70 = scalar_select %p67, %s68, %s69
      %p73 = pneg %p67
      %p74 = scmp.eq.s32.totalorder %s11, 1
      %p75 = por %p73, %p74
      %p76 = scmp.ne.s32.totalorder %s68, %s71
      %p77 = scmp.eq.s32.totalorder %s11, 0
      %p78 = por %p76, %p77
      %p79 = scmp.ne.s32.totalorder %s68, %s71
      %p80 = scmp.eq.s32.totalorder %s16, 1
      %p81 = por %p79, %p80
      %p82 = scmp.ne.s32.totalorder %s71, %s72
      %p83 = scmp.eq.s32.totalorder %s16, 0
      %p84 = por %p82, %p83
      %p85 = scmp.ne.s32.totalorder %s71, %s72
      %p86 = scmp.eq.s32.totalorder %s17, 1
      %p87 = por %p85, %p86
      %p89 = scmp.ne.s32.totalorder %s72, %s88
      %p90 = scmp.eq.s32.totalorder %s17, 0
      %p91 = por %p89, %p90
      %s92 = ssub.s32 %s11, %s18
      %p93 = scmp.eq.s32.totalorder %s92, 0
      %s95 = sadd.s32 %s94, 1
      %s96 = scalar_select %p93, %s94, %s95
      %p99 = pneg %p93
      %p100 = scmp.eq.s32.totalorder %s11, 1
      %p101 = por %p99, %p100
      %p102 = scmp.ne.s32.totalorder %s94, %s97
      %p103 = scmp.eq.s32.totalorder %s11, 0
      %p104 = por %p102, %p103
      %p105 = scmp.ne.s32.totalorder %s94, %s97
      %p106 = scmp.eq.s32.totalorder %s16, 1
      %p107 = por %p105, %p106
      %p108 = scmp.ne.s32.totalorder %s97, %s98
      %p109 = scmp.eq.s32.totalorder %s16, 0
      %p110 = por %p108, %p109
      %p111 = scmp.ne.s32.totalorder %s97, %s98
      %p112 = scmp.eq.s32.totalorder %s17, 1
      %p113 = por %p111, %p112
      %p115 = scmp.ne.s32.totalorder %s98, %s114
      %p116 = scmp.eq.s32.totalorder %s17, 0
      %p117 = por %p115, %p116
      %s118 = ssub.s32 %s11, %s18
      %p119 = scmp.eq.s32.totalorder %s118, 0
      %s121 = sadd.s32 %s120, 1
      %s122 = scalar_select %p119, %s120, %s121
      %p125 = pneg %p119
      %p126 = scmp.eq.s32.totalorder %s11, 1
      %p127 = por %p125, %p126
      %p128 = scmp.ne.s32.totalorder %s120, %s123
      %p129 = scmp.eq.s32.totalorder %s11, 0
      %p130 = por %p128, %p129
      %p131 = scmp.ne.s32.totalorder %s120, %s123
      %p132 = scmp.eq.s32.totalorder %s16, 1
      %p133 = por %p131, %p132
      %p134 = scmp.ne.s32.totalorder %s123, %s124
      %p135 = scmp.eq.s32.totalorder %s16, 0
      %p136 = por %p134, %p135
      %p137 = scmp.ne.s32.totalorder %s123, %s124
      %p138 = scmp.eq.s32.totalorder %s17, 1
      %p139 = por %p137, %p138
      %p141 = scmp.ne.s32.totalorder %s124, %s140
      %p142 = scmp.eq.s32.totalorder %s17, 0
      %p143 = por %p141, %p142
      %s144 = ssub.s32 %s11, %s18
      %p145 = scmp.eq.s32.totalorder %s144, 0
      %s147 = sadd.s32 %s146, 1
      %s148 = scalar_select %p145, %s146, %s147
      %p151 = pneg %p145
      %p152 = scmp.eq.s32.totalorder %s11, 1
      %p153 = por %p151, %p152
      %p154 = scmp.ne.s32.totalorder %s146, %s149
      %p155 = scmp.eq.s32.totalorder %s11, 0
      %p156 = por %p154, %p155
      %p157 = scmp.ne.s32.totalorder %s146, %s149
      %p158 = scmp.eq.s32.totalorder %s16, 1
      %p159 = por %p157, %p158
      %p160 = scmp.ne.s32.totalorder %s149, %s150
      %p161 = scmp.eq.s32.totalorder %s16, 0
      %p162 = por %p160, %p161
      %p163 = scmp.ne.s32.totalorder %s149, %s150
      %p164 = scmp.eq.s32.totalorder %s17, 1
      %p165 = por %p163, %p164
      %p167 = scmp.ne.s32.totalorder %s150, %s166
      %p168 = scmp.eq.s32.totalorder %s17, 0
      %p169 = por %p167, %p168
      %p170 = scmp.le.s32.totalorder 1, %s11
      %p171 = scmp.lt.s32.totalorder %s11, 3
      %p172 = pnand %p170, %p171
      %p173 = pneg %p172
      // Predicated region
      $region9: #{conv_bn_add_relu.1} parent=5 // pred_check
        _
      $region10: #{conv_bn_add_relu.1} parent=5 // pred_check_branch
        %175 = sbr.rel (%p172) target = $region12
      $region11: #{conv_bn_add_relu.1} parent=5 // pred_region
        %s176 = ssub.s32 %s11, 1
        // Predicated region
        $region13: #{conv_bn_add_relu.1} parent=11 // pred_check
          %p177 = pneg %p32
        $region14: #{conv_bn_add_relu.1} parent=11 // pred_check_branch
          %179 = sbr.rel (%p177) target = $region16
        $region15: #{conv_bn_add_relu.1} parent=11 // pred_region
          _
        $region16: #{conv_bn_add_relu.1} parent=11 // pred_fallthru
          _
      $region12: #{conv_bn_add_relu.1} parent=5 // pred_fallthru
        _
      %p180 = scmp.lt.s32.totalorder %s11, 2
      // Predicated region
      $region17: #{conv_bn_add_relu.1} parent=5 // pred_check
        %p181 = pneg %p180
      $region18: #{conv_bn_add_relu.1} parent=5 // pred_check_branch
        %183 = sbr.rel (%p181) target = $region20
      $region19: #{conv_bn_add_relu.1} parent=5 // pred_region
        // Predicated region
        $region21: #{conv_bn_add_relu.1} parent=19 // pred_check
          %p184 = pneg %p52
        $region22: #{conv_bn_add_relu.1} parent=19 // pred_check_branch
          %186 = sbr.rel (%p184) target = $region24
        $region23: #{conv_bn_add_relu.1} parent=19 // pred_region
          %s187 = smul.u32 160, %s11
          %p188 = scmp.lt.s32.totalorder %s187, 319
          %s189 = scalar_select %p188, %s187, 319
          %s190 = smul.addr %s189, 11
          %s191 = smul.addr %s190, 4
          %s192 = scalar_lea.vmem %s1, %s191
          %s193 = smul.u32 160, %s11
        $region24: #{conv_bn_add_relu.1} parent=19 // pred_fallthru
          _
        // Predicated region
        $region25: #{conv_bn_add_relu.1} parent=19 // pred_check
          %p194 = pneg %p78
        $region26: #{conv_bn_add_relu.1} parent=19 // pred_check_branch
          %196 = sbr.rel (%p194) target = $region28
        $region27: #{conv_bn_add_relu.1} parent=19 // pred_region
          %s197 = smul.u32 10, %s11
          %p198 = scmp.lt.s32.totalorder %s197, 19
          %s199 = scalar_select %p198, %s197, 19
          %s200 = scalar_lea.vmem %s2, %s199
          %s201 = smul.u32 10, %s11
        $region28: #{conv_bn_add_relu.1} parent=19 // pred_fallthru
          _
        // Predicated region
        $region29: #{conv_bn_add_relu.1} parent=19 // pred_check
          %p202 = pneg %p104
        $region30: #{conv_bn_add_relu.1} parent=19 // pred_check_branch
          %204 = sbr.rel (%p202) target = $region32
        $region31: #{conv_bn_add_relu.1} parent=19 // pred_region
          %s205 = smul.u32 10, %s11
          %p206 = scmp.lt.s32.totalorder %s205, 19
          %s207 = scalar_select %p206, %s205, 19
          %s208 = scalar_lea.vmem %s3, %s207
          %s209 = smul.u32 10, %s11
        $region32: #{conv_bn_add_relu.1} parent=19 // pred_fallthru
          _
        // Predicated region
        $region33: #{conv_bn_add_relu.1} parent=19 // pred_check
          %p210 = pneg %p130
        $region34: #{conv_bn_add_relu.1} parent=19 // pred_check_branch
          %212 = sbr.rel (%p210) target = $region36
        $region35: #{conv_bn_add_relu.1} parent=19 // pred_region
          %s213 = sand.u32 %s120, 1
          %s214 = sand.u32 %s120, 1
          %s215 = smul.addr %s214, 640
          %s216 = scalar_lea.vmem [#allocation2], %s215
          %s217 = smul.u32 10, %s11
          %s218 = smul.addr %s217, 8
          %s219 = scalar_lea.vmem %s4, %s218
          // Predicated region
          $region37: #{conv_bn_add_relu.1} parent=35 // pred_check
            _
          $region38: #{conv_bn_add_relu.1} parent=35 // pred_check_branch
            %221 = sbr.rel (0) target = $region40
          $region39: #{conv_bn_add_relu.1} parent=35 // pred_region
            // Predicated region
            $region41: #{conv_bn_add_relu.1} parent=39 // pred_check
              _
            $region42: #{conv_bn_add_relu.1} parent=39 // pred_check_branch
              %223 = sbr.rel (0) target = $region44
            $region43: #{conv_bn_add_relu.1} parent=39 // pred_region
              loop: start=0, step=1, limit=1
              $region45: #{conv_bn_add_relu.1} parent=43 // loop_pre_header
                _
              $region46: #{conv_bn_add_relu.1} parent=43 // loop_header
                %s225 = sphi 0, %s229
                %p226 = scmp.ge.s32.totalorder %s225, 1
                %s230 = sphi %s219, %s219
                %s231 = sphi %s216, %s216
              $region47: #{conv_bn_add_relu.1} parent=43 // loop_header_branch
                %228 = sbr.rel (%p226) target = $region51
              $region48: #{conv_bn_add_relu.1} parent=43 // loop_body
                %v232 = vld [vmem:[%s230] sm:$0xff]
                %233 = vst [vmem:[%s231] sm:$0xff] %v232
                %v234 = vld [vmem:[%s230 + $0x8] sm:$0xff]
                %235 = vst [vmem:[%s231 + $0x8] sm:$0xff] %v234
                %v236 = vld [vmem:[%s230 + $0x10] sm:$0xff]
                %237 = vst [vmem:[%s231 + $0x10] sm:$0xff] %v236
                %v238 = vld [vmem:[%s230 + $0x18] sm:$0xff]
                %239 = vst [vmem:[%s231 + $0x18] sm:$0xff] %v238
                %v240 = vld [vmem:[%s230 + $0x20] sm:$0xff]
                %241 = vst [vmem:[%s231 + $0x20] sm:$0xff] %v240
                %v242 = vld [vmem:[%s230 + $0x28] sm:$0xff]
                %243 = vst [vmem:[%s231 + $0x28] sm:$0xff] %v242
                %v244 = vld [vmem:[%s230 + $0x30] sm:$0xff]
                %245 = vst [vmem:[%s231 + $0x30] sm:$0xff] %v244
                %v246 = vld [vmem:[%s230 + $0x38] sm:$0xff]
                %247 = vst [vmem:[%s231 + $0x38] sm:$0xff] %v246
                %v248 = vld [vmem:[%s230 + $0x40] sm:$0xff]
                %249 = vst [vmem:[%s231 + $0x40] sm:$0xff] %v248
                %v250 = vld [vmem:[%s230 + $0x48] sm:$0xff]
                %251 = vst [vmem:[%s231 + $0x48] sm:$0xff] %v250
                %v252 = vld [vmem:[%s230 + $0xa0] sm:$0xff]
                %253 = vst [vmem:[%s231 + $0x50] sm:$0xff] %v252
                %v254 = vld [vmem:[%s230 + $0xa8] sm:$0xff]
                %255 = vst [vmem:[%s231 + $0x58] sm:$0xff] %v254
                %v256 = vld [vmem:[%s230 + $0xb0] sm:$0xff]
                %257 = vst [vmem:[%s231 + $0x60] sm:$0xff] %v256
                %v258 = vld [vmem:[%s230 + $0xb8] sm:$0xff]
                %259 = vst [vmem:[%s231 + $0x68] sm:$0xff] %v258
                %v260 = vld [vmem:[%s230 + $0xc0] sm:$0xff]
                %261 = vst [vmem:[%s231 + $0x70] sm:$0xff] %v260
                %v262 = vld [vmem:[%s230 + $0xc8] sm:$0xff]
                %263 = vst [vmem:[%s231 + $0x78] sm:$0xff] %v262
                %v264 = vld [vmem:[%s230 + $0xd0] sm:$0xff]
                %265 = vst [vmem:[%s231 + $0x80] sm:$0xff] %v264
                %v266 = vld [vmem:[%s230 + $0xd8] sm:$0xff]
                %267 = vst [vmem:[%s231 + $0x88] sm:$0xff] %v266
                %v268 = vld [vmem:[%s230 + $0xe0] sm:$0xff]
                %269 = vst [vmem:[%s231 + $0x90] sm:$0xff] %v268
                %v270 = vld [vmem:[%s230 + $0xe8] sm:$0xff]
                %271 = vst [vmem:[%s231 + $0x98] sm:$0xff] %v270
                %v272 = vld [vmem:[%s230 + $0x140] sm:$0xff]
                %273 = vst [vmem:[%s231 + $0xa0] sm:$0xff] %v272
                %v274 = vld [vmem:[%s230 + $0x148] sm:$0xff]
                %275 = vst [vmem:[%s231 + $0xa8] sm:$0xff] %v274
                %v276 = vld [vmem:[%s230 + $0x150] sm:$0xff]
                %277 = vst [vmem:[%s231 + $0xb0] sm:$0xff] %v276
                %v278 = vld [vmem:[%s230 + $0x158] sm:$0xff]
                %279 = vst [vmem:[%s231 + $0xb8] sm:$0xff] %v278
                %v280 = vld [vmem:[%s230 + $0x160] sm:$0xff]
                %281 = vst [vmem:[%s231 + $0xc0] sm:$0xff] %v280
                %v282 = vld [vmem:[%s230 + $0x168] sm:$0xff]
                %283 = vst [vmem:[%s231 + $0xc8] sm:$0xff] %v282
                %v284 = vld [vmem:[%s230 + $0x170] sm:$0xff]
                %285 = vst [vmem:[%s231 + $0xd0] sm:$0xff] %v284
                %v286 = vld [vmem:[%s230 + $0x178] sm:$0xff]
                %287 = vst [vmem:[%s231 + $0xd8] sm:$0xff] %v286
                %v288 = vld [vmem:[%s230 + $0x180] sm:$0xff]
                %289 = vst [vmem:[%s231 + $0xe0] sm:$0xff] %v288
                %v290 = vld [vmem:[%s230 + $0x188] sm:$0xff]
                %291 = vst [vmem:[%s231 + $0xe8] sm:$0xff] %v290
                %v292 = vld [vmem:[%s230 + $0x1e0] sm:$0xff]
                %293 = vst [vmem:[%s231 + $0xf0] sm:$0xff] %v292
                %v294 = vld [vmem:[%s230 + $0x1e8] sm:$0xff]
                %295 = vst [vmem:[%s231 + $0xf8] sm:$0xff] %v294
                %v296 = vld [vmem:[%s230 + $0x1f0] sm:$0xff]
                %297 = vst [vmem:[%s231 + $0x100] sm:$0xff] %v296
                %v298 = vld [vmem:[%s230 + $0x1f8] sm:$0xff]
                %299 = vst [vmem:[%s231 + $0x108] sm:$0xff] %v298
                %v300 = vld [vmem:[%s230 + $0x200] sm:$0xff]
                %301 = vst [vmem:[%s231 + $0x110] sm:$0xff] %v300
                %v302 = vld [vmem:[%s230 + $0x208] sm:$0xff]
                %303 = vst [vmem:[%s231 + $0x118] sm:$0xff] %v302
                %v304 = vld [vmem:[%s230 + $0x210] sm:$0xff]
                %305 = vst [vmem:[%s231 + $0x120] sm:$0xff] %v304
                %v306 = vld [vmem:[%s230 + $0x218] sm:$0xff]
                %307 = vst [vmem:[%s231 + $0x128] sm:$0xff] %v306
                %v308 = vld [vmem:[%s230 + $0x220] sm:$0xff]
                %309 = vst [vmem:[%s231 + $0x130] sm:$0xff] %v308
                %v310 = vld [vmem:[%s230 + $0x228] sm:$0xff]
                %311 = vst [vmem:[%s231 + $0x138] sm:$0xff] %v310
                %v312 = vld [vmem:[%s230 + $0x280] sm:$0xff]
                %313 = vst [vmem:[%s231 + $0x140] sm:$0xff] %v312
                %v314 = vld [vmem:[%s230 + $0x288] sm:$0xff]
                %315 = vst [vmem:[%s231 + $0x148] sm:$0xff] %v314
                %v316 = vld [vmem:[%s230 + $0x290] sm:$0xff]
                %317 = vst [vmem:[%s231 + $0x150] sm:$0xff] %v316
                %v318 = vld [vmem:[%s230 + $0x298] sm:$0xff]
                %319 = vst [vmem:[%s231 + $0x158] sm:$0xff] %v318
                %v320 = vld [vmem:[%s230 + $0x2a0] sm:$0xff]
                %321 = vst [vmem:[%s231 + $0x160] sm:$0xff] %v320
                %v322 = vld [vmem:[%s230 + $0x2a8] sm:$0xff]
                %323 = vst [vmem:[%s231 + $0x168] sm:$0xff] %v322
                %v324 = vld [vmem:[%s230 + $0x2b0] sm:$0xff]
                %325 = vst [vmem:[%s231 + $0x170] sm:$0xff] %v324
                %v326 = vld [vmem:[%s230 + $0x2b8] sm:$0xff]
                %327 = vst [vmem:[%s231 + $0x178] sm:$0xff] %v326
                %v328 = vld [vmem:[%s230 + $0x2c0] sm:$0xff]
                %329 = vst [vmem:[%s231 + $0x180] sm:$0xff] %v328
                %v330 = vld [vmem:[%s230 + $0x2c8] sm:$0xff]
                %331 = vst [vmem:[%s231 + $0x188] sm:$0xff] %v330
                %v332 = vld [vmem:[%s230 + $0x320] sm:$0xff]
                %333 = vst [vmem:[%s231 + $0x190] sm:$0xff] %v332
                %v334 = vld [vmem:[%s230 + $0x328] sm:$0xff]
                %335 = vst [vmem:[%s231 + $0x198] sm:$0xff] %v334
                %v336 = vld [vmem:[%s230 + $0x330] sm:$0xff]
                %337 = vst [vmem:[%s231 + $0x1a0] sm:$0xff] %v336
                %v338 = vld [vmem:[%s230 + $0x338] sm:$0xff]
                %339 = vst [vmem:[%s231 + $0x1a8] sm:$0xff] %v338
                %v340 = vld [vmem:[%s230 + $0x340] sm:$0xff]
                %341 = vst [vmem:[%s231 + $0x1b0] sm:$0xff] %v340
                %v342 = vld [vmem:[%s230 + $0x348] sm:$0xff]
                %343 = vst [vmem:[%s231 + $0x1b8] sm:$0xff] %v342
                %v344 = vld [vmem:[%s230 + $0x350] sm:$0xff]
                %345 = vst [vmem:[%s231 + $0x1c0] sm:$0xff] %v344
                %v346 = vld [vmem:[%s230 + $0x358] sm:$0xff]
                %347 = vst [vmem:[%s231 + $0x1c8] sm:$0xff] %v346
                %v348 = vld [vmem:[%s230 + $0x360] sm:$0xff]
                %349 = vst [vmem:[%s231 + $0x1d0] sm:$0xff] %v348
                %v350 = vld [vmem:[%s230 + $0x368] sm:$0xff]
                %351 = vst [vmem:[%s231 + $0x1d8] sm:$0xff] %v350
                %v352 = vld [vmem:[%s230 + $0x3c0] sm:$0xff]
                %353 = vst [vmem:[%s231 + $0x1e0] sm:$0xff] %v352
                %v354 = vld [vmem:[%s230 + $0x3c8] sm:$0xff]
                %355 = vst [vmem:[%s231 + $0x1e8] sm:$0xff] %v354
                %v356 = vld [vmem:[%s230 + $0x3d0] sm:$0xff]
                %357 = vst [vmem:[%s231 + $0x1f0] sm:$0xff] %v356
                %v358 = vld [vmem:[%s230 + $0x3d8] sm:$0xff]
                %359 = vst [vmem:[%s231 + $0x1f8] sm:$0xff] %v358
                %v360 = vld [vmem:[%s230 + $0x3e0] sm:$0xff]
                %361 = vst [vmem:[%s231 + $0x200] sm:$0xff] %v360
                %v362 = vld [vmem:[%s230 + $0x3e8] sm:$0xff]
                %363 = vst [vmem:[%s231 + $0x208] sm:$0xff] %v362
                %v364 = vld [vmem:[%s230 + $0x3f0] sm:$0xff]
                %365 = vst [vmem:[%s231 + $0x210] sm:$0xff] %v364
                %v366 = vld [vmem:[%s230 + $0x3f8] sm:$0xff]
                %367 = vst [vmem:[%s231 + $0x218] sm:$0xff] %v366
                %v368 = vld [vmem:[%s230 + $0x400] sm:$0xff]
                %369 = vst [vmem:[%s231 + $0x220] sm:$0xff] %v368
                %v370 = vld [vmem:[%s230 + $0x408] sm:$0xff]
                %371 = vst [vmem:[%s231 + $0x228] sm:$0xff] %v370
                %v372 = vld [vmem:[%s230 + $0x460] sm:$0xff]
                %373 = vst [vmem:[%s231 + $0x230] sm:$0xff] %v372
                %v374 = vld [vmem:[%s230 + $0x468] sm:$0xff]
                %375 = vst [vmem:[%s231 + $0x238] sm:$0xff] %v374
                %v376 = vld [vmem:[%s230 + $0x470] sm:$0xff]
                %377 = vst [vmem:[%s231 + $0x240] sm:$0xff] %v376
                %v378 = vld [vmem:[%s230 + $0x478] sm:$0xff]
                %379 = vst [vmem:[%s231 + $0x248] sm:$0xff] %v378
                %v380 = vld [vmem:[%s230 + $0x480] sm:$0xff]
                %381 = vst [vmem:[%s231 + $0x250] sm:$0xff] %v380
                %v382 = vld [vmem:[%s230 + $0x488] sm:$0xff]
                %383 = vst [vmem:[%s231 + $0x258] sm:$0xff] %v382
                %v384 = vld [vmem:[%s230 + $0x490] sm:$0xff]
                %385 = vst [vmem:[%s231 + $0x260] sm:$0xff] %v384
                %v386 = vld [vmem:[%s230 + $0x498] sm:$0xff]
                %387 = vst [vmem:[%s231 + $0x268] sm:$0xff] %v386
                %v388 = vld [vmem:[%s230 + $0x4a0] sm:$0xff]
                %389 = vst [vmem:[%s231 + $0x270] sm:$0xff] %v388
                %v390 = vld [vmem:[%s230 + $0x4a8] sm:$0xff]
                %391 = vst [vmem:[%s231 + $0x278] sm:$0xff] %v390
              $region49: #{conv_bn_add_relu.1} parent=43 // loop_footer
                %s229 = sadd.s32 1, %s225
              $region50: #{conv_bn_add_relu.1} parent=43 // loop_footer_branch
                %224 = sbr.rel target = $region46
              $region51: #{conv_bn_add_relu.1} parent=43 // loop_exit
                _
            $region44: #{conv_bn_add_relu.1} parent=39 // pred_fallthru
              _
            // Predicated region
            $region52: #{conv_bn_add_relu.1} parent=39 // pred_check
              _
            $region53: #{conv_bn_add_relu.1} parent=39 // pred_check_branch
              %393 = sbr.rel target = $region55
            $region54: #{conv_bn_add_relu.1} parent=39 // pred_region
              _
            $region55: #{conv_bn_add_relu.1} parent=39 // pred_fallthru
              _
          $region40: #{conv_bn_add_relu.1} parent=35 // pred_fallthru
            _
          %394 = vnop
        $region36: #{conv_bn_add_relu.1} parent=19 // pred_fallthru
          _
      $region20: #{conv_bn_add_relu.1} parent=5 // pred_fallthru
        _
      %p395 = scmp.le.s32.totalorder 1, %s11
      %p396 = scmp.lt.s32.totalorder %s11, 3
      %p397 = pnand %p395, %p396
      %p398 = pneg %p397
      // Predicated region
      $region56: #{conv_bn_add_relu.1} parent=5 // pred_check
        _
      $region57: #{conv_bn_add_relu.1} parent=5 // pred_check_branch
        %400 = sbr.rel (%p397) target = $region59
      $region58: #{conv_bn_add_relu.1} parent=5 // pred_region
        %s401 = ssub.s32 %s11, 1
        %s402 = sand.u32 %s123, 1
        %s403 = sand.u32 %s123, 1
        %s404 = smul.addr %s403, 640
        %s405 = scalar_lea.vmem [#allocation2], %s404
        // Predicated region
        $region60: #{conv_bn_add_relu.1} parent=58 // pred_check
          %p406 = pneg %p136
        $region61: #{conv_bn_add_relu.1} parent=58 // pred_check_branch
          %408 = sbr.rel (%p406) target = $region63
        $region62: #{conv_bn_add_relu.1} parent=58 // pred_region
          _
        $region63: #{conv_bn_add_relu.1} parent=58 // pred_fallthru
          _
        %p409 = pneg %p32
        %p410 = pneg %p29
        %s411 = smul.u32 160, %s16
        %p412 = scmp.lt.s32.totalorder %s411, 319
        %s413 = scalar_select %p412, %s411, 319
        %s414 = smul.addr %s413, 11
        %s415 = smul.addr %s414, 4
        %s416 = scalar_lea.vmem %s1, %s415
        %p417 = pneg %p58
        %p418 = pneg %p55
        %s419 = smul.u32 10, %s16
        %p420 = scmp.lt.s32.totalorder %s419, 19
        %s421 = scalar_select %p420, %s419, 19
        %s422 = scalar_lea.vmem %s2, %s421
        %p423 = pneg %p84
        %p424 = pneg %p81
        %s425 = smul.u32 10, %s16
        %p426 = scmp.lt.s32.totalorder %s425, 19
        %s427 = scalar_select %p426, %s425, 19
        %s428 = scalar_lea.vmem %s3, %s427
        %p429 = pneg %p110
        %p430 = pneg %p107
        %s431 = sand.u32 %s123, 1
        %s432 = sand.u32 %s123, 1
        %s433 = smul.addr %s432, 640
        %s434 = scalar_lea.vmem [#allocation2], %s433
        %p435 = pneg %p136
        %p436 = pneg %p133
        %p437 = pneg %p162
        %p438 = pneg %p159
        %s439 = sand.u32 %s149, 1
        %s440 = sand.u32 %s149, 1
        %s441 = smul.addr %s440, 640
        %s442 = scalar_lea.vmem [#allocation3], %s441
        %s443 = smul.u32 160, %s16
        %p444 = scmp.lt.s32.totalorder %s443, 319
        %s445 = scalar_select %p444, %s443, 319
        %s446 = smul.addr %s445, 11
        %s447 = smul.addr %s446, 4
        %s448 = scalar_lea.vmem %s1, %s447
        %s449 = smul.u32 160, %s16
        %s450 = smul.u32 10, %s16
        %p451 = scmp.lt.s32.totalorder %s450, 19
        %s452 = scalar_select %p451, %s450, 19
        %s453 = scalar_lea.vmem %s2, %s452
        %s454 = smul.u32 10, %s16
        %s455 = smul.u32 10, %s16
        %p456 = scmp.lt.s32.totalorder %s455, 19
        %s457 = scalar_select %p456, %s455, 19
        %s458 = scalar_lea.vmem %s3, %s457
        %s459 = smul.u32 10, %s16
        %s460 = smul.u32 10, %s16
        %s461 = smul.u32 10, %s16
        %v463 = vld [vmem:[%s0] sm:$0xff]
        %v464 = vld [vmem:[%s0 + $0x8] sm:$0xff]
        %v465 = vld [vmem:[%s0 + $0x10] sm:$0xff]
        %v466 = vld [vmem:[%s0 + $0x18] sm:$0xff]
        %v467 = vld [vmem:[%s0 + $0x20] sm:$0xff]
        %v468 = vld [vmem:[%s0 + $0x28] sm:$0xf]
        %v469 = vld [vmem:[%s0 + $0x2c] sm:$0xff]
        %v470 = vld [vmem:[%s0 + $0x34] sm:$0xff]
        %v471 = vld [vmem:[%s0 + $0x3c] sm:$0xff]
        %v472 = vld [vmem:[%s0 + $0x44] sm:$0xff]
        %v473 = vld [vmem:[%s0 + $0x4c] sm:$0xff]
        %v474 = vld [vmem:[%s0 + $0x54] sm:$0xf]
        %v475 = vld [vmem:[%s0 + $0x58] sm:$0xff]
        %v476 = vld [vmem:[%s0 + $0x60] sm:$0xff]
        %v477 = vld [vmem:[%s0 + $0x68] sm:$0xff]
        %v478 = vld [vmem:[%s0 + $0x70] sm:$0xff]
        %v479 = vld [vmem:[%s0 + $0x78] sm:$0xff]
        %v480 = vld [vmem:[%s0 + $0x80] sm:$0xf]
        %v481 = vld [vmem:[%s0 + $0x84] sm:$0xff]
        %v482 = vld [vmem:[%s0 + $0x8c] sm:$0xff]
        %v483 = vld [vmem:[%s0 + $0x94] sm:$0xff]
        %v484 = vld [vmem:[%s0 + $0x9c] sm:$0xff]
        %v485 = vld [vmem:[%s0 + $0xa4] sm:$0xff]
        %v486 = vld [vmem:[%s0 + $0xac] sm:$0xf]
        %v487 = vld [vmem:[%s0 + $0xb0] sm:$0xff]
        %v488 = vld [vmem:[%s0 + $0xb8] sm:$0xff]
        %v489 = vld [vmem:[%s0 + $0xc0] sm:$0xff]
        %v490 = vld [vmem:[%s0 + $0xc8] sm:$0xff]
        %v491 = vld [vmem:[%s0 + $0xd0] sm:$0xff]
        %v492 = vld [vmem:[%s0 + $0xd8] sm:$0xf]
        %v493 = vld [vmem:[%s0 + $0xdc] sm:$0xff]
        %v494 = vld [vmem:[%s0 + $0xe4] sm:$0xff]
        %v495 = vld [vmem:[%s0 + $0xec] sm:$0xff]
        %v496 = vld [vmem:[%s0 + $0xf4] sm:$0xff]
        %v497 = vld [vmem:[%s0 + $0xfc] sm:$0xff]
        %v498 = vld [vmem:[%s0 + $0x104] sm:$0xf]
        %v499 = vld [vmem:[%s0 + $0x108] sm:$0xff]
        %v500 = vld [vmem:[%s0 + $0x110] sm:$0xff]
        %v501 = vld [vmem:[%s0 + $0x118] sm:$0xff]
        %v502 = vld [vmem:[%s0 + $0x120] sm:$0xff]
        %v503 = vld [vmem:[%s0 + $0x128] sm:$0xff]
        %v504 = vld [vmem:[%s0 + $0x130] sm:$0xf]
        %v505 = vld [vmem:[%s0 + $0x134] sm:$0xff]
        %v506 = vld [vmem:[%s0 + $0x13c] sm:$0xff]
        %v507 = vld [vmem:[%s0 + $0x144] sm:$0xff]
        %v508 = vld [vmem:[%s0 + $0x14c] sm:$0xff]
        %v509 = vld [vmem:[%s0 + $0x154] sm:$0xff]
        %v510 = vld [vmem:[%s0 + $0x15c] sm:$0xf]
        %v511 = vld [vmem:[%s448] sm:$0xff]
        %v512 = vld [vmem:[%s448 + $0x8] sm:$0xff]
        %v513 = vld [vmem:[%s448 + $0x10] sm:$0xff]
        %v514 = vld [vmem:[%s448 + $0x18] sm:$0xff]
        %v515 = vld [vmem:[%s448 + $0x20] sm:$0xff]
        %v516 = vld [vmem:[%s448 + $0x28] sm:$0xf]
        %v517 = vld [vmem:[%s448 + $0x2c] sm:$0xff]
        %v518 = vld [vmem:[%s448 + $0x34] sm:$0xff]
        %v519 = vld [vmem:[%s448 + $0x3c] sm:$0xff]
        %v520 = vld [vmem:[%s448 + $0x44] sm:$0xff]
        %v521 = vld [vmem:[%s448 + $0x4c] sm:$0xff]
        %v522 = vld [vmem:[%s448 + $0x54] sm:$0xf]
        %v523 = vld [vmem:[%s448 + $0x58] sm:$0xff]
        %v524 = vld [vmem:[%s448 + $0x60] sm:$0xff]
        %v525 = vld [vmem:[%s448 + $0x68] sm:$0xff]
        %v526 = vld [vmem:[%s448 + $0x70] sm:$0xff]
        %v527 = vld [vmem:[%s448 + $0x78] sm:$0xff]
        %v528 = vld [vmem:[%s448 + $0x80] sm:$0xf]
        %v529 = vld [vmem:[%s448 + $0x84] sm:$0xff]
        %v530 = vld [vmem:[%s448 + $0x8c] sm:$0xff]
        %v531 = vld [vmem:[%s448 + $0x94] sm:$0xff]
        %v532 = vld [vmem:[%s448 + $0x9c] sm:$0xff]
        %v533 = vld [vmem:[%s448 + $0xa4] sm:$0xff]
        %v534 = vld [vmem:[%s448 + $0xac] sm:$0xf]
        %v535 = vld [vmem:[%s448 + $0xb0] sm:$0xff]
        %v536 = vld [vmem:[%s448 + $0xb8] sm:$0xff]
        %v537 = vld [vmem:[%s448 + $0xc0] sm:$0xff]
        %v538 = vld [vmem:[%s448 + $0xc8] sm:$0xff]
        %v539 = vld [vmem:[%s448 + $0xd0] sm:$0xff]
        %v540 = vld [vmem:[%s448 + $0xd8] sm:$0xf]
        %v541 = vld [vmem:[%s448 + $0xdc] sm:$0xff]
        %v542 = vld [vmem:[%s448 + $0xe4] sm:$0xff]
        %v543 = vld [vmem:[%s448 + $0xec] sm:$0xff]
        %v544 = vld [vmem:[%s448 + $0xf4] sm:$0xff]
        %v545 = vld [vmem:[%s448 + $0xfc] sm:$0xff]
        %v546 = vld [vmem:[%s448 + $0x104] sm:$0xf]
        %v547 = vld [vmem:[%s448 + $0x108] sm:$0xff]
        %v548 = vld [vmem:[%s448 + $0x110] sm:$0xff]
        %v549 = vld [vmem:[%s448 + $0x118] sm:$0xff]
        %v550 = vld [vmem:[%s448 + $0x120] sm:$0xff]
        %v551 = vld [vmem:[%s448 + $0x128] sm:$0xff]
        %v552 = vld [vmem:[%s448 + $0x130] sm:$0xf]
        %v553 = vld [vmem:[%s448 + $0x134] sm:$0xff]
        %v554 = vld [vmem:[%s448 + $0x13c] sm:$0xff]
        %v555 = vld [vmem:[%s448 + $0x144] sm:$0xff]
        %v556 = vld [vmem:[%s448 + $0x14c] sm:$0xff]
        %v557 = vld [vmem:[%s448 + $0x154] sm:$0xff]
        %v558 = vld [vmem:[%s448 + $0x15c] sm:$0xf]
        %v559 = vld [vmem:[%s448 + $0x160] sm:$0xff]
        %v560 = vld [vmem:[%s448 + $0x168] sm:$0xff]
        %v561 = vld [vmem:[%s448 + $0x170] sm:$0xff]
        %v562 = vld [vmem:[%s448 + $0x178] sm:$0xff]
        %v563 = vld [vmem:[%s448 + $0x180] sm:$0xff]
        %v564 = vld [vmem:[%s448 + $0x188] sm:$0xf]
        %v565 = vld [vmem:[%s448 + $0x18c] sm:$0xff]
        %v566 = vld [vmem:[%s448 + $0x194] sm:$0xff]
        %v567 = vld [vmem:[%s448 + $0x19c] sm:$0xff]
        %v568 = vld [vmem:[%s448 + $0x1a4] sm:$0xff]
        %v569 = vld [vmem:[%s448 + $0x1ac] sm:$0xff]
        %v570 = vld [vmem:[%s448 + $0x1b4] sm:$0xf]
        %v571 = vld [vmem:[%s448 + $0x1b8] sm:$0xff]
        %v572 = vld [vmem:[%s448 + $0x1c0] sm:$0xff]
        %v573 = vld [vmem:[%s448 + $0x1c8] sm:$0xff]
        %v574 = vld [vmem:[%s448 + $0x1d0] sm:$0xff]
        %v575 = vld [vmem:[%s448 + $0x1d8] sm:$0xff]
        %v576 = vld [vmem:[%s448 + $0x1e0] sm:$0xf]
        %v577 = vld [vmem:[%s448 + $0x1e4] sm:$0xff]
        %v578 = vld [vmem:[%s448 + $0x1ec] sm:$0xff]
        %v579 = vld [vmem:[%s448 + $0x1f4] sm:$0xff]
        %v580 = vld [vmem:[%s448 + $0x1fc] sm:$0xff]
        %v581 = vld [vmem:[%s448 + $0x204] sm:$0xff]
        %v582 = vld [vmem:[%s448 + $0x20c] sm:$0xf]
        %v583 = vld [vmem:[%s448 + $0x210] sm:$0xff]
        %v584 = vld [vmem:[%s448 + $0x218] sm:$0xff]
        %v585 = vld [vmem:[%s448 + $0x220] sm:$0xff]
        %v586 = vld [vmem:[%s448 + $0x228] sm:$0xff]
        %v587 = vld [vmem:[%s448 + $0x230] sm:$0xff]
        %v588 = vld [vmem:[%s448 + $0x238] sm:$0xf]
        %v589 = vld [vmem:[%s448 + $0x23c] sm:$0xff]
        %v590 = vld [vmem:[%s448 + $0x244] sm:$0xff]
        %v591 = vld [vmem:[%s448 + $0x24c] sm:$0xff]
        %v592 = vld [vmem:[%s448 + $0x254] sm:$0xff]
        %v593 = vld [vmem:[%s448 + $0x25c] sm:$0xff]
        %v594 = vld [vmem:[%s448 + $0x264] sm:$0xf]
        %v595 = vld [vmem:[%s448 + $0x268] sm:$0xff]
        %v596 = vld [vmem:[%s448 + $0x270] sm:$0xff]
        %v597 = vld [vmem:[%s448 + $0x278] sm:$0xff]
        %v598 = vld [vmem:[%s448 + $0x280] sm:$0xff]
        %v599 = vld [vmem:[%s448 + $0x288] sm:$0xff]
        %v600 = vld [vmem:[%s448 + $0x290] sm:$0xf]
        %v601 = vld [vmem:[%s448 + $0x294] sm:$0xff]
        %v602 = vld [vmem:[%s448 + $0x29c] sm:$0xff]
        %v603 = vld [vmem:[%s448 + $0x2a4] sm:$0xff]
        %v604 = vld [vmem:[%s448 + $0x2ac] sm:$0xff]
        %v605 = vld [vmem:[%s448 + $0x2b4] sm:$0xff]
        %v606 = vld [vmem:[%s448 + $0x2bc] sm:$0xf]
        %v607 = vld [vmem:[%s448 + $0x2c0] sm:$0xff]
        %v608 = vld [vmem:[%s448 + $0x2c8] sm:$0xff]
        %v609 = vld [vmem:[%s448 + $0x2d0] sm:$0xff]
        %v610 = vld [vmem:[%s448 + $0x2d8] sm:$0xff]
        %v611 = vld [vmem:[%s448 + $0x2e0] sm:$0xff]
        %v612 = vld [vmem:[%s448 + $0x2e8] sm:$0xf]
        %v613 = vld [vmem:[%s448 + $0x2ec] sm:$0xff]
        %v614 = vld [vmem:[%s448 + $0x2f4] sm:$0xff]
        %v615 = vld [vmem:[%s448 + $0x2fc] sm:$0xff]
        %v616 = vld [vmem:[%s448 + $0x304] sm:$0xff]
        %v617 = vld [vmem:[%s448 + $0x30c] sm:$0xff]
        %v618 = vld [vmem:[%s448 + $0x314] sm:$0xf]
        %v619 = vld [vmem:[%s448 + $0x318] sm:$0xff]
        %v620 = vld [vmem:[%s448 + $0x320] sm:$0xff]
        %v621 = vld [vmem:[%s448 + $0x328] sm:$0xff]
        %v622 = vld [vmem:[%s448 + $0x330] sm:$0xff]
        %v623 = vld [vmem:[%s448 + $0x338] sm:$0xff]
        %v624 = vld [vmem:[%s448 + $0x340] sm:$0xf]
        %v625 = vld [vmem:[%s448 + $0x344] sm:$0xff]
        %v626 = vld [vmem:[%s448 + $0x34c] sm:$0xff]
        %v627 = vld [vmem:[%s448 + $0x354] sm:$0xff]
        %v628 = vld [vmem:[%s448 + $0x35c] sm:$0xff]
        %v629 = vld [vmem:[%s448 + $0x364] sm:$0xff]
        %v630 = vld [vmem:[%s448 + $0x36c] sm:$0xf]
        %v631 = vld [vmem:[%s448 + $0x370] sm:$0xff]
        %v632 = vld [vmem:[%s448 + $0x378] sm:$0xff]
        %v633 = vld [vmem:[%s448 + $0x380] sm:$0xff]
        %v634 = vld [vmem:[%s448 + $0x388] sm:$0xff]
        %v635 = vld [vmem:[%s448 + $0x390] sm:$0xff]
        %v636 = vld [vmem:[%s448 + $0x398] sm:$0xf]
        %v637 = vld [vmem:[%s448 + $0x39c] sm:$0xff]
        %v638 = vld [vmem:[%s448 + $0x3a4] sm:$0xff]
        %v639 = vld [vmem:[%s448 + $0x3ac] sm:$0xff]
        %v640 = vld [vmem:[%s448 + $0x3b4] sm:$0xff]
        %v641 = vld [vmem:[%s448 + $0x3bc] sm:$0xff]
        %v642 = vld [vmem:[%s448 + $0x3c4] sm:$0xf]
        %v643 = vld [vmem:[%s448 + $0x3c8] sm:$0xff]
        %v644 = vld [vmem:[%s448 + $0x3d0] sm:$0xff]
        %v645 = vld [vmem:[%s448 + $0x3d8] sm:$0xff]
        %v646 = vld [vmem:[%s448 + $0x3e0] sm:$0xff]
        %v647 = vld [vmem:[%s448 + $0x3e8] sm:$0xff]
        %v648 = vld [vmem:[%s448 + $0x3f0] sm:$0xf]
        %v649 = vld [vmem:[%s448 + $0x3f4] sm:$0xff]
        %v650 = vld [vmem:[%s448 + $0x3fc] sm:$0xff]
        %v651 = vld [vmem:[%s448 + $0x404] sm:$0xff]
        %v652 = vld [vmem:[%s448 + $0x40c] sm:$0xff]
        %v653 = vld [vmem:[%s448 + $0x414] sm:$0xff]
        %v654 = vld [vmem:[%s448 + $0x41c] sm:$0xf]
        %v655 = vld [vmem:[%s448 + $0x420] sm:$0xff]
        %v656 = vld [vmem:[%s448 + $0x428] sm:$0xff]
        %v657 = vld [vmem:[%s448 + $0x430] sm:$0xff]
        %v658 = vld [vmem:[%s448 + $0x438] sm:$0xff]
        %v659 = vld [vmem:[%s448 + $0x440] sm:$0xff]
        %v660 = vld [vmem:[%s448 + $0x448] sm:$0xf]
        %v661 = vld [vmem:[%s448 + $0x44c] sm:$0xff]
        %v662 = vld [vmem:[%s448 + $0x454] sm:$0xff]
        %v663 = vld [vmem:[%s448 + $0x45c] sm:$0xff]
        %v664 = vld [vmem:[%s448 + $0x464] sm:$0xff]
        %v665 = vld [vmem:[%s448 + $0x46c] sm:$0xff]
        %v666 = vld [vmem:[%s448 + $0x474] sm:$0xf]
        %v667 = vld [vmem:[%s448 + $0x478] sm:$0xff]
        %v668 = vld [vmem:[%s448 + $0x480] sm:$0xff]
        %v669 = vld [vmem:[%s448 + $0x488] sm:$0xff]
        %v670 = vld [vmem:[%s448 + $0x490] sm:$0xff]
        %v671 = vld [vmem:[%s448 + $0x498] sm:$0xff]
        %v672 = vld [vmem:[%s448 + $0x4a0] sm:$0xf]
        %v673 = vld [vmem:[%s448 + $0x4a4] sm:$0xff]
        %v674 = vld [vmem:[%s448 + $0x4ac] sm:$0xff]
        %v675 = vld [vmem:[%s448 + $0x4b4] sm:$0xff]
        %v676 = vld [vmem:[%s448 + $0x4bc] sm:$0xff]
        %v677 = vld [vmem:[%s448 + $0x4c4] sm:$0xff]
        %v678 = vld [vmem:[%s448 + $0x4cc] sm:$0xf]
        %v679 = vld [vmem:[%s448 + $0x4d0] sm:$0xff]
        %v680 = vld [vmem:[%s448 + $0x4d8] sm:$0xff]
        %v681 = vld [vmem:[%s448 + $0x4e0] sm:$0xff]
        %v682 = vld [vmem:[%s448 + $0x4e8] sm:$0xff]
        %v683 = vld [vmem:[%s448 + $0x4f0] sm:$0xff]
        %v684 = vld [vmem:[%s448 + $0x4f8] sm:$0xf]
        %v685 = vld [vmem:[%s448 + $0x4fc] sm:$0xff]
        %v686 = vld [vmem:[%s448 + $0x504] sm:$0xff]
        %v687 = vld [vmem:[%s448 + $0x50c] sm:$0xff]
        %v688 = vld [vmem:[%s448 + $0x514] sm:$0xff]
        %v689 = vld [vmem:[%s448 + $0x51c] sm:$0xff]
        %v690 = vld [vmem:[%s448 + $0x524] sm:$0xf]
        %v691 = vld [vmem:[%s448 + $0x528] sm:$0xff]
        %v692 = vld [vmem:[%s448 + $0x530] sm:$0xff]
        %v693 = vld [vmem:[%s448 + $0x538] sm:$0xff]
        %v694 = vld [vmem:[%s448 + $0x540] sm:$0xff]
        %v695 = vld [vmem:[%s448 + $0x548] sm:$0xff]
        %v696 = vld [vmem:[%s448 + $0x550] sm:$0xf]
        %v697 = vld [vmem:[%s448 + $0x554] sm:$0xff]
        %v698 = vld [vmem:[%s448 + $0x55c] sm:$0xff]
        %v699 = vld [vmem:[%s448 + $0x564] sm:$0xff]
        %v700 = vld [vmem:[%s448 + $0x56c] sm:$0xff]
        %v701 = vld [vmem:[%s448 + $0x574] sm:$0xff]
        %v702 = vld [vmem:[%s448 + $0x57c] sm:$0xf]
        %v703 = vld [vmem:[%s448 + $0x580] sm:$0xff]
        %v704 = vld [vmem:[%s448 + $0x588] sm:$0xff]
        %v705 = vld [vmem:[%s448 + $0x590] sm:$0xff]
        %v706 = vld [vmem:[%s448 + $0x598] sm:$0xff]
        %v707 = vld [vmem:[%s448 + $0x5a0] sm:$0xff]
        %v708 = vld [vmem:[%s448 + $0x5a8] sm:$0xf]
        %v709 = vld [vmem:[%s448 + $0x5ac] sm:$0xff]
        %v710 = vld [vmem:[%s448 + $0x5b4] sm:$0xff]
        %v711 = vld [vmem:[%s448 + $0x5bc] sm:$0xff]
        %v712 = vld [vmem:[%s448 + $0x5c4] sm:$0xff]
        %v713 = vld [vmem:[%s448 + $0x5cc] sm:$0xff]
        %v714 = vld [vmem:[%s448 + $0x5d4] sm:$0xf]
        %v715 = vld [vmem:[%s448 + $0x5d8] sm:$0xff]
        %v716 = vld [vmem:[%s448 + $0x5e0] sm:$0xff]
        %v717 = vld [vmem:[%s448 + $0x5e8] sm:$0xff]
        %v718 = vld [vmem:[%s448 + $0x5f0] sm:$0xff]
        %v719 = vld [vmem:[%s448 + $0x5f8] sm:$0xff]
        %v720 = vld [vmem:[%s448 + $0x600] sm:$0xf]
        %v721 = vld [vmem:[%s448 + $0x604] sm:$0xff]
        %v722 = vld [vmem:[%s448 + $0x60c] sm:$0xff]
        %v723 = vld [vmem:[%s448 + $0x614] sm:$0xff]
        %v724 = vld [vmem:[%s448 + $0x61c] sm:$0xff]
        %v725 = vld [vmem:[%s448 + $0x624] sm:$0xff]
        %v726 = vld [vmem:[%s448 + $0x62c] sm:$0xf]
        %v727 = vld [vmem:[%s448 + $0x630] sm:$0xff]
        %v728 = vld [vmem:[%s448 + $0x638] sm:$0xff]
        %v729 = vld [vmem:[%s448 + $0x640] sm:$0xff]
        %v730 = vld [vmem:[%s448 + $0x648] sm:$0xff]
        %v731 = vld [vmem:[%s448 + $0x650] sm:$0xff]
        %v732 = vld [vmem:[%s448 + $0x658] sm:$0xf]
        %v733 = vld [vmem:[%s448 + $0x65c] sm:$0xff]
        %v734 = vld [vmem:[%s448 + $0x664] sm:$0xff]
        %v735 = vld [vmem:[%s448 + $0x66c] sm:$0xff]
        %v736 = vld [vmem:[%s448 + $0x674] sm:$0xff]
        %v737 = vld [vmem:[%s448 + $0x67c] sm:$0xff]
        %v738 = vld [vmem:[%s448 + $0x684] sm:$0xf]
        %v739 = vld [vmem:[%s448 + $0x688] sm:$0xff]
        %v740 = vld [vmem:[%s448 + $0x690] sm:$0xff]
        %v741 = vld [vmem:[%s448 + $0x698] sm:$0xff]
        %v742 = vld [vmem:[%s448 + $0x6a0] sm:$0xff]
        %v743 = vld [vmem:[%s448 + $0x6a8] sm:$0xff]
        %v744 = vld [vmem:[%s448 + $0x6b0] sm:$0xf]
        %v745 = vld [vmem:[%s448 + $0x6b4] sm:$0xff]
        %v746 = vld [vmem:[%s448 + $0x6bc] sm:$0xff]
        %v747 = vld [vmem:[%s448 + $0x6c4] sm:$0xff]
        %v748 = vld [vmem:[%s448 + $0x6cc] sm:$0xff]
        %v749 = vld [vmem:[%s448 + $0x6d4] sm:$0xff]
        %v750 = vld [vmem:[%s448 + $0x6dc] sm:$0xf]
        %v751 = vld [vmem:[%s448 + $0x6e0] sm:$0xff]
        %v752 = vld [vmem:[%s448 + $0x6e8] sm:$0xff]
        %v753 = vld [vmem:[%s448 + $0x6f0] sm:$0xff]
        %v754 = vld [vmem:[%s448 + $0x6f8] sm:$0xff]
        %v755 = vld [vmem:[%s448 + $0x700] sm:$0xff]
        %v756 = vld [vmem:[%s448 + $0x708] sm:$0xf]
        %v757 = vld [vmem:[%s448 + $0x70c] sm:$0xff]
        %v758 = vld [vmem:[%s448 + $0x714] sm:$0xff]
        %v759 = vld [vmem:[%s448 + $0x71c] sm:$0xff]
        %v760 = vld [vmem:[%s448 + $0x724] sm:$0xff]
        %v761 = vld [vmem:[%s448 + $0x72c] sm:$0xff]
        %v762 = vld [vmem:[%s448 + $0x734] sm:$0xf]
        %v763 = vld [vmem:[%s448 + $0x738] sm:$0xff]
        %v764 = vld [vmem:[%s448 + $0x740] sm:$0xff]
        %v765 = vld [vmem:[%s448 + $0x748] sm:$0xff]
        %v766 = vld [vmem:[%s448 + $0x750] sm:$0xff]
        %v767 = vld [vmem:[%s448 + $0x758] sm:$0xff]
        %v768 = vld [vmem:[%s448 + $0x760] sm:$0xf]
        %v769 = vld [vmem:[%s448 + $0x764] sm:$0xff]
        %v770 = vld [vmem:[%s448 + $0x76c] sm:$0xff]
        %v771 = vld [vmem:[%s448 + $0x774] sm:$0xff]
        %v772 = vld [vmem:[%s448 + $0x77c] sm:$0xff]
        %v773 = vld [vmem:[%s448 + $0x784] sm:$0xff]
        %v774 = vld [vmem:[%s448 + $0x78c] sm:$0xf]
        %v775 = vld [vmem:[%s448 + $0x790] sm:$0xff]
        %v776 = vld [vmem:[%s448 + $0x798] sm:$0xff]
        %v777 = vld [vmem:[%s448 + $0x7a0] sm:$0xff]
        %v778 = vld [vmem:[%s448 + $0x7a8] sm:$0xff]
        %v779 = vld [vmem:[%s448 + $0x7b0] sm:$0xff]
        %v780 = vld [vmem:[%s448 + $0x7b8] sm:$0xf]
        %v781 = vld [vmem:[%s448 + $0x7bc] sm:$0xff]
        %v782 = vld [vmem:[%s448 + $0x7c4] sm:$0xff]
        %v783 = vld [vmem:[%s448 + $0x7cc] sm:$0xff]
        %v784 = vld [vmem:[%s448 + $0x7d4] sm:$0xff]
        %v785 = vld [vmem:[%s448 + $0x7dc] sm:$0xff]
        %v786 = vld [vmem:[%s448 + $0x7e4] sm:$0xf]
        %v787 = vld [vmem:[%s448 + $0x7e8] sm:$0xff]
        %v788 = vld [vmem:[%s448 + $0x7f0] sm:$0xff]
        %v789 = vld [vmem:[%s448 + $0x7f8] sm:$0xff]
        %v790 = vld [vmem:[%s448 + $0x800] sm:$0xff]
        %v791 = vld [vmem:[%s448 + $0x808] sm:$0xff]
        %v792 = vld [vmem:[%s448 + $0x810] sm:$0xf]
        %v793 = vld [vmem:[%s448 + $0x814] sm:$0xff]
        %v794 = vld [vmem:[%s448 + $0x81c] sm:$0xff]
        %v795 = vld [vmem:[%s448 + $0x824] sm:$0xff]
        %v796 = vld [vmem:[%s448 + $0x82c] sm:$0xff]
        %v797 = vld [vmem:[%s448 + $0x834] sm:$0xff]
        %v798 = vld [vmem:[%s448 + $0x83c] sm:$0xf]
        %v799 = vld [vmem:[%s448 + $0x840] sm:$0xff]
        %v800 = vld [vmem:[%s448 + $0x848] sm:$0xff]
        %v801 = vld [vmem:[%s448 + $0x850] sm:$0xff]
        %v802 = vld [vmem:[%s448 + $0x858] sm:$0xff]
        %v803 = vld [vmem:[%s448 + $0x860] sm:$0xff]
        %v804 = vld [vmem:[%s448 + $0x868] sm:$0xf]
        %v805 = vld [vmem:[%s448 + $0x86c] sm:$0xff]
        %v806 = vld [vmem:[%s448 + $0x874] sm:$0xff]
        %v807 = vld [vmem:[%s448 + $0x87c] sm:$0xff]
        %v808 = vld [vmem:[%s448 + $0x884] sm:$0xff]
        %v809 = vld [vmem:[%s448 + $0x88c] sm:$0xff]
        %v810 = vld [vmem:[%s448 + $0x894] sm:$0xf]
        %v811 = vld [vmem:[%s448 + $0x898] sm:$0xff]
        %v812 = vld [vmem:[%s448 + $0x8a0] sm:$0xff]
        %v813 = vld [vmem:[%s448 + $0x8a8] sm:$0xff]
        %v814 = vld [vmem:[%s448 + $0x8b0] sm:$0xff]
        %v815 = vld [vmem:[%s448 + $0x8b8] sm:$0xff]
        %v816 = vld [vmem:[%s448 + $0x8c0] sm:$0xf]
        %v817 = vld [vmem:[%s448 + $0x8c4] sm:$0xff]
        %v818 = vld [vmem:[%s448 + $0x8cc] sm:$0xff]
        %v819 = vld [vmem:[%s448 + $0x8d4] sm:$0xff]
        %v820 = vld [vmem:[%s448 + $0x8dc] sm:$0xff]
        %v821 = vld [vmem:[%s448 + $0x8e4] sm:$0xff]
        %v822 = vld [vmem:[%s448 + $0x8ec] sm:$0xf]
        %v823 = vld [vmem:[%s448 + $0x8f0] sm:$0xff]
        %v824 = vld [vmem:[%s448 + $0x8f8] sm:$0xff]
        %v825 = vld [vmem:[%s448 + $0x900] sm:$0xff]
        %v826 = vld [vmem:[%s448 + $0x908] sm:$0xff]
        %v827 = vld [vmem:[%s448 + $0x910] sm:$0xff]
        %v828 = vld [vmem:[%s448 + $0x918] sm:$0xf]
        %v829 = vld [vmem:[%s448 + $0x91c] sm:$0xff]
        %v830 = vld [vmem:[%s448 + $0x924] sm:$0xff]
        %v831 = vld [vmem:[%s448 + $0x92c] sm:$0xff]
        %v832 = vld [vmem:[%s448 + $0x934] sm:$0xff]
        %v833 = vld [vmem:[%s448 + $0x93c] sm:$0xff]
        %v834 = vld [vmem:[%s448 + $0x944] sm:$0xf]
        %v835 = vld [vmem:[%s448 + $0x948] sm:$0xff]
        %v836 = vld [vmem:[%s448 + $0x950] sm:$0xff]
        %v837 = vld [vmem:[%s448 + $0x958] sm:$0xff]
        %v838 = vld [vmem:[%s448 + $0x960] sm:$0xff]
        %v839 = vld [vmem:[%s448 + $0x968] sm:$0xff]
        %v840 = vld [vmem:[%s448 + $0x970] sm:$0xf]
        %v841 = vld [vmem:[%s448 + $0x974] sm:$0xff]
        %v842 = vld [vmem:[%s448 + $0x97c] sm:$0xff]
        %v843 = vld [vmem:[%s448 + $0x984] sm:$0xff]
        %v844 = vld [vmem:[%s448 + $0x98c] sm:$0xff]
        %v845 = vld [vmem:[%s448 + $0x994] sm:$0xff]
        %v846 = vld [vmem:[%s448 + $0x99c] sm:$0xf]
        %v847 = vld [vmem:[%s448 + $0x9a0] sm:$0xff]
        %v848 = vld [vmem:[%s448 + $0x9a8] sm:$0xff]
        %v849 = vld [vmem:[%s448 + $0x9b0] sm:$0xff]
        %v850 = vld [vmem:[%s448 + $0x9b8] sm:$0xff]
        %v851 = vld [vmem:[%s448 + $0x9c0] sm:$0xff]
        %v852 = vld [vmem:[%s448 + $0x9c8] sm:$0xf]
        %v853 = vld [vmem:[%s448 + $0x9cc] sm:$0xff]
        %v854 = vld [vmem:[%s448 + $0x9d4] sm:$0xff]
        %v855 = vld [vmem:[%s448 + $0x9dc] sm:$0xff]
        %v856 = vld [vmem:[%s448 + $0x9e4] sm:$0xff]
        %v857 = vld [vmem:[%s448 + $0x9ec] sm:$0xff]
        %v858 = vld [vmem:[%s448 + $0x9f4] sm:$0xf]
        %v859 = vld [vmem:[%s448 + $0x9f8] sm:$0xff]
        %v860 = vld [vmem:[%s448 + $0xa00] sm:$0xff]
        %v861 = vld [vmem:[%s448 + $0xa08] sm:$0xff]
        %v862 = vld [vmem:[%s448 + $0xa10] sm:$0xff]
        %v863 = vld [vmem:[%s448 + $0xa18] sm:$0xff]
        %v864 = vld [vmem:[%s448 + $0xa20] sm:$0xf]
        %v865 = vld [vmem:[%s448 + $0xa24] sm:$0xff]
        %v866 = vld [vmem:[%s448 + $0xa2c] sm:$0xff]
        %v867 = vld [vmem:[%s448 + $0xa34] sm:$0xff]
        %v868 = vld [vmem:[%s448 + $0xa3c] sm:$0xff]
        %v869 = vld [vmem:[%s448 + $0xa44] sm:$0xff]
        %v870 = vld [vmem:[%s448 + $0xa4c] sm:$0xf]
        %v871 = vld [vmem:[%s448 + $0xa50] sm:$0xff]
        %v872 = vld [vmem:[%s448 + $0xa58] sm:$0xff]
        %v873 = vld [vmem:[%s448 + $0xa60] sm:$0xff]
        %v874 = vld [vmem:[%s448 + $0xa68] sm:$0xff]
        %v875 = vld [vmem:[%s448 + $0xa70] sm:$0xff]
        %v876 = vld [vmem:[%s448 + $0xa78] sm:$0xf]
        %v877 = vld [vmem:[%s448 + $0xa7c] sm:$0xff]
        %v878 = vld [vmem:[%s448 + $0xa84] sm:$0xff]
        %v879 = vld [vmem:[%s448 + $0xa8c] sm:$0xff]
        %v880 = vld [vmem:[%s448 + $0xa94] sm:$0xff]
        %v881 = vld [vmem:[%s448 + $0xa9c] sm:$0xff]
        %v882 = vld [vmem:[%s448 + $0xaa4] sm:$0xf]
        %v883 = vld [vmem:[%s448 + $0xaa8] sm:$0xff]
        %v884 = vld [vmem:[%s448 + $0xab0] sm:$0xff]
        %v885 = vld [vmem:[%s448 + $0xab8] sm:$0xff]
        %v886 = vld [vmem:[%s448 + $0xac0] sm:$0xff]
        %v887 = vld [vmem:[%s448 + $0xac8] sm:$0xff]
        %v888 = vld [vmem:[%s448 + $0xad0] sm:$0xf]
        %v889 = vld [vmem:[%s448 + $0xad4] sm:$0xff]
        %v890 = vld [vmem:[%s448 + $0xadc] sm:$0xff]
        %v891 = vld [vmem:[%s448 + $0xae4] sm:$0xff]
        %v892 = vld [vmem:[%s448 + $0xaec] sm:$0xff]
        %v893 = vld [vmem:[%s448 + $0xaf4] sm:$0xff]
        %v894 = vld [vmem:[%s448 + $0xafc] sm:$0xf]
        %v895 = vld [vmem:[%s448 + $0xb00] sm:$0xff]
        %v896 = vld [vmem:[%s448 + $0xb08] sm:$0xff]
        %v897 = vld [vmem:[%s448 + $0xb10] sm:$0xff]
        %v898 = vld [vmem:[%s448 + $0xb18] sm:$0xff]
        %v899 = vld [vmem:[%s448 + $0xb20] sm:$0xff]
        %v900 = vld [vmem:[%s448 + $0xb28] sm:$0xf]
        %v901 = vld [vmem:[%s448 + $0xb2c] sm:$0xff]
        %v902 = vld [vmem:[%s448 + $0xb34] sm:$0xff]
        %v903 = vld [vmem:[%s448 + $0xb3c] sm:$0xff]
        %v904 = vld [vmem:[%s448 + $0xb44] sm:$0xff]
        %v905 = vld [vmem:[%s448 + $0xb4c] sm:$0xff]
        %v906 = vld [vmem:[%s448 + $0xb54] sm:$0xf]
        %v907 = vld [vmem:[%s448 + $0xb58] sm:$0xff]
        %v908 = vld [vmem:[%s448 + $0xb60] sm:$0xff]
        %v909 = vld [vmem:[%s448 + $0xb68] sm:$0xff]
        %v910 = vld [vmem:[%s448 + $0xb70] sm:$0xff]
        %v911 = vld [vmem:[%s448 + $0xb78] sm:$0xff]
        %v912 = vld [vmem:[%s448 + $0xb80] sm:$0xf]
        %v913 = vld [vmem:[%s448 + $0xb84] sm:$0xff]
        %v914 = vld [vmem:[%s448 + $0xb8c] sm:$0xff]
        %v915 = vld [vmem:[%s448 + $0xb94] sm:$0xff]
        %v916 = vld [vmem:[%s448 + $0xb9c] sm:$0xff]
        %v917 = vld [vmem:[%s448 + $0xba4] sm:$0xff]
        %v918 = vld [vmem:[%s448 + $0xbac] sm:$0xf]
        %v919 = vld [vmem:[%s448 + $0xbb0] sm:$0xff]
        %v920 = vld [vmem:[%s448 + $0xbb8] sm:$0xff]
        %v921 = vld [vmem:[%s448 + $0xbc0] sm:$0xff]
        %v922 = vld [vmem:[%s448 + $0xbc8] sm:$0xff]
        %v923 = vld [vmem:[%s448 + $0xbd0] sm:$0xff]
        %v924 = vld [vmem:[%s448 + $0xbd8] sm:$0xf]
        %v925 = vld [vmem:[%s448 + $0xbdc] sm:$0xff]
        %v926 = vld [vmem:[%s448 + $0xbe4] sm:$0xff]
        %v927 = vld [vmem:[%s448 + $0xbec] sm:$0xff]
        %v928 = vld [vmem:[%s448 + $0xbf4] sm:$0xff]
        %v929 = vld [vmem:[%s448 + $0xbfc] sm:$0xff]
        %v930 = vld [vmem:[%s448 + $0xc04] sm:$0xf]
        %v931 = vld [vmem:[%s448 + $0xc08] sm:$0xff]
        %v932 = vld [vmem:[%s448 + $0xc10] sm:$0xff]
        %v933 = vld [vmem:[%s448 + $0xc18] sm:$0xff]
        %v934 = vld [vmem:[%s448 + $0xc20] sm:$0xff]
        %v935 = vld [vmem:[%s448 + $0xc28] sm:$0xff]
        %v936 = vld [vmem:[%s448 + $0xc30] sm:$0xf]
        %v937 = vld [vmem:[%s448 + $0xc34] sm:$0xff]
        %v938 = vld [vmem:[%s448 + $0xc3c] sm:$0xff]
        %v939 = vld [vmem:[%s448 + $0xc44] sm:$0xff]
        %v940 = vld [vmem:[%s448 + $0xc4c] sm:$0xff]
        %v941 = vld [vmem:[%s448 + $0xc54] sm:$0xff]
        %v942 = vld [vmem:[%s448 + $0xc5c] sm:$0xf]
        %v943 = vld [vmem:[%s448 + $0xc60] sm:$0xff]
        %v944 = vld [vmem:[%s448 + $0xc68] sm:$0xff]
        %v945 = vld [vmem:[%s448 + $0xc70] sm:$0xff]
        %v946 = vld [vmem:[%s448 + $0xc78] sm:$0xff]
        %v947 = vld [vmem:[%s448 + $0xc80] sm:$0xff]
        %v948 = vld [vmem:[%s448 + $0xc88] sm:$0xf]
        %v949 = vld [vmem:[%s448 + $0xc8c] sm:$0xff]
        %v950 = vld [vmem:[%s448 + $0xc94] sm:$0xff]
        %v951 = vld [vmem:[%s448 + $0xc9c] sm:$0xff]
        %v952 = vld [vmem:[%s448 + $0xca4] sm:$0xff]
        %v953 = vld [vmem:[%s448 + $0xcac] sm:$0xff]
        %v954 = vld [vmem:[%s448 + $0xcb4] sm:$0xf]
        %v955 = vld [vmem:[%s448 + $0xcb8] sm:$0xff]
        %v956 = vld [vmem:[%s448 + $0xcc0] sm:$0xff]
        %v957 = vld [vmem:[%s448 + $0xcc8] sm:$0xff]
        %v958 = vld [vmem:[%s448 + $0xcd0] sm:$0xff]
        %v959 = vld [vmem:[%s448 + $0xcd8] sm:$0xff]
        %v960 = vld [vmem:[%s448 + $0xce0] sm:$0xf]
        %v961 = vld [vmem:[%s448 + $0xce4] sm:$0xff]
        %v962 = vld [vmem:[%s448 + $0xcec] sm:$0xff]
        %v963 = vld [vmem:[%s448 + $0xcf4] sm:$0xff]
        %v964 = vld [vmem:[%s448 + $0xcfc] sm:$0xff]
        %v965 = vld [vmem:[%s448 + $0xd04] sm:$0xff]
        %v966 = vld [vmem:[%s448 + $0xd0c] sm:$0xf]
        %v967 = vld [vmem:[%s448 + $0xd10] sm:$0xff]
        %v968 = vld [vmem:[%s448 + $0xd18] sm:$0xff]
        %v969 = vld [vmem:[%s448 + $0xd20] sm:$0xff]
        %v970 = vld [vmem:[%s448 + $0xd28] sm:$0xff]
        %v971 = vld [vmem:[%s448 + $0xd30] sm:$0xff]
        %v972 = vld [vmem:[%s448 + $0xd38] sm:$0xf]
        %v973 = vld [vmem:[%s448 + $0xd3c] sm:$0xff]
        %v974 = vld [vmem:[%s448 + $0xd44] sm:$0xff]
        %v975 = vld [vmem:[%s448 + $0xd4c] sm:$0xff]
        %v976 = vld [vmem:[%s448 + $0xd54] sm:$0xff]
        %v977 = vld [vmem:[%s448 + $0xd5c] sm:$0xff]
        %v978 = vld [vmem:[%s448 + $0xd64] sm:$0xf]
        %v979 = vld [vmem:[%s448 + $0xd68] sm:$0xff]
        %v980 = vld [vmem:[%s448 + $0xd70] sm:$0xff]
        %v981 = vld [vmem:[%s448 + $0xd78] sm:$0xff]
        %v982 = vld [vmem:[%s448 + $0xd80] sm:$0xff]
        %v983 = vld [vmem:[%s448 + $0xd88] sm:$0xff]
        %v984 = vld [vmem:[%s448 + $0xd90] sm:$0xf]
        %v985 = vld [vmem:[%s448 + $0xd94] sm:$0xff]
        %v986 = vld [vmem:[%s448 + $0xd9c] sm:$0xff]
        %v987 = vld [vmem:[%s448 + $0xda4] sm:$0xff]
        %v988 = vld [vmem:[%s448 + $0xdac] sm:$0xff]
        %v989 = vld [vmem:[%s448 + $0xdb4] sm:$0xff]
        %v990 = vld [vmem:[%s448 + $0xdbc] sm:$0xf]
        %v991 = vld [vmem:[%s448 + $0xdc0] sm:$0xff]
        %v992 = vld [vmem:[%s448 + $0xdc8] sm:$0xff]
        %v993 = vld [vmem:[%s448 + $0xdd0] sm:$0xff]
        %v994 = vld [vmem:[%s448 + $0xdd8] sm:$0xff]
        %v995 = vld [vmem:[%s448 + $0xde0] sm:$0xff]
        %v996 = vld [vmem:[%s448 + $0xde8] sm:$0xf]
        %v997 = vld [vmem:[%s448 + $0xdec] sm:$0xff]
        %v998 = vld [vmem:[%s448 + $0xdf4] sm:$0xff]
        %v999 = vld [vmem:[%s448 + $0xdfc] sm:$0xff]
        %v1000 = vld [vmem:[%s448 + $0xe04] sm:$0xff]
        %v1001 = vld [vmem:[%s448 + $0xe0c] sm:$0xff]
        %v1002 = vld [vmem:[%s448 + $0xe14] sm:$0xf]
        %v1003 = vld [vmem:[%s448 + $0xe18] sm:$0xff]
        %v1004 = vld [vmem:[%s448 + $0xe20] sm:$0xff]
        %v1005 = vld [vmem:[%s448 + $0xe28] sm:$0xff]
        %v1006 = vld [vmem:[%s448 + $0xe30] sm:$0xff]
        %v1007 = vld [vmem:[%s448 + $0xe38] sm:$0xff]
        %v1008 = vld [vmem:[%s448 + $0xe40] sm:$0xf]
        %v1009 = vld [vmem:[%s448 + $0xe44] sm:$0xff]
        %v1010 = vld [vmem:[%s448 + $0xe4c] sm:$0xff]
        %v1011 = vld [vmem:[%s448 + $0xe54] sm:$0xff]
        %v1012 = vld [vmem:[%s448 + $0xe5c] sm:$0xff]
        %v1013 = vld [vmem:[%s448 + $0xe64] sm:$0xff]
        %v1014 = vld [vmem:[%s448 + $0xe6c] sm:$0xf]
        %v1015 = vld [vmem:[%s448 + $0xe70] sm:$0xff]
        %v1016 = vld [vmem:[%s448 + $0xe78] sm:$0xff]
        %v1017 = vld [vmem:[%s448 + $0xe80] sm:$0xff]
        %v1018 = vld [vmem:[%s448 + $0xe88] sm:$0xff]
        %v1019 = vld [vmem:[%s448 + $0xe90] sm:$0xff]
        %v1020 = vld [vmem:[%s448 + $0xe98] sm:$0xf]
        %v1021 = vld [vmem:[%s448 + $0xe9c] sm:$0xff]
        %v1022 = vld [vmem:[%s448 + $0xea4] sm:$0xff]
        %v1023 = vld [vmem:[%s448 + $0xeac] sm:$0xff]
        %v1024 = vld [vmem:[%s448 + $0xeb4] sm:$0xff]
        %v1025 = vld [vmem:[%s448 + $0xebc] sm:$0xff]
        %v1026 = vld [vmem:[%s448 + $0xec4] sm:$0xf]
        %v1027 = vld [vmem:[%s448 + $0xec8] sm:$0xff]
        %v1028 = vld [vmem:[%s448 + $0xed0] sm:$0xff]
        %v1029 = vld [vmem:[%s448 + $0xed8] sm:$0xff]
        %v1030 = vld [vmem:[%s448 + $0xee0] sm:$0xff]
        %v1031 = vld [vmem:[%s448 + $0xee8] sm:$0xff]
        %v1032 = vld [vmem:[%s448 + $0xef0] sm:$0xf]
        %v1033 = vld [vmem:[%s448 + $0xef4] sm:$0xff]
        %v1034 = vld [vmem:[%s448 + $0xefc] sm:$0xff]
        %v1035 = vld [vmem:[%s448 + $0xf04] sm:$0xff]
        %v1036 = vld [vmem:[%s448 + $0xf0c] sm:$0xff]
        %v1037 = vld [vmem:[%s448 + $0xf14] sm:$0xff]
        %v1038 = vld [vmem:[%s448 + $0xf1c] sm:$0xf]
        %v1039 = vld [vmem:[%s448 + $0xf20] sm:$0xff]
        %v1040 = vld [vmem:[%s448 + $0xf28] sm:$0xff]
        %v1041 = vld [vmem:[%s448 + $0xf30] sm:$0xff]
        %v1042 = vld [vmem:[%s448 + $0xf38] sm:$0xff]
        %v1043 = vld [vmem:[%s448 + $0xf40] sm:$0xff]
        %v1044 = vld [vmem:[%s448 + $0xf48] sm:$0xf]
        %v1045 = vld [vmem:[%s448 + $0xf4c] sm:$0xff]
        %v1046 = vld [vmem:[%s448 + $0xf54] sm:$0xff]
        %v1047 = vld [vmem:[%s448 + $0xf5c] sm:$0xff]
        %v1048 = vld [vmem:[%s448 + $0xf64] sm:$0xff]
        %v1049 = vld [vmem:[%s448 + $0xf6c] sm:$0xff]
        %v1050 = vld [vmem:[%s448 + $0xf74] sm:$0xf]
        %v1051 = vld [vmem:[%s448 + $0xf78] sm:$0xff]
        %v1052 = vld [vmem:[%s448 + $0xf80] sm:$0xff]
        %v1053 = vld [vmem:[%s448 + $0xf88] sm:$0xff]
        %v1054 = vld [vmem:[%s448 + $0xf90] sm:$0xff]
        %v1055 = vld [vmem:[%s448 + $0xf98] sm:$0xff]
        %v1056 = vld [vmem:[%s448 + $0xfa0] sm:$0xf]
        %v1057 = vld [vmem:[%s448 + $0xfa4] sm:$0xff]
        %v1058 = vld [vmem:[%s448 + $0xfac] sm:$0xff]
        %v1059 = vld [vmem:[%s448 + $0xfb4] sm:$0xff]
        %v1060 = vld [vmem:[%s448 + $0xfbc] sm:$0xff]
        %v1061 = vld [vmem:[%s448 + $0xfc4] sm:$0xff]
        %v1062 = vld [vmem:[%s448 + $0xfcc] sm:$0xf]
        %v1063 = vld [vmem:[%s448 + $0xfd0] sm:$0xff]
        %v1064 = vld [vmem:[%s448 + $0xfd8] sm:$0xff]
        %v1065 = vld [vmem:[%s448 + $0xfe0] sm:$0xff]
        %v1066 = vld [vmem:[%s448 + $0xfe8] sm:$0xff]
        %v1067 = vld [vmem:[%s448 + $0xff0] sm:$0xff]
        %v1068 = vld [vmem:[%s448 + $0xff8] sm:$0xf]
        %v1069 = vld [vmem:[%s448 + $0xffc] sm:$0xff]
        %v1070 = vld [vmem:[%s448 + $0x1004] sm:$0xff]
        %v1071 = vld [vmem:[%s448 + $0x100c] sm:$0xff]
        %v1072 = vld [vmem:[%s448 + $0x1014] sm:$0xff]
        %v1073 = vld [vmem:[%s448 + $0x101c] sm:$0xff]
        %v1074 = vld [vmem:[%s448 + $0x1024] sm:$0xf]
        %v1075 = vld [vmem:[%s448 + $0x1028] sm:$0xff]
        %v1076 = vld [vmem:[%s448 + $0x1030] sm:$0xff]
        %v1077 = vld [vmem:[%s448 + $0x1038] sm:$0xff]
        %v1078 = vld [vmem:[%s448 + $0x1040] sm:$0xff]
        %v1079 = vld [vmem:[%s448 + $0x1048] sm:$0xff]
        %v1080 = vld [vmem:[%s448 + $0x1050] sm:$0xf]
        %v1081 = vld [vmem:[%s448 + $0x1054] sm:$0xff]
        %v1082 = vld [vmem:[%s448 + $0x105c] sm:$0xff]
        %v1083 = vld [vmem:[%s448 + $0x1064] sm:$0xff]
        %v1084 = vld [vmem:[%s448 + $0x106c] sm:$0xff]
        %v1085 = vld [vmem:[%s448 + $0x1074] sm:$0xff]
        %v1086 = vld [vmem:[%s448 + $0x107c] sm:$0xf]
        %v1087 = vld [vmem:[%s448 + $0x1080] sm:$0xff]
        %v1088 = vld [vmem:[%s448 + $0x1088] sm:$0xff]
        %v1089 = vld [vmem:[%s448 + $0x1090] sm:$0xff]
        %v1090 = vld [vmem:[%s448 + $0x1098] sm:$0xff]
        %v1091 = vld [vmem:[%s448 + $0x10a0] sm:$0xff]
        %v1092 = vld [vmem:[%s448 + $0x10a8] sm:$0xf]
        %v1093 = vld [vmem:[%s448 + $0x10ac] sm:$0xff]
        %v1094 = vld [vmem:[%s448 + $0x10b4] sm:$0xff]
        %v1095 = vld [vmem:[%s448 + $0x10bc] sm:$0xff]
        %v1096 = vld [vmem:[%s448 + $0x10c4] sm:$0xff]
        %v1097 = vld [vmem:[%s448 + $0x10cc] sm:$0xff]
        %v1098 = vld [vmem:[%s448 + $0x10d4] sm:$0xf]
        %v1099 = vld [vmem:[%s448 + $0x10d8] sm:$0xff]
        %v1100 = vld [vmem:[%s448 + $0x10e0] sm:$0xff]
        %v1101 = vld [vmem:[%s448 + $0x10e8] sm:$0xff]
        %v1102 = vld [vmem:[%s448 + $0x10f0] sm:$0xff]
        %v1103 = vld [vmem:[%s448 + $0x10f8] sm:$0xff]
        %v1104 = vld [vmem:[%s448 + $0x1100] sm:$0xf]
        %v1105 = vld [vmem:[%s448 + $0x1104] sm:$0xff]
        %v1106 = vld [vmem:[%s448 + $0x110c] sm:$0xff]
        %v1107 = vld [vmem:[%s448 + $0x1114] sm:$0xff]
        %v1108 = vld [vmem:[%s448 + $0x111c] sm:$0xff]
        %v1109 = vld [vmem:[%s448 + $0x1124] sm:$0xff]
        %v1110 = vld [vmem:[%s448 + $0x112c] sm:$0xf]
        %v1111 = vld [vmem:[%s448 + $0x1130] sm:$0xff]
        %v1112 = vld [vmem:[%s448 + $0x1138] sm:$0xff]
        %v1113 = vld [vmem:[%s448 + $0x1140] sm:$0xff]
        %v1114 = vld [vmem:[%s448 + $0x1148] sm:$0xff]
        %v1115 = vld [vmem:[%s448 + $0x1150] sm:$0xff]
        %v1116 = vld [vmem:[%s448 + $0x1158] sm:$0xf]
        %v1117 = vld [vmem:[%s448 + $0x115c] sm:$0xff]
        %v1118 = vld [vmem:[%s448 + $0x1164] sm:$0xff]
        %v1119 = vld [vmem:[%s448 + $0x116c] sm:$0xff]
        %v1120 = vld [vmem:[%s448 + $0x1174] sm:$0xff]
        %v1121 = vld [vmem:[%s448 + $0x117c] sm:$0xff]
        %v1122 = vld [vmem:[%s448 + $0x1184] sm:$0xf]
        %v1123 = vld [vmem:[%s448 + $0x1188] sm:$0xff]
        %v1124 = vld [vmem:[%s448 + $0x1190] sm:$0xff]
        %v1125 = vld [vmem:[%s448 + $0x1198] sm:$0xff]
        %v1126 = vld [vmem:[%s448 + $0x11a0] sm:$0xff]
        %v1127 = vld [vmem:[%s448 + $0x11a8] sm:$0xff]
        %v1128 = vld [vmem:[%s448 + $0x11b0] sm:$0xf]
        %v1129 = vld [vmem:[%s448 + $0x11b4] sm:$0xff]
        %v1130 = vld [vmem:[%s448 + $0x11bc] sm:$0xff]
        %v1131 = vld [vmem:[%s448 + $0x11c4] sm:$0xff]
        %v1132 = vld [vmem:[%s448 + $0x11cc] sm:$0xff]
        %v1133 = vld [vmem:[%s448 + $0x11d4] sm:$0xff]
        %v1134 = vld [vmem:[%s448 + $0x11dc] sm:$0xf]
        %v1135 = vld [vmem:[%s448 + $0x11e0] sm:$0xff]
        %v1136 = vld [vmem:[%s448 + $0x11e8] sm:$0xff]
        %v1137 = vld [vmem:[%s448 + $0x11f0] sm:$0xff]
        %v1138 = vld [vmem:[%s448 + $0x11f8] sm:$0xff]
        %v1139 = vld [vmem:[%s448 + $0x1200] sm:$0xff]
        %v1140 = vld [vmem:[%s448 + $0x1208] sm:$0xf]
        %v1141 = vld [vmem:[%s448 + $0x120c] sm:$0xff]
        %v1142 = vld [vmem:[%s448 + $0x1214] sm:$0xff]
        %v1143 = vld [vmem:[%s448 + $0x121c] sm:$0xff]
        %v1144 = vld [vmem:[%s448 + $0x1224] sm:$0xff]
        %v1145 = vld [vmem:[%s448 + $0x122c] sm:$0xff]
        %v1146 = vld [vmem:[%s448 + $0x1234] sm:$0xf]
        %v1147 = vld [vmem:[%s448 + $0x1238] sm:$0xff]
        %v1148 = vld [vmem:[%s448 + $0x1240] sm:$0xff]
        %v1149 = vld [vmem:[%s448 + $0x1248] sm:$0xff]
        %v1150 = vld [vmem:[%s448 + $0x1250] sm:$0xff]
        %v1151 = vld [vmem:[%s448 + $0x1258] sm:$0xff]
        %v1152 = vld [vmem:[%s448 + $0x1260] sm:$0xf]
        %v1153 = vld [vmem:[%s448 + $0x1264] sm:$0xff]
        %v1154 = vld [vmem:[%s448 + $0x126c] sm:$0xff]
        %v1155 = vld [vmem:[%s448 + $0x1274] sm:$0xff]
        %v1156 = vld [vmem:[%s448 + $0x127c] sm:$0xff]
        %v1157 = vld [vmem:[%s448 + $0x1284] sm:$0xff]
        %v1158 = vld [vmem:[%s448 + $0x128c] sm:$0xf]
        %v1159 = vld [vmem:[%s448 + $0x1290] sm:$0xff]
        %v1160 = vld [vmem:[%s448 + $0x1298] sm:$0xff]
        %v1161 = vld [vmem:[%s448 + $0x12a0] sm:$0xff]
        %v1162 = vld [vmem:[%s448 + $0x12a8] sm:$0xff]
        %v1163 = vld [vmem:[%s448 + $0x12b0] sm:$0xff]
        %v1164 = vld [vmem:[%s448 + $0x12b8] sm:$0xf]
        %v1165 = vld [vmem:[%s448 + $0x12bc] sm:$0xff]
        %v1166 = vld [vmem:[%s448 + $0x12c4] sm:$0xff]
        %v1167 = vld [vmem:[%s448 + $0x12cc] sm:$0xff]
        %v1168 = vld [vmem:[%s448 + $0x12d4] sm:$0xff]
        %v1169 = vld [vmem:[%s448 + $0x12dc] sm:$0xff]
        %v1170 = vld [vmem:[%s448 + $0x12e4] sm:$0xf]
        %v1171 = vld [vmem:[%s448 + $0x12e8] sm:$0xff]
        %v1172 = vld [vmem:[%s448 + $0x12f0] sm:$0xff]
        %v1173 = vld [vmem:[%s448 + $0x12f8] sm:$0xff]
        %v1174 = vld [vmem:[%s448 + $0x1300] sm:$0xff]
        %v1175 = vld [vmem:[%s448 + $0x1308] sm:$0xff]
        %v1176 = vld [vmem:[%s448 + $0x1310] sm:$0xf]
        %v1177 = vld [vmem:[%s448 + $0x1314] sm:$0xff]
        %v1178 = vld [vmem:[%s448 + $0x131c] sm:$0xff]
        %v1179 = vld [vmem:[%s448 + $0x1324] sm:$0xff]
        %v1180 = vld [vmem:[%s448 + $0x132c] sm:$0xff]
        %v1181 = vld [vmem:[%s448 + $0x1334] sm:$0xff]
        %v1182 = vld [vmem:[%s448 + $0x133c] sm:$0xf]
        %v1183 = vld [vmem:[%s448 + $0x1340] sm:$0xff]
        %v1184 = vld [vmem:[%s448 + $0x1348] sm:$0xff]
        %v1185 = vld [vmem:[%s448 + $0x1350] sm:$0xff]
        %v1186 = vld [vmem:[%s448 + $0x1358] sm:$0xff]
        %v1187 = vld [vmem:[%s448 + $0x1360] sm:$0xff]
        %v1188 = vld [vmem:[%s448 + $0x1368] sm:$0xf]
        %v1189 = vld [vmem:[%s448 + $0x136c] sm:$0xff]
        %v1190 = vld [vmem:[%s448 + $0x1374] sm:$0xff]
        %v1191 = vld [vmem:[%s448 + $0x137c] sm:$0xff]
        %v1192 = vld [vmem:[%s448 + $0x1384] sm:$0xff]
        %v1193 = vld [vmem:[%s448 + $0x138c] sm:$0xff]
        %v1194 = vld [vmem:[%s448 + $0x1394] sm:$0xf]
        %v1195 = vld [vmem:[%s448 + $0x1398] sm:$0xff]
        %v1196 = vld [vmem:[%s448 + $0x13a0] sm:$0xff]
        %v1197 = vld [vmem:[%s448 + $0x13a8] sm:$0xff]
        %v1198 = vld [vmem:[%s448 + $0x13b0] sm:$0xff]
        %v1199 = vld [vmem:[%s448 + $0x13b8] sm:$0xff]
        %v1200 = vld [vmem:[%s448 + $0x13c0] sm:$0xf]
        %v1201 = vld [vmem:[%s448 + $0x13c4] sm:$0xff]
        %v1202 = vld [vmem:[%s448 + $0x13cc] sm:$0xff]
        %v1203 = vld [vmem:[%s448 + $0x13d4] sm:$0xff]
        %v1204 = vld [vmem:[%s448 + $0x13dc] sm:$0xff]
        %v1205 = vld [vmem:[%s448 + $0x13e4] sm:$0xff]
        %v1206 = vld [vmem:[%s448 + $0x13ec] sm:$0xf]
        %v1207 = vld [vmem:[%s448 + $0x13f0] sm:$0xff]
        %v1208 = vld [vmem:[%s448 + $0x13f8] sm:$0xff]
        %v1209 = vld [vmem:[%s448 + $0x1400] sm:$0xff]
        %v1210 = vld [vmem:[%s448 + $0x1408] sm:$0xff]
        %v1211 = vld [vmem:[%s448 + $0x1410] sm:$0xff]
        %v1212 = vld [vmem:[%s448 + $0x1418] sm:$0xf]
        %v1213 = vld [vmem:[%s448 + $0x141c] sm:$0xff]
        %v1214 = vld [vmem:[%s448 + $0x1424] sm:$0xff]
        %v1215 = vld [vmem:[%s448 + $0x142c] sm:$0xff]
        %v1216 = vld [vmem:[%s448 + $0x1434] sm:$0xff]
        %v1217 = vld [vmem:[%s448 + $0x143c] sm:$0xff]
        %v1218 = vld [vmem:[%s448 + $0x1444] sm:$0xf]
        %v1219 = vld [vmem:[%s448 + $0x1448] sm:$0xff]
        %v1220 = vld [vmem:[%s448 + $0x1450] sm:$0xff]
        %v1221 = vld [vmem:[%s448 + $0x1458] sm:$0xff]
        %v1222 = vld [vmem:[%s448 + $0x1460] sm:$0xff]
        %v1223 = vld [vmem:[%s448 + $0x1468] sm:$0xff]
        %v1224 = vld [vmem:[%s448 + $0x1470] sm:$0xf]
        %v1225 = vld [vmem:[%s448 + $0x1474] sm:$0xff]
        %v1226 = vld [vmem:[%s448 + $0x147c] sm:$0xff]
        %v1227 = vld [vmem:[%s448 + $0x1484] sm:$0xff]
        %v1228 = vld [vmem:[%s448 + $0x148c] sm:$0xff]
        %v1229 = vld [vmem:[%s448 + $0x1494] sm:$0xff]
        %v1230 = vld [vmem:[%s448 + $0x149c] sm:$0xf]
        %v1231 = vld [vmem:[%s448 + $0x14a0] sm:$0xff]
        %v1232 = vld [vmem:[%s448 + $0x14a8] sm:$0xff]
        %v1233 = vld [vmem:[%s448 + $0x14b0] sm:$0xff]
        %v1234 = vld [vmem:[%s448 + $0x14b8] sm:$0xff]
        %v1235 = vld [vmem:[%s448 + $0x14c0] sm:$0xff]
        %v1236 = vld [vmem:[%s448 + $0x14c8] sm:$0xf]
        %v1237 = vld [vmem:[%s448 + $0x14cc] sm:$0xff]
        %v1238 = vld [vmem:[%s448 + $0x14d4] sm:$0xff]
        %v1239 = vld [vmem:[%s448 + $0x14dc] sm:$0xff]
        %v1240 = vld [vmem:[%s448 + $0x14e4] sm:$0xff]
        %v1241 = vld [vmem:[%s448 + $0x14ec] sm:$0xff]
        %v1242 = vld [vmem:[%s448 + $0x14f4] sm:$0xf]
        %v1243 = vld [vmem:[%s448 + $0x14f8] sm:$0xff]
        %v1244 = vld [vmem:[%s448 + $0x1500] sm:$0xff]
        %v1245 = vld [vmem:[%s448 + $0x1508] sm:$0xff]
        %v1246 = vld [vmem:[%s448 + $0x1510] sm:$0xff]
        %v1247 = vld [vmem:[%s448 + $0x1518] sm:$0xff]
        %v1248 = vld [vmem:[%s448 + $0x1520] sm:$0xf]
        %v1249 = vld [vmem:[%s448 + $0x1524] sm:$0xff]
        %v1250 = vld [vmem:[%s448 + $0x152c] sm:$0xff]
        %v1251 = vld [vmem:[%s448 + $0x1534] sm:$0xff]
        %v1252 = vld [vmem:[%s448 + $0x153c] sm:$0xff]
        %v1253 = vld [vmem:[%s448 + $0x1544] sm:$0xff]
        %v1254 = vld [vmem:[%s448 + $0x154c] sm:$0xf]
        %v1255 = vld [vmem:[%s448 + $0x1550] sm:$0xff]
        %v1256 = vld [vmem:[%s448 + $0x1558] sm:$0xff]
        %v1257 = vld [vmem:[%s448 + $0x1560] sm:$0xff]
        %v1258 = vld [vmem:[%s448 + $0x1568] sm:$0xff]
        %v1259 = vld [vmem:[%s448 + $0x1570] sm:$0xff]
        %v1260 = vld [vmem:[%s448 + $0x1578] sm:$0xf]
        %v1261 = vld [vmem:[%s448 + $0x157c] sm:$0xff]
        %v1262 = vld [vmem:[%s448 + $0x1584] sm:$0xff]
        %v1263 = vld [vmem:[%s448 + $0x158c] sm:$0xff]
        %v1264 = vld [vmem:[%s448 + $0x1594] sm:$0xff]
        %v1265 = vld [vmem:[%s448 + $0x159c] sm:$0xff]
        %v1266 = vld [vmem:[%s448 + $0x15a4] sm:$0xf]
        %v1267 = vld [vmem:[%s448 + $0x15a8] sm:$0xff]
        %v1268 = vld [vmem:[%s448 + $0x15b0] sm:$0xff]
        %v1269 = vld [vmem:[%s448 + $0x15b8] sm:$0xff]
        %v1270 = vld [vmem:[%s448 + $0x15c0] sm:$0xff]
        %v1271 = vld [vmem:[%s448 + $0x15c8] sm:$0xff]
        %v1272 = vld [vmem:[%s448 + $0x15d0] sm:$0xf]
        %v1273 = vld [vmem:[%s448 + $0x15d4] sm:$0xff]
        %v1274 = vld [vmem:[%s448 + $0x15dc] sm:$0xff]
        %v1275 = vld [vmem:[%s448 + $0x15e4] sm:$0xff]
        %v1276 = vld [vmem:[%s448 + $0x15ec] sm:$0xff]
        %v1277 = vld [vmem:[%s448 + $0x15f4] sm:$0xff]
        %v1278 = vld [vmem:[%s448 + $0x15fc] sm:$0xf]
        %v1279 = vld [vmem:[%s448 + $0x1600] sm:$0xff]
        %v1280 = vld [vmem:[%s448 + $0x1608] sm:$0xff]
        %v1281 = vld [vmem:[%s448 + $0x1610] sm:$0xff]
        %v1282 = vld [vmem:[%s448 + $0x1618] sm:$0xff]
        %v1283 = vld [vmem:[%s448 + $0x1620] sm:$0xff]
        %v1284 = vld [vmem:[%s448 + $0x1628] sm:$0xf]
        %v1285 = vld [vmem:[%s448 + $0x162c] sm:$0xff]
        %v1286 = vld [vmem:[%s448 + $0x1634] sm:$0xff]
        %v1287 = vld [vmem:[%s448 + $0x163c] sm:$0xff]
        %v1288 = vld [vmem:[%s448 + $0x1644] sm:$0xff]
        %v1289 = vld [vmem:[%s448 + $0x164c] sm:$0xff]
        %v1290 = vld [vmem:[%s448 + $0x1654] sm:$0xf]
        %v1291 = vld [vmem:[%s448 + $0x1658] sm:$0xff]
        %v1292 = vld [vmem:[%s448 + $0x1660] sm:$0xff]
        %v1293 = vld [vmem:[%s448 + $0x1668] sm:$0xff]
        %v1294 = vld [vmem:[%s448 + $0x1670] sm:$0xff]
        %v1295 = vld [vmem:[%s448 + $0x1678] sm:$0xff]
        %v1296 = vld [vmem:[%s448 + $0x1680] sm:$0xf]
        %v1297 = vld [vmem:[%s448 + $0x1684] sm:$0xff]
        %v1298 = vld [vmem:[%s448 + $0x168c] sm:$0xff]
        %v1299 = vld [vmem:[%s448 + $0x1694] sm:$0xff]
        %v1300 = vld [vmem:[%s448 + $0x169c] sm:$0xff]
        %v1301 = vld [vmem:[%s448 + $0x16a4] sm:$0xff]
        %v1302 = vld [vmem:[%s448 + $0x16ac] sm:$0xf]
        %v1303 = vld [vmem:[%s448 + $0x16b0] sm:$0xff]
        %v1304 = vld [vmem:[%s448 + $0x16b8] sm:$0xff]
        %v1305 = vld [vmem:[%s448 + $0x16c0] sm:$0xff]
        %v1306 = vld [vmem:[%s448 + $0x16c8] sm:$0xff]
        %v1307 = vld [vmem:[%s448 + $0x16d0] sm:$0xff]
        %v1308 = vld [vmem:[%s448 + $0x16d8] sm:$0xf]
        %v1309 = vld [vmem:[%s448 + $0x16dc] sm:$0xff]
        %v1310 = vld [vmem:[%s448 + $0x16e4] sm:$0xff]
        %v1311 = vld [vmem:[%s448 + $0x16ec] sm:$0xff]
        %v1312 = vld [vmem:[%s448 + $0x16f4] sm:$0xff]
        %v1313 = vld [vmem:[%s448 + $0x16fc] sm:$0xff]
        %v1314 = vld [vmem:[%s448 + $0x1704] sm:$0xf]
        %v1315 = vld [vmem:[%s448 + $0x1708] sm:$0xff]
        %v1316 = vld [vmem:[%s448 + $0x1710] sm:$0xff]
        %v1317 = vld [vmem:[%s448 + $0x1718] sm:$0xff]
        %v1318 = vld [vmem:[%s448 + $0x1720] sm:$0xff]
        %v1319 = vld [vmem:[%s448 + $0x1728] sm:$0xff]
        %v1320 = vld [vmem:[%s448 + $0x1730] sm:$0xf]
        %v1321 = vld [vmem:[%s448 + $0x1734] sm:$0xff]
        %v1322 = vld [vmem:[%s448 + $0x173c] sm:$0xff]
        %v1323 = vld [vmem:[%s448 + $0x1744] sm:$0xff]
        %v1324 = vld [vmem:[%s448 + $0x174c] sm:$0xff]
        %v1325 = vld [vmem:[%s448 + $0x1754] sm:$0xff]
        %v1326 = vld [vmem:[%s448 + $0x175c] sm:$0xf]
        %v1327 = vld [vmem:[%s448 + $0x1760] sm:$0xff]
        %v1328 = vld [vmem:[%s448 + $0x1768] sm:$0xff]
        %v1329 = vld [vmem:[%s448 + $0x1770] sm:$0xff]
        %v1330 = vld [vmem:[%s448 + $0x1778] sm:$0xff]
        %v1331 = vld [vmem:[%s448 + $0x1780] sm:$0xff]
        %v1332 = vld [vmem:[%s448 + $0x1788] sm:$0xf]
        %v1333 = vld [vmem:[%s448 + $0x178c] sm:$0xff]
        %v1334 = vld [vmem:[%s448 + $0x1794] sm:$0xff]
        %v1335 = vld [vmem:[%s448 + $0x179c] sm:$0xff]
        %v1336 = vld [vmem:[%s448 + $0x17a4] sm:$0xff]
        %v1337 = vld [vmem:[%s448 + $0x17ac] sm:$0xff]
        %v1338 = vld [vmem:[%s448 + $0x17b4] sm:$0xf]
        %v1339 = vld [vmem:[%s448 + $0x17b8] sm:$0xff]
        %v1340 = vld [vmem:[%s448 + $0x17c0] sm:$0xff]
        %v1341 = vld [vmem:[%s448 + $0x17c8] sm:$0xff]
        %v1342 = vld [vmem:[%s448 + $0x17d0] sm:$0xff]
        %v1343 = vld [vmem:[%s448 + $0x17d8] sm:$0xff]
        %v1344 = vld [vmem:[%s448 + $0x17e0] sm:$0xf]
        %v1345 = vld [vmem:[%s448 + $0x17e4] sm:$0xff]
        %v1346 = vld [vmem:[%s448 + $0x17ec] sm:$0xff]
        %v1347 = vld [vmem:[%s448 + $0x17f4] sm:$0xff]
        %v1348 = vld [vmem:[%s448 + $0x17fc] sm:$0xff]
        %v1349 = vld [vmem:[%s448 + $0x1804] sm:$0xff]
        %v1350 = vld [vmem:[%s448 + $0x180c] sm:$0xf]
        %v1351 = vld [vmem:[%s448 + $0x1810] sm:$0xff]
        %v1352 = vld [vmem:[%s448 + $0x1818] sm:$0xff]
        %v1353 = vld [vmem:[%s448 + $0x1820] sm:$0xff]
        %v1354 = vld [vmem:[%s448 + $0x1828] sm:$0xff]
        %v1355 = vld [vmem:[%s448 + $0x1830] sm:$0xff]
        %v1356 = vld [vmem:[%s448 + $0x1838] sm:$0xf]
        %v1357 = vld [vmem:[%s448 + $0x183c] sm:$0xff]
        %v1358 = vld [vmem:[%s448 + $0x1844] sm:$0xff]
        %v1359 = vld [vmem:[%s448 + $0x184c] sm:$0xff]
        %v1360 = vld [vmem:[%s448 + $0x1854] sm:$0xff]
        %v1361 = vld [vmem:[%s448 + $0x185c] sm:$0xff]
        %v1362 = vld [vmem:[%s448 + $0x1864] sm:$0xf]
        %v1363 = vld [vmem:[%s448 + $0x1868] sm:$0xff]
        %v1364 = vld [vmem:[%s448 + $0x1870] sm:$0xff]
        %v1365 = vld [vmem:[%s448 + $0x1878] sm:$0xff]
        %v1366 = vld [vmem:[%s448 + $0x1880] sm:$0xff]
        %v1367 = vld [vmem:[%s448 + $0x1888] sm:$0xff]
        %v1368 = vld [vmem:[%s448 + $0x1890] sm:$0xf]
        %v1369 = vld [vmem:[%s448 + $0x1894] sm:$0xff]
        %v1370 = vld [vmem:[%s448 + $0x189c] sm:$0xff]
        %v1371 = vld [vmem:[%s448 + $0x18a4] sm:$0xff]
        %v1372 = vld [vmem:[%s448 + $0x18ac] sm:$0xff]
        %v1373 = vld [vmem:[%s448 + $0x18b4] sm:$0xff]
        %v1374 = vld [vmem:[%s448 + $0x18bc] sm:$0xf]
        %v1375 = vld [vmem:[%s448 + $0x18c0] sm:$0xff]
        %v1376 = vld [vmem:[%s448 + $0x18c8] sm:$0xff]
        %v1377 = vld [vmem:[%s448 + $0x18d0] sm:$0xff]
        %v1378 = vld [vmem:[%s448 + $0x18d8] sm:$0xff]
        %v1379 = vld [vmem:[%s448 + $0x18e0] sm:$0xff]
        %v1380 = vld [vmem:[%s448 + $0x18e8] sm:$0xf]
        %v1381 = vld [vmem:[%s448 + $0x18ec] sm:$0xff]
        %v1382 = vld [vmem:[%s448 + $0x18f4] sm:$0xff]
        %v1383 = vld [vmem:[%s448 + $0x18fc] sm:$0xff]
        %v1384 = vld [vmem:[%s448 + $0x1904] sm:$0xff]
        %v1385 = vld [vmem:[%s448 + $0x190c] sm:$0xff]
        %v1386 = vld [vmem:[%s448 + $0x1914] sm:$0xf]
        %v1387 = vld [vmem:[%s448 + $0x1918] sm:$0xff]
        %v1388 = vld [vmem:[%s448 + $0x1920] sm:$0xff]
        %v1389 = vld [vmem:[%s448 + $0x1928] sm:$0xff]
        %v1390 = vld [vmem:[%s448 + $0x1930] sm:$0xff]
        %v1391 = vld [vmem:[%s448 + $0x1938] sm:$0xff]
        %v1392 = vld [vmem:[%s448 + $0x1940] sm:$0xf]
        %v1393 = vld [vmem:[%s448 + $0x1944] sm:$0xff]
        %v1394 = vld [vmem:[%s448 + $0x194c] sm:$0xff]
        %v1395 = vld [vmem:[%s448 + $0x1954] sm:$0xff]
        %v1396 = vld [vmem:[%s448 + $0x195c] sm:$0xff]
        %v1397 = vld [vmem:[%s448 + $0x1964] sm:$0xff]
        %v1398 = vld [vmem:[%s448 + $0x196c] sm:$0xf]
        %v1399 = vld [vmem:[%s448 + $0x1970] sm:$0xff]
        %v1400 = vld [vmem:[%s448 + $0x1978] sm:$0xff]
        %v1401 = vld [vmem:[%s448 + $0x1980] sm:$0xff]
        %v1402 = vld [vmem:[%s448 + $0x1988] sm:$0xff]
        %v1403 = vld [vmem:[%s448 + $0x1990] sm:$0xff]
        %v1404 = vld [vmem:[%s448 + $0x1998] sm:$0xf]
        %v1405 = vld [vmem:[%s448 + $0x199c] sm:$0xff]
        %v1406 = vld [vmem:[%s448 + $0x19a4] sm:$0xff]
        %v1407 = vld [vmem:[%s448 + $0x19ac] sm:$0xff]
        %v1408 = vld [vmem:[%s448 + $0x19b4] sm:$0xff]
        %v1409 = vld [vmem:[%s448 + $0x19bc] sm:$0xff]
        %v1410 = vld [vmem:[%s448 + $0x19c4] sm:$0xf]
        %v1411 = vld [vmem:[%s448 + $0x19c8] sm:$0xff]
        %v1412 = vld [vmem:[%s448 + $0x19d0] sm:$0xff]
        %v1413 = vld [vmem:[%s448 + $0x19d8] sm:$0xff]
        %v1414 = vld [vmem:[%s448 + $0x19e0] sm:$0xff]
        %v1415 = vld [vmem:[%s448 + $0x19e8] sm:$0xff]
        %v1416 = vld [vmem:[%s448 + $0x19f0] sm:$0xf]
        %v1417 = vld [vmem:[%s448 + $0x19f4] sm:$0xff]
        %v1418 = vld [vmem:[%s448 + $0x19fc] sm:$0xff]
        %v1419 = vld [vmem:[%s448 + $0x1a04] sm:$0xff]
        %v1420 = vld [vmem:[%s448 + $0x1a0c] sm:$0xff]
        %v1421 = vld [vmem:[%s448 + $0x1a14] sm:$0xff]
        %v1422 = vld [vmem:[%s448 + $0x1a1c] sm:$0xf]
        %v1423 = vld [vmem:[%s448 + $0x1a20] sm:$0xff]
        %v1424 = vld [vmem:[%s448 + $0x1a28] sm:$0xff]
        %v1425 = vld [vmem:[%s448 + $0x1a30] sm:$0xff]
        %v1426 = vld [vmem:[%s448 + $0x1a38] sm:$0xff]
        %v1427 = vld [vmem:[%s448 + $0x1a40] sm:$0xff]
        %v1428 = vld [vmem:[%s448 + $0x1a48] sm:$0xf]
        %v1429 = vld [vmem:[%s448 + $0x1a4c] sm:$0xff]
        %v1430 = vld [vmem:[%s448 + $0x1a54] sm:$0xff]
        %v1431 = vld [vmem:[%s448 + $0x1a5c] sm:$0xff]
        %v1432 = vld [vmem:[%s448 + $0x1a64] sm:$0xff]
        %v1433 = vld [vmem:[%s448 + $0x1a6c] sm:$0xff]
        %v1434 = vld [vmem:[%s448 + $0x1a74] sm:$0xf]
        %v1435 = vld [vmem:[%s448 + $0x1a78] sm:$0xff]
        %v1436 = vld [vmem:[%s448 + $0x1a80] sm:$0xff]
        %v1437 = vld [vmem:[%s448 + $0x1a88] sm:$0xff]
        %v1438 = vld [vmem:[%s448 + $0x1a90] sm:$0xff]
        %v1439 = vld [vmem:[%s448 + $0x1a98] sm:$0xff]
        %v1440 = vld [vmem:[%s448 + $0x1aa0] sm:$0xf]
        %v1441 = vld [vmem:[%s448 + $0x1aa4] sm:$0xff]
        %v1442 = vld [vmem:[%s448 + $0x1aac] sm:$0xff]
        %v1443 = vld [vmem:[%s448 + $0x1ab4] sm:$0xff]
        %v1444 = vld [vmem:[%s448 + $0x1abc] sm:$0xff]
        %v1445 = vld [vmem:[%s448 + $0x1ac4] sm:$0xff]
        %v1446 = vld [vmem:[%s448 + $0x1acc] sm:$0xf]
        %v1447 = vld [vmem:[%s448 + $0x1ad0] sm:$0xff]
        %v1448 = vld [vmem:[%s448 + $0x1ad8] sm:$0xff]
        %v1449 = vld [vmem:[%s448 + $0x1ae0] sm:$0xff]
        %v1450 = vld [vmem:[%s448 + $0x1ae8] sm:$0xff]
        %v1451 = vld [vmem:[%s448 + $0x1af0] sm:$0xff]
        %v1452 = vld [vmem:[%s448 + $0x1af8] sm:$0xf]
        %v1453 = vld [vmem:[%s448 + $0x1afc] sm:$0xff]
        %v1454 = vld [vmem:[%s448 + $0x1b04] sm:$0xff]
        %v1455 = vld [vmem:[%s448 + $0x1b0c] sm:$0xff]
        %v1456 = vld [vmem:[%s448 + $0x1b14] sm:$0xff]
        %v1457 = vld [vmem:[%s448 + $0x1b1c] sm:$0xff]
        %v1458 = vld [vmem:[%s448 + $0x1b24] sm:$0xf]
        %v1459 = vld [vmem:[%s448 + $0x1b28] sm:$0xff]
        %v1460 = vld [vmem:[%s448 + $0x1b30] sm:$0xff]
        %v1461 = vld [vmem:[%s448 + $0x1b38] sm:$0xff]
        %v1462 = vld [vmem:[%s448 + $0x1b40] sm:$0xff]
        %v1463 = vld [vmem:[%s448 + $0x1b48] sm:$0xff]
        %v1464 = vld [vmem:[%s448 + $0x1b50] sm:$0xf]
        %v1465 = vld [vmem:[%s448 + $0x1b54] sm:$0xff]
        %v1466 = vld [vmem:[%s448 + $0x1b5c] sm:$0xff]
        %v1467 = vld [vmem:[%s448 + $0x1b64] sm:$0xff]
        %v1468 = vld [vmem:[%s448 + $0x1b6c] sm:$0xff]
        %v1469 = vld [vmem:[%s448 + $0x1b74] sm:$0xff]
        %v1470 = vld [vmem:[%s448 + $0x1b7c] sm:$0xf]
        %v1519 = vunpack.c.l.b16 %v463
        %v1520 = vunpack.c.h.b16 %v463
        %v1521 = vunpack.c.l.b16 %v464
        %v1522 = vunpack.c.h.b16 %v464
        %v1523 = vunpack.c.l.b16 %v465
        %v1524 = vunpack.c.h.b16 %v465
        %v1525 = vunpack.c.l.b16 %v466
        %v1526 = vunpack.c.h.b16 %v466
        %v1527 = vunpack.c.l.b16 %v467
        %v1528 = vunpack.c.h.b16 %v467
        %v1529 = vunpack.c.l.b16 %v468
        %v1530 = vunpack.c.l.b16 %v469
        %v1531 = vunpack.c.h.b16 %v469
        %v1532 = vunpack.c.l.b16 %v470
        %v1533 = vunpack.c.h.b16 %v470
        %v1534 = vunpack.c.l.b16 %v471
        %v1535 = vunpack.c.h.b16 %v471
        %v1536 = vunpack.c.l.b16 %v472
        %v1537 = vunpack.c.h.b16 %v472
        %v1538 = vunpack.c.l.b16 %v473
        %v1539 = vunpack.c.h.b16 %v473
        %v1540 = vunpack.c.l.b16 %v474
        %v1541 = vunpack.c.l.b16 %v475
        %v1542 = vunpack.c.h.b16 %v475
        %v1543 = vunpack.c.l.b16 %v476
        %v1544 = vunpack.c.h.b16 %v476
        %v1545 = vunpack.c.l.b16 %v477
        %v1546 = vunpack.c.h.b16 %v477
        %v1547 = vunpack.c.l.b16 %v478
        %v1548 = vunpack.c.h.b16 %v478
        %v1549 = vunpack.c.l.b16 %v479
        %v1550 = vunpack.c.h.b16 %v479
        %v1551 = vunpack.c.l.b16 %v480
        %v1552 = vunpack.c.l.b16 %v481
        %v1553 = vunpack.c.h.b16 %v481
        %v1554 = vunpack.c.l.b16 %v482
        %v1555 = vunpack.c.h.b16 %v482
        %v1556 = vunpack.c.l.b16 %v483
        %v1557 = vunpack.c.h.b16 %v483
        %v1558 = vunpack.c.l.b16 %v484
        %v1559 = vunpack.c.h.b16 %v484
        %v1560 = vunpack.c.l.b16 %v485
        %v1561 = vunpack.c.h.b16 %v485
        %v1562 = vunpack.c.l.b16 %v486
        %v1563 = vunpack.c.l.b16 %v487
        %v1564 = vunpack.c.h.b16 %v487
        %v1565 = vunpack.c.l.b16 %v488
        %v1566 = vunpack.c.h.b16 %v488
        %v1567 = vunpack.c.l.b16 %v489
        %v1568 = vunpack.c.h.b16 %v489
        %v1569 = vunpack.c.l.b16 %v490
        %v1570 = vunpack.c.h.b16 %v490
        %v1571 = vunpack.c.l.b16 %v491
        %v1572 = vunpack.c.h.b16 %v491
        %v1573 = vunpack.c.l.b16 %v492
        %v1574 = vunpack.c.l.b16 %v493
        %v1575 = vunpack.c.h.b16 %v493
        %v1576 = vunpack.c.l.b16 %v494
        %v1577 = vunpack.c.h.b16 %v494
        %v1578 = vunpack.c.l.b16 %v495
        %v1579 = vunpack.c.h.b16 %v495
        %v1580 = vunpack.c.l.b16 %v496
        %v1581 = vunpack.c.h.b16 %v496
        %v1582 = vunpack.c.l.b16 %v497
        %v1583 = vunpack.c.h.b16 %v497
        %v1584 = vunpack.c.l.b16 %v498
        %v1585 = vunpack.c.l.b16 %v499
        %v1586 = vunpack.c.h.b16 %v499
        %v1587 = vunpack.c.l.b16 %v500
        %v1588 = vunpack.c.h.b16 %v500
        %v1589 = vunpack.c.l.b16 %v501
        %v1590 = vunpack.c.h.b16 %v501
        %v1591 = vunpack.c.l.b16 %v502
        %v1592 = vunpack.c.h.b16 %v502
        %v1593 = vunpack.c.l.b16 %v503
        %v1594 = vunpack.c.h.b16 %v503
        %v1595 = vunpack.c.l.b16 %v504
        %v1596 = vunpack.c.l.b16 %v505
        %v1597 = vunpack.c.h.b16 %v505
        %v1598 = vunpack.c.l.b16 %v506
        %v1599 = vunpack.c.h.b16 %v506
        %v1600 = vunpack.c.l.b16 %v507
        %v1601 = vunpack.c.h.b16 %v507
        %v1602 = vunpack.c.l.b16 %v508
        %v1603 = vunpack.c.h.b16 %v508
        %v1604 = vunpack.c.l.b16 %v509
        %v1605 = vunpack.c.h.b16 %v509
        %v1606 = vunpack.c.l.b16 %v510
        %v1607 = vpack.c.b16 %v1530, %v1519
        %v1608 = vpack.c.b16 %v1531, %v1520
        %v1609 = vpack.c.b16 %v1532, %v1521
        %v1610 = vpack.c.b16 %v1533, %v1522
        %v1611 = vpack.c.b16 %v1534, %v1523
        %v1612 = vpack.c.b16 %v1535, %v1524
        %v1613 = vpack.c.b16 %v1536, %v1525
        %v1614 = vpack.c.b16 %v1537, %v1526
        %v1615 = vpack.c.b16 %v1538, %v1527
        %v1616 = vpack.c.b16 %v1539, %v1528
        %v1617 = vpack.c.b16 %v1540, %v1529
        %v1618 = vpack.c.b16 %v1552, %v1541
        %v1619 = vpack.c.b16 %v1553, %v1542
        %v1620 = vpack.c.b16 %v1554, %v1543
        %v1621 = vpack.c.b16 %v1555, %v1544
        %v1622 = vpack.c.b16 %v1556, %v1545
        %v1623 = vpack.c.b16 %v1557, %v1546
        %v1624 = vpack.c.b16 %v1558, %v1547
        %v1625 = vpack.c.b16 %v1559, %v1548
        %v1626 = vpack.c.b16 %v1560, %v1549
        %v1627 = vpack.c.b16 %v1561, %v1550
        %v1628 = vpack.c.b16 %v1562, %v1551
        %v1629 = vpack.c.b16 %v1574, %v1563
        %v1630 = vpack.c.b16 %v1575, %v1564
        %v1631 = vpack.c.b16 %v1576, %v1565
        %v1632 = vpack.c.b16 %v1577, %v1566
        %v1633 = vpack.c.b16 %v1578, %v1567
        %v1634 = vpack.c.b16 %v1579, %v1568
        %v1635 = vpack.c.b16 %v1580, %v1569
        %v1636 = vpack.c.b16 %v1581, %v1570
        %v1637 = vpack.c.b16 %v1582, %v1571
        %v1638 = vpack.c.b16 %v1583, %v1572
        %v1639 = vpack.c.b16 %v1584, %v1573
        %v1640 = vpack.c.b16 %v1596, %v1585
        %v1641 = vpack.c.b16 %v1597, %v1586
        %v1642 = vpack.c.b16 %v1598, %v1587
        %v1643 = vpack.c.b16 %v1599, %v1588
        %v1644 = vpack.c.b16 %v1600, %v1589
        %v1645 = vpack.c.b16 %v1601, %v1590
        %v1646 = vpack.c.b16 %v1602, %v1591
        %v1647 = vpack.c.b16 %v1603, %v1592
        %v1648 = vpack.c.b16 %v1604, %v1593
        %v1649 = vpack.c.b16 %v1605, %v1594
        %v1650 = vpack.c.b16 %v1606, %v1595
        %v2651 = vunpack.c.l.b16 %v511
        %v2652 = vunpack.c.h.b16 %v511
        %v2653 = vunpack.c.l.b16 %v512
        %v2654 = vunpack.c.h.b16 %v512
        %v2655 = vunpack.c.l.b16 %v513
        %v2656 = vunpack.c.h.b16 %v513
        %v2657 = vunpack.c.l.b16 %v514
        %v2658 = vunpack.c.h.b16 %v514
        %v2659 = vunpack.c.l.b16 %v515
        %v2660 = vunpack.c.h.b16 %v515
        %v2661 = vunpack.c.l.b16 %v516
        %v2662 = vunpack.c.l.b16 %v517
        %v2663 = vunpack.c.h.b16 %v517
        %v2664 = vunpack.c.l.b16 %v518
        %v2665 = vunpack.c.h.b16 %v518
        %v2666 = vunpack.c.l.b16 %v519
        %v2667 = vunpack.c.h.b16 %v519
        %v2668 = vunpack.c.l.b16 %v520
        %v2669 = vunpack.c.h.b16 %v520
        %v2670 = vunpack.c.l.b16 %v521
        %v2671 = vunpack.c.h.b16 %v521
        %v2672 = vunpack.c.l.b16 %v522
        %v2673 = vunpack.c.l.b16 %v523
        %v2674 = vunpack.c.h.b16 %v523
        %v2675 = vunpack.c.l.b16 %v524
        %v2676 = vunpack.c.h.b16 %v524
        %v2677 = vunpack.c.l.b16 %v525
        %v2678 = vunpack.c.h.b16 %v525
        %v2679 = vunpack.c.l.b16 %v526
        %v2680 = vunpack.c.h.b16 %v526
        %v2681 = vunpack.c.l.b16 %v527
        %v2682 = vunpack.c.h.b16 %v527
        %v2683 = vunpack.c.l.b16 %v528
        %v2684 = vunpack.c.l.b16 %v529
        %v2685 = vunpack.c.h.b16 %v529
        %v2686 = vunpack.c.l.b16 %v530
        %v2687 = vunpack.c.h.b16 %v530
        %v2688 = vunpack.c.l.b16 %v531
        %v2689 = vunpack.c.h.b16 %v531
        %v2690 = vunpack.c.l.b16 %v532
        %v2691 = vunpack.c.h.b16 %v532
        %v2692 = vunpack.c.l.b16 %v533
        %v2693 = vunpack.c.h.b16 %v533
        %v2694 = vunpack.c.l.b16 %v534
        %v2695 = vunpack.c.l.b16 %v535
        %v2696 = vunpack.c.h.b16 %v535
        %v2697 = vunpack.c.l.b16 %v536
        %v2698 = vunpack.c.h.b16 %v536
        %v2699 = vunpack.c.l.b16 %v537
        %v2700 = vunpack.c.h.b16 %v537
        %v2701 = vunpack.c.l.b16 %v538
        %v2702 = vunpack.c.h.b16 %v538
        %v2703 = vunpack.c.l.b16 %v539
        %v2704 = vunpack.c.h.b16 %v539
        %v2705 = vunpack.c.l.b16 %v540
        %v2706 = vunpack.c.l.b16 %v541
        %v2707 = vunpack.c.h.b16 %v541
        %v2708 = vunpack.c.l.b16 %v542
        %v2709 = vunpack.c.h.b16 %v542
        %v2710 = vunpack.c.l.b16 %v543
        %v2711 = vunpack.c.h.b16 %v543
        %v2712 = vunpack.c.l.b16 %v544
        %v2713 = vunpack.c.h.b16 %v544
        %v2714 = vunpack.c.l.b16 %v545
        %v2715 = vunpack.c.h.b16 %v545
        %v2716 = vunpack.c.l.b16 %v546
        %v2717 = vunpack.c.l.b16 %v547
        %v2718 = vunpack.c.h.b16 %v547
        %v2719 = vunpack.c.l.b16 %v548
        %v2720 = vunpack.c.h.b16 %v548
        %v2721 = vunpack.c.l.b16 %v549
        %v2722 = vunpack.c.h.b16 %v549
        %v2723 = vunpack.c.l.b16 %v550
        %v2724 = vunpack.c.h.b16 %v550
        %v2725 = vunpack.c.l.b16 %v551
        %v2726 = vunpack.c.h.b16 %v551
        %v2727 = vunpack.c.l.b16 %v552
        %v2728 = vunpack.c.l.b16 %v553
        %v2729 = vunpack.c.h.b16 %v553
        %v2730 = vunpack.c.l.b16 %v554
        %v2731 = vunpack.c.h.b16 %v554
        %v2732 = vunpack.c.l.b16 %v555
        %v2733 = vunpack.c.h.b16 %v555
        %v2734 = vunpack.c.l.b16 %v556
        %v2735 = vunpack.c.h.b16 %v556
        %v2736 = vunpack.c.l.b16 %v557
        %v2737 = vunpack.c.h.b16 %v557
        %v2738 = vunpack.c.l.b16 %v558
        %v2739 = vunpack.c.l.b16 %v559
        %v2740 = vunpack.c.h.b16 %v559
        %v2741 = vunpack.c.l.b16 %v560
        %v2742 = vunpack.c.h.b16 %v560
        %v2743 = vunpack.c.l.b16 %v561
        %v2744 = vunpack.c.h.b16 %v561
        %v2745 = vunpack.c.l.b16 %v562
        %v2746 = vunpack.c.h.b16 %v562
        %v2747 = vunpack.c.l.b16 %v563
        %v2748 = vunpack.c.h.b16 %v563
        %v2749 = vunpack.c.l.b16 %v564
        %v2750 = vunpack.c.l.b16 %v565
        %v2751 = vunpack.c.h.b16 %v565
        %v2752 = vunpack.c.l.b16 %v566
        %v2753 = vunpack.c.h.b16 %v566
        %v2754 = vunpack.c.l.b16 %v567
        %v2755 = vunpack.c.h.b16 %v567
        %v2756 = vunpack.c.l.b16 %v568
        %v2757 = vunpack.c.h.b16 %v568
        %v2758 = vunpack.c.l.b16 %v569
        %v2759 = vunpack.c.h.b16 %v569
        %v2760 = vunpack.c.l.b16 %v570
        %v2761 = vunpack.c.l.b16 %v571
        %v2762 = vunpack.c.h.b16 %v571
        %v2763 = vunpack.c.l.b16 %v572
        %v2764 = vunpack.c.h.b16 %v572
        %v2765 = vunpack.c.l.b16 %v573
        %v2766 = vunpack.c.h.b16 %v573
        %v2767 = vunpack.c.l.b16 %v574
        %v2768 = vunpack.c.h.b16 %v574
        %v2769 = vunpack.c.l.b16 %v575
        %v2770 = vunpack.c.h.b16 %v575
        %v2771 = vunpack.c.l.b16 %v576
        %v2772 = vunpack.c.l.b16 %v577
        %v2773 = vunpack.c.h.b16 %v577
        %v2774 = vunpack.c.l.b16 %v578
        %v2775 = vunpack.c.h.b16 %v578
        %v2776 = vunpack.c.l.b16 %v579
        %v2777 = vunpack.c.h.b16 %v579
        %v2778 = vunpack.c.l.b16 %v580
        %v2779 = vunpack.c.h.b16 %v580
        %v2780 = vunpack.c.l.b16 %v581
        %v2781 = vunpack.c.h.b16 %v581
        %v2782 = vunpack.c.l.b16 %v582
        %v2783 = vunpack.c.l.b16 %v583
        %v2784 = vunpack.c.h.b16 %v583
        %v2785 = vunpack.c.l.b16 %v584
        %v2786 = vunpack.c.h.b16 %v584
        %v2787 = vunpack.c.l.b16 %v585
        %v2788 = vunpack.c.h.b16 %v585
        %v2789 = vunpack.c.l.b16 %v586
        %v2790 = vunpack.c.h.b16 %v586
        %v2791 = vunpack.c.l.b16 %v587
        %v2792 = vunpack.c.h.b16 %v587
        %v2793 = vunpack.c.l.b16 %v588
        %v2794 = vunpack.c.l.b16 %v589
        %v2795 = vunpack.c.h.b16 %v589
        %v2796 = vunpack.c.l.b16 %v590
        %v2797 = vunpack.c.h.b16 %v590
        %v2798 = vunpack.c.l.b16 %v591
        %v2799 = vunpack.c.h.b16 %v591
        %v2800 = vunpack.c.l.b16 %v592
        %v2801 = vunpack.c.h.b16 %v592
        %v2802 = vunpack.c.l.b16 %v593
        %v2803 = vunpack.c.h.b16 %v593
        %v2804 = vunpack.c.l.b16 %v594
        %v2805 = vunpack.c.l.b16 %v595
        %v2806 = vunpack.c.h.b16 %v595
        %v2807 = vunpack.c.l.b16 %v596
        %v2808 = vunpack.c.h.b16 %v596
        %v2809 = vunpack.c.l.b16 %v597
        %v2810 = vunpack.c.h.b16 %v597
        %v2811 = vunpack.c.l.b16 %v598
        %v2812 = vunpack.c.h.b16 %v598
        %v2813 = vunpack.c.l.b16 %v599
        %v2814 = vunpack.c.h.b16 %v599
        %v2815 = vunpack.c.l.b16 %v600
        %v2816 = vunpack.c.l.b16 %v601
        %v2817 = vunpack.c.h.b16 %v601
        %v2818 = vunpack.c.l.b16 %v602
        %v2819 = vunpack.c.h.b16 %v602
        %v2820 = vunpack.c.l.b16 %v603
        %v2821 = vunpack.c.h.b16 %v603
        %v2822 = vunpack.c.l.b16 %v604
        %v2823 = vunpack.c.h.b16 %v604
        %v2824 = vunpack.c.l.b16 %v605
        %v2825 = vunpack.c.h.b16 %v605
        %v2826 = vunpack.c.l.b16 %v606
        %v2827 = vunpack.c.l.b16 %v607
        %v2828 = vunpack.c.h.b16 %v607
        %v2829 = vunpack.c.l.b16 %v608
        %v2830 = vunpack.c.h.b16 %v608
        %v2831 = vunpack.c.l.b16 %v609
        %v2832 = vunpack.c.h.b16 %v609
        %v2833 = vunpack.c.l.b16 %v610
        %v2834 = vunpack.c.h.b16 %v610
        %v2835 = vunpack.c.l.b16 %v611
        %v2836 = vunpack.c.h.b16 %v611
        %v2837 = vunpack.c.l.b16 %v612
        %v2838 = vunpack.c.l.b16 %v613
        %v2839 = vunpack.c.h.b16 %v613
        %v2840 = vunpack.c.l.b16 %v614
        %v2841 = vunpack.c.h.b16 %v614
        %v2842 = vunpack.c.l.b16 %v615
        %v2843 = vunpack.c.h.b16 %v615
        %v2844 = vunpack.c.l.b16 %v616
        %v2845 = vunpack.c.h.b16 %v616
        %v2846 = vunpack.c.l.b16 %v617
        %v2847 = vunpack.c.h.b16 %v617
        %v2848 = vunpack.c.l.b16 %v618
        %v2849 = vunpack.c.l.b16 %v619
        %v2850 = vunpack.c.h.b16 %v619
        %v2851 = vunpack.c.l.b16 %v620
        %v2852 = vunpack.c.h.b16 %v620
        %v2853 = vunpack.c.l.b16 %v621
        %v2854 = vunpack.c.h.b16 %v621
        %v2855 = vunpack.c.l.b16 %v622
        %v2856 = vunpack.c.h.b16 %v622
        %v2857 = vunpack.c.l.b16 %v623
        %v2858 = vunpack.c.h.b16 %v623
        %v2859 = vunpack.c.l.b16 %v624
        %v2860 = vunpack.c.l.b16 %v625
        %v2861 = vunpack.c.h.b16 %v625
        %v2862 = vunpack.c.l.b16 %v626
        %v2863 = vunpack.c.h.b16 %v626
        %v2864 = vunpack.c.l.b16 %v627
        %v2865 = vunpack.c.h.b16 %v627
        %v2866 = vunpack.c.l.b16 %v628
        %v2867 = vunpack.c.h.b16 %v628
        %v2868 = vunpack.c.l.b16 %v629
        %v2869 = vunpack.c.h.b16 %v629
        %v2870 = vunpack.c.l.b16 %v630
        %v2871 = vunpack.c.l.b16 %v631
        %v2872 = vunpack.c.h.b16 %v631
        %v2873 = vunpack.c.l.b16 %v632
        %v2874 = vunpack.c.h.b16 %v632
        %v2875 = vunpack.c.l.b16 %v633
        %v2876 = vunpack.c.h.b16 %v633
        %v2877 = vunpack.c.l.b16 %v634
        %v2878 = vunpack.c.h.b16 %v634
        %v2879 = vunpack.c.l.b16 %v635
        %v2880 = vunpack.c.h.b16 %v635
        %v2881 = vunpack.c.l.b16 %v636
        %v2882 = vunpack.c.l.b16 %v637
        %v2883 = vunpack.c.h.b16 %v637
        %v2884 = vunpack.c.l.b16 %v638
        %v2885 = vunpack.c.h.b16 %v638
        %v2886 = vunpack.c.l.b16 %v639
        %v2887 = vunpack.c.h.b16 %v639
        %v2888 = vunpack.c.l.b16 %v640
        %v2889 = vunpack.c.h.b16 %v640
        %v2890 = vunpack.c.l.b16 %v641
        %v2891 = vunpack.c.h.b16 %v641
        %v2892 = vunpack.c.l.b16 %v642
        %v2893 = vunpack.c.l.b16 %v643
        %v2894 = vunpack.c.h.b16 %v643
        %v2895 = vunpack.c.l.b16 %v644
        %v2896 = vunpack.c.h.b16 %v644
        %v2897 = vunpack.c.l.b16 %v645
        %v2898 = vunpack.c.h.b16 %v645
        %v2899 = vunpack.c.l.b16 %v646
        %v2900 = vunpack.c.h.b16 %v646
        %v2901 = vunpack.c.l.b16 %v647
        %v2902 = vunpack.c.h.b16 %v647
        %v2903 = vunpack.c.l.b16 %v648
        %v2904 = vunpack.c.l.b16 %v649
        %v2905 = vunpack.c.h.b16 %v649
        %v2906 = vunpack.c.l.b16 %v650
        %v2907 = vunpack.c.h.b16 %v650
        %v2908 = vunpack.c.l.b16 %v651
        %v2909 = vunpack.c.h.b16 %v651
        %v2910 = vunpack.c.l.b16 %v652
        %v2911 = vunpack.c.h.b16 %v652
        %v2912 = vunpack.c.l.b16 %v653
        %v2913 = vunpack.c.h.b16 %v653
        %v2914 = vunpack.c.l.b16 %v654
        %v2915 = vunpack.c.l.b16 %v655
        %v2916 = vunpack.c.h.b16 %v655
        %v2917 = vunpack.c.l.b16 %v656
        %v2918 = vunpack.c.h.b16 %v656
        %v2919 = vunpack.c.l.b16 %v657
        %v2920 = vunpack.c.h.b16 %v657
        %v2921 = vunpack.c.l.b16 %v658
        %v2922 = vunpack.c.h.b16 %v658
        %v2923 = vunpack.c.l.b16 %v659
        %v2924 = vunpack.c.h.b16 %v659
        %v2925 = vunpack.c.l.b16 %v660
        %v2926 = vunpack.c.l.b16 %v661
        %v2927 = vunpack.c.h.b16 %v661
        %v2928 = vunpack.c.l.b16 %v662
        %v2929 = vunpack.c.h.b16 %v662
        %v2930 = vunpack.c.l.b16 %v663
        %v2931 = vunpack.c.h.b16 %v663
        %v2932 = vunpack.c.l.b16 %v664
        %v2933 = vunpack.c.h.b16 %v664
        %v2934 = vunpack.c.l.b16 %v665
        %v2935 = vunpack.c.h.b16 %v665
        %v2936 = vunpack.c.l.b16 %v666
        %v2937 = vunpack.c.l.b16 %v667
        %v2938 = vunpack.c.h.b16 %v667
        %v2939 = vunpack.c.l.b16 %v668
        %v2940 = vunpack.c.h.b16 %v668
        %v2941 = vunpack.c.l.b16 %v669
        %v2942 = vunpack.c.h.b16 %v669
        %v2943 = vunpack.c.l.b16 %v670
        %v2944 = vunpack.c.h.b16 %v670
        %v2945 = vunpack.c.l.b16 %v671
        %v2946 = vunpack.c.h.b16 %v671
        %v2947 = vunpack.c.l.b16 %v672
        %v2948 = vunpack.c.l.b16 %v673
        %v2949 = vunpack.c.h.b16 %v673
        %v2950 = vunpack.c.l.b16 %v674
        %v2951 = vunpack.c.h.b16 %v674
        %v2952 = vunpack.c.l.b16 %v675
        %v2953 = vunpack.c.h.b16 %v675
        %v2954 = vunpack.c.l.b16 %v676
        %v2955 = vunpack.c.h.b16 %v676
        %v2956 = vunpack.c.l.b16 %v677
        %v2957 = vunpack.c.h.b16 %v677
        %v2958 = vunpack.c.l.b16 %v678
        %v2959 = vunpack.c.l.b16 %v679
        %v2960 = vunpack.c.h.b16 %v679
        %v2961 = vunpack.c.l.b16 %v680
        %v2962 = vunpack.c.h.b16 %v680
        %v2963 = vunpack.c.l.b16 %v681
        %v2964 = vunpack.c.h.b16 %v681
        %v2965 = vunpack.c.l.b16 %v682
        %v2966 = vunpack.c.h.b16 %v682
        %v2967 = vunpack.c.l.b16 %v683
        %v2968 = vunpack.c.h.b16 %v683
        %v2969 = vunpack.c.l.b16 %v684
        %v2970 = vunpack.c.l.b16 %v685
        %v2971 = vunpack.c.h.b16 %v685
        %v2972 = vunpack.c.l.b16 %v686
        %v2973 = vunpack.c.h.b16 %v686
        %v2974 = vunpack.c.l.b16 %v687
        %v2975 = vunpack.c.h.b16 %v687
        %v2976 = vunpack.c.l.b16 %v688
        %v2977 = vunpack.c.h.b16 %v688
        %v2978 = vunpack.c.l.b16 %v689
        %v2979 = vunpack.c.h.b16 %v689
        %v2980 = vunpack.c.l.b16 %v690
        %v2981 = vunpack.c.l.b16 %v691
        %v2982 = vunpack.c.h.b16 %v691
        %v2983 = vunpack.c.l.b16 %v692
        %v2984 = vunpack.c.h.b16 %v692
        %v2985 = vunpack.c.l.b16 %v693
        %v2986 = vunpack.c.h.b16 %v693
        %v2987 = vunpack.c.l.b16 %v694
        %v2988 = vunpack.c.h.b16 %v694
        %v2989 = vunpack.c.l.b16 %v695
        %v2990 = vunpack.c.h.b16 %v695
        %v2991 = vunpack.c.l.b16 %v696
        %v2992 = vunpack.c.l.b16 %v697
        %v2993 = vunpack.c.h.b16 %v697
        %v2994 = vunpack.c.l.b16 %v698
        %v2995 = vunpack.c.h.b16 %v698
        %v2996 = vunpack.c.l.b16 %v699
        %v2997 = vunpack.c.h.b16 %v699
        %v2998 = vunpack.c.l.b16 %v700
        %v2999 = vunpack.c.h.b16 %v700
        %v3000 = vunpack.c.l.b16 %v701
        %v3001 = vunpack.c.h.b16 %v701
        %v3002 = vunpack.c.l.b16 %v702
        %v3003 = vunpack.c.l.b16 %v703
        %v3004 = vunpack.c.h.b16 %v703
        %v3005 = vunpack.c.l.b16 %v704
        %v3006 = vunpack.c.h.b16 %v704
        %v3007 = vunpack.c.l.b16 %v705
        %v3008 = vunpack.c.h.b16 %v705
        %v3009 = vunpack.c.l.b16 %v706
        %v3010 = vunpack.c.h.b16 %v706
        %v3011 = vunpack.c.l.b16 %v707
        %v3012 = vunpack.c.h.b16 %v707
        %v3013 = vunpack.c.l.b16 %v708
        %v3014 = vunpack.c.l.b16 %v709
        %v3015 = vunpack.c.h.b16 %v709
        %v3016 = vunpack.c.l.b16 %v710
        %v3017 = vunpack.c.h.b16 %v710
        %v3018 = vunpack.c.l.b16 %v711
        %v3019 = vunpack.c.h.b16 %v711
        %v3020 = vunpack.c.l.b16 %v712
        %v3021 = vunpack.c.h.b16 %v712
        %v3022 = vunpack.c.l.b16 %v713
        %v3023 = vunpack.c.h.b16 %v713
        %v3024 = vunpack.c.l.b16 %v714
        %v3025 = vunpack.c.l.b16 %v715
        %v3026 = vunpack.c.h.b16 %v715
        %v3027 = vunpack.c.l.b16 %v716
        %v3028 = vunpack.c.h.b16 %v716
        %v3029 = vunpack.c.l.b16 %v717
        %v3030 = vunpack.c.h.b16 %v717
        %v3031 = vunpack.c.l.b16 %v718
        %v3032 = vunpack.c.h.b16 %v718
        %v3033 = vunpack.c.l.b16 %v719
        %v3034 = vunpack.c.h.b16 %v719
        %v3035 = vunpack.c.l.b16 %v720
        %v3036 = vunpack.c.l.b16 %v721
        %v3037 = vunpack.c.h.b16 %v721
        %v3038 = vunpack.c.l.b16 %v722
        %v3039 = vunpack.c.h.b16 %v722
        %v3040 = vunpack.c.l.b16 %v723
        %v3041 = vunpack.c.h.b16 %v723
        %v3042 = vunpack.c.l.b16 %v724
        %v3043 = vunpack.c.h.b16 %v724
        %v3044 = vunpack.c.l.b16 %v725
        %v3045 = vunpack.c.h.b16 %v725
        %v3046 = vunpack.c.l.b16 %v726
        %v3047 = vunpack.c.l.b16 %v727
        %v3048 = vunpack.c.h.b16 %v727
        %v3049 = vunpack.c.l.b16 %v728
        %v3050 = vunpack.c.h.b16 %v728
        %v3051 = vunpack.c.l.b16 %v729
        %v3052 = vunpack.c.h.b16 %v729
        %v3053 = vunpack.c.l.b16 %v730
        %v3054 = vunpack.c.h.b16 %v730
        %v3055 = vunpack.c.l.b16 %v731
        %v3056 = vunpack.c.h.b16 %v731
        %v3057 = vunpack.c.l.b16 %v732
        %v3058 = vunpack.c.l.b16 %v733
        %v3059 = vunpack.c.h.b16 %v733
        %v3060 = vunpack.c.l.b16 %v734
        %v3061 = vunpack.c.h.b16 %v734
        %v3062 = vunpack.c.l.b16 %v735
        %v3063 = vunpack.c.h.b16 %v735
        %v3064 = vunpack.c.l.b16 %v736
        %v3065 = vunpack.c.h.b16 %v736
        %v3066 = vunpack.c.l.b16 %v737
        %v3067 = vunpack.c.h.b16 %v737
        %v3068 = vunpack.c.l.b16 %v738
        %v3069 = vunpack.c.l.b16 %v739
        %v3070 = vunpack.c.h.b16 %v739
        %v3071 = vunpack.c.l.b16 %v740
        %v3072 = vunpack.c.h.b16 %v740
        %v3073 = vunpack.c.l.b16 %v741
        %v3074 = vunpack.c.h.b16 %v741
        %v3075 = vunpack.c.l.b16 %v742
        %v3076 = vunpack.c.h.b16 %v742
        %v3077 = vunpack.c.l.b16 %v743
        %v3078 = vunpack.c.h.b16 %v743
        %v3079 = vunpack.c.l.b16 %v744
        %v3080 = vunpack.c.l.b16 %v745
        %v3081 = vunpack.c.h.b16 %v745
        %v3082 = vunpack.c.l.b16 %v746
        %v3083 = vunpack.c.h.b16 %v746
        %v3084 = vunpack.c.l.b16 %v747
        %v3085 = vunpack.c.h.b16 %v747
        %v3086 = vunpack.c.l.b16 %v748
        %v3087 = vunpack.c.h.b16 %v748
        %v3088 = vunpack.c.l.b16 %v749
        %v3089 = vunpack.c.h.b16 %v749
        %v3090 = vunpack.c.l.b16 %v750
        %v3091 = vunpack.c.l.b16 %v751
        %v3092 = vunpack.c.h.b16 %v751
        %v3093 = vunpack.c.l.b16 %v752
        %v3094 = vunpack.c.h.b16 %v752
        %v3095 = vunpack.c.l.b16 %v753
        %v3096 = vunpack.c.h.b16 %v753
        %v3097 = vunpack.c.l.b16 %v754
        %v3098 = vunpack.c.h.b16 %v754
        %v3099 = vunpack.c.l.b16 %v755
        %v3100 = vunpack.c.h.b16 %v755
        %v3101 = vunpack.c.l.b16 %v756
        %v3102 = vunpack.c.l.b16 %v757
        %v3103 = vunpack.c.h.b16 %v757
        %v3104 = vunpack.c.l.b16 %v758
        %v3105 = vunpack.c.h.b16 %v758
        %v3106 = vunpack.c.l.b16 %v759
        %v3107 = vunpack.c.h.b16 %v759
        %v3108 = vunpack.c.l.b16 %v760
        %v3109 = vunpack.c.h.b16 %v760
        %v3110 = vunpack.c.l.b16 %v761
        %v3111 = vunpack.c.h.b16 %v761
        %v3112 = vunpack.c.l.b16 %v762
        %v3113 = vunpack.c.l.b16 %v763
        %v3114 = vunpack.c.h.b16 %v763
        %v3115 = vunpack.c.l.b16 %v764
        %v3116 = vunpack.c.h.b16 %v764
        %v3117 = vunpack.c.l.b16 %v765
        %v3118 = vunpack.c.h.b16 %v765
        %v3119 = vunpack.c.l.b16 %v766
        %v3120 = vunpack.c.h.b16 %v766
        %v3121 = vunpack.c.l.b16 %v767
        %v3122 = vunpack.c.h.b16 %v767
        %v3123 = vunpack.c.l.b16 %v768
        %v3124 = vunpack.c.l.b16 %v769
        %v3125 = vunpack.c.h.b16 %v769
        %v3126 = vunpack.c.l.b16 %v770
        %v3127 = vunpack.c.h.b16 %v770
        %v3128 = vunpack.c.l.b16 %v771
        %v3129 = vunpack.c.h.b16 %v771
        %v3130 = vunpack.c.l.b16 %v772
        %v3131 = vunpack.c.h.b16 %v772
        %v3132 = vunpack.c.l.b16 %v773
        %v3133 = vunpack.c.h.b16 %v773
        %v3134 = vunpack.c.l.b16 %v774
        %v3135 = vunpack.c.l.b16 %v775
        %v3136 = vunpack.c.h.b16 %v775
        %v3137 = vunpack.c.l.b16 %v776
        %v3138 = vunpack.c.h.b16 %v776
        %v3139 = vunpack.c.l.b16 %v777
        %v3140 = vunpack.c.h.b16 %v777
        %v3141 = vunpack.c.l.b16 %v778
        %v3142 = vunpack.c.h.b16 %v778
        %v3143 = vunpack.c.l.b16 %v779
        %v3144 = vunpack.c.h.b16 %v779
        %v3145 = vunpack.c.l.b16 %v780
        %v3146 = vunpack.c.l.b16 %v781
        %v3147 = vunpack.c.h.b16 %v781
        %v3148 = vunpack.c.l.b16 %v782
        %v3149 = vunpack.c.h.b16 %v782
        %v3150 = vunpack.c.l.b16 %v783
        %v3151 = vunpack.c.h.b16 %v783
        %v3152 = vunpack.c.l.b16 %v784
        %v3153 = vunpack.c.h.b16 %v784
        %v3154 = vunpack.c.l.b16 %v785
        %v3155 = vunpack.c.h.b16 %v785
        %v3156 = vunpack.c.l.b16 %v786
        %v3157 = vunpack.c.l.b16 %v787
        %v3158 = vunpack.c.h.b16 %v787
        %v3159 = vunpack.c.l.b16 %v788
        %v3160 = vunpack.c.h.b16 %v788
        %v3161 = vunpack.c.l.b16 %v789
        %v3162 = vunpack.c.h.b16 %v789
        %v3163 = vunpack.c.l.b16 %v790
        %v3164 = vunpack.c.h.b16 %v790
        %v3165 = vunpack.c.l.b16 %v791
        %v3166 = vunpack.c.h.b16 %v791
        %v3167 = vunpack.c.l.b16 %v792
        %v3168 = vunpack.c.l.b16 %v793
        %v3169 = vunpack.c.h.b16 %v793
        %v3170 = vunpack.c.l.b16 %v794
        %v3171 = vunpack.c.h.b16 %v794
        %v3172 = vunpack.c.l.b16 %v795
        %v3173 = vunpack.c.h.b16 %v795
        %v3174 = vunpack.c.l.b16 %v796
        %v3175 = vunpack.c.h.b16 %v796
        %v3176 = vunpack.c.l.b16 %v797
        %v3177 = vunpack.c.h.b16 %v797
        %v3178 = vunpack.c.l.b16 %v798
        %v3179 = vunpack.c.l.b16 %v799
        %v3180 = vunpack.c.h.b16 %v799
        %v3181 = vunpack.c.l.b16 %v800
        %v3182 = vunpack.c.h.b16 %v800
        %v3183 = vunpack.c.l.b16 %v801
        %v3184 = vunpack.c.h.b16 %v801
        %v3185 = vunpack.c.l.b16 %v802
        %v3186 = vunpack.c.h.b16 %v802
        %v3187 = vunpack.c.l.b16 %v803
        %v3188 = vunpack.c.h.b16 %v803
        %v3189 = vunpack.c.l.b16 %v804
        %v3190 = vunpack.c.l.b16 %v805
        %v3191 = vunpack.c.h.b16 %v805
        %v3192 = vunpack.c.l.b16 %v806
        %v3193 = vunpack.c.h.b16 %v806
        %v3194 = vunpack.c.l.b16 %v807
        %v3195 = vunpack.c.h.b16 %v807
        %v3196 = vunpack.c.l.b16 %v808
        %v3197 = vunpack.c.h.b16 %v808
        %v3198 = vunpack.c.l.b16 %v809
        %v3199 = vunpack.c.h.b16 %v809
        %v3200 = vunpack.c.l.b16 %v810
        %v3201 = vunpack.c.l.b16 %v811
        %v3202 = vunpack.c.h.b16 %v811
        %v3203 = vunpack.c.l.b16 %v812
        %v3204 = vunpack.c.h.b16 %v812
        %v3205 = vunpack.c.l.b16 %v813
        %v3206 = vunpack.c.h.b16 %v813
        %v3207 = vunpack.c.l.b16 %v814
        %v3208 = vunpack.c.h.b16 %v814
        %v3209 = vunpack.c.l.b16 %v815
        %v3210 = vunpack.c.h.b16 %v815
        %v3211 = vunpack.c.l.b16 %v816
        %v3212 = vunpack.c.l.b16 %v817
        %v3213 = vunpack.c.h.b16 %v817
        %v3214 = vunpack.c.l.b16 %v818
        %v3215 = vunpack.c.h.b16 %v818
        %v3216 = vunpack.c.l.b16 %v819
        %v3217 = vunpack.c.h.b16 %v819
        %v3218 = vunpack.c.l.b16 %v820
        %v3219 = vunpack.c.h.b16 %v820
        %v3220 = vunpack.c.l.b16 %v821
        %v3221 = vunpack.c.h.b16 %v821
        %v3222 = vunpack.c.l.b16 %v822
        %v3223 = vunpack.c.l.b16 %v823
        %v3224 = vunpack.c.h.b16 %v823
        %v3225 = vunpack.c.l.b16 %v824
        %v3226 = vunpack.c.h.b16 %v824
        %v3227 = vunpack.c.l.b16 %v825
        %v3228 = vunpack.c.h.b16 %v825
        %v3229 = vunpack.c.l.b16 %v826
        %v3230 = vunpack.c.h.b16 %v826
        %v3231 = vunpack.c.l.b16 %v827
        %v3232 = vunpack.c.h.b16 %v827
        %v3233 = vunpack.c.l.b16 %v828
        %v3234 = vunpack.c.l.b16 %v829
        %v3235 = vunpack.c.h.b16 %v829
        %v3236 = vunpack.c.l.b16 %v830
        %v3237 = vunpack.c.h.b16 %v830
        %v3238 = vunpack.c.l.b16 %v831
        %v3239 = vunpack.c.h.b16 %v831
        %v3240 = vunpack.c.l.b16 %v832
        %v3241 = vunpack.c.h.b16 %v832
        %v3242 = vunpack.c.l.b16 %v833
        %v3243 = vunpack.c.h.b16 %v833
        %v3244 = vunpack.c.l.b16 %v834
        %v3245 = vunpack.c.l.b16 %v835
        %v3246 = vunpack.c.h.b16 %v835
        %v3247 = vunpack.c.l.b16 %v836
        %v3248 = vunpack.c.h.b16 %v836
        %v3249 = vunpack.c.l.b16 %v837
        %v3250 = vunpack.c.h.b16 %v837
        %v3251 = vunpack.c.l.b16 %v838
        %v3252 = vunpack.c.h.b16 %v838
        %v3253 = vunpack.c.l.b16 %v839
        %v3254 = vunpack.c.h.b16 %v839
        %v3255 = vunpack.c.l.b16 %v840
        %v3256 = vunpack.c.l.b16 %v841
        %v3257 = vunpack.c.h.b16 %v841
        %v3258 = vunpack.c.l.b16 %v842
        %v3259 = vunpack.c.h.b16 %v842
        %v3260 = vunpack.c.l.b16 %v843
        %v3261 = vunpack.c.h.b16 %v843
        %v3262 = vunpack.c.l.b16 %v844
        %v3263 = vunpack.c.h.b16 %v844
        %v3264 = vunpack.c.l.b16 %v845
        %v3265 = vunpack.c.h.b16 %v845
        %v3266 = vunpack.c.l.b16 %v846
        %v3267 = vunpack.c.l.b16 %v847
        %v3268 = vunpack.c.h.b16 %v847
        %v3269 = vunpack.c.l.b16 %v848
        %v3270 = vunpack.c.h.b16 %v848
        %v3271 = vunpack.c.l.b16 %v849
        %v3272 = vunpack.c.h.b16 %v849
        %v3273 = vunpack.c.l.b16 %v850
        %v3274 = vunpack.c.h.b16 %v850
        %v3275 = vunpack.c.l.b16 %v851
        %v3276 = vunpack.c.h.b16 %v851
        %v3277 = vunpack.c.l.b16 %v852
        %v3278 = vunpack.c.l.b16 %v853
        %v3279 = vunpack.c.h.b16 %v853
        %v3280 = vunpack.c.l.b16 %v854
        %v3281 = vunpack.c.h.b16 %v854
        %v3282 = vunpack.c.l.b16 %v855
        %v3283 = vunpack.c.h.b16 %v855
        %v3284 = vunpack.c.l.b16 %v856
        %v3285 = vunpack.c.h.b16 %v856
        %v3286 = vunpack.c.l.b16 %v857
        %v3287 = vunpack.c.h.b16 %v857
        %v3288 = vunpack.c.l.b16 %v858
        %v3289 = vunpack.c.l.b16 %v859
        %v3290 = vunpack.c.h.b16 %v859
        %v3291 = vunpack.c.l.b16 %v860
        %v3292 = vunpack.c.h.b16 %v860
        %v3293 = vunpack.c.l.b16 %v861
        %v3294 = vunpack.c.h.b16 %v861
        %v3295 = vunpack.c.l.b16 %v862
        %v3296 = vunpack.c.h.b16 %v862
        %v3297 = vunpack.c.l.b16 %v863
        %v3298 = vunpack.c.h.b16 %v863
        %v3299 = vunpack.c.l.b16 %v864
        %v3300 = vunpack.c.l.b16 %v865
        %v3301 = vunpack.c.h.b16 %v865
        %v3302 = vunpack.c.l.b16 %v866
        %v3303 = vunpack.c.h.b16 %v866
        %v3304 = vunpack.c.l.b16 %v867
        %v3305 = vunpack.c.h.b16 %v867
        %v3306 = vunpack.c.l.b16 %v868
        %v3307 = vunpack.c.h.b16 %v868
        %v3308 = vunpack.c.l.b16 %v869
        %v3309 = vunpack.c.h.b16 %v869
        %v3310 = vunpack.c.l.b16 %v870
        %v3311 = vunpack.c.l.b16 %v871
        %v3312 = vunpack.c.h.b16 %v871
        %v3313 = vunpack.c.l.b16 %v872
        %v3314 = vunpack.c.h.b16 %v872
        %v3315 = vunpack.c.l.b16 %v873
        %v3316 = vunpack.c.h.b16 %v873
        %v3317 = vunpack.c.l.b16 %v874
        %v3318 = vunpack.c.h.b16 %v874
        %v3319 = vunpack.c.l.b16 %v875
        %v3320 = vunpack.c.h.b16 %v875
        %v3321 = vunpack.c.l.b16 %v876
        %v3322 = vunpack.c.l.b16 %v877
        %v3323 = vunpack.c.h.b16 %v877
        %v3324 = vunpack.c.l.b16 %v878
        %v3325 = vunpack.c.h.b16 %v878
        %v3326 = vunpack.c.l.b16 %v879
        %v3327 = vunpack.c.h.b16 %v879
        %v3328 = vunpack.c.l.b16 %v880
        %v3329 = vunpack.c.h.b16 %v880
        %v3330 = vunpack.c.l.b16 %v881
        %v3331 = vunpack.c.h.b16 %v881
        %v3332 = vunpack.c.l.b16 %v882
        %v3333 = vunpack.c.l.b16 %v883
        %v3334 = vunpack.c.h.b16 %v883
        %v3335 = vunpack.c.l.b16 %v884
        %v3336 = vunpack.c.h.b16 %v884
        %v3337 = vunpack.c.l.b16 %v885
        %v3338 = vunpack.c.h.b16 %v885
        %v3339 = vunpack.c.l.b16 %v886
        %v3340 = vunpack.c.h.b16 %v886
        %v3341 = vunpack.c.l.b16 %v887
        %v3342 = vunpack.c.h.b16 %v887
        %v3343 = vunpack.c.l.b16 %v888
        %v3344 = vunpack.c.l.b16 %v889
        %v3345 = vunpack.c.h.b16 %v889
        %v3346 = vunpack.c.l.b16 %v890
        %v3347 = vunpack.c.h.b16 %v890
        %v3348 = vunpack.c.l.b16 %v891
        %v3349 = vunpack.c.h.b16 %v891
        %v3350 = vunpack.c.l.b16 %v892
        %v3351 = vunpack.c.h.b16 %v892
        %v3352 = vunpack.c.l.b16 %v893
        %v3353 = vunpack.c.h.b16 %v893
        %v3354 = vunpack.c.l.b16 %v894
        %v3355 = vunpack.c.l.b16 %v895
        %v3356 = vunpack.c.h.b16 %v895
        %v3357 = vunpack.c.l.b16 %v896
        %v3358 = vunpack.c.h.b16 %v896
        %v3359 = vunpack.c.l.b16 %v897
        %v3360 = vunpack.c.h.b16 %v897
        %v3361 = vunpack.c.l.b16 %v898
        %v3362 = vunpack.c.h.b16 %v898
        %v3363 = vunpack.c.l.b16 %v899
        %v3364 = vunpack.c.h.b16 %v899
        %v3365 = vunpack.c.l.b16 %v900
        %v3366 = vunpack.c.l.b16 %v901
        %v3367 = vunpack.c.h.b16 %v901
        %v3368 = vunpack.c.l.b16 %v902
        %v3369 = vunpack.c.h.b16 %v902
        %v3370 = vunpack.c.l.b16 %v903
        %v3371 = vunpack.c.h.b16 %v903
        %v3372 = vunpack.c.l.b16 %v904
        %v3373 = vunpack.c.h.b16 %v904
        %v3374 = vunpack.c.l.b16 %v905
        %v3375 = vunpack.c.h.b16 %v905
        %v3376 = vunpack.c.l.b16 %v906
        %v3377 = vunpack.c.l.b16 %v907
        %v3378 = vunpack.c.h.b16 %v907
        %v3379 = vunpack.c.l.b16 %v908
        %v3380 = vunpack.c.h.b16 %v908
        %v3381 = vunpack.c.l.b16 %v909
        %v3382 = vunpack.c.h.b16 %v909
        %v3383 = vunpack.c.l.b16 %v910
        %v3384 = vunpack.c.h.b16 %v910
        %v3385 = vunpack.c.l.b16 %v911
        %v3386 = vunpack.c.h.b16 %v911
        %v3387 = vunpack.c.l.b16 %v912
        %v3388 = vunpack.c.l.b16 %v913
        %v3389 = vunpack.c.h.b16 %v913
        %v3390 = vunpack.c.l.b16 %v914
        %v3391 = vunpack.c.h.b16 %v914
        %v3392 = vunpack.c.l.b16 %v915
        %v3393 = vunpack.c.h.b16 %v915
        %v3394 = vunpack.c.l.b16 %v916
        %v3395 = vunpack.c.h.b16 %v916
        %v3396 = vunpack.c.l.b16 %v917
        %v3397 = vunpack.c.h.b16 %v917
        %v3398 = vunpack.c.l.b16 %v918
        %v3399 = vunpack.c.l.b16 %v919
        %v3400 = vunpack.c.h.b16 %v919
        %v3401 = vunpack.c.l.b16 %v920
        %v3402 = vunpack.c.h.b16 %v920
        %v3403 = vunpack.c.l.b16 %v921
        %v3404 = vunpack.c.h.b16 %v921
        %v3405 = vunpack.c.l.b16 %v922
        %v3406 = vunpack.c.h.b16 %v922
        %v3407 = vunpack.c.l.b16 %v923
        %v3408 = vunpack.c.h.b16 %v923
        %v3409 = vunpack.c.l.b16 %v924
        %v3410 = vunpack.c.l.b16 %v925
        %v3411 = vunpack.c.h.b16 %v925
        %v3412 = vunpack.c.l.b16 %v926
        %v3413 = vunpack.c.h.b16 %v926
        %v3414 = vunpack.c.l.b16 %v927
        %v3415 = vunpack.c.h.b16 %v927
        %v3416 = vunpack.c.l.b16 %v928
        %v3417 = vunpack.c.h.b16 %v928
        %v3418 = vunpack.c.l.b16 %v929
        %v3419 = vunpack.c.h.b16 %v929
        %v3420 = vunpack.c.l.b16 %v930
        %v3421 = vunpack.c.l.b16 %v931
        %v3422 = vunpack.c.h.b16 %v931
        %v3423 = vunpack.c.l.b16 %v932
        %v3424 = vunpack.c.h.b16 %v932
        %v3425 = vunpack.c.l.b16 %v933
        %v3426 = vunpack.c.h.b16 %v933
        %v3427 = vunpack.c.l.b16 %v934
        %v3428 = vunpack.c.h.b16 %v934
        %v3429 = vunpack.c.l.b16 %v935
        %v3430 = vunpack.c.h.b16 %v935
        %v3431 = vunpack.c.l.b16 %v936
        %v3432 = vunpack.c.l.b16 %v937
        %v3433 = vunpack.c.h.b16 %v937
        %v3434 = vunpack.c.l.b16 %v938
        %v3435 = vunpack.c.h.b16 %v938
        %v3436 = vunpack.c.l.b16 %v939
        %v3437 = vunpack.c.h.b16 %v939
        %v3438 = vunpack.c.l.b16 %v940
        %v3439 = vunpack.c.h.b16 %v940
        %v3440 = vunpack.c.l.b16 %v941
        %v3441 = vunpack.c.h.b16 %v941
        %v3442 = vunpack.c.l.b16 %v942
        %v3443 = vunpack.c.l.b16 %v943
        %v3444 = vunpack.c.h.b16 %v943
        %v3445 = vunpack.c.l.b16 %v944
        %v3446 = vunpack.c.h.b16 %v944
        %v3447 = vunpack.c.l.b16 %v945
        %v3448 = vunpack.c.h.b16 %v945
        %v3449 = vunpack.c.l.b16 %v946
        %v3450 = vunpack.c.h.b16 %v946
        %v3451 = vunpack.c.l.b16 %v947
        %v3452 = vunpack.c.h.b16 %v947
        %v3453 = vunpack.c.l.b16 %v948
        %v3454 = vunpack.c.l.b16 %v949
        %v3455 = vunpack.c.h.b16 %v949
        %v3456 = vunpack.c.l.b16 %v950
        %v3457 = vunpack.c.h.b16 %v950
        %v3458 = vunpack.c.l.b16 %v951
        %v3459 = vunpack.c.h.b16 %v951
        %v3460 = vunpack.c.l.b16 %v952
        %v3461 = vunpack.c.h.b16 %v952
        %v3462 = vunpack.c.l.b16 %v953
        %v3463 = vunpack.c.h.b16 %v953
        %v3464 = vunpack.c.l.b16 %v954
        %v3465 = vunpack.c.l.b16 %v955
        %v3466 = vunpack.c.h.b16 %v955
        %v3467 = vunpack.c.l.b16 %v956
        %v3468 = vunpack.c.h.b16 %v956
        %v3469 = vunpack.c.l.b16 %v957
        %v3470 = vunpack.c.h.b16 %v957
        %v3471 = vunpack.c.l.b16 %v958
        %v3472 = vunpack.c.h.b16 %v958
        %v3473 = vunpack.c.l.b16 %v959
        %v3474 = vunpack.c.h.b16 %v959
        %v3475 = vunpack.c.l.b16 %v960
        %v3476 = vunpack.c.l.b16 %v961
        %v3477 = vunpack.c.h.b16 %v961
        %v3478 = vunpack.c.l.b16 %v962
        %v3479 = vunpack.c.h.b16 %v962
        %v3480 = vunpack.c.l.b16 %v963
        %v3481 = vunpack.c.h.b16 %v963
        %v3482 = vunpack.c.l.b16 %v964
        %v3483 = vunpack.c.h.b16 %v964
        %v3484 = vunpack.c.l.b16 %v965
        %v3485 = vunpack.c.h.b16 %v965
        %v3486 = vunpack.c.l.b16 %v966
        %v3487 = vunpack.c.l.b16 %v967
        %v3488 = vunpack.c.h.b16 %v967
        %v3489 = vunpack.c.l.b16 %v968
        %v3490 = vunpack.c.h.b16 %v968
        %v3491 = vunpack.c.l.b16 %v969
        %v3492 = vunpack.c.h.b16 %v969
        %v3493 = vunpack.c.l.b16 %v970
        %v3494 = vunpack.c.h.b16 %v970
        %v3495 = vunpack.c.l.b16 %v971
        %v3496 = vunpack.c.h.b16 %v971
        %v3497 = vunpack.c.l.b16 %v972
        %v3498 = vunpack.c.l.b16 %v973
        %v3499 = vunpack.c.h.b16 %v973
        %v3500 = vunpack.c.l.b16 %v974
        %v3501 = vunpack.c.h.b16 %v974
        %v3502 = vunpack.c.l.b16 %v975
        %v3503 = vunpack.c.h.b16 %v975
        %v3504 = vunpack.c.l.b16 %v976
        %v3505 = vunpack.c.h.b16 %v976
        %v3506 = vunpack.c.l.b16 %v977
        %v3507 = vunpack.c.h.b16 %v977
        %v3508 = vunpack.c.l.b16 %v978
        %v3509 = vunpack.c.l.b16 %v979
        %v3510 = vunpack.c.h.b16 %v979
        %v3511 = vunpack.c.l.b16 %v980
        %v3512 = vunpack.c.h.b16 %v980
        %v3513 = vunpack.c.l.b16 %v981
        %v3514 = vunpack.c.h.b16 %v981
        %v3515 = vunpack.c.l.b16 %v982
        %v3516 = vunpack.c.h.b16 %v982
        %v3517 = vunpack.c.l.b16 %v983
        %v3518 = vunpack.c.h.b16 %v983
        %v3519 = vunpack.c.l.b16 %v984
        %v3520 = vunpack.c.l.b16 %v985
        %v3521 = vunpack.c.h.b16 %v985
        %v3522 = vunpack.c.l.b16 %v986
        %v3523 = vunpack.c.h.b16 %v986
        %v3524 = vunpack.c.l.b16 %v987
        %v3525 = vunpack.c.h.b16 %v987
        %v3526 = vunpack.c.l.b16 %v988
        %v3527 = vunpack.c.h.b16 %v988
        %v3528 = vunpack.c.l.b16 %v989
        %v3529 = vunpack.c.h.b16 %v989
        %v3530 = vunpack.c.l.b16 %v990
        %v3531 = vunpack.c.l.b16 %v991
        %v3532 = vunpack.c.h.b16 %v991
        %v3533 = vunpack.c.l.b16 %v992
        %v3534 = vunpack.c.h.b16 %v992
        %v3535 = vunpack.c.l.b16 %v993
        %v3536 = vunpack.c.h.b16 %v993
        %v3537 = vunpack.c.l.b16 %v994
        %v3538 = vunpack.c.h.b16 %v994
        %v3539 = vunpack.c.l.b16 %v995
        %v3540 = vunpack.c.h.b16 %v995
        %v3541 = vunpack.c.l.b16 %v996
        %v3542 = vunpack.c.l.b16 %v997
        %v3543 = vunpack.c.h.b16 %v997
        %v3544 = vunpack.c.l.b16 %v998
        %v3545 = vunpack.c.h.b16 %v998
        %v3546 = vunpack.c.l.b16 %v999
        %v3547 = vunpack.c.h.b16 %v999
        %v3548 = vunpack.c.l.b16 %v1000
        %v3549 = vunpack.c.h.b16 %v1000
        %v3550 = vunpack.c.l.b16 %v1001
        %v3551 = vunpack.c.h.b16 %v1001
        %v3552 = vunpack.c.l.b16 %v1002
        %v3553 = vunpack.c.l.b16 %v1003
        %v3554 = vunpack.c.h.b16 %v1003
        %v3555 = vunpack.c.l.b16 %v1004
        %v3556 = vunpack.c.h.b16 %v1004
        %v3557 = vunpack.c.l.b16 %v1005
        %v3558 = vunpack.c.h.b16 %v1005
        %v3559 = vunpack.c.l.b16 %v1006
        %v3560 = vunpack.c.h.b16 %v1006
        %v3561 = vunpack.c.l.b16 %v1007
        %v3562 = vunpack.c.h.b16 %v1007
        %v3563 = vunpack.c.l.b16 %v1008
        %v3564 = vunpack.c.l.b16 %v1009
        %v3565 = vunpack.c.h.b16 %v1009
        %v3566 = vunpack.c.l.b16 %v1010
        %v3567 = vunpack.c.h.b16 %v1010
        %v3568 = vunpack.c.l.b16 %v1011
        %v3569 = vunpack.c.h.b16 %v1011
        %v3570 = vunpack.c.l.b16 %v1012
        %v3571 = vunpack.c.h.b16 %v1012
        %v3572 = vunpack.c.l.b16 %v1013
        %v3573 = vunpack.c.h.b16 %v1013
        %v3574 = vunpack.c.l.b16 %v1014
        %v3575 = vunpack.c.l.b16 %v1015
        %v3576 = vunpack.c.h.b16 %v1015
        %v3577 = vunpack.c.l.b16 %v1016
        %v3578 = vunpack.c.h.b16 %v1016
        %v3579 = vunpack.c.l.b16 %v1017
        %v3580 = vunpack.c.h.b16 %v1017
        %v3581 = vunpack.c.l.b16 %v1018
        %v3582 = vunpack.c.h.b16 %v1018
        %v3583 = vunpack.c.l.b16 %v1019
        %v3584 = vunpack.c.h.b16 %v1019
        %v3585 = vunpack.c.l.b16 %v1020
        %v3586 = vunpack.c.l.b16 %v1021
        %v3587 = vunpack.c.h.b16 %v1021
        %v3588 = vunpack.c.l.b16 %v1022
        %v3589 = vunpack.c.h.b16 %v1022
        %v3590 = vunpack.c.l.b16 %v1023
        %v3591 = vunpack.c.h.b16 %v1023
        %v3592 = vunpack.c.l.b16 %v1024
        %v3593 = vunpack.c.h.b16 %v1024
        %v3594 = vunpack.c.l.b16 %v1025
        %v3595 = vunpack.c.h.b16 %v1025
        %v3596 = vunpack.c.l.b16 %v1026
        %v3597 = vunpack.c.l.b16 %v1027
        %v3598 = vunpack.c.h.b16 %v1027
        %v3599 = vunpack.c.l.b16 %v1028
        %v3600 = vunpack.c.h.b16 %v1028
        %v3601 = vunpack.c.l.b16 %v1029
        %v3602 = vunpack.c.h.b16 %v1029
        %v3603 = vunpack.c.l.b16 %v1030
        %v3604 = vunpack.c.h.b16 %v1030
        %v3605 = vunpack.c.l.b16 %v1031
        %v3606 = vunpack.c.h.b16 %v1031
        %v3607 = vunpack.c.l.b16 %v1032
        %v3608 = vunpack.c.l.b16 %v1033
        %v3609 = vunpack.c.h.b16 %v1033
        %v3610 = vunpack.c.l.b16 %v1034
        %v3611 = vunpack.c.h.b16 %v1034
        %v3612 = vunpack.c.l.b16 %v1035
        %v3613 = vunpack.c.h.b16 %v1035
        %v3614 = vunpack.c.l.b16 %v1036
        %v3615 = vunpack.c.h.b16 %v1036
        %v3616 = vunpack.c.l.b16 %v1037
        %v3617 = vunpack.c.h.b16 %v1037
        %v3618 = vunpack.c.l.b16 %v1038
        %v3619 = vunpack.c.l.b16 %v1039
        %v3620 = vunpack.c.h.b16 %v1039
        %v3621 = vunpack.c.l.b16 %v1040
        %v3622 = vunpack.c.h.b16 %v1040
        %v3623 = vunpack.c.l.b16 %v1041
        %v3624 = vunpack.c.h.b16 %v1041
        %v3625 = vunpack.c.l.b16 %v1042
        %v3626 = vunpack.c.h.b16 %v1042
        %v3627 = vunpack.c.l.b16 %v1043
        %v3628 = vunpack.c.h.b16 %v1043
        %v3629 = vunpack.c.l.b16 %v1044
        %v3630 = vunpack.c.l.b16 %v1045
        %v3631 = vunpack.c.h.b16 %v1045
        %v3632 = vunpack.c.l.b16 %v1046
        %v3633 = vunpack.c.h.b16 %v1046
        %v3634 = vunpack.c.l.b16 %v1047
        %v3635 = vunpack.c.h.b16 %v1047
        %v3636 = vunpack.c.l.b16 %v1048
        %v3637 = vunpack.c.h.b16 %v1048
        %v3638 = vunpack.c.l.b16 %v1049
        %v3639 = vunpack.c.h.b16 %v1049
        %v3640 = vunpack.c.l.b16 %v1050
        %v3641 = vunpack.c.l.b16 %v1051
        %v3642 = vunpack.c.h.b16 %v1051
        %v3643 = vunpack.c.l.b16 %v1052
        %v3644 = vunpack.c.h.b16 %v1052
        %v3645 = vunpack.c.l.b16 %v1053
        %v3646 = vunpack.c.h.b16 %v1053
        %v3647 = vunpack.c.l.b16 %v1054
        %v3648 = vunpack.c.h.b16 %v1054
        %v3649 = vunpack.c.l.b16 %v1055
        %v3650 = vunpack.c.h.b16 %v1055
        %v3651 = vunpack.c.l.b16 %v1056
        %v3652 = vunpack.c.l.b16 %v1057
        %v3653 = vunpack.c.h.b16 %v1057
        %v3654 = vunpack.c.l.b16 %v1058
        %v3655 = vunpack.c.h.b16 %v1058
        %v3656 = vunpack.c.l.b16 %v1059
        %v3657 = vunpack.c.h.b16 %v1059
        %v3658 = vunpack.c.l.b16 %v1060
        %v3659 = vunpack.c.h.b16 %v1060
        %v3660 = vunpack.c.l.b16 %v1061
        %v3661 = vunpack.c.h.b16 %v1061
        %v3662 = vunpack.c.l.b16 %v1062
        %v3663 = vunpack.c.l.b16 %v1063
        %v3664 = vunpack.c.h.b16 %v1063
        %v3665 = vunpack.c.l.b16 %v1064
        %v3666 = vunpack.c.h.b16 %v1064
        %v3667 = vunpack.c.l.b16 %v1065
        %v3668 = vunpack.c.h.b16 %v1065
        %v3669 = vunpack.c.l.b16 %v1066
        %v3670 = vunpack.c.h.b16 %v1066
        %v3671 = vunpack.c.l.b16 %v1067
        %v3672 = vunpack.c.h.b16 %v1067
        %v3673 = vunpack.c.l.b16 %v1068
        %v3674 = vunpack.c.l.b16 %v1069
        %v3675 = vunpack.c.h.b16 %v1069
        %v3676 = vunpack.c.l.b16 %v1070
        %v3677 = vunpack.c.h.b16 %v1070
        %v3678 = vunpack.c.l.b16 %v1071
        %v3679 = vunpack.c.h.b16 %v1071
        %v3680 = vunpack.c.l.b16 %v1072
        %v3681 = vunpack.c.h.b16 %v1072
        %v3682 = vunpack.c.l.b16 %v1073
        %v3683 = vunpack.c.h.b16 %v1073
        %v3684 = vunpack.c.l.b16 %v1074
        %v3685 = vunpack.c.l.b16 %v1075
        %v3686 = vunpack.c.h.b16 %v1075
        %v3687 = vunpack.c.l.b16 %v1076
        %v3688 = vunpack.c.h.b16 %v1076
        %v3689 = vunpack.c.l.b16 %v1077
        %v3690 = vunpack.c.h.b16 %v1077
        %v3691 = vunpack.c.l.b16 %v1078
        %v3692 = vunpack.c.h.b16 %v1078
        %v3693 = vunpack.c.l.b16 %v1079
        %v3694 = vunpack.c.h.b16 %v1079
        %v3695 = vunpack.c.l.b16 %v1080
        %v3696 = vunpack.c.l.b16 %v1081
        %v3697 = vunpack.c.h.b16 %v1081
        %v3698 = vunpack.c.l.b16 %v1082
        %v3699 = vunpack.c.h.b16 %v1082
        %v3700 = vunpack.c.l.b16 %v1083
        %v3701 = vunpack.c.h.b16 %v1083
        %v3702 = vunpack.c.l.b16 %v1084
        %v3703 = vunpack.c.h.b16 %v1084
        %v3704 = vunpack.c.l.b16 %v1085
        %v3705 = vunpack.c.h.b16 %v1085
        %v3706 = vunpack.c.l.b16 %v1086
        %v3707 = vunpack.c.l.b16 %v1087
        %v3708 = vunpack.c.h.b16 %v1087
        %v3709 = vunpack.c.l.b16 %v1088
        %v3710 = vunpack.c.h.b16 %v1088
        %v3711 = vunpack.c.l.b16 %v1089
        %v3712 = vunpack.c.h.b16 %v1089
        %v3713 = vunpack.c.l.b16 %v1090
        %v3714 = vunpack.c.h.b16 %v1090
        %v3715 = vunpack.c.l.b16 %v1091
        %v3716 = vunpack.c.h.b16 %v1091
        %v3717 = vunpack.c.l.b16 %v1092
        %v3718 = vunpack.c.l.b16 %v1093
        %v3719 = vunpack.c.h.b16 %v1093
        %v3720 = vunpack.c.l.b16 %v1094
        %v3721 = vunpack.c.h.b16 %v1094
        %v3722 = vunpack.c.l.b16 %v1095
        %v3723 = vunpack.c.h.b16 %v1095
        %v3724 = vunpack.c.l.b16 %v1096
        %v3725 = vunpack.c.h.b16 %v1096
        %v3726 = vunpack.c.l.b16 %v1097
        %v3727 = vunpack.c.h.b16 %v1097
        %v3728 = vunpack.c.l.b16 %v1098
        %v3729 = vunpack.c.l.b16 %v1099
        %v3730 = vunpack.c.h.b16 %v1099
        %v3731 = vunpack.c.l.b16 %v1100
        %v3732 = vunpack.c.h.b16 %v1100
        %v3733 = vunpack.c.l.b16 %v1101
        %v3734 = vunpack.c.h.b16 %v1101
        %v3735 = vunpack.c.l.b16 %v1102
        %v3736 = vunpack.c.h.b16 %v1102
        %v3737 = vunpack.c.l.b16 %v1103
        %v3738 = vunpack.c.h.b16 %v1103
        %v3739 = vunpack.c.l.b16 %v1104
        %v3740 = vunpack.c.l.b16 %v1105
        %v3741 = vunpack.c.h.b16 %v1105
        %v3742 = vunpack.c.l.b16 %v1106
        %v3743 = vunpack.c.h.b16 %v1106
        %v3744 = vunpack.c.l.b16 %v1107
        %v3745 = vunpack.c.h.b16 %v1107
        %v3746 = vunpack.c.l.b16 %v1108
        %v3747 = vunpack.c.h.b16 %v1108
        %v3748 = vunpack.c.l.b16 %v1109
        %v3749 = vunpack.c.h.b16 %v1109
        %v3750 = vunpack.c.l.b16 %v1110
        %v3751 = vunpack.c.l.b16 %v1111
        %v3752 = vunpack.c.h.b16 %v1111
        %v3753 = vunpack.c.l.b16 %v1112
        %v3754 = vunpack.c.h.b16 %v1112
        %v3755 = vunpack.c.l.b16 %v1113
        %v3756 = vunpack.c.h.b16 %v1113
        %v3757 = vunpack.c.l.b16 %v1114
        %v3758 = vunpack.c.h.b16 %v1114
        %v3759 = vunpack.c.l.b16 %v1115
        %v3760 = vunpack.c.h.b16 %v1115
        %v3761 = vunpack.c.l.b16 %v1116
        %v3762 = vunpack.c.l.b16 %v1117
        %v3763 = vunpack.c.h.b16 %v1117
        %v3764 = vunpack.c.l.b16 %v1118
        %v3765 = vunpack.c.h.b16 %v1118
        %v3766 = vunpack.c.l.b16 %v1119
        %v3767 = vunpack.c.h.b16 %v1119
        %v3768 = vunpack.c.l.b16 %v1120
        %v3769 = vunpack.c.h.b16 %v1120
        %v3770 = vunpack.c.l.b16 %v1121
        %v3771 = vunpack.c.h.b16 %v1121
        %v3772 = vunpack.c.l.b16 %v1122
        %v3773 = vunpack.c.l.b16 %v1123
        %v3774 = vunpack.c.h.b16 %v1123
        %v3775 = vunpack.c.l.b16 %v1124
        %v3776 = vunpack.c.h.b16 %v1124
        %v3777 = vunpack.c.l.b16 %v1125
        %v3778 = vunpack.c.h.b16 %v1125
        %v3779 = vunpack.c.l.b16 %v1126
        %v3780 = vunpack.c.h.b16 %v1126
        %v3781 = vunpack.c.l.b16 %v1127
        %v3782 = vunpack.c.h.b16 %v1127
        %v3783 = vunpack.c.l.b16 %v1128
        %v3784 = vunpack.c.l.b16 %v1129
        %v3785 = vunpack.c.h.b16 %v1129
        %v3786 = vunpack.c.l.b16 %v1130
        %v3787 = vunpack.c.h.b16 %v1130
        %v3788 = vunpack.c.l.b16 %v1131
        %v3789 = vunpack.c.h.b16 %v1131
        %v3790 = vunpack.c.l.b16 %v1132
        %v3791 = vunpack.c.h.b16 %v1132
        %v3792 = vunpack.c.l.b16 %v1133
        %v3793 = vunpack.c.h.b16 %v1133
        %v3794 = vunpack.c.l.b16 %v1134
        %v3795 = vunpack.c.l.b16 %v1135
        %v3796 = vunpack.c.h.b16 %v1135
        %v3797 = vunpack.c.l.b16 %v1136
        %v3798 = vunpack.c.h.b16 %v1136
        %v3799 = vunpack.c.l.b16 %v1137
        %v3800 = vunpack.c.h.b16 %v1137
        %v3801 = vunpack.c.l.b16 %v1138
        %v3802 = vunpack.c.h.b16 %v1138
        %v3803 = vunpack.c.l.b16 %v1139
        %v3804 = vunpack.c.h.b16 %v1139
        %v3805 = vunpack.c.l.b16 %v1140
        %v3806 = vunpack.c.l.b16 %v1141
        %v3807 = vunpack.c.h.b16 %v1141
        %v3808 = vunpack.c.l.b16 %v1142
        %v3809 = vunpack.c.h.b16 %v1142
        %v3810 = vunpack.c.l.b16 %v1143
        %v3811 = vunpack.c.h.b16 %v1143
        %v3812 = vunpack.c.l.b16 %v1144
        %v3813 = vunpack.c.h.b16 %v1144
        %v3814 = vunpack.c.l.b16 %v1145
        %v3815 = vunpack.c.h.b16 %v1145
        %v3816 = vunpack.c.l.b16 %v1146
        %v3817 = vunpack.c.l.b16 %v1147
        %v3818 = vunpack.c.h.b16 %v1147
        %v3819 = vunpack.c.l.b16 %v1148
        %v3820 = vunpack.c.h.b16 %v1148
        %v3821 = vunpack.c.l.b16 %v1149
        %v3822 = vunpack.c.h.b16 %v1149
        %v3823 = vunpack.c.l.b16 %v1150
        %v3824 = vunpack.c.h.b16 %v1150
        %v3825 = vunpack.c.l.b16 %v1151
        %v3826 = vunpack.c.h.b16 %v1151
        %v3827 = vunpack.c.l.b16 %v1152
        %v3828 = vunpack.c.l.b16 %v1153
        %v3829 = vunpack.c.h.b16 %v1153
        %v3830 = vunpack.c.l.b16 %v1154
        %v3831 = vunpack.c.h.b16 %v1154
        %v3832 = vunpack.c.l.b16 %v1155
        %v3833 = vunpack.c.h.b16 %v1155
        %v3834 = vunpack.c.l.b16 %v1156
        %v3835 = vunpack.c.h.b16 %v1156
        %v3836 = vunpack.c.l.b16 %v1157
        %v3837 = vunpack.c.h.b16 %v1157
        %v3838 = vunpack.c.l.b16 %v1158
        %v3839 = vunpack.c.l.b16 %v1159
        %v3840 = vunpack.c.h.b16 %v1159
        %v3841 = vunpack.c.l.b16 %v1160
        %v3842 = vunpack.c.h.b16 %v1160
        %v3843 = vunpack.c.l.b16 %v1161
        %v3844 = vunpack.c.h.b16 %v1161
        %v3845 = vunpack.c.l.b16 %v1162
        %v3846 = vunpack.c.h.b16 %v1162
        %v3847 = vunpack.c.l.b16 %v1163
        %v3848 = vunpack.c.h.b16 %v1163
        %v3849 = vunpack.c.l.b16 %v1164
        %v3850 = vunpack.c.l.b16 %v1165
        %v3851 = vunpack.c.h.b16 %v1165
        %v3852 = vunpack.c.l.b16 %v1166
        %v3853 = vunpack.c.h.b16 %v1166
        %v3854 = vunpack.c.l.b16 %v1167
        %v3855 = vunpack.c.h.b16 %v1167
        %v3856 = vunpack.c.l.b16 %v1168
        %v3857 = vunpack.c.h.b16 %v1168
        %v3858 = vunpack.c.l.b16 %v1169
        %v3859 = vunpack.c.h.b16 %v1169
        %v3860 = vunpack.c.l.b16 %v1170
        %v3861 = vunpack.c.l.b16 %v1171
        %v3862 = vunpack.c.h.b16 %v1171
        %v3863 = vunpack.c.l.b16 %v1172
        %v3864 = vunpack.c.h.b16 %v1172
        %v3865 = vunpack.c.l.b16 %v1173
        %v3866 = vunpack.c.h.b16 %v1173
        %v3867 = vunpack.c.l.b16 %v1174
        %v3868 = vunpack.c.h.b16 %v1174
        %v3869 = vunpack.c.l.b16 %v1175
        %v3870 = vunpack.c.h.b16 %v1175
        %v3871 = vunpack.c.l.b16 %v1176
        %v3872 = vunpack.c.l.b16 %v1177
        %v3873 = vunpack.c.h.b16 %v1177
        %v3874 = vunpack.c.l.b16 %v1178
        %v3875 = vunpack.c.h.b16 %v1178
        %v3876 = vunpack.c.l.b16 %v1179
        %v3877 = vunpack.c.h.b16 %v1179
        %v3878 = vunpack.c.l.b16 %v1180
        %v3879 = vunpack.c.h.b16 %v1180
        %v3880 = vunpack.c.l.b16 %v1181
        %v3881 = vunpack.c.h.b16 %v1181
        %v3882 = vunpack.c.l.b16 %v1182
        %v3883 = vunpack.c.l.b16 %v1183
        %v3884 = vunpack.c.h.b16 %v1183
        %v3885 = vunpack.c.l.b16 %v1184
        %v3886 = vunpack.c.h.b16 %v1184
        %v3887 = vunpack.c.l.b16 %v1185
        %v3888 = vunpack.c.h.b16 %v1185
        %v3889 = vunpack.c.l.b16 %v1186
        %v3890 = vunpack.c.h.b16 %v1186
        %v3891 = vunpack.c.l.b16 %v1187
        %v3892 = vunpack.c.h.b16 %v1187
        %v3893 = vunpack.c.l.b16 %v1188
        %v3894 = vunpack.c.l.b16 %v1189
        %v3895 = vunpack.c.h.b16 %v1189
        %v3896 = vunpack.c.l.b16 %v1190
        %v3897 = vunpack.c.h.b16 %v1190
        %v3898 = vunpack.c.l.b16 %v1191
        %v3899 = vunpack.c.h.b16 %v1191
        %v3900 = vunpack.c.l.b16 %v1192
        %v3901 = vunpack.c.h.b16 %v1192
        %v3902 = vunpack.c.l.b16 %v1193
        %v3903 = vunpack.c.h.b16 %v1193
        %v3904 = vunpack.c.l.b16 %v1194
        %v3905 = vunpack.c.l.b16 %v1195
        %v3906 = vunpack.c.h.b16 %v1195
        %v3907 = vunpack.c.l.b16 %v1196
        %v3908 = vunpack.c.h.b16 %v1196
        %v3909 = vunpack.c.l.b16 %v1197
        %v3910 = vunpack.c.h.b16 %v1197
        %v3911 = vunpack.c.l.b16 %v1198
        %v3912 = vunpack.c.h.b16 %v1198
        %v3913 = vunpack.c.l.b16 %v1199
        %v3914 = vunpack.c.h.b16 %v1199
        %v3915 = vunpack.c.l.b16 %v1200
        %v3916 = vunpack.c.l.b16 %v1201
        %v3917 = vunpack.c.h.b16 %v1201
        %v3918 = vunpack.c.l.b16 %v1202
        %v3919 = vunpack.c.h.b16 %v1202
        %v3920 = vunpack.c.l.b16 %v1203
        %v3921 = vunpack.c.h.b16 %v1203
        %v3922 = vunpack.c.l.b16 %v1204
        %v3923 = vunpack.c.h.b16 %v1204
        %v3924 = vunpack.c.l.b16 %v1205
        %v3925 = vunpack.c.h.b16 %v1205
        %v3926 = vunpack.c.l.b16 %v1206
        %v3927 = vunpack.c.l.b16 %v1207
        %v3928 = vunpack.c.h.b16 %v1207
        %v3929 = vunpack.c.l.b16 %v1208
        %v3930 = vunpack.c.h.b16 %v1208
        %v3931 = vunpack.c.l.b16 %v1209
        %v3932 = vunpack.c.h.b16 %v1209
        %v3933 = vunpack.c.l.b16 %v1210
        %v3934 = vunpack.c.h.b16 %v1210
        %v3935 = vunpack.c.l.b16 %v1211
        %v3936 = vunpack.c.h.b16 %v1211
        %v3937 = vunpack.c.l.b16 %v1212
        %v3938 = vunpack.c.l.b16 %v1213
        %v3939 = vunpack.c.h.b16 %v1213
        %v3940 = vunpack.c.l.b16 %v1214
        %v3941 = vunpack.c.h.b16 %v1214
        %v3942 = vunpack.c.l.b16 %v1215
        %v3943 = vunpack.c.h.b16 %v1215
        %v3944 = vunpack.c.l.b16 %v1216
        %v3945 = vunpack.c.h.b16 %v1216
        %v3946 = vunpack.c.l.b16 %v1217
        %v3947 = vunpack.c.h.b16 %v1217
        %v3948 = vunpack.c.l.b16 %v1218
        %v3949 = vunpack.c.l.b16 %v1219
        %v3950 = vunpack.c.h.b16 %v1219
        %v3951 = vunpack.c.l.b16 %v1220
        %v3952 = vunpack.c.h.b16 %v1220
        %v3953 = vunpack.c.l.b16 %v1221
        %v3954 = vunpack.c.h.b16 %v1221
        %v3955 = vunpack.c.l.b16 %v1222
        %v3956 = vunpack.c.h.b16 %v1222
        %v3957 = vunpack.c.l.b16 %v1223
        %v3958 = vunpack.c.h.b16 %v1223
        %v3959 = vunpack.c.l.b16 %v1224
        %v3960 = vunpack.c.l.b16 %v1225
        %v3961 = vunpack.c.h.b16 %v1225
        %v3962 = vunpack.c.l.b16 %v1226
        %v3963 = vunpack.c.h.b16 %v1226
        %v3964 = vunpack.c.l.b16 %v1227
        %v3965 = vunpack.c.h.b16 %v1227
        %v3966 = vunpack.c.l.b16 %v1228
        %v3967 = vunpack.c.h.b16 %v1228
        %v3968 = vunpack.c.l.b16 %v1229
        %v3969 = vunpack.c.h.b16 %v1229
        %v3970 = vunpack.c.l.b16 %v1230
        %v3971 = vunpack.c.l.b16 %v1231
        %v3972 = vunpack.c.h.b16 %v1231
        %v3973 = vunpack.c.l.b16 %v1232
        %v3974 = vunpack.c.h.b16 %v1232
        %v3975 = vunpack.c.l.b16 %v1233
        %v3976 = vunpack.c.h.b16 %v1233
        %v3977 = vunpack.c.l.b16 %v1234
        %v3978 = vunpack.c.h.b16 %v1234
        %v3979 = vunpack.c.l.b16 %v1235
        %v3980 = vunpack.c.h.b16 %v1235
        %v3981 = vunpack.c.l.b16 %v1236
        %v3982 = vunpack.c.l.b16 %v1237
        %v3983 = vunpack.c.h.b16 %v1237
        %v3984 = vunpack.c.l.b16 %v1238
        %v3985 = vunpack.c.h.b16 %v1238
        %v3986 = vunpack.c.l.b16 %v1239
        %v3987 = vunpack.c.h.b16 %v1239
        %v3988 = vunpack.c.l.b16 %v1240
        %v3989 = vunpack.c.h.b16 %v1240
        %v3990 = vunpack.c.l.b16 %v1241
        %v3991 = vunpack.c.h.b16 %v1241
        %v3992 = vunpack.c.l.b16 %v1242
        %v3993 = vunpack.c.l.b16 %v1243
        %v3994 = vunpack.c.h.b16 %v1243
        %v3995 = vunpack.c.l.b16 %v1244
        %v3996 = vunpack.c.h.b16 %v1244
        %v3997 = vunpack.c.l.b16 %v1245
        %v3998 = vunpack.c.h.b16 %v1245
        %v3999 = vunpack.c.l.b16 %v1246
        %v4000 = vunpack.c.h.b16 %v1246
        %v4001 = vunpack.c.l.b16 %v1247
        %v4002 = vunpack.c.h.b16 %v1247
        %v4003 = vunpack.c.l.b16 %v1248
        %v4004 = vunpack.c.l.b16 %v1249
        %v4005 = vunpack.c.h.b16 %v1249
        %v4006 = vunpack.c.l.b16 %v1250
        %v4007 = vunpack.c.h.b16 %v1250
        %v4008 = vunpack.c.l.b16 %v1251
        %v4009 = vunpack.c.h.b16 %v1251
        %v4010 = vunpack.c.l.b16 %v1252
        %v4011 = vunpack.c.h.b16 %v1252
        %v4012 = vunpack.c.l.b16 %v1253
        %v4013 = vunpack.c.h.b16 %v1253
        %v4014 = vunpack.c.l.b16 %v1254
        %v4015 = vunpack.c.l.b16 %v1255
        %v4016 = vunpack.c.h.b16 %v1255
        %v4017 = vunpack.c.l.b16 %v1256
        %v4018 = vunpack.c.h.b16 %v1256
        %v4019 = vunpack.c.l.b16 %v1257
        %v4020 = vunpack.c.h.b16 %v1257
        %v4021 = vunpack.c.l.b16 %v1258
        %v4022 = vunpack.c.h.b16 %v1258
        %v4023 = vunpack.c.l.b16 %v1259
        %v4024 = vunpack.c.h.b16 %v1259
        %v4025 = vunpack.c.l.b16 %v1260
        %v4026 = vunpack.c.l.b16 %v1261
        %v4027 = vunpack.c.h.b16 %v1261
        %v4028 = vunpack.c.l.b16 %v1262
        %v4029 = vunpack.c.h.b16 %v1262
        %v4030 = vunpack.c.l.b16 %v1263
        %v4031 = vunpack.c.h.b16 %v1263
        %v4032 = vunpack.c.l.b16 %v1264
        %v4033 = vunpack.c.h.b16 %v1264
        %v4034 = vunpack.c.l.b16 %v1265
        %v4035 = vunpack.c.h.b16 %v1265
        %v4036 = vunpack.c.l.b16 %v1266
        %v4037 = vunpack.c.l.b16 %v1267
        %v4038 = vunpack.c.h.b16 %v1267
        %v4039 = vunpack.c.l.b16 %v1268
        %v4040 = vunpack.c.h.b16 %v1268
        %v4041 = vunpack.c.l.b16 %v1269
        %v4042 = vunpack.c.h.b16 %v1269
        %v4043 = vunpack.c.l.b16 %v1270
        %v4044 = vunpack.c.h.b16 %v1270
        %v4045 = vunpack.c.l.b16 %v1271
        %v4046 = vunpack.c.h.b16 %v1271
        %v4047 = vunpack.c.l.b16 %v1272
        %v4048 = vunpack.c.l.b16 %v1273
        %v4049 = vunpack.c.h.b16 %v1273
        %v4050 = vunpack.c.l.b16 %v1274
        %v4051 = vunpack.c.h.b16 %v1274
        %v4052 = vunpack.c.l.b16 %v1275
        %v4053 = vunpack.c.h.b16 %v1275
        %v4054 = vunpack.c.l.b16 %v1276
        %v4055 = vunpack.c.h.b16 %v1276
        %v4056 = vunpack.c.l.b16 %v1277
        %v4057 = vunpack.c.h.b16 %v1277
        %v4058 = vunpack.c.l.b16 %v1278
        %v4059 = vunpack.c.l.b16 %v1279
        %v4060 = vunpack.c.h.b16 %v1279
        %v4061 = vunpack.c.l.b16 %v1280
        %v4062 = vunpack.c.h.b16 %v1280
        %v4063 = vunpack.c.l.b16 %v1281
        %v4064 = vunpack.c.h.b16 %v1281
        %v4065 = vunpack.c.l.b16 %v1282
        %v4066 = vunpack.c.h.b16 %v1282
        %v4067 = vunpack.c.l.b16 %v1283
        %v4068 = vunpack.c.h.b16 %v1283
        %v4069 = vunpack.c.l.b16 %v1284
        %v4070 = vunpack.c.l.b16 %v1285
        %v4071 = vunpack.c.h.b16 %v1285
        %v4072 = vunpack.c.l.b16 %v1286
        %v4073 = vunpack.c.h.b16 %v1286
        %v4074 = vunpack.c.l.b16 %v1287
        %v4075 = vunpack.c.h.b16 %v1287
        %v4076 = vunpack.c.l.b16 %v1288
        %v4077 = vunpack.c.h.b16 %v1288
        %v4078 = vunpack.c.l.b16 %v1289
        %v4079 = vunpack.c.h.b16 %v1289
        %v4080 = vunpack.c.l.b16 %v1290
        %v4081 = vunpack.c.l.b16 %v1291
        %v4082 = vunpack.c.h.b16 %v1291
        %v4083 = vunpack.c.l.b16 %v1292
        %v4084 = vunpack.c.h.b16 %v1292
        %v4085 = vunpack.c.l.b16 %v1293
        %v4086 = vunpack.c.h.b16 %v1293
        %v4087 = vunpack.c.l.b16 %v1294
        %v4088 = vunpack.c.h.b16 %v1294
        %v4089 = vunpack.c.l.b16 %v1295
        %v4090 = vunpack.c.h.b16 %v1295
        %v4091 = vunpack.c.l.b16 %v1296
        %v4092 = vunpack.c.l.b16 %v1297
        %v4093 = vunpack.c.h.b16 %v1297
        %v4094 = vunpack.c.l.b16 %v1298
        %v4095 = vunpack.c.h.b16 %v1298
        %v4096 = vunpack.c.l.b16 %v1299
        %v4097 = vunpack.c.h.b16 %v1299
        %v4098 = vunpack.c.l.b16 %v1300
        %v4099 = vunpack.c.h.b16 %v1300
        %v4100 = vunpack.c.l.b16 %v1301
        %v4101 = vunpack.c.h.b16 %v1301
        %v4102 = vunpack.c.l.b16 %v1302
        %v4103 = vunpack.c.l.b16 %v1303
        %v4104 = vunpack.c.h.b16 %v1303
        %v4105 = vunpack.c.l.b16 %v1304
        %v4106 = vunpack.c.h.b16 %v1304
        %v4107 = vunpack.c.l.b16 %v1305
        %v4108 = vunpack.c.h.b16 %v1305
        %v4109 = vunpack.c.l.b16 %v1306
        %v4110 = vunpack.c.h.b16 %v1306
        %v4111 = vunpack.c.l.b16 %v1307
        %v4112 = vunpack.c.h.b16 %v1307
        %v4113 = vunpack.c.l.b16 %v1308
        %v4114 = vunpack.c.l.b16 %v1309
        %v4115 = vunpack.c.h.b16 %v1309
        %v4116 = vunpack.c.l.b16 %v1310
        %v4117 = vunpack.c.h.b16 %v1310
        %v4118 = vunpack.c.l.b16 %v1311
        %v4119 = vunpack.c.h.b16 %v1311
        %v4120 = vunpack.c.l.b16 %v1312
        %v4121 = vunpack.c.h.b16 %v1312
        %v4122 = vunpack.c.l.b16 %v1313
        %v4123 = vunpack.c.h.b16 %v1313
        %v4124 = vunpack.c.l.b16 %v1314
        %v4125 = vunpack.c.l.b16 %v1315
        %v4126 = vunpack.c.h.b16 %v1315
        %v4127 = vunpack.c.l.b16 %v1316
        %v4128 = vunpack.c.h.b16 %v1316
        %v4129 = vunpack.c.l.b16 %v1317
        %v4130 = vunpack.c.h.b16 %v1317
        %v4131 = vunpack.c.l.b16 %v1318
        %v4132 = vunpack.c.h.b16 %v1318
        %v4133 = vunpack.c.l.b16 %v1319
        %v4134 = vunpack.c.h.b16 %v1319
        %v4135 = vunpack.c.l.b16 %v1320
        %v4136 = vunpack.c.l.b16 %v1321
        %v4137 = vunpack.c.h.b16 %v1321
        %v4138 = vunpack.c.l.b16 %v1322
        %v4139 = vunpack.c.h.b16 %v1322
        %v4140 = vunpack.c.l.b16 %v1323
        %v4141 = vunpack.c.h.b16 %v1323
        %v4142 = vunpack.c.l.b16 %v1324
        %v4143 = vunpack.c.h.b16 %v1324
        %v4144 = vunpack.c.l.b16 %v1325
        %v4145 = vunpack.c.h.b16 %v1325
        %v4146 = vunpack.c.l.b16 %v1326
        %v4147 = vunpack.c.l.b16 %v1327
        %v4148 = vunpack.c.h.b16 %v1327
        %v4149 = vunpack.c.l.b16 %v1328
        %v4150 = vunpack.c.h.b16 %v1328
        %v4151 = vunpack.c.l.b16 %v1329
        %v4152 = vunpack.c.h.b16 %v1329
        %v4153 = vunpack.c.l.b16 %v1330
        %v4154 = vunpack.c.h.b16 %v1330
        %v4155 = vunpack.c.l.b16 %v1331
        %v4156 = vunpack.c.h.b16 %v1331
        %v4157 = vunpack.c.l.b16 %v1332
        %v4158 = vunpack.c.l.b16 %v1333
        %v4159 = vunpack.c.h.b16 %v1333
        %v4160 = vunpack.c.l.b16 %v1334
        %v4161 = vunpack.c.h.b16 %v1334
        %v4162 = vunpack.c.l.b16 %v1335
        %v4163 = vunpack.c.h.b16 %v1335
        %v4164 = vunpack.c.l.b16 %v1336
        %v4165 = vunpack.c.h.b16 %v1336
        %v4166 = vunpack.c.l.b16 %v1337
        %v4167 = vunpack.c.h.b16 %v1337
        %v4168 = vunpack.c.l.b16 %v1338
        %v4169 = vunpack.c.l.b16 %v1339
        %v4170 = vunpack.c.h.b16 %v1339
        %v4171 = vunpack.c.l.b16 %v1340
        %v4172 = vunpack.c.h.b16 %v1340
        %v4173 = vunpack.c.l.b16 %v1341
        %v4174 = vunpack.c.h.b16 %v1341
        %v4175 = vunpack.c.l.b16 %v1342
        %v4176 = vunpack.c.h.b16 %v1342
        %v4177 = vunpack.c.l.b16 %v1343
        %v4178 = vunpack.c.h.b16 %v1343
        %v4179 = vunpack.c.l.b16 %v1344
        %v4180 = vunpack.c.l.b16 %v1345
        %v4181 = vunpack.c.h.b16 %v1345
        %v4182 = vunpack.c.l.b16 %v1346
        %v4183 = vunpack.c.h.b16 %v1346
        %v4184 = vunpack.c.l.b16 %v1347
        %v4185 = vunpack.c.h.b16 %v1347
        %v4186 = vunpack.c.l.b16 %v1348
        %v4187 = vunpack.c.h.b16 %v1348
        %v4188 = vunpack.c.l.b16 %v1349
        %v4189 = vunpack.c.h.b16 %v1349
        %v4190 = vunpack.c.l.b16 %v1350
        %v4191 = vunpack.c.l.b16 %v1351
        %v4192 = vunpack.c.h.b16 %v1351
        %v4193 = vunpack.c.l.b16 %v1352
        %v4194 = vunpack.c.h.b16 %v1352
        %v4195 = vunpack.c.l.b16 %v1353
        %v4196 = vunpack.c.h.b16 %v1353
        %v4197 = vunpack.c.l.b16 %v1354
        %v4198 = vunpack.c.h.b16 %v1354
        %v4199 = vunpack.c.l.b16 %v1355
        %v4200 = vunpack.c.h.b16 %v1355
        %v4201 = vunpack.c.l.b16 %v1356
        %v4202 = vunpack.c.l.b16 %v1357
        %v4203 = vunpack.c.h.b16 %v1357
        %v4204 = vunpack.c.l.b16 %v1358
        %v4205 = vunpack.c.h.b16 %v1358
        %v4206 = vunpack.c.l.b16 %v1359
        %v4207 = vunpack.c.h.b16 %v1359
        %v4208 = vunpack.c.l.b16 %v1360
        %v4209 = vunpack.c.h.b16 %v1360
        %v4210 = vunpack.c.l.b16 %v1361
        %v4211 = vunpack.c.h.b16 %v1361
        %v4212 = vunpack.c.l.b16 %v1362
        %v4213 = vunpack.c.l.b16 %v1363
        %v4214 = vunpack.c.h.b16 %v1363
        %v4215 = vunpack.c.l.b16 %v1364
        %v4216 = vunpack.c.h.b16 %v1364
        %v4217 = vunpack.c.l.b16 %v1365
        %v4218 = vunpack.c.h.b16 %v1365
        %v4219 = vunpack.c.l.b16 %v1366
        %v4220 = vunpack.c.h.b16 %v1366
        %v4221 = vunpack.c.l.b16 %v1367
        %v4222 = vunpack.c.h.b16 %v1367
        %v4223 = vunpack.c.l.b16 %v1368
        %v4224 = vunpack.c.l.b16 %v1369
        %v4225 = vunpack.c.h.b16 %v1369
        %v4226 = vunpack.c.l.b16 %v1370
        %v4227 = vunpack.c.h.b16 %v1370
        %v4228 = vunpack.c.l.b16 %v1371
        %v4229 = vunpack.c.h.b16 %v1371
        %v4230 = vunpack.c.l.b16 %v1372
        %v4231 = vunpack.c.h.b16 %v1372
        %v4232 = vunpack.c.l.b16 %v1373
        %v4233 = vunpack.c.h.b16 %v1373
        %v4234 = vunpack.c.l.b16 %v1374
        %v4235 = vunpack.c.l.b16 %v1375
        %v4236 = vunpack.c.h.b16 %v1375
        %v4237 = vunpack.c.l.b16 %v1376
        %v4238 = vunpack.c.h.b16 %v1376
        %v4239 = vunpack.c.l.b16 %v1377
        %v4240 = vunpack.c.h.b16 %v1377
        %v4241 = vunpack.c.l.b16 %v1378
        %v4242 = vunpack.c.h.b16 %v1378
        %v4243 = vunpack.c.l.b16 %v1379
        %v4244 = vunpack.c.h.b16 %v1379
        %v4245 = vunpack.c.l.b16 %v1380
        %v4246 = vunpack.c.l.b16 %v1381
        %v4247 = vunpack.c.h.b16 %v1381
        %v4248 = vunpack.c.l.b16 %v1382
        %v4249 = vunpack.c.h.b16 %v1382
        %v4250 = vunpack.c.l.b16 %v1383
        %v4251 = vunpack.c.h.b16 %v1383
        %v4252 = vunpack.c.l.b16 %v1384
        %v4253 = vunpack.c.h.b16 %v1384
        %v4254 = vunpack.c.l.b16 %v1385
        %v4255 = vunpack.c.h.b16 %v1385
        %v4256 = vunpack.c.l.b16 %v1386
        %v4257 = vunpack.c.l.b16 %v1387
        %v4258 = vunpack.c.h.b16 %v1387
        %v4259 = vunpack.c.l.b16 %v1388
        %v4260 = vunpack.c.h.b16 %v1388
        %v4261 = vunpack.c.l.b16 %v1389
        %v4262 = vunpack.c.h.b16 %v1389
        %v4263 = vunpack.c.l.b16 %v1390
        %v4264 = vunpack.c.h.b16 %v1390
        %v4265 = vunpack.c.l.b16 %v1391
        %v4266 = vunpack.c.h.b16 %v1391
        %v4267 = vunpack.c.l.b16 %v1392
        %v4268 = vunpack.c.l.b16 %v1393
        %v4269 = vunpack.c.h.b16 %v1393
        %v4270 = vunpack.c.l.b16 %v1394
        %v4271 = vunpack.c.h.b16 %v1394
        %v4272 = vunpack.c.l.b16 %v1395
        %v4273 = vunpack.c.h.b16 %v1395
        %v4274 = vunpack.c.l.b16 %v1396
        %v4275 = vunpack.c.h.b16 %v1396
        %v4276 = vunpack.c.l.b16 %v1397
        %v4277 = vunpack.c.h.b16 %v1397
        %v4278 = vunpack.c.l.b16 %v1398
        %v4279 = vunpack.c.l.b16 %v1399
        %v4280 = vunpack.c.h.b16 %v1399
        %v4281 = vunpack.c.l.b16 %v1400
        %v4282 = vunpack.c.h.b16 %v1400
        %v4283 = vunpack.c.l.b16 %v1401
        %v4284 = vunpack.c.h.b16 %v1401
        %v4285 = vunpack.c.l.b16 %v1402
        %v4286 = vunpack.c.h.b16 %v1402
        %v4287 = vunpack.c.l.b16 %v1403
        %v4288 = vunpack.c.h.b16 %v1403
        %v4289 = vunpack.c.l.b16 %v1404
        %v4290 = vunpack.c.l.b16 %v1405
        %v4291 = vunpack.c.h.b16 %v1405
        %v4292 = vunpack.c.l.b16 %v1406
        %v4293 = vunpack.c.h.b16 %v1406
        %v4294 = vunpack.c.l.b16 %v1407
        %v4295 = vunpack.c.h.b16 %v1407
        %v4296 = vunpack.c.l.b16 %v1408
        %v4297 = vunpack.c.h.b16 %v1408
        %v4298 = vunpack.c.l.b16 %v1409
        %v4299 = vunpack.c.h.b16 %v1409
        %v4300 = vunpack.c.l.b16 %v1410
        %v4301 = vunpack.c.l.b16 %v1411
        %v4302 = vunpack.c.h.b16 %v1411
        %v4303 = vunpack.c.l.b16 %v1412
        %v4304 = vunpack.c.h.b16 %v1412
        %v4305 = vunpack.c.l.b16 %v1413
        %v4306 = vunpack.c.h.b16 %v1413
        %v4307 = vunpack.c.l.b16 %v1414
        %v4308 = vunpack.c.h.b16 %v1414
        %v4309 = vunpack.c.l.b16 %v1415
        %v4310 = vunpack.c.h.b16 %v1415
        %v4311 = vunpack.c.l.b16 %v1416
        %v4312 = vunpack.c.l.b16 %v1417
        %v4313 = vunpack.c.h.b16 %v1417
        %v4314 = vunpack.c.l.b16 %v1418
        %v4315 = vunpack.c.h.b16 %v1418
        %v4316 = vunpack.c.l.b16 %v1419
        %v4317 = vunpack.c.h.b16 %v1419
        %v4318 = vunpack.c.l.b16 %v1420
        %v4319 = vunpack.c.h.b16 %v1420
        %v4320 = vunpack.c.l.b16 %v1421
        %v4321 = vunpack.c.h.b16 %v1421
        %v4322 = vunpack.c.l.b16 %v1422
        %v4323 = vunpack.c.l.b16 %v1423
        %v4324 = vunpack.c.h.b16 %v1423
        %v4325 = vunpack.c.l.b16 %v1424
        %v4326 = vunpack.c.h.b16 %v1424
        %v4327 = vunpack.c.l.b16 %v1425
        %v4328 = vunpack.c.h.b16 %v1425
        %v4329 = vunpack.c.l.b16 %v1426
        %v4330 = vunpack.c.h.b16 %v1426
        %v4331 = vunpack.c.l.b16 %v1427
        %v4332 = vunpack.c.h.b16 %v1427
        %v4333 = vunpack.c.l.b16 %v1428
        %v4334 = vunpack.c.l.b16 %v1429
        %v4335 = vunpack.c.h.b16 %v1429
        %v4336 = vunpack.c.l.b16 %v1430
        %v4337 = vunpack.c.h.b16 %v1430
        %v4338 = vunpack.c.l.b16 %v1431
        %v4339 = vunpack.c.h.b16 %v1431
        %v4340 = vunpack.c.l.b16 %v1432
        %v4341 = vunpack.c.h.b16 %v1432
        %v4342 = vunpack.c.l.b16 %v1433
        %v4343 = vunpack.c.h.b16 %v1433
        %v4344 = vunpack.c.l.b16 %v1434
        %v4345 = vunpack.c.l.b16 %v1435
        %v4346 = vunpack.c.h.b16 %v1435
        %v4347 = vunpack.c.l.b16 %v1436
        %v4348 = vunpack.c.h.b16 %v1436
        %v4349 = vunpack.c.l.b16 %v1437
        %v4350 = vunpack.c.h.b16 %v1437
        %v4351 = vunpack.c.l.b16 %v1438
        %v4352 = vunpack.c.h.b16 %v1438
        %v4353 = vunpack.c.l.b16 %v1439
        %v4354 = vunpack.c.h.b16 %v1439
        %v4355 = vunpack.c.l.b16 %v1440
        %v4356 = vunpack.c.l.b16 %v1441
        %v4357 = vunpack.c.h.b16 %v1441
        %v4358 = vunpack.c.l.b16 %v1442
        %v4359 = vunpack.c.h.b16 %v1442
        %v4360 = vunpack.c.l.b16 %v1443
        %v4361 = vunpack.c.h.b16 %v1443
        %v4362 = vunpack.c.l.b16 %v1444
        %v4363 = vunpack.c.h.b16 %v1444
        %v4364 = vunpack.c.l.b16 %v1445
        %v4365 = vunpack.c.h.b16 %v1445
        %v4366 = vunpack.c.l.b16 %v1446
        %v4367 = vunpack.c.l.b16 %v1447
        %v4368 = vunpack.c.h.b16 %v1447
        %v4369 = vunpack.c.l.b16 %v1448
        %v4370 = vunpack.c.h.b16 %v1448
        %v4371 = vunpack.c.l.b16 %v1449
        %v4372 = vunpack.c.h.b16 %v1449
        %v4373 = vunpack.c.l.b16 %v1450
        %v4374 = vunpack.c.h.b16 %v1450
        %v4375 = vunpack.c.l.b16 %v1451
        %v4376 = vunpack.c.h.b16 %v1451
        %v4377 = vunpack.c.l.b16 %v1452
        %v4378 = vunpack.c.l.b16 %v1453
        %v4379 = vunpack.c.h.b16 %v1453
        %v4380 = vunpack.c.l.b16 %v1454
        %v4381 = vunpack.c.h.b16 %v1454
        %v4382 = vunpack.c.l.b16 %v1455
        %v4383 = vunpack.c.h.b16 %v1455
        %v4384 = vunpack.c.l.b16 %v1456
        %v4385 = vunpack.c.h.b16 %v1456
        %v4386 = vunpack.c.l.b16 %v1457
        %v4387 = vunpack.c.h.b16 %v1457
        %v4388 = vunpack.c.l.b16 %v1458
        %v4389 = vunpack.c.l.b16 %v1459
        %v4390 = vunpack.c.h.b16 %v1459
        %v4391 = vunpack.c.l.b16 %v1460
        %v4392 = vunpack.c.h.b16 %v1460
        %v4393 = vunpack.c.l.b16 %v1461
        %v4394 = vunpack.c.h.b16 %v1461
        %v4395 = vunpack.c.l.b16 %v1462
        %v4396 = vunpack.c.h.b16 %v1462
        %v4397 = vunpack.c.l.b16 %v1463
        %v4398 = vunpack.c.h.b16 %v1463
        %v4399 = vunpack.c.l.b16 %v1464
        %v4400 = vunpack.c.l.b16 %v1465
        %v4401 = vunpack.c.h.b16 %v1465
        %v4402 = vunpack.c.l.b16 %v1466
        %v4403 = vunpack.c.h.b16 %v1466
        %v4404 = vunpack.c.l.b16 %v1467
        %v4405 = vunpack.c.h.b16 %v1467
        %v4406 = vunpack.c.l.b16 %v1468
        %v4407 = vunpack.c.h.b16 %v1468
        %v4408 = vunpack.c.l.b16 %v1469
        %v4409 = vunpack.c.h.b16 %v1469
        %v4410 = vunpack.c.l.b16 %v1470
        %v4411 = vpack.c.b16 %v2662, %v2651
        %v4412 = vpack.c.b16 %v2663, %v2652
        %v4413 = vpack.c.b16 %v2664, %v2653
        %v4414 = vpack.c.b16 %v2665, %v2654
        %v4415 = vpack.c.b16 %v2666, %v2655
        %v4416 = vpack.c.b16 %v2667, %v2656
        %v4417 = vpack.c.b16 %v2668, %v2657
        %v4418 = vpack.c.b16 %v2669, %v2658
        %v4419 = vpack.c.b16 %v2670, %v2659
        %v4420 = vpack.c.b16 %v2671, %v2660
        %v4421 = vpack.c.b16 %v2672, %v2661
        %v4422 = vpack.c.b16 %v2684, %v2673
        %v4423 = vpack.c.b16 %v2685, %v2674
        %v4424 = vpack.c.b16 %v2686, %v2675
        %v4425 = vpack.c.b16 %v2687, %v2676
        %v4426 = vpack.c.b16 %v2688, %v2677
        %v4427 = vpack.c.b16 %v2689, %v2678
        %v4428 = vpack.c.b16 %v2690, %v2679
        %v4429 = vpack.c.b16 %v2691, %v2680
        %v4430 = vpack.c.b16 %v2692, %v2681
        %v4431 = vpack.c.b16 %v2693, %v2682
        %v4432 = vpack.c.b16 %v2694, %v2683
        %v4433 = vpack.c.b16 %v2706, %v2695
        %v4434 = vpack.c.b16 %v2707, %v2696
        %v4435 = vpack.c.b16 %v2708, %v2697
        %v4436 = vpack.c.b16 %v2709, %v2698
        %v4437 = vpack.c.b16 %v2710, %v2699
        %v4438 = vpack.c.b16 %v2711, %v2700
        %v4439 = vpack.c.b16 %v2712, %v2701
        %v4440 = vpack.c.b16 %v2713, %v2702
        %v4441 = vpack.c.b16 %v2714, %v2703
        %v4442 = vpack.c.b16 %v2715, %v2704
        %v4443 = vpack.c.b16 %v2716, %v2705
        %v4444 = vpack.c.b16 %v2728, %v2717
        %v4445 = vpack.c.b16 %v2729, %v2718
        %v4446 = vpack.c.b16 %v2730, %v2719
        %v4447 = vpack.c.b16 %v2731, %v2720
        %v4448 = vpack.c.b16 %v2732, %v2721
        %v4449 = vpack.c.b16 %v2733, %v2722
        %v4450 = vpack.c.b16 %v2734, %v2723
        %v4451 = vpack.c.b16 %v2735, %v2724
        %v4452 = vpack.c.b16 %v2736, %v2725
        %v4453 = vpack.c.b16 %v2737, %v2726
        %v4454 = vpack.c.b16 %v2738, %v2727
        %v4455 = vpack.c.b16 %v2750, %v2739
        %v4456 = vpack.c.b16 %v2751, %v2740
        %v4457 = vpack.c.b16 %v2752, %v2741
        %v4458 = vpack.c.b16 %v2753, %v2742
        %v4459 = vpack.c.b16 %v2754, %v2743
        %v4460 = vpack.c.b16 %v2755, %v2744
        %v4461 = vpack.c.b16 %v2756, %v2745
        %v4462 = vpack.c.b16 %v2757, %v2746
        %v4463 = vpack.c.b16 %v2758, %v2747
        %v4464 = vpack.c.b16 %v2759, %v2748
        %v4465 = vpack.c.b16 %v2760, %v2749
        %v4466 = vpack.c.b16 %v2772, %v2761
        %v4467 = vpack.c.b16 %v2773, %v2762
        %v4468 = vpack.c.b16 %v2774, %v2763
        %v4469 = vpack.c.b16 %v2775, %v2764
        %v4470 = vpack.c.b16 %v2776, %v2765
        %v4471 = vpack.c.b16 %v2777, %v2766
        %v4472 = vpack.c.b16 %v2778, %v2767
        %v4473 = vpack.c.b16 %v2779, %v2768
        %v4474 = vpack.c.b16 %v2780, %v2769
        %v4475 = vpack.c.b16 %v2781, %v2770
        %v4476 = vpack.c.b16 %v2782, %v2771
        %v4477 = vpack.c.b16 %v2794, %v2783
        %v4478 = vpack.c.b16 %v2795, %v2784
        %v4479 = vpack.c.b16 %v2796, %v2785
        %v4480 = vpack.c.b16 %v2797, %v2786
        %v4481 = vpack.c.b16 %v2798, %v2787
        %v4482 = vpack.c.b16 %v2799, %v2788
        %v4483 = vpack.c.b16 %v2800, %v2789
        %v4484 = vpack.c.b16 %v2801, %v2790
        %v4485 = vpack.c.b16 %v2802, %v2791
        %v4486 = vpack.c.b16 %v2803, %v2792
        %v4487 = vpack.c.b16 %v2804, %v2793
        %v4488 = vpack.c.b16 %v2816, %v2805
        %v4489 = vpack.c.b16 %v2817, %v2806
        %v4490 = vpack.c.b16 %v2818, %v2807
        %v4491 = vpack.c.b16 %v2819, %v2808
        %v4492 = vpack.c.b16 %v2820, %v2809
        %v4493 = vpack.c.b16 %v2821, %v2810
        %v4494 = vpack.c.b16 %v2822, %v2811
        %v4495 = vpack.c.b16 %v2823, %v2812
        %v4496 = vpack.c.b16 %v2824, %v2813
        %v4497 = vpack.c.b16 %v2825, %v2814
        %v4498 = vpack.c.b16 %v2826, %v2815
        %v4499 = vpack.c.b16 %v2838, %v2827
        %v4500 = vpack.c.b16 %v2839, %v2828
        %v4501 = vpack.c.b16 %v2840, %v2829
        %v4502 = vpack.c.b16 %v2841, %v2830
        %v4503 = vpack.c.b16 %v2842, %v2831
        %v4504 = vpack.c.b16 %v2843, %v2832
        %v4505 = vpack.c.b16 %v2844, %v2833
        %v4506 = vpack.c.b16 %v2845, %v2834
        %v4507 = vpack.c.b16 %v2846, %v2835
        %v4508 = vpack.c.b16 %v2847, %v2836
        %v4509 = vpack.c.b16 %v2848, %v2837
        %v4510 = vpack.c.b16 %v2860, %v2849
        %v4511 = vpack.c.b16 %v2861, %v2850
        %v4512 = vpack.c.b16 %v2862, %v2851
        %v4513 = vpack.c.b16 %v2863, %v2852
        %v4514 = vpack.c.b16 %v2864, %v2853
        %v4515 = vpack.c.b16 %v2865, %v2854
        %v4516 = vpack.c.b16 %v2866, %v2855
        %v4517 = vpack.c.b16 %v2867, %v2856
        %v4518 = vpack.c.b16 %v2868, %v2857
        %v4519 = vpack.c.b16 %v2869, %v2858
        %v4520 = vpack.c.b16 %v2870, %v2859
        %v4521 = vpack.c.b16 %v2882, %v2871
        %v4522 = vpack.c.b16 %v2883, %v2872
        %v4523 = vpack.c.b16 %v2884, %v2873
        %v4524 = vpack.c.b16 %v2885, %v2874
        %v4525 = vpack.c.b16 %v2886, %v2875
        %v4526 = vpack.c.b16 %v2887, %v2876
        %v4527 = vpack.c.b16 %v2888, %v2877
        %v4528 = vpack.c.b16 %v2889, %v2878
        %v4529 = vpack.c.b16 %v2890, %v2879
        %v4530 = vpack.c.b16 %v2891, %v2880
        %v4531 = vpack.c.b16 %v2892, %v2881
        %v4532 = vpack.c.b16 %v2904, %v2893
        %v4533 = vpack.c.b16 %v2905, %v2894
        %v4534 = vpack.c.b16 %v2906, %v2895
        %v4535 = vpack.c.b16 %v2907, %v2896
        %v4536 = vpack.c.b16 %v2908, %v2897
        %v4537 = vpack.c.b16 %v2909, %v2898
        %v4538 = vpack.c.b16 %v2910, %v2899
        %v4539 = vpack.c.b16 %v2911, %v2900
        %v4540 = vpack.c.b16 %v2912, %v2901
        %v4541 = vpack.c.b16 %v2913, %v2902
        %v4542 = vpack.c.b16 %v2914, %v2903
        %v4543 = vpack.c.b16 %v2926, %v2915
        %v4544 = vpack.c.b16 %v2927, %v2916
        %v4545 = vpack.c.b16 %v2928, %v2917
        %v4546 = vpack.c.b16 %v2929, %v2918
        %v4547 = vpack.c.b16 %v2930, %v2919
        %v4548 = vpack.c.b16 %v2931, %v2920
        %v4549 = vpack.c.b16 %v2932, %v2921
        %v4550 = vpack.c.b16 %v2933, %v2922
        %v4551 = vpack.c.b16 %v2934, %v2923
        %v4552 = vpack.c.b16 %v2935, %v2924
        %v4553 = vpack.c.b16 %v2936, %v2925
        %v4554 = vpack.c.b16 %v2948, %v2937
        %v4555 = vpack.c.b16 %v2949, %v2938
        %v4556 = vpack.c.b16 %v2950, %v2939
        %v4557 = vpack.c.b16 %v2951, %v2940
        %v4558 = vpack.c.b16 %v2952, %v2941
        %v4559 = vpack.c.b16 %v2953, %v2942
        %v4560 = vpack.c.b16 %v2954, %v2943
        %v4561 = vpack.c.b16 %v2955, %v2944
        %v4562 = vpack.c.b16 %v2956, %v2945
        %v4563 = vpack.c.b16 %v2957, %v2946
        %v4564 = vpack.c.b16 %v2958, %v2947
        %v4565 = vpack.c.b16 %v2970, %v2959
        %v4566 = vpack.c.b16 %v2971, %v2960
        %v4567 = vpack.c.b16 %v2972, %v2961
        %v4568 = vpack.c.b16 %v2973, %v2962
        %v4569 = vpack.c.b16 %v2974, %v2963
        %v4570 = vpack.c.b16 %v2975, %v2964
        %v4571 = vpack.c.b16 %v2976, %v2965
        %v4572 = vpack.c.b16 %v2977, %v2966
        %v4573 = vpack.c.b16 %v2978, %v2967
        %v4574 = vpack.c.b16 %v2979, %v2968
        %v4575 = vpack.c.b16 %v2980, %v2969
        %v4576 = vpack.c.b16 %v2992, %v2981
        %v4577 = vpack.c.b16 %v2993, %v2982
        %v4578 = vpack.c.b16 %v2994, %v2983
        %v4579 = vpack.c.b16 %v2995, %v2984
        %v4580 = vpack.c.b16 %v2996, %v2985
        %v4581 = vpack.c.b16 %v2997, %v2986
        %v4582 = vpack.c.b16 %v2998, %v2987
        %v4583 = vpack.c.b16 %v2999, %v2988
        %v4584 = vpack.c.b16 %v3000, %v2989
        %v4585 = vpack.c.b16 %v3001, %v2990
        %v4586 = vpack.c.b16 %v3002, %v2991
        %v4587 = vpack.c.b16 %v3014, %v3003
        %v4588 = vpack.c.b16 %v3015, %v3004
        %v4589 = vpack.c.b16 %v3016, %v3005
        %v4590 = vpack.c.b16 %v3017, %v3006
        %v4591 = vpack.c.b16 %v3018, %v3007
        %v4592 = vpack.c.b16 %v3019, %v3008
        %v4593 = vpack.c.b16 %v3020, %v3009
        %v4594 = vpack.c.b16 %v3021, %v3010
        %v4595 = vpack.c.b16 %v3022, %v3011
        %v4596 = vpack.c.b16 %v3023, %v3012
        %v4597 = vpack.c.b16 %v3024, %v3013
        %v4598 = vpack.c.b16 %v3036, %v3025
        %v4599 = vpack.c.b16 %v3037, %v3026
        %v4600 = vpack.c.b16 %v3038, %v3027
        %v4601 = vpack.c.b16 %v3039, %v3028
        %v4602 = vpack.c.b16 %v3040, %v3029
        %v4603 = vpack.c.b16 %v3041, %v3030
        %v4604 = vpack.c.b16 %v3042, %v3031
        %v4605 = vpack.c.b16 %v3043, %v3032
        %v4606 = vpack.c.b16 %v3044, %v3033
        %v4607 = vpack.c.b16 %v3045, %v3034
        %v4608 = vpack.c.b16 %v3046, %v3035
        %v4609 = vpack.c.b16 %v3058, %v3047
        %v4610 = vpack.c.b16 %v3059, %v3048
        %v4611 = vpack.c.b16 %v3060, %v3049
        %v4612 = vpack.c.b16 %v3061, %v3050
        %v4613 = vpack.c.b16 %v3062, %v3051
        %v4614 = vpack.c.b16 %v3063, %v3052
        %v4615 = vpack.c.b16 %v3064, %v3053
        %v4616 = vpack.c.b16 %v3065, %v3054
        %v4617 = vpack.c.b16 %v3066, %v3055
        %v4618 = vpack.c.b16 %v3067, %v3056
        %v4619 = vpack.c.b16 %v3068, %v3057
        %v4620 = vpack.c.b16 %v3080, %v3069
        %v4621 = vpack.c.b16 %v3081, %v3070
        %v4622 = vpack.c.b16 %v3082, %v3071
        %v4623 = vpack.c.b16 %v3083, %v3072
        %v4624 = vpack.c.b16 %v3084, %v3073
        %v4625 = vpack.c.b16 %v3085, %v3074
        %v4626 = vpack.c.b16 %v3086, %v3075
        %v4627 = vpack.c.b16 %v3087, %v3076
        %v4628 = vpack.c.b16 %v3088, %v3077
        %v4629 = vpack.c.b16 %v3089, %v3078
        %v4630 = vpack.c.b16 %v3090, %v3079
        %v4631 = vpack.c.b16 %v3102, %v3091
        %v4632 = vpack.c.b16 %v3103, %v3092
        %v4633 = vpack.c.b16 %v3104, %v3093
        %v4634 = vpack.c.b16 %v3105, %v3094
        %v4635 = vpack.c.b16 %v3106, %v3095
        %v4636 = vpack.c.b16 %v3107, %v3096
        %v4637 = vpack.c.b16 %v3108, %v3097
        %v4638 = vpack.c.b16 %v3109, %v3098
        %v4639 = vpack.c.b16 %v3110, %v3099
        %v4640 = vpack.c.b16 %v3111, %v3100
        %v4641 = vpack.c.b16 %v3112, %v3101
        %v4642 = vpack.c.b16 %v3124, %v3113
        %v4643 = vpack.c.b16 %v3125, %v3114
        %v4644 = vpack.c.b16 %v3126, %v3115
        %v4645 = vpack.c.b16 %v3127, %v3116
        %v4646 = vpack.c.b16 %v3128, %v3117
        %v4647 = vpack.c.b16 %v3129, %v3118
        %v4648 = vpack.c.b16 %v3130, %v3119
        %v4649 = vpack.c.b16 %v3131, %v3120
        %v4650 = vpack.c.b16 %v3132, %v3121
        %v4651 = vpack.c.b16 %v3133, %v3122
        %v4652 = vpack.c.b16 %v3134, %v3123
        %v4653 = vpack.c.b16 %v3146, %v3135
        %v4654 = vpack.c.b16 %v3147, %v3136
        %v4655 = vpack.c.b16 %v3148, %v3137
        %v4656 = vpack.c.b16 %v3149, %v3138
        %v4657 = vpack.c.b16 %v3150, %v3139
        %v4658 = vpack.c.b16 %v3151, %v3140
        %v4659 = vpack.c.b16 %v3152, %v3141
        %v4660 = vpack.c.b16 %v3153, %v3142
        %v4661 = vpack.c.b16 %v3154, %v3143
        %v4662 = vpack.c.b16 %v3155, %v3144
        %v4663 = vpack.c.b16 %v3156, %v3145
        %v4664 = vpack.c.b16 %v3168, %v3157
        %v4665 = vpack.c.b16 %v3169, %v3158
        %v4666 = vpack.c.b16 %v3170, %v3159
        %v4667 = vpack.c.b16 %v3171, %v3160
        %v4668 = vpack.c.b16 %v3172, %v3161
        %v4669 = vpack.c.b16 %v3173, %v3162
        %v4670 = vpack.c.b16 %v3174, %v3163
        %v4671 = vpack.c.b16 %v3175, %v3164
        %v4672 = vpack.c.b16 %v3176, %v3165
        %v4673 = vpack.c.b16 %v3177, %v3166
        %v4674 = vpack.c.b16 %v3178, %v3167
        %v4675 = vpack.c.b16 %v3190, %v3179
        %v4676 = vpack.c.b16 %v3191, %v3180
        %v4677 = vpack.c.b16 %v3192, %v3181
        %v4678 = vpack.c.b16 %v3193, %v3182
        %v4679 = vpack.c.b16 %v3194, %v3183
        %v4680 = vpack.c.b16 %v3195, %v3184
        %v4681 = vpack.c.b16 %v3196, %v3185
        %v4682 = vpack.c.b16 %v3197, %v3186
        %v4683 = vpack.c.b16 %v3198, %v3187
        %v4684 = vpack.c.b16 %v3199, %v3188
        %v4685 = vpack.c.b16 %v3200, %v3189
        %v4686 = vpack.c.b16 %v3212, %v3201
        %v4687 = vpack.c.b16 %v3213, %v3202
        %v4688 = vpack.c.b16 %v3214, %v3203
        %v4689 = vpack.c.b16 %v3215, %v3204
        %v4690 = vpack.c.b16 %v3216, %v3205
        %v4691 = vpack.c.b16 %v3217, %v3206
        %v4692 = vpack.c.b16 %v3218, %v3207
        %v4693 = vpack.c.b16 %v3219, %v3208
        %v4694 = vpack.c.b16 %v3220, %v3209
        %v4695 = vpack.c.b16 %v3221, %v3210
        %v4696 = vpack.c.b16 %v3222, %v3211
        %v4697 = vpack.c.b16 %v3234, %v3223
        %v4698 = vpack.c.b16 %v3235, %v3224
        %v4699 = vpack.c.b16 %v3236, %v3225
        %v4700 = vpack.c.b16 %v3237, %v3226
        %v4701 = vpack.c.b16 %v3238, %v3227
        %v4702 = vpack.c.b16 %v3239, %v3228
        %v4703 = vpack.c.b16 %v3240, %v3229
        %v4704 = vpack.c.b16 %v3241, %v3230
        %v4705 = vpack.c.b16 %v3242, %v3231
        %v4706 = vpack.c.b16 %v3243, %v3232
        %v4707 = vpack.c.b16 %v3244, %v3233
        %v4708 = vpack.c.b16 %v3256, %v3245
        %v4709 = vpack.c.b16 %v3257, %v3246
        %v4710 = vpack.c.b16 %v3258, %v3247
        %v4711 = vpack.c.b16 %v3259, %v3248
        %v4712 = vpack.c.b16 %v3260, %v3249
        %v4713 = vpack.c.b16 %v3261, %v3250
        %v4714 = vpack.c.b16 %v3262, %v3251
        %v4715 = vpack.c.b16 %v3263, %v3252
        %v4716 = vpack.c.b16 %v3264, %v3253
        %v4717 = vpack.c.b16 %v3265, %v3254
        %v4718 = vpack.c.b16 %v3266, %v3255
        %v4719 = vpack.c.b16 %v3278, %v3267
        %v4720 = vpack.c.b16 %v3279, %v3268
        %v4721 = vpack.c.b16 %v3280, %v3269
        %v4722 = vpack.c.b16 %v3281, %v3270
        %v4723 = vpack.c.b16 %v3282, %v3271
        %v4724 = vpack.c.b16 %v3283, %v3272
        %v4725 = vpack.c.b16 %v3284, %v3273
        %v4726 = vpack.c.b16 %v3285, %v3274
        %v4727 = vpack.c.b16 %v3286, %v3275
        %v4728 = vpack.c.b16 %v3287, %v3276
        %v4729 = vpack.c.b16 %v3288, %v3277
        %v4730 = vpack.c.b16 %v3300, %v3289
        %v4731 = vpack.c.b16 %v3301, %v3290
        %v4732 = vpack.c.b16 %v3302, %v3291
        %v4733 = vpack.c.b16 %v3303, %v3292
        %v4734 = vpack.c.b16 %v3304, %v3293
        %v4735 = vpack.c.b16 %v3305, %v3294
        %v4736 = vpack.c.b16 %v3306, %v3295
        %v4737 = vpack.c.b16 %v3307, %v3296
        %v4738 = vpack.c.b16 %v3308, %v3297
        %v4739 = vpack.c.b16 %v3309, %v3298
        %v4740 = vpack.c.b16 %v3310, %v3299
        %v4741 = vpack.c.b16 %v3322, %v3311
        %v4742 = vpack.c.b16 %v3323, %v3312
        %v4743 = vpack.c.b16 %v3324, %v3313
        %v4744 = vpack.c.b16 %v3325, %v3314
        %v4745 = vpack.c.b16 %v3326, %v3315
        %v4746 = vpack.c.b16 %v3327, %v3316
        %v4747 = vpack.c.b16 %v3328, %v3317
        %v4748 = vpack.c.b16 %v3329, %v3318
        %v4749 = vpack.c.b16 %v3330, %v3319
        %v4750 = vpack.c.b16 %v3331, %v3320
        %v4751 = vpack.c.b16 %v3332, %v3321
        %v4752 = vpack.c.b16 %v3344, %v3333
        %v4753 = vpack.c.b16 %v3345, %v3334
        %v4754 = vpack.c.b16 %v3346, %v3335
        %v4755 = vpack.c.b16 %v3347, %v3336
        %v4756 = vpack.c.b16 %v3348, %v3337
        %v4757 = vpack.c.b16 %v3349, %v3338
        %v4758 = vpack.c.b16 %v3350, %v3339
        %v4759 = vpack.c.b16 %v3351, %v3340
        %v4760 = vpack.c.b16 %v3352, %v3341
        %v4761 = vpack.c.b16 %v3353, %v3342
        %v4762 = vpack.c.b16 %v3354, %v3343
        %v4763 = vpack.c.b16 %v3366, %v3355
        %v4764 = vpack.c.b16 %v3367, %v3356
        %v4765 = vpack.c.b16 %v3368, %v3357
        %v4766 = vpack.c.b16 %v3369, %v3358
        %v4767 = vpack.c.b16 %v3370, %v3359
        %v4768 = vpack.c.b16 %v3371, %v3360
        %v4769 = vpack.c.b16 %v3372, %v3361
        %v4770 = vpack.c.b16 %v3373, %v3362
        %v4771 = vpack.c.b16 %v3374, %v3363
        %v4772 = vpack.c.b16 %v3375, %v3364
        %v4773 = vpack.c.b16 %v3376, %v3365
        %v4774 = vpack.c.b16 %v3388, %v3377
        %v4775 = vpack.c.b16 %v3389, %v3378
        %v4776 = vpack.c.b16 %v3390, %v3379
        %v4777 = vpack.c.b16 %v3391, %v3380
        %v4778 = vpack.c.b16 %v3392, %v3381
        %v4779 = vpack.c.b16 %v3393, %v3382
        %v4780 = vpack.c.b16 %v3394, %v3383
        %v4781 = vpack.c.b16 %v3395, %v3384
        %v4782 = vpack.c.b16 %v3396, %v3385
        %v4783 = vpack.c.b16 %v3397, %v3386
        %v4784 = vpack.c.b16 %v3398, %v3387
        %v4785 = vpack.c.b16 %v3410, %v3399
        %v4786 = vpack.c.b16 %v3411, %v3400
        %v4787 = vpack.c.b16 %v3412, %v3401
        %v4788 = vpack.c.b16 %v3413, %v3402
        %v4789 = vpack.c.b16 %v3414, %v3403
        %v4790 = vpack.c.b16 %v3415, %v3404
        %v4791 = vpack.c.b16 %v3416, %v3405
        %v4792 = vpack.c.b16 %v3417, %v3406
        %v4793 = vpack.c.b16 %v3418, %v3407
        %v4794 = vpack.c.b16 %v3419, %v3408
        %v4795 = vpack.c.b16 %v3420, %v3409
        %v4796 = vpack.c.b16 %v3432, %v3421
        %v4797 = vpack.c.b16 %v3433, %v3422
        %v4798 = vpack.c.b16 %v3434, %v3423
        %v4799 = vpack.c.b16 %v3435, %v3424
        %v4800 = vpack.c.b16 %v3436, %v3425
        %v4801 = vpack.c.b16 %v3437, %v3426
        %v4802 = vpack.c.b16 %v3438, %v3427
        %v4803 = vpack.c.b16 %v3439, %v3428
        %v4804 = vpack.c.b16 %v3440, %v3429
        %v4805 = vpack.c.b16 %v3441, %v3430
        %v4806 = vpack.c.b16 %v3442, %v3431
        %v4807 = vpack.c.b16 %v3454, %v3443
        %v4808 = vpack.c.b16 %v3455, %v3444
        %v4809 = vpack.c.b16 %v3456, %v3445
        %v4810 = vpack.c.b16 %v3457, %v3446
        %v4811 = vpack.c.b16 %v3458, %v3447
        %v4812 = vpack.c.b16 %v3459, %v3448
        %v4813 = vpack.c.b16 %v3460, %v3449
        %v4814 = vpack.c.b16 %v3461, %v3450
        %v4815 = vpack.c.b16 %v3462, %v3451
        %v4816 = vpack.c.b16 %v3463, %v3452
        %v4817 = vpack.c.b16 %v3464, %v3453
        %v4818 = vpack.c.b16 %v3476, %v3465
        %v4819 = vpack.c.b16 %v3477, %v3466
        %v4820 = vpack.c.b16 %v3478, %v3467
        %v4821 = vpack.c.b16 %v3479, %v3468
        %v4822 = vpack.c.b16 %v3480, %v3469
        %v4823 = vpack.c.b16 %v3481, %v3470
        %v4824 = vpack.c.b16 %v3482, %v3471
        %v4825 = vpack.c.b16 %v3483, %v3472
        %v4826 = vpack.c.b16 %v3484, %v3473
        %v4827 = vpack.c.b16 %v3485, %v3474
        %v4828 = vpack.c.b16 %v3486, %v3475
        %v4829 = vpack.c.b16 %v3498, %v3487
        %v4830 = vpack.c.b16 %v3499, %v3488
        %v4831 = vpack.c.b16 %v3500, %v3489
        %v4832 = vpack.c.b16 %v3501, %v3490
        %v4833 = vpack.c.b16 %v3502, %v3491
        %v4834 = vpack.c.b16 %v3503, %v3492
        %v4835 = vpack.c.b16 %v3504, %v3493
        %v4836 = vpack.c.b16 %v3505, %v3494
        %v4837 = vpack.c.b16 %v3506, %v3495
        %v4838 = vpack.c.b16 %v3507, %v3496
        %v4839 = vpack.c.b16 %v3508, %v3497
        %v4840 = vpack.c.b16 %v3520, %v3509
        %v4841 = vpack.c.b16 %v3521, %v3510
        %v4842 = vpack.c.b16 %v3522, %v3511
        %v4843 = vpack.c.b16 %v3523, %v3512
        %v4844 = vpack.c.b16 %v3524, %v3513
        %v4845 = vpack.c.b16 %v3525, %v3514
        %v4846 = vpack.c.b16 %v3526, %v3515
        %v4847 = vpack.c.b16 %v3527, %v3516
        %v4848 = vpack.c.b16 %v3528, %v3517
        %v4849 = vpack.c.b16 %v3529, %v3518
        %v4850 = vpack.c.b16 %v3530, %v3519
        %v4851 = vpack.c.b16 %v3542, %v3531
        %v4852 = vpack.c.b16 %v3543, %v3532
        %v4853 = vpack.c.b16 %v3544, %v3533
        %v4854 = vpack.c.b16 %v3545, %v3534
        %v4855 = vpack.c.b16 %v3546, %v3535
        %v4856 = vpack.c.b16 %v3547, %v3536
        %v4857 = vpack.c.b16 %v3548, %v3537
        %v4858 = vpack.c.b16 %v3549, %v3538
        %v4859 = vpack.c.b16 %v3550, %v3539
        %v4860 = vpack.c.b16 %v3551, %v3540
        %v4861 = vpack.c.b16 %v3552, %v3541
        %v4862 = vpack.c.b16 %v3564, %v3553
        %v4863 = vpack.c.b16 %v3565, %v3554
        %v4864 = vpack.c.b16 %v3566, %v3555
        %v4865 = vpack.c.b16 %v3567, %v3556
        %v4866 = vpack.c.b16 %v3568, %v3557
        %v4867 = vpack.c.b16 %v3569, %v3558
        %v4868 = vpack.c.b16 %v3570, %v3559
        %v4869 = vpack.c.b16 %v3571, %v3560
        %v4870 = vpack.c.b16 %v3572, %v3561
        %v4871 = vpack.c.b16 %v3573, %v3562
        %v4872 = vpack.c.b16 %v3574, %v3563
        %v4873 = vpack.c.b16 %v3586, %v3575
        %v4874 = vpack.c.b16 %v3587, %v3576
        %v4875 = vpack.c.b16 %v3588, %v3577
        %v4876 = vpack.c.b16 %v3589, %v3578
        %v4877 = vpack.c.b16 %v3590, %v3579
        %v4878 = vpack.c.b16 %v3591, %v3580
        %v4879 = vpack.c.b16 %v3592, %v3581
        %v4880 = vpack.c.b16 %v3593, %v3582
        %v4881 = vpack.c.b16 %v3594, %v3583
        %v4882 = vpack.c.b16 %v3595, %v3584
        %v4883 = vpack.c.b16 %v3596, %v3585
        %v4884 = vpack.c.b16 %v3608, %v3597
        %v4885 = vpack.c.b16 %v3609, %v3598
        %v4886 = vpack.c.b16 %v3610, %v3599
        %v4887 = vpack.c.b16 %v3611, %v3600
        %v4888 = vpack.c.b16 %v3612, %v3601
        %v4889 = vpack.c.b16 %v3613, %v3602
        %v4890 = vpack.c.b16 %v3614, %v3603
        %v4891 = vpack.c.b16 %v3615, %v3604
        %v4892 = vpack.c.b16 %v3616, %v3605
        %v4893 = vpack.c.b16 %v3617, %v3606
        %v4894 = vpack.c.b16 %v3618, %v3607
        %v4895 = vpack.c.b16 %v3630, %v3619
        %v4896 = vpack.c.b16 %v3631, %v3620
        %v4897 = vpack.c.b16 %v3632, %v3621
        %v4898 = vpack.c.b16 %v3633, %v3622
        %v4899 = vpack.c.b16 %v3634, %v3623
        %v4900 = vpack.c.b16 %v3635, %v3624
        %v4901 = vpack.c.b16 %v3636, %v3625
        %v4902 = vpack.c.b16 %v3637, %v3626
        %v4903 = vpack.c.b16 %v3638, %v3627
        %v4904 = vpack.c.b16 %v3639, %v3628
        %v4905 = vpack.c.b16 %v3640, %v3629
        %v4906 = vpack.c.b16 %v3652, %v3641
        %v4907 = vpack.c.b16 %v3653, %v3642
        %v4908 = vpack.c.b16 %v3654, %v3643
        %v4909 = vpack.c.b16 %v3655, %v3644
        %v4910 = vpack.c.b16 %v3656, %v3645
        %v4911 = vpack.c.b16 %v3657, %v3646
        %v4912 = vpack.c.b16 %v3658, %v3647
        %v4913 = vpack.c.b16 %v3659, %v3648
        %v4914 = vpack.c.b16 %v3660, %v3649
        %v4915 = vpack.c.b16 %v3661, %v3650
        %v4916 = vpack.c.b16 %v3662, %v3651
        %v4917 = vpack.c.b16 %v3674, %v3663
        %v4918 = vpack.c.b16 %v3675, %v3664
        %v4919 = vpack.c.b16 %v3676, %v3665
        %v4920 = vpack.c.b16 %v3677, %v3666
        %v4921 = vpack.c.b16 %v3678, %v3667
        %v4922 = vpack.c.b16 %v3679, %v3668
        %v4923 = vpack.c.b16 %v3680, %v3669
        %v4924 = vpack.c.b16 %v3681, %v3670
        %v4925 = vpack.c.b16 %v3682, %v3671
        %v4926 = vpack.c.b16 %v3683, %v3672
        %v4927 = vpack.c.b16 %v3684, %v3673
        %v4928 = vpack.c.b16 %v3696, %v3685
        %v4929 = vpack.c.b16 %v3697, %v3686
        %v4930 = vpack.c.b16 %v3698, %v3687
        %v4931 = vpack.c.b16 %v3699, %v3688
        %v4932 = vpack.c.b16 %v3700, %v3689
        %v4933 = vpack.c.b16 %v3701, %v3690
        %v4934 = vpack.c.b16 %v3702, %v3691
        %v4935 = vpack.c.b16 %v3703, %v3692
        %v4936 = vpack.c.b16 %v3704, %v3693
        %v4937 = vpack.c.b16 %v3705, %v3694
        %v4938 = vpack.c.b16 %v3706, %v3695
        %v4939 = vpack.c.b16 %v3718, %v3707
        %v4940 = vpack.c.b16 %v3719, %v3708
        %v4941 = vpack.c.b16 %v3720, %v3709
        %v4942 = vpack.c.b16 %v3721, %v3710
        %v4943 = vpack.c.b16 %v3722, %v3711
        %v4944 = vpack.c.b16 %v3723, %v3712
        %v4945 = vpack.c.b16 %v3724, %v3713
        %v4946 = vpack.c.b16 %v3725, %v3714
        %v4947 = vpack.c.b16 %v3726, %v3715
        %v4948 = vpack.c.b16 %v3727, %v3716
        %v4949 = vpack.c.b16 %v3728, %v3717
        %v4950 = vpack.c.b16 %v3740, %v3729
        %v4951 = vpack.c.b16 %v3741, %v3730
        %v4952 = vpack.c.b16 %v3742, %v3731
        %v4953 = vpack.c.b16 %v3743, %v3732
        %v4954 = vpack.c.b16 %v3744, %v3733
        %v4955 = vpack.c.b16 %v3745, %v3734
        %v4956 = vpack.c.b16 %v3746, %v3735
        %v4957 = vpack.c.b16 %v3747, %v3736
        %v4958 = vpack.c.b16 %v3748, %v3737
        %v4959 = vpack.c.b16 %v3749, %v3738
        %v4960 = vpack.c.b16 %v3750, %v3739
        %v4961 = vpack.c.b16 %v3762, %v3751
        %v4962 = vpack.c.b16 %v3763, %v3752
        %v4963 = vpack.c.b16 %v3764, %v3753
        %v4964 = vpack.c.b16 %v3765, %v3754
        %v4965 = vpack.c.b16 %v3766, %v3755
        %v4966 = vpack.c.b16 %v3767, %v3756
        %v4967 = vpack.c.b16 %v3768, %v3757
        %v4968 = vpack.c.b16 %v3769, %v3758
        %v4969 = vpack.c.b16 %v3770, %v3759
        %v4970 = vpack.c.b16 %v3771, %v3760
        %v4971 = vpack.c.b16 %v3772, %v3761
        %v4972 = vpack.c.b16 %v3784, %v3773
        %v4973 = vpack.c.b16 %v3785, %v3774
        %v4974 = vpack.c.b16 %v3786, %v3775
        %v4975 = vpack.c.b16 %v3787, %v3776
        %v4976 = vpack.c.b16 %v3788, %v3777
        %v4977 = vpack.c.b16 %v3789, %v3778
        %v4978 = vpack.c.b16 %v3790, %v3779
        %v4979 = vpack.c.b16 %v3791, %v3780
        %v4980 = vpack.c.b16 %v3792, %v3781
        %v4981 = vpack.c.b16 %v3793, %v3782
        %v4982 = vpack.c.b16 %v3794, %v3783
        %v4983 = vpack.c.b16 %v3806, %v3795
        %v4984 = vpack.c.b16 %v3807, %v3796
        %v4985 = vpack.c.b16 %v3808, %v3797
        %v4986 = vpack.c.b16 %v3809, %v3798
        %v4987 = vpack.c.b16 %v3810, %v3799
        %v4988 = vpack.c.b16 %v3811, %v3800
        %v4989 = vpack.c.b16 %v3812, %v3801
        %v4990 = vpack.c.b16 %v3813, %v3802
        %v4991 = vpack.c.b16 %v3814, %v3803
        %v4992 = vpack.c.b16 %v3815, %v3804
        %v4993 = vpack.c.b16 %v3816, %v3805
        %v4994 = vpack.c.b16 %v3828, %v3817
        %v4995 = vpack.c.b16 %v3829, %v3818
        %v4996 = vpack.c.b16 %v3830, %v3819
        %v4997 = vpack.c.b16 %v3831, %v3820
        %v4998 = vpack.c.b16 %v3832, %v3821
        %v4999 = vpack.c.b16 %v3833, %v3822
        %v5000 = vpack.c.b16 %v3834, %v3823
        %v5001 = vpack.c.b16 %v3835, %v3824
        %v5002 = vpack.c.b16 %v3836, %v3825
        %v5003 = vpack.c.b16 %v3837, %v3826
        %v5004 = vpack.c.b16 %v3838, %v3827
        %v5005 = vpack.c.b16 %v3850, %v3839
        %v5006 = vpack.c.b16 %v3851, %v3840
        %v5007 = vpack.c.b16 %v3852, %v3841
        %v5008 = vpack.c.b16 %v3853, %v3842
        %v5009 = vpack.c.b16 %v3854, %v3843
        %v5010 = vpack.c.b16 %v3855, %v3844
        %v5011 = vpack.c.b16 %v3856, %v3845
        %v5012 = vpack.c.b16 %v3857, %v3846
        %v5013 = vpack.c.b16 %v3858, %v3847
        %v5014 = vpack.c.b16 %v3859, %v3848
        %v5015 = vpack.c.b16 %v3860, %v3849
        %v5016 = vpack.c.b16 %v3872, %v3861
        %v5017 = vpack.c.b16 %v3873, %v3862
        %v5018 = vpack.c.b16 %v3874, %v3863
        %v5019 = vpack.c.b16 %v3875, %v3864
        %v5020 = vpack.c.b16 %v3876, %v3865
        %v5021 = vpack.c.b16 %v3877, %v3866
        %v5022 = vpack.c.b16 %v3878, %v3867
        %v5023 = vpack.c.b16 %v3879, %v3868
        %v5024 = vpack.c.b16 %v3880, %v3869
        %v5025 = vpack.c.b16 %v3881, %v3870
        %v5026 = vpack.c.b16 %v3882, %v3871
        %v5027 = vpack.c.b16 %v3894, %v3883
        %v5028 = vpack.c.b16 %v3895, %v3884
        %v5029 = vpack.c.b16 %v3896, %v3885
        %v5030 = vpack.c.b16 %v3897, %v3886
        %v5031 = vpack.c.b16 %v3898, %v3887
        %v5032 = vpack.c.b16 %v3899, %v3888
        %v5033 = vpack.c.b16 %v3900, %v3889
        %v5034 = vpack.c.b16 %v3901, %v3890
        %v5035 = vpack.c.b16 %v3902, %v3891
        %v5036 = vpack.c.b16 %v3903, %v3892
        %v5037 = vpack.c.b16 %v3904, %v3893
        %v5038 = vpack.c.b16 %v3916, %v3905
        %v5039 = vpack.c.b16 %v3917, %v3906
        %v5040 = vpack.c.b16 %v3918, %v3907
        %v5041 = vpack.c.b16 %v3919, %v3908
        %v5042 = vpack.c.b16 %v3920, %v3909
        %v5043 = vpack.c.b16 %v3921, %v3910
        %v5044 = vpack.c.b16 %v3922, %v3911
        %v5045 = vpack.c.b16 %v3923, %v3912
        %v5046 = vpack.c.b16 %v3924, %v3913
        %v5047 = vpack.c.b16 %v3925, %v3914
        %v5048 = vpack.c.b16 %v3926, %v3915
        %v5049 = vpack.c.b16 %v3938, %v3927
        %v5050 = vpack.c.b16 %v3939, %v3928
        %v5051 = vpack.c.b16 %v3940, %v3929
        %v5052 = vpack.c.b16 %v3941, %v3930
        %v5053 = vpack.c.b16 %v3942, %v3931
        %v5054 = vpack.c.b16 %v3943, %v3932
        %v5055 = vpack.c.b16 %v3944, %v3933
        %v5056 = vpack.c.b16 %v3945, %v3934
        %v5057 = vpack.c.b16 %v3946, %v3935
        %v5058 = vpack.c.b16 %v3947, %v3936
        %v5059 = vpack.c.b16 %v3948, %v3937
        %v5060 = vpack.c.b16 %v3960, %v3949
        %v5061 = vpack.c.b16 %v3961, %v3950
        %v5062 = vpack.c.b16 %v3962, %v3951
        %v5063 = vpack.c.b16 %v3963, %v3952
        %v5064 = vpack.c.b16 %v3964, %v3953
        %v5065 = vpack.c.b16 %v3965, %v3954
        %v5066 = vpack.c.b16 %v3966, %v3955
        %v5067 = vpack.c.b16 %v3967, %v3956
        %v5068 = vpack.c.b16 %v3968, %v3957
        %v5069 = vpack.c.b16 %v3969, %v3958
        %v5070 = vpack.c.b16 %v3970, %v3959
        %v5071 = vpack.c.b16 %v3982, %v3971
        %v5072 = vpack.c.b16 %v3983, %v3972
        %v5073 = vpack.c.b16 %v3984, %v3973
        %v5074 = vpack.c.b16 %v3985, %v3974
        %v5075 = vpack.c.b16 %v3986, %v3975
        %v5076 = vpack.c.b16 %v3987, %v3976
        %v5077 = vpack.c.b16 %v3988, %v3977
        %v5078 = vpack.c.b16 %v3989, %v3978
        %v5079 = vpack.c.b16 %v3990, %v3979
        %v5080 = vpack.c.b16 %v3991, %v3980
        %v5081 = vpack.c.b16 %v3992, %v3981
        %v5082 = vpack.c.b16 %v4004, %v3993
        %v5083 = vpack.c.b16 %v4005, %v3994
        %v5084 = vpack.c.b16 %v4006, %v3995
        %v5085 = vpack.c.b16 %v4007, %v3996
        %v5086 = vpack.c.b16 %v4008, %v3997
        %v5087 = vpack.c.b16 %v4009, %v3998
        %v5088 = vpack.c.b16 %v4010, %v3999
        %v5089 = vpack.c.b16 %v4011, %v4000
        %v5090 = vpack.c.b16 %v4012, %v4001
        %v5091 = vpack.c.b16 %v4013, %v4002
        %v5092 = vpack.c.b16 %v4014, %v4003
        %v5093 = vpack.c.b16 %v4026, %v4015
        %v5094 = vpack.c.b16 %v4027, %v4016
        %v5095 = vpack.c.b16 %v4028, %v4017
        %v5096 = vpack.c.b16 %v4029, %v4018
        %v5097 = vpack.c.b16 %v4030, %v4019
        %v5098 = vpack.c.b16 %v4031, %v4020
        %v5099 = vpack.c.b16 %v4032, %v4021
        %v5100 = vpack.c.b16 %v4033, %v4022
        %v5101 = vpack.c.b16 %v4034, %v4023
        %v5102 = vpack.c.b16 %v4035, %v4024
        %v5103 = vpack.c.b16 %v4036, %v4025
        %v5104 = vpack.c.b16 %v4048, %v4037
        %v5105 = vpack.c.b16 %v4049, %v4038
        %v5106 = vpack.c.b16 %v4050, %v4039
        %v5107 = vpack.c.b16 %v4051, %v4040
        %v5108 = vpack.c.b16 %v4052, %v4041
        %v5109 = vpack.c.b16 %v4053, %v4042
        %v5110 = vpack.c.b16 %v4054, %v4043
        %v5111 = vpack.c.b16 %v4055, %v4044
        %v5112 = vpack.c.b16 %v4056, %v4045
        %v5113 = vpack.c.b16 %v4057, %v4046
        %v5114 = vpack.c.b16 %v4058, %v4047
        %v5115 = vpack.c.b16 %v4070, %v4059
        %v5116 = vpack.c.b16 %v4071, %v4060
        %v5117 = vpack.c.b16 %v4072, %v4061
        %v5118 = vpack.c.b16 %v4073, %v4062
        %v5119 = vpack.c.b16 %v4074, %v4063
        %v5120 = vpack.c.b16 %v4075, %v4064
        %v5121 = vpack.c.b16 %v4076, %v4065
        %v5122 = vpack.c.b16 %v4077, %v4066
        %v5123 = vpack.c.b16 %v4078, %v4067
        %v5124 = vpack.c.b16 %v4079, %v4068
        %v5125 = vpack.c.b16 %v4080, %v4069
        %v5126 = vpack.c.b16 %v4092, %v4081
        %v5127 = vpack.c.b16 %v4093, %v4082
        %v5128 = vpack.c.b16 %v4094, %v4083
        %v5129 = vpack.c.b16 %v4095, %v4084
        %v5130 = vpack.c.b16 %v4096, %v4085
        %v5131 = vpack.c.b16 %v4097, %v4086
        %v5132 = vpack.c.b16 %v4098, %v4087
        %v5133 = vpack.c.b16 %v4099, %v4088
        %v5134 = vpack.c.b16 %v4100, %v4089
        %v5135 = vpack.c.b16 %v4101, %v4090
        %v5136 = vpack.c.b16 %v4102, %v4091
        %v5137 = vpack.c.b16 %v4114, %v4103
        %v5138 = vpack.c.b16 %v4115, %v4104
        %v5139 = vpack.c.b16 %v4116, %v4105
        %v5140 = vpack.c.b16 %v4117, %v4106
        %v5141 = vpack.c.b16 %v4118, %v4107
        %v5142 = vpack.c.b16 %v4119, %v4108
        %v5143 = vpack.c.b16 %v4120, %v4109
        %v5144 = vpack.c.b16 %v4121, %v4110
        %v5145 = vpack.c.b16 %v4122, %v4111
        %v5146 = vpack.c.b16 %v4123, %v4112
        %v5147 = vpack.c.b16 %v4124, %v4113
        %v5148 = vpack.c.b16 %v4136, %v4125
        %v5149 = vpack.c.b16 %v4137, %v4126
        %v5150 = vpack.c.b16 %v4138, %v4127
        %v5151 = vpack.c.b16 %v4139, %v4128
        %v5152 = vpack.c.b16 %v4140, %v4129
        %v5153 = vpack.c.b16 %v4141, %v4130
        %v5154 = vpack.c.b16 %v4142, %v4131
        %v5155 = vpack.c.b16 %v4143, %v4132
        %v5156 = vpack.c.b16 %v4144, %v4133
        %v5157 = vpack.c.b16 %v4145, %v4134
        %v5158 = vpack.c.b16 %v4146, %v4135
        %v5159 = vpack.c.b16 %v4158, %v4147
        %v5160 = vpack.c.b16 %v4159, %v4148
        %v5161 = vpack.c.b16 %v4160, %v4149
        %v5162 = vpack.c.b16 %v4161, %v4150
        %v5163 = vpack.c.b16 %v4162, %v4151
        %v5164 = vpack.c.b16 %v4163, %v4152
        %v5165 = vpack.c.b16 %v4164, %v4153
        %v5166 = vpack.c.b16 %v4165, %v4154
        %v5167 = vpack.c.b16 %v4166, %v4155
        %v5168 = vpack.c.b16 %v4167, %v4156
        %v5169 = vpack.c.b16 %v4168, %v4157
        %v5170 = vpack.c.b16 %v4180, %v4169
        %v5171 = vpack.c.b16 %v4181, %v4170
        %v5172 = vpack.c.b16 %v4182, %v4171
        %v5173 = vpack.c.b16 %v4183, %v4172
        %v5174 = vpack.c.b16 %v4184, %v4173
        %v5175 = vpack.c.b16 %v4185, %v4174
        %v5176 = vpack.c.b16 %v4186, %v4175
        %v5177 = vpack.c.b16 %v4187, %v4176
        %v5178 = vpack.c.b16 %v4188, %v4177
        %v5179 = vpack.c.b16 %v4189, %v4178
        %v5180 = vpack.c.b16 %v4190, %v4179
        %v5181 = vpack.c.b16 %v4202, %v4191
        %v5182 = vpack.c.b16 %v4203, %v4192
        %v5183 = vpack.c.b16 %v4204, %v4193
        %v5184 = vpack.c.b16 %v4205, %v4194
        %v5185 = vpack.c.b16 %v4206, %v4195
        %v5186 = vpack.c.b16 %v4207, %v4196
        %v5187 = vpack.c.b16 %v4208, %v4197
        %v5188 = vpack.c.b16 %v4209, %v4198
        %v5189 = vpack.c.b16 %v4210, %v4199
        %v5190 = vpack.c.b16 %v4211, %v4200
        %v5191 = vpack.c.b16 %v4212, %v4201
        %v5192 = vpack.c.b16 %v4224, %v4213
        %v5193 = vpack.c.b16 %v4225, %v4214
        %v5194 = vpack.c.b16 %v4226, %v4215
        %v5195 = vpack.c.b16 %v4227, %v4216
        %v5196 = vpack.c.b16 %v4228, %v4217
        %v5197 = vpack.c.b16 %v4229, %v4218
        %v5198 = vpack.c.b16 %v4230, %v4219
        %v5199 = vpack.c.b16 %v4231, %v4220
        %v5200 = vpack.c.b16 %v4232, %v4221
        %v5201 = vpack.c.b16 %v4233, %v4222
        %v5202 = vpack.c.b16 %v4234, %v4223
        %v5203 = vpack.c.b16 %v4246, %v4235
        %v5204 = vpack.c.b16 %v4247, %v4236
        %v5205 = vpack.c.b16 %v4248, %v4237
        %v5206 = vpack.c.b16 %v4249, %v4238
        %v5207 = vpack.c.b16 %v4250, %v4239
        %v5208 = vpack.c.b16 %v4251, %v4240
        %v5209 = vpack.c.b16 %v4252, %v4241
        %v5210 = vpack.c.b16 %v4253, %v4242
        %v5211 = vpack.c.b16 %v4254, %v4243
        %v5212 = vpack.c.b16 %v4255, %v4244
        %v5213 = vpack.c.b16 %v4256, %v4245
        %v5214 = vpack.c.b16 %v4268, %v4257
        %v5215 = vpack.c.b16 %v4269, %v4258
        %v5216 = vpack.c.b16 %v4270, %v4259
        %v5217 = vpack.c.b16 %v4271, %v4260
        %v5218 = vpack.c.b16 %v4272, %v4261
        %v5219 = vpack.c.b16 %v4273, %v4262
        %v5220 = vpack.c.b16 %v4274, %v4263
        %v5221 = vpack.c.b16 %v4275, %v4264
        %v5222 = vpack.c.b16 %v4276, %v4265
        %v5223 = vpack.c.b16 %v4277, %v4266
        %v5224 = vpack.c.b16 %v4278, %v4267
        %v5225 = vpack.c.b16 %v4290, %v4279
        %v5226 = vpack.c.b16 %v4291, %v4280
        %v5227 = vpack.c.b16 %v4292, %v4281
        %v5228 = vpack.c.b16 %v4293, %v4282
        %v5229 = vpack.c.b16 %v4294, %v4283
        %v5230 = vpack.c.b16 %v4295, %v4284
        %v5231 = vpack.c.b16 %v4296, %v4285
        %v5232 = vpack.c.b16 %v4297, %v4286
        %v5233 = vpack.c.b16 %v4298, %v4287
        %v5234 = vpack.c.b16 %v4299, %v4288
        %v5235 = vpack.c.b16 %v4300, %v4289
        %v5236 = vpack.c.b16 %v4312, %v4301
        %v5237 = vpack.c.b16 %v4313, %v4302
        %v5238 = vpack.c.b16 %v4314, %v4303
        %v5239 = vpack.c.b16 %v4315, %v4304
        %v5240 = vpack.c.b16 %v4316, %v4305
        %v5241 = vpack.c.b16 %v4317, %v4306
        %v5242 = vpack.c.b16 %v4318, %v4307
        %v5243 = vpack.c.b16 %v4319, %v4308
        %v5244 = vpack.c.b16 %v4320, %v4309
        %v5245 = vpack.c.b16 %v4321, %v4310
        %v5246 = vpack.c.b16 %v4322, %v4311
        %v5247 = vpack.c.b16 %v4334, %v4323
        %v5248 = vpack.c.b16 %v4335, %v4324
        %v5249 = vpack.c.b16 %v4336, %v4325
        %v5250 = vpack.c.b16 %v4337, %v4326
        %v5251 = vpack.c.b16 %v4338, %v4327
        %v5252 = vpack.c.b16 %v4339, %v4328
        %v5253 = vpack.c.b16 %v4340, %v4329
        %v5254 = vpack.c.b16 %v4341, %v4330
        %v5255 = vpack.c.b16 %v4342, %v4331
        %v5256 = vpack.c.b16 %v4343, %v4332
        %v5257 = vpack.c.b16 %v4344, %v4333
        %v5258 = vpack.c.b16 %v4356, %v4345
        %v5259 = vpack.c.b16 %v4357, %v4346
        %v5260 = vpack.c.b16 %v4358, %v4347
        %v5261 = vpack.c.b16 %v4359, %v4348
        %v5262 = vpack.c.b16 %v4360, %v4349
        %v5263 = vpack.c.b16 %v4361, %v4350
        %v5264 = vpack.c.b16 %v4362, %v4351
        %v5265 = vpack.c.b16 %v4363, %v4352
        %v5266 = vpack.c.b16 %v4364, %v4353
        %v5267 = vpack.c.b16 %v4365, %v4354
        %v5268 = vpack.c.b16 %v4366, %v4355
        %v5269 = vpack.c.b16 %v4378, %v4367
        %v5270 = vpack.c.b16 %v4379, %v4368
        %v5271 = vpack.c.b16 %v4380, %v4369
        %v5272 = vpack.c.b16 %v4381, %v4370
        %v5273 = vpack.c.b16 %v4382, %v4371
        %v5274 = vpack.c.b16 %v4383, %v4372
        %v5275 = vpack.c.b16 %v4384, %v4373
        %v5276 = vpack.c.b16 %v4385, %v4374
        %v5277 = vpack.c.b16 %v4386, %v4375
        %v5278 = vpack.c.b16 %v4387, %v4376
        %v5279 = vpack.c.b16 %v4388, %v4377
        %v5280 = vpack.c.b16 %v4400, %v4389
        %v5281 = vpack.c.b16 %v4401, %v4390
        %v5282 = vpack.c.b16 %v4402, %v4391
        %v5283 = vpack.c.b16 %v4403, %v4392
        %v5284 = vpack.c.b16 %v4404, %v4393
        %v5285 = vpack.c.b16 %v4405, %v4394
        %v5286 = vpack.c.b16 %v4406, %v4395
        %v5287 = vpack.c.b16 %v4407, %v4396
        %v5288 = vpack.c.b16 %v4408, %v4397
        %v5289 = vpack.c.b16 %v4409, %v4398
        %v5290 = vpack.c.b16 %v4410, %v4399
        %vm6091 = vcmask 523264
        %v6093 = vsel %vm6091, %v1617, 0
        %v6096 = vsel %vm6091, %v1628, 0
        %v6099 = vsel %vm6091, %v1639, 0
        %v6102 = vsel %vm6091, %v1650, 0
        %v6105 = vsel %vm6091, %v4421, 0
        %v6108 = vsel %vm6091, %v4432, 0
        %v6111 = vsel %vm6091, %v4443, 0
        %v6114 = vsel %vm6091, %v4454, 0
        %v6117 = vsel %vm6091, %v4465, 0
        %v6120 = vsel %vm6091, %v4476, 0
        %v6123 = vsel %vm6091, %v4487, 0
        %v6126 = vsel %vm6091, %v4498, 0
        %v6129 = vsel %vm6091, %v4509, 0
        %v6132 = vsel %vm6091, %v4520, 0
        %v6135 = vsel %vm6091, %v4531, 0
        %v6138 = vsel %vm6091, %v4542, 0
        %v6141 = vsel %vm6091, %v4553, 0
        %v6144 = vsel %vm6091, %v4564, 0
        %v6147 = vsel %vm6091, %v4575, 0
        %v6150 = vsel %vm6091, %v4586, 0
        %v6153 = vsel %vm6091, %v4597, 0
        %v6156 = vsel %vm6091, %v4608, 0
        %v6159 = vsel %vm6091, %v4619, 0
        %v6162 = vsel %vm6091, %v4630, 0
        %v6165 = vsel %vm6091, %v4641, 0
        %v6168 = vsel %vm6091, %v4652, 0
        %v6171 = vsel %vm6091, %v4663, 0
        %v6174 = vsel %vm6091, %v4674, 0
        %v6177 = vsel %vm6091, %v4685, 0
        %v6180 = vsel %vm6091, %v4696, 0
        %v6183 = vsel %vm6091, %v4707, 0
        %v6186 = vsel %vm6091, %v4718, 0
        %v6189 = vsel %vm6091, %v4729, 0
        %v6192 = vsel %vm6091, %v4740, 0
        %v6195 = vsel %vm6091, %v4751, 0
        %v6198 = vsel %vm6091, %v4762, 0
        %v6201 = vsel %vm6091, %v4773, 0
        %v6204 = vsel %vm6091, %v4784, 0
        %v6207 = vsel %vm6091, %v4795, 0
        %v6210 = vsel %vm6091, %v4806, 0
        %v6213 = vsel %vm6091, %v4817, 0
        %v6216 = vsel %vm6091, %v4828, 0
        %v6219 = vsel %vm6091, %v4839, 0
        %v6222 = vsel %vm6091, %v4850, 0
        %v6225 = vsel %vm6091, %v4861, 0
        %v6228 = vsel %vm6091, %v4872, 0
        %v6231 = vsel %vm6091, %v4883, 0
        %v6234 = vsel %vm6091, %v4894, 0
        %v6237 = vsel %vm6091, %v4905, 0
        %v6240 = vsel %vm6091, %v4916, 0
        %v6243 = vsel %vm6091, %v4927, 0
        %v6246 = vsel %vm6091, %v4938, 0
        %v6249 = vsel %vm6091, %v4949, 0
        %v6252 = vsel %vm6091, %v4960, 0
        %v6255 = vsel %vm6091, %v4971, 0
        %v6258 = vsel %vm6091, %v4982, 0
        %v6261 = vsel %vm6091, %v4993, 0
        %v6264 = vsel %vm6091, %v5004, 0
        %v6267 = vsel %vm6091, %v5015, 0
        %v6270 = vsel %vm6091, %v5026, 0
        %v6273 = vsel %vm6091, %v5037, 0
        %v6276 = vsel %vm6091, %v5048, 0
        %v6279 = vsel %vm6091, %v5059, 0
        %v6282 = vsel %vm6091, %v5070, 0
        %v6285 = vsel %vm6091, %v5081, 0
        %v6288 = vsel %vm6091, %v5092, 0
        %v6291 = vsel %vm6091, %v5103, 0
        %v6294 = vsel %vm6091, %v5114, 0
        %v6297 = vsel %vm6091, %v5125, 0
        %v6300 = vsel %vm6091, %v5136, 0
        %v6303 = vsel %vm6091, %v5147, 0
        %v6306 = vsel %vm6091, %v5158, 0
        %v6309 = vsel %vm6091, %v5169, 0
        %v6312 = vsel %vm6091, %v5180, 0
        %v6315 = vsel %vm6091, %v5191, 0
        %v6318 = vsel %vm6091, %v5202, 0
        %v6321 = vsel %vm6091, %v5213, 0
        %v6324 = vsel %vm6091, %v5224, 0
        %v6327 = vsel %vm6091, %v5235, 0
        %v6330 = vsel %vm6091, %v5246, 0
        %v6333 = vsel %vm6091, %v5257, 0
        %v6336 = vsel %vm6091, %v5268, 0
        %v6339 = vsel %vm6091, %v5279, 0
        %v6342 = vsel %vm6091, %v5290, 0
        %6344 = vmatprep.subr.bf16.mxu0 %v4412
        %6345 = vmatpush1.bf16.xpose.msra.mxu0 %v4411
        %6346 = vmatprep.subr.bf16.mxu0 %v4423
        %6347 = vmatpush1.bf16.xpose.msra.mxu0 %v4422
        %6348 = vmatprep.subr.bf16.mxu0 %v4434
        %6349 = vmatpush1.bf16.xpose.msra.mxu0 %v4433
        %6350 = vmatprep.subr.bf16.mxu0 %v4445
        %6351 = vmatpush1.bf16.xpose.msra.mxu0 %v4444
        %6352 = vmatprep.subr.bf16.mxu0 %v4456
        %6353 = vmatpush1.bf16.xpose.msra.mxu0 %v4455
        %6354 = vmatprep.subr.bf16.mxu0 %v4467
        %6355 = vmatpush1.bf16.xpose.msra.mxu0 %v4466
        %6356 = vmatprep.subr.bf16.mxu0 %v4478
        %6357 = vmatpush1.bf16.xpose.msra.mxu0 %v4477
        %6358 = vmatprep.subr.bf16.mxu0 %v4489
        %6359 = vmatpush1.bf16.xpose.msra.mxu0 %v4488
        %6360 = vmatprep.subr.bf16.mxu0 %v4500
        %6361 = vmatpush1.bf16.xpose.msra.mxu0 %v4499
        %6362 = vmatprep.subr.bf16.mxu0 %v4511
        %6363 = vmatpush1.bf16.xpose.msra.mxu0 %v4510
        %6364 = vmatprep.subr.bf16.mxu0 %v4522
        %6365 = vmatpush1.bf16.xpose.msra.mxu0 %v4521
        %6366 = vmatprep.subr.bf16.mxu0 %v4533
        %6367 = vmatpush1.bf16.xpose.msra.mxu0 %v4532
        %6368 = vmatprep.subr.bf16.mxu0 %v4544
        %6369 = vmatpush1.bf16.xpose.msra.mxu0 %v4543
        %6370 = vmatprep.subr.bf16.mxu0 %v4555
        %6371 = vmatpush1.bf16.xpose.msra.mxu0 %v4554
        %6372 = vmatprep.subr.bf16.mxu0 %v4566
        %6373 = vmatpush1.bf16.xpose.msra.mxu0 %v4565
        %6374 = vmatprep.subr.bf16.mxu0 %v4577
        %6375 = vmatpush1.bf16.xpose.msra.mxu0 %v4576
        %6376 = vmatprep.mubr.bf16.mxu0 %v1608
        %6377 = vmatmul.mubr.bf16.gmra.mrb[0].mxu0 %v1607
        %v6378 = vpop.f32.mrb[0].mxu0
        %v6379 = vadd.f32 0.0, %v6378
        %v6380 = vpop.f32.mrb[0].mxu0
        %v6381 = vadd.f32 0.0, %v6380
        %v6382 = vpop.f32.mrb[0].mxu0
        %v6383 = vadd.f32 0.0, %v6382
        %v6384 = vpop.f32.mrb[0].mxu0
        %v6385 = vadd.f32 0.0, %v6384
        %6386 = vmatprep.mubr.bf16.mxu0 %v1619
        %6387 = vmatmul.mubr.bf16.gmra.mrb[0].mxu0 %v1618
        %v6388 = vpop.f32.mrb[0].mxu0
        %v6389 = vadd.f32 0.0, %v6388
        %v6390 = vpop.f32.mrb[0].mxu0
        %v6391 = vadd.f32 0.0, %v6390
        %v6392 = vpop.f32.mrb[0].mxu0
        %v6393 = vadd.f32 0.0, %v6392
        %v6394 = vpop.f32.mrb[0].mxu0
        %v6395 = vadd.f32 0.0, %v6394
        %6396 = vmatprep.mubr.bf16.mxu0 %v1630
        %6397 = vmatmul.mubr.bf16.gmra.mrb[0].mxu0 %v1629
        %v6398 = vpop.f32.mrb[0].mxu0
        %v6399 = vadd.f32 0.0, %v6398
        %v6400 = vpop.f32.mrb[0].mxu0
        %v6401 = vadd.f32 0.0, %v6400
        %v6402 = vpop.f32.mrb[0].mxu0
        %v6403 = vadd.f32 0.0, %v6402
        %v6404 = vpop.f32.mrb[0].mxu0
        %v6405 = vadd.f32 0.0, %v6404
        %6406 = vmatprep.mubr.bf16.mxu0 %v1641
        %6407 = vmatmul.mubr.bf16.gmra.mrb[0].mxu0 %v1640
        %v6408 = vpop.f32.mrb[0].mxu0
        %v6409 = vadd.f32 0.0, %v6408
        %v6410 = vpop.f32.mrb[0].mxu0
        %v6411 = vadd.f32 0.0, %v6410
        %v6412 = vpop.f32.mrb[0].mxu0
        %v6413 = vadd.f32 0.0, %v6412
        %v6414 = vpop.f32.mrb[0].mxu0
        %v6415 = vadd.f32 0.0, %v6414
        %6416 = vdwg.mxu0
        %6417 = vmatprep.subr.bf16.mxu0 %v4414
        %6418 = vmatpush1.bf16.xpose.msra.mxu0 %v4413
        %6419 = vmatprep.subr.bf16.mxu0 %v4425
        %6420 = vmatpush1.bf16.xpose.msra.mxu0 %v4424
        %6421 = vmatprep.subr.bf16.mxu0 %v4436
        %6422 = vmatpush1.bf16.xpose.msra.mxu0 %v4435
        %6423 = vmatprep.subr.bf16.mxu0 %v4447
        %6424 = vmatpush1.bf16.xpose.msra.mxu0 %v4446
        %6425 = vmatprep.subr.bf16.mxu0 %v4458
        %6426 = vmatpush1.bf16.xpose.msra.mxu0 %v4457
        %6427 = vmatprep.subr.bf16.mxu0 %v4469
        %6428 = vmatpush1.bf16.xpose.msra.mxu0 %v4468
        %6429 = vmatprep.subr.bf16.mxu0 %v4480
        %6430 = vmatpush1.bf16.xpose.msra.mxu0 %v4479
        %6431 = vmatprep.subr.bf16.mxu0 %v4491
        %6432 = vmatpush1.bf16.xpose.msra.mxu0 %v4490
        %6433 = vmatprep.subr.bf16.mxu0 %v4502
        %6434 = vmatpush1.bf16.xpose.msra.mxu0 %v4501
        %6435 = vmatprep.subr.bf16.mxu0 %v4513
        %6436 = vmatpush1.bf16.xpose.msra.mxu0 %v4512
        %6437 = vmatprep.subr.bf16.mxu0 %v4524
        %6438 = vmatpush1.bf16.xpose.msra.mxu0 %v4523
        %6439 = vmatprep.subr.bf16.mxu0 %v4535
        %6440 = vmatpush1.bf16.xpose.msra.mxu0 %v4534
        %6441 = vmatprep.subr.bf16.mxu0 %v4546
        %6442 = vmatpush1.bf16.xpose.msra.mxu0 %v4545
        %6443 = vmatprep.subr.bf16.mxu0 %v4557
        %6444 = vmatpush1.bf16.xpose.msra.mxu0 %v4556
        %6445 = vmatprep.subr.bf16.mxu0 %v4568
        %6446 = vmatpush1.bf16.xpose.msra.mxu0 %v4567
        %6447 = vmatprep.subr.bf16.mxu0 %v4579
        %6448 = vmatpush1.bf16.xpose.msra.mxu0 %v4578
        %6449 = vmatprep.mubr.bf16.mxu0 %v1610
        %6450 = vmatmul.mubr.bf16.gmra.mrb[0].mxu0 %v1609
        %v6451 = vpop.f32.mrb[0].mxu0
        %v6452 = vadd.f32 %v6379, %v6451
        %v6453 = vpop.f32.mrb[0].mxu0
        %v6454 = vadd.f32 %v6381, %v6453
        %v6455 = vpop.f32.mrb[0].mxu0
        %v6456 = vadd.f32 %v6383, %v6455
        %v6457 = vpop.f32.mrb[0].mxu0
        %v6458 = vadd.f32 %v6385, %v6457
        %6459 = vmatprep.mubr.bf16.mxu0 %v1621
        %6460 = vmatmul.mubr.bf16.gmra.mrb[0].mxu0 %v1620
        %v6461 = vpop.f32.mrb[0].mxu0
        %v6462 = vadd.f32 %v6389, %v6461
        %v6463 = vpop.f32.mrb[0].mxu0
        %v6464 = vadd.f32 %v6391, %v6463
        %v6465 = vpop.f32.mrb[0].mxu0
        %v6466 = vadd.f32 %v6393, %v6465
        %v6467 = vpop.f32.mrb[0].mxu0
        %v6468 = vadd.f32 %v6395, %v6467
        %6469 = vmatprep.mubr.bf16.mxu0 %v1632
        %6470 = vmatmul.mubr.bf16.gmra.mrb[0].mxu0 %v1631
        %v6471 = vpop.f32.mrb[0].mxu0
        %v6472 = vadd.f32 %v6399, %v6471
        %v6473 = vpop.f32.mrb[0].mxu0
        %v6474 = vadd.f32 %v6401, %v6473
        %v6475 = vpop.f32.mrb[0].mxu0
        %v6476 = vadd.f32 %v6403, %v6475
        %v6477 = vpop.f32.mrb[0].mxu0
        %v6478 = vadd.f32 %v6405, %v6477
        %6479 = vmatprep.mubr.bf16.mxu0 %v1643
        %6480 = vmatmul.mubr.bf16.gmra.mrb[0].mxu0 %v1642
        %v6481 = vpop.f32.mrb[0].mxu0
        %v6482 = vadd.f32 %v6409, %v6481
        %v6483 = vpop.f32.mrb[0].mxu0
        %v6484 = vadd.f32 %v6411, %v6483
        %v6485 = vpop.f32.mrb[0].mxu0
        %v6486 = vadd.f32 %v6413, %v6485
        %v6487 = vpop.f32.mrb[0].mxu0
        %v6488 = vadd.f32 %v6415, %v6487
        %6489 = vdwg.mxu0
        %6490 = vmatprep.subr.bf16.mxu0 %v4416
        %6491 = vmatpush1.bf16.xpose.msra.mxu0 %v4415
        %6492 = vmatprep.subr.bf16.mxu0 %v4427
        %6493 = vmatpush1.bf16.xpose.msra.mxu0 %v4426
        %6494 = vmatprep.subr.bf16.mxu0 %v4438
        %6495 = vmatpush1.bf16.xpose.msra.mxu0 %v4437
        %6496 = vmatprep.subr.bf16.mxu0 %v4449
        %6497 = vmatpush1.bf16.xpose.msra.mxu0 %v4448
        %6498 = vmatprep.subr.bf16.mxu0 %v4460
        %6499 = vmatpush1.bf16.xpose.msra.mxu0 %v4459
        %6500 = vmatprep.subr.bf16.mxu0 %v4471
        %6501 = vmatpush1.bf16.xpose.msra.mxu0 %v4470
        %6502 = vmatprep.subr.bf16.mxu0 %v4482
        %6503 = vmatpush1.bf16.xpose.msra.mxu0 %v4481
        %6504 = vmatprep.subr.bf16.mxu0 %v4493
        %6505 = vmatpush1.bf16.xpose.msra.mxu0 %v4492
        %6506 = vmatprep.subr.bf16.mxu0 %v4504
        %6507 = vmatpush1.bf16.xpose.msra.mxu0 %v4503
        %6508 = vmatprep.subr.bf16.mxu0 %v4515
        %6509 = vmatpush1.bf16.xpose.msra.mxu0 %v4514
        %6510 = vmatprep.subr.bf16.mxu0 %v4526
        %6511 = vmatpush1.bf16.xpose.msra.mxu0 %v4525
        %6512 = vmatprep.subr.bf16.mxu0 %v4537
        %6513 = vmatpush1.bf16.xpose.msra.mxu0 %v4536
        %6514 = vmatprep.subr.bf16.mxu0 %v4548
        %6515 = vmatpush1.bf16.xpose.msra.mxu0 %v4547
        %6516 = vmatprep.subr.bf16.mxu0 %v4559
        %6517 = vmatpush1.bf16.xpose.msra.mxu0 %v4558
        %6518 = vmatprep.subr.bf16.mxu0 %v4570
        %6519 = vmatpush1.bf16.xpose.msra.mxu0 %v4569
        %6520 = vmatprep.subr.bf16.mxu0 %v4581
        %6521 = vmatpush1.bf16.xpose.msra.mxu0 %v4580
        %6522 = vmatprep.mubr.bf16.mxu0 %v1612
        %6523 = vmatmul.mubr.bf16.gmra.mrb[0].mxu0 %v1611
        %v6524 = vpop.f32.mrb[0].mxu0
        %v6525 = vadd.f32 %v6452, %v6524
        %v6526 = vpop.f32.mrb[0].mxu0
        %v6527 = vadd.f32 %v6454, %v6526
        %v6528 = vpop.f32.mrb[0].mxu0
        %v6529 = vadd.f32 %v6456, %v6528
        %v6530 = vpop.f32.mrb[0].mxu0
        %v6531 = vadd.f32 %v6458, %v6530
        %6532 = vmatprep.mubr.bf16.mxu0 %v1623
        %6533 = vmatmul.mubr.bf16.gmra.mrb[0].mxu0 %v1622
        %v6534 = vpop.f32.mrb[0].mxu0
        %v6535 = vadd.f32 %v6462, %v6534
        %v6536 = vpop.f32.mrb[0].mxu0
        %v6537 = vadd.f32 %v6464, %v6536
        %v6538 = vpop.f32.mrb[0].mxu0
        %v6539 = vadd.f32 %v6466, %v6538
        %v6540 = vpop.f32.mrb[0].mxu0
        %v6541 = vadd.f32 %v6468, %v6540
        %6542 = vmatprep.mubr.bf16.mxu0 %v1634
        %6543 = vmatmul.mubr.bf16.gmra.mrb[0].mxu0 %v1633
        %v6544 = vpop.f32.mrb[0].mxu0
        %v6545 = vadd.f32 %v6472, %v6544
        %v6546 = vpop.f32.mrb[0].mxu0
        %v6547 = vadd.f32 %v6474, %v6546
        %v6548 = vpop.f32.mrb[0].mxu0
        %v6549 = vadd.f32 %v6476, %v6548
        %v6550 = vpop.f32.mrb[0].mxu0
        %v6551 = vadd.f32 %v6478, %v6550
        %6552 = vmatprep.mubr.bf16.mxu0 %v1645
        %6553 = vmatmul.mubr.bf16.gmra.mrb[0].mxu0 %v1644
        %v6554 = vpop.f32.mrb[0].mxu0
        %v6555 = vadd.f32 %v6482, %v6554
        %v6556 = vpop.f32.mrb[0].mxu0
        %v6557 = vadd.f32 %v6484, %v6556
        %v6558 = vpop.f32.mrb[0].mxu0
        %v6559 = vadd.f32 %v6486, %v6558
        %v6560 = vpop.f32.mrb[0].mxu0
        %v6561 = vadd.f32 %v6488, %v6560
        %6562 = vdwg.mxu0
        %6563 = vmatprep.subr.bf16.mxu0 %v4418
        %6564 = vmatpush1.bf16.xpose.msra.mxu0 %v4417
        %6565 = vmatprep.subr.bf16.mxu0 %v4429
        %6566 = vmatpush1.bf16.xpose.msra.mxu0 %v4428
        %6567 = vmatprep.subr.bf16.mxu0 %v4440
        %6568 = vmatpush1.bf16.xpose.msra.mxu0 %v4439
        %6569 = vmatprep.subr.bf16.mxu0 %v4451
        %6570 = vmatpush1.bf16.xpose.msra.mxu0 %v4450
        %6571 = vmatprep.subr.bf16.mxu0 %v4462
        %6572 = vmatpush1.bf16.xpose.msra.mxu0 %v4461
        %6573 = vmatprep.subr.bf16.mxu0 %v4473
        %6574 = vmatpush1.bf16.xpose.msra.mxu0 %v4472
        %6575 = vmatprep.subr.bf16.mxu0 %v4484
        %6576 = vmatpush1.bf16.xpose.msra.mxu0 %v4483
        %6577 = vmatprep.subr.bf16.mxu0 %v4495
        %6578 = vmatpush1.bf16.xpose.msra.mxu0 %v4494
        %6579 = vmatprep.subr.bf16.mxu0 %v4506
        %6580 = vmatpush1.bf16.xpose.msra.mxu0 %v4505
        %6581 = vmatprep.subr.bf16.mxu0 %v4517
        %6582 = vmatpush1.bf16.xpose.msra.mxu0 %v4516
        %6583 = vmatprep.subr.bf16.mxu0 %v4528
        %6584 = vmatpush1.bf16.xpose.msra.mxu0 %v4527
        %6585 = vmatprep.subr.bf16.mxu0 %v4539
        %6586 = vmatpush1.bf16.xpose.msra.mxu0 %v4538
        %6587 = vmatprep.subr.bf16.mxu0 %v4550
        %6588 = vmatpush1.bf16.xpose.msra.mxu0 %v4549
        %6589 = vmatprep.subr.bf16.mxu0 %v4561
        %6590 = vmatpush1.bf16.xpose.msra.mxu0 %v4560
        %6591 = vmatprep.subr.bf16.mxu0 %v4572
        %6592 = vmatpush1.bf16.xpose.msra.mxu0 %v4571
        %6593 = vmatprep.subr.bf16.mxu0 %v4583
        %6594 = vmatpush1.bf16.xpose.msra.mxu0 %v4582
        %6595 = vmatprep.mubr.bf16.mxu0 %v1614
        %6596 = vmatmul.mubr.bf16.gmra.mrb[0].mxu0 %v1613
        %v6597 = vpop.f32.mrb[0].mxu0
        %v6598 = vadd.f32 %v6525, %v6597
        %v6599 = vpop.f32.mrb[0].mxu0
        %v6600 = vadd.f32 %v6527, %v6599
        %v6601 = vpop.f32.mrb[0].mxu0
        %v6602 = vadd.f32 %v6529, %v6601
        %v6603 = vpop.f32.mrb[0].mxu0
        %v6604 = vadd.f32 %v6531, %v6603
        %6605 = vmatprep.mubr.bf16.mxu0 %v1625
        %6606 = vmatmul.mubr.bf16.gmra.mrb[0].mxu0 %v1624
        %v6607 = vpop.f32.mrb[0].mxu0
        %v6608 = vadd.f32 %v6535, %v6607
        %v6609 = vpop.f32.mrb[0].mxu0
        %v6610 = vadd.f32 %v6537, %v6609
        %v6611 = vpop.f32.mrb[0].mxu0
        %v6612 = vadd.f32 %v6539, %v6611
        %v6613 = vpop.f32.mrb[0].mxu0
        %v6614 = vadd.f32 %v6541, %v6613
        %6615 = vmatprep.mubr.bf16.mxu0 %v1636
        %6616 = vmatmul.mubr.bf16.gmra.mrb[0].mxu0 %v1635
        %v6617 = vpop.f32.mrb[0].mxu0
        %v6618 = vadd.f32 %v6545, %v6617
        %v6619 = vpop.f32.mrb[0].mxu0
        %v6620 = vadd.f32 %v6547, %v6619
        %v6621 = vpop.f32.mrb[0].mxu0
        %v6622 = vadd.f32 %v6549, %v6621
        %v6623 = vpop.f32.mrb[0].mxu0
        %v6624 = vadd.f32 %v6551, %v6623
        %6625 = vmatprep.mubr.bf16.mxu0 %v1647
        %6626 = vmatmul.mubr.bf16.gmra.mrb[0].mxu0 %v1646
        %v6627 = vpop.f32.mrb[0].mxu0
        %v6628 = vadd.f32 %v6555, %v6627
        %v6629 = vpop.f32.mrb[0].mxu0
        %v6630 = vadd.f32 %v6557, %v6629
        %v6631 = vpop.f32.mrb[0].mxu0
        %v6632 = vadd.f32 %v6559, %v6631
        %v6633 = vpop.f32.mrb[0].mxu0
        %v6634 = vadd.f32 %v6561, %v6633
        %6635 = vdwg.mxu0
        %6636 = vmatprep.subr.bf16.mxu0 %v4420
        %6637 = vmatpush1.bf16.xpose.msra.mxu0 %v4419
        %6638 = vmatprep.subr.bf16.mxu0 %v4431
        %6639 = vmatpush1.bf16.xpose.msra.mxu0 %v4430
        %6640 = vmatprep.subr.bf16.mxu0 %v4442
        %6641 = vmatpush1.bf16.xpose.msra.mxu0 %v4441
        %6642 = vmatprep.subr.bf16.mxu0 %v4453
        %6643 = vmatpush1.bf16.xpose.msra.mxu0 %v4452
        %6644 = vmatprep.subr.bf16.mxu0 %v4464
        %6645 = vmatpush1.bf16.xpose.msra.mxu0 %v4463
        %6646 = vmatprep.subr.bf16.mxu0 %v4475
        %6647 = vmatpush1.bf16.xpose.msra.mxu0 %v4474
        %6648 = vmatprep.subr.bf16.mxu0 %v4486
        %6649 = vmatpush1.bf16.xpose.msra.mxu0 %v4485
        %6650 = vmatprep.subr.bf16.mxu0 %v4497
        %6651 = vmatpush1.bf16.xpose.msra.mxu0 %v4496
        %6652 = vmatprep.subr.bf16.mxu0 %v4508
        %6653 = vmatpush1.bf16.xpose.msra.mxu0 %v4507
        %6654 = vmatprep.subr.bf16.mxu0 %v4519
        %6655 = vmatpush1.bf16.xpose.msra.mxu0 %v4518
        %6656 = vmatprep.subr.bf16.mxu0 %v4530
        %6657 = vmatpush1.bf16.xpose.msra.mxu0 %v4529
        %6658 = vmatprep.subr.bf16.mxu0 %v4541
        %6659 = vmatpush1.bf16.xpose.msra.mxu0 %v4540
        %6660 = vmatprep.subr.bf16.mxu0 %v4552
        %6661 = vmatpush1.bf16.xpose.msra.mxu0 %v4551
        %6662 = vmatprep.subr.bf16.mxu0 %v4563
        %6663 = vmatpush1.bf16.xpose.msra.mxu0 %v4562
        %6664 = vmatprep.subr.bf16.mxu0 %v4574
        %6665 = vmatpush1.bf16.xpose.msra.mxu0 %v4573
        %6666 = vmatprep.subr.bf16.mxu0 %v4585
        %6667 = vmatpush1.bf16.xpose.msra.mxu0 %v4584
        %6668 = vmatprep.mubr.bf16.mxu0 %v1616
        %6669 = vmatmul.mubr.bf16.gmra.mrb[0].mxu0 %v1615
        %v6670 = vpop.f32.mrb[0].mxu0
        %v6671 = vadd.f32 %v6598, %v6670
        %v6672 = vpop.f32.mrb[0].mxu0
        %v6673 = vadd.f32 %v6600, %v6672
        %v6674 = vpop.f32.mrb[0].mxu0
        %v6675 = vadd.f32 %v6602, %v6674
        %v6676 = vpop.f32.mrb[0].mxu0
        %v6677 = vadd.f32 %v6604, %v6676
        %6678 = vmatprep.mubr.bf16.mxu0 %v1627
        %6679 = vmatmul.mubr.bf16.gmra.mrb[0].mxu0 %v1626
        %v6680 = vpop.f32.mrb[0].mxu0
        %v6681 = vadd.f32 %v6608, %v6680
        %v6682 = vpop.f32.mrb[0].mxu0
        %v6683 = vadd.f32 %v6610, %v6682
        %v6684 = vpop.f32.mrb[0].mxu0
        %v6685 = vadd.f32 %v6612, %v6684
        %v6686 = vpop.f32.mrb[0].mxu0
        %v6687 = vadd.f32 %v6614, %v6686
        %6688 = vmatprep.mubr.bf16.mxu0 %v1638
        %6689 = vmatmul.mubr.bf16.gmra.mrb[0].mxu0 %v1637
        %v6690 = vpop.f32.mrb[0].mxu0
        %v6691 = vadd.f32 %v6618, %v6690
        %v6692 = vpop.f32.mrb[0].mxu0
        %v6693 = vadd.f32 %v6620, %v6692
        %v6694 = vpop.f32.mrb[0].mxu0
        %v6695 = vadd.f32 %v6622, %v6694
        %v6696 = vpop.f32.mrb[0].mxu0
        %v6697 = vadd.f32 %v6624, %v6696
        %6698 = vmatprep.mubr.bf16.mxu0 %v1649
        %6699 = vmatmul.mubr.bf16.gmra.mrb[0].mxu0 %v1648
        %v6700 = vpop.f32.mrb[0].mxu0
        %v6701 = vadd.f32 %v6628, %v6700
        %v6702 = vpop.f32.mrb[0].mxu0
        %v6703 = vadd.f32 %v6630, %v6702
        %v6704 = vpop.f32.mrb[0].mxu0
        %v6705 = vadd.f32 %v6632, %v6704
        %v6706 = vpop.f32.mrb[0].mxu0
        %v6707 = vadd.f32 %v6634, %v6706
        %6708 = vdwg.mxu0
        %6709 = vmatprep.subr.bf16.mxu0 0
        %6710 = vmatpush1.bf16.xpose.msra.mxu0 %v6105
        %6711 = vmatprep.subr.bf16.mxu0 0
        %6712 = vmatpush1.bf16.xpose.msra.mxu0 %v6108
        %6713 = vmatprep.subr.bf16.mxu0 0
        %6714 = vmatpush1.bf16.xpose.msra.mxu0 %v6111
        %6715 = vmatprep.subr.bf16.mxu0 0
        %6716 = vmatpush1.bf16.xpose.msra.mxu0 %v6114
        %6717 = vmatprep.subr.bf16.mxu0 0
        %6718 = vmatpush1.bf16.xpose.msra.mxu0 %v6117
        %6719 = vmatprep.subr.bf16.mxu0 0
        %6720 = vmatpush1.bf16.xpose.msra.mxu0 %v6120
        %6721 = vmatprep.subr.bf16.mxu0 0
        %6722 = vmatpush1.bf16.xpose.msra.mxu0 %v6123
        %6723 = vmatprep.subr.bf16.mxu0 0
        %6724 = vmatpush1.bf16.xpose.msra.mxu0 %v6126
        %6725 = vmatprep.subr.bf16.mxu0 0
        %6726 = vmatpush1.bf16.xpose.msra.mxu0 %v6129
        %6727 = vmatprep.subr.bf16.mxu0 0
        %6728 = vmatpush1.bf16.xpose.msra.mxu0 %v6132
        %6729 = vmatprep.subr.bf16.mxu0 0
        %6730 = vmatpush1.bf16.xpose.msra.mxu0 %v6135
        %6731 = vmatprep.subr.bf16.mxu0 0
        %6732 = vmatpush1.bf16.xpose.msra.mxu0 %v6138
        %6733 = vmatprep.subr.bf16.mxu0 0
        %6734 = vmatpush1.bf16.xpose.msra.mxu0 %v6141
        %6735 = vmatprep.subr.bf16.mxu0 0
        %6736 = vmatpush1.bf16.xpose.msra.mxu0 %v6144
        %6737 = vmatprep.subr.bf16.mxu0 0
        %6738 = vmatpush1.bf16.xpose.msra.mxu0 %v6147
        %6739 = vmatprep.subr.bf16.mxu0 0
        %6740 = vmatpush1.bf16.xpose.msra.mxu0 %v6150
        %6741 = vmatprep.mubr.bf16.mxu0 0
        %6742 = vmatmul.mubr.bf16.gmra.mrb[0].mxu0 %v6093
        %v6743 = vpop.f32.mrb[0].mxu0
        %v6744 = vadd.f32 %v6671, %v6743
        %v6745 = vpop.f32.mrb[0].mxu0
        %v6746 = vadd.f32 %v6673, %v6745
        %v6747 = vpop.f32.mrb[0].mxu0
        %v6748 = vadd.f32 %v6675, %v6747
        %v6749 = vpop.f32.mrb[0].mxu0
        %v6750 = vadd.f32 %v6677, %v6749
        %6751 = vmatprep.mubr.bf16.mxu0 0
        %6752 = vmatmul.mubr.bf16.gmra.mrb[0].mxu0 %v6096
        %v6753 = vpop.f32.mrb[0].mxu0
        %v6754 = vadd.f32 %v6681, %v6753
        %v6755 = vpop.f32.mrb[0].mxu0
        %v6756 = vadd.f32 %v6683, %v6755
        %v6757 = vpop.f32.mrb[0].mxu0
        %v6758 = vadd.f32 %v6685, %v6757
        %v6759 = vpop.f32.mrb[0].mxu0
        %v6760 = vadd.f32 %v6687, %v6759
        %6761 = vmatprep.mubr.bf16.mxu0 0
        %6762 = vmatmul.mubr.bf16.gmra.mrb[0].mxu0 %v6099
        %v6763 = vpop.f32.mrb[0].mxu0
        %v6764 = vadd.f32 %v6691, %v6763
        %v6765 = vpop.f32.mrb[0].mxu0
        %v6766 = vadd.f32 %v6693, %v6765
        %v6767 = vpop.f32.mrb[0].mxu0
        %v6768 = vadd.f32 %v6695, %v6767
        %v6769 = vpop.f32.mrb[0].mxu0
        %v6770 = vadd.f32 %v6697, %v6769
        %6771 = vmatprep.mubr.bf16.mxu0 0
        %6772 = vmatmul.mubr.bf16.gmra.mrb[0].mxu0 %v6102
        %v6773 = vpop.f32.mrb[0].mxu0
        %v6774 = vadd.f32 %v6701, %v6773
        %v6775 = vpop.f32.mrb[0].mxu0
        %v6776 = vadd.f32 %v6703, %v6775
        %v6777 = vpop.f32.mrb[0].mxu0
        %v6778 = vadd.f32 %v6705, %v6777
        %v6779 = vpop.f32.mrb[0].mxu0
        %v6780 = vadd.f32 %v6707, %v6779
        %6781 = vdwg.mxu0
        %6782 = vmatprep.subr.bf16.mxu0 %v4588
        %6783 = vmatpush1.bf16.xpose.msra.mxu0 %v4587
        %6784 = vmatprep.subr.bf16.mxu0 %v4599
        %6785 = vmatpush1.bf16.xpose.msra.mxu0 %v4598
        %6786 = vmatprep.subr.bf16.mxu0 %v4610
        %6787 = vmatpush1.bf16.xpose.msra.mxu0 %v4609
        %6788 = vmatprep.subr.bf16.mxu0 %v4621
        %6789 = vmatpush1.bf16.xpose.msra.mxu0 %v4620
        %6790 = vmatprep.subr.bf16.mxu0 %v4632
        %6791 = vmatpush1.bf16.xpose.msra.mxu0 %v4631
        %6792 = vmatprep.subr.bf16.mxu0 %v4643
        %6793 = vmatpush1.bf16.xpose.msra.mxu0 %v4642
        %6794 = vmatprep.subr.bf16.mxu0 %v4654
        %6795 = vmatpush1.bf16.xpose.msra.mxu0 %v4653
        %6796 = vmatprep.subr.bf16.mxu0 %v4665
        %6797 = vmatpush1.bf16.xpose.msra.mxu0 %v4664
        %6798 = vmatprep.subr.bf16.mxu0 %v4676
        %6799 = vmatpush1.bf16.xpose.msra.mxu0 %v4675
        %6800 = vmatprep.subr.bf16.mxu0 %v4687
        %6801 = vmatpush1.bf16.xpose.msra.mxu0 %v4686
        %6802 = vmatprep.subr.bf16.mxu0 %v4698
        %6803 = vmatpush1.bf16.xpose.msra.mxu0 %v4697
        %6804 = vmatprep.subr.bf16.mxu0 %v4709
        %6805 = vmatpush1.bf16.xpose.msra.mxu0 %v4708
        %6806 = vmatprep.subr.bf16.mxu0 %v4720
        %6807 = vmatpush1.bf16.xpose.msra.mxu0 %v4719
        %6808 = vmatprep.subr.bf16.mxu0 %v4731
        %6809 = vmatpush1.bf16.xpose.msra.mxu0 %v4730
        %6810 = vmatprep.subr.bf16.mxu0 %v4742
        %6811 = vmatpush1.bf16.xpose.msra.mxu0 %v4741
        %6812 = vmatprep.subr.bf16.mxu0 %v4753
        %6813 = vmatpush1.bf16.xpose.msra.mxu0 %v4752
        %6814 = vmatprep.mubr.bf16.mxu0 %v1608
        %6815 = vmatmul.mubr.bf16.gmra.mrb[0].mxu0 %v1607
        %v6816 = vpop.f32.mrb[0].mxu0
        %v6817 = vadd.f32 0.0, %v6816
        %v6818 = vpop.f32.mrb[0].mxu0
        %v6819 = vadd.f32 0.0, %v6818
        %v6820 = vpop.f32.mrb[0].mxu0
        %v6821 = vadd.f32 0.0, %v6820
        %v6822 = vpop.f32.mrb[0].mxu0
        %v6823 = vadd.f32 0.0, %v6822
        %6824 = vmatprep.mubr.bf16.mxu0 %v1619
        %6825 = vmatmul.mubr.bf16.gmra.mrb[0].mxu0 %v1618
        %v6826 = vpop.f32.mrb[0].mxu0
        %v6827 = vadd.f32 0.0, %v6826
        %v6828 = vpop.f32.mrb[0].mxu0
        %v6829 = vadd.f32 0.0, %v6828
        %v6830 = vpop.f32.mrb[0].mxu0
        %v6831 = vadd.f32 0.0, %v6830
        %v6832 = vpop.f32.mrb[0].mxu0
        %v6833 = vadd.f32 0.0, %v6832
        %6834 = vmatprep.mubr.bf16.mxu0 %v1630
        %6835 = vmatmul.mubr.bf16.gmra.mrb[0].mxu0 %v1629
        %v6836 = vpop.f32.mrb[0].mxu0
        %v6837 = vadd.f32 0.0, %v6836
        %v6838 = vpop.f32.mrb[0].mxu0
        %v6839 = vadd.f32 0.0, %v6838
        %v6840 = vpop.f32.mrb[0].mxu0
        %v6841 = vadd.f32 0.0, %v6840
        %v6842 = vpop.f32.mrb[0].mxu0
        %v6843 = vadd.f32 0.0, %v6842
        %6844 = vmatprep.mubr.bf16.mxu0 %v1641
        %6845 = vmatmul.mubr.bf16.gmra.mrb[0].mxu0 %v1640
        %v6846 = vpop.f32.mrb[0].mxu0
        %v6847 = vadd.f32 0.0, %v6846
        %v6848 = vpop.f32.mrb[0].mxu0
        %v6849 = vadd.f32 0.0, %v6848
        %v6850 = vpop.f32.mrb[0].mxu0
        %v6851 = vadd.f32 0.0, %v6850
        %v6852 = vpop.f32.mrb[0].mxu0
        %v6853 = vadd.f32 0.0, %v6852
        %6854 = vdwg.mxu0
        %6855 = vmatprep.subr.bf16.mxu0 %v4590
        %6856 = vmatpush1.bf16.xpose.msra.mxu0 %v4589
        %6857 = vmatprep.subr.bf16.mxu0 %v4601
        %6858 = vmatpush1.bf16.xpose.msra.mxu0 %v4600
        %6859 = vmatprep.subr.bf16.mxu0 %v4612
        %6860 = vmatpush1.bf16.xpose.msra.mxu0 %v4611
        %6861 = vmatprep.subr.bf16.mxu0 %v4623
        %6862 = vmatpush1.bf16.xpose.msra.mxu0 %v4622
        %6863 = vmatprep.subr.bf16.mxu0 %v4634
        %6864 = vmatpush1.bf16.xpose.msra.mxu0 %v4633
        %6865 = vmatprep.subr.bf16.mxu0 %v4645
        %6866 = vmatpush1.bf16.xpose.msra.mxu0 %v4644
        %6867 = vmatprep.subr.bf16.mxu0 %v4656
        %6868 = vmatpush1.bf16.xpose.msra.mxu0 %v4655
        %6869 = vmatprep.subr.bf16.mxu0 %v4667
        %6870 = vmatpush1.bf16.xpose.msra.mxu0 %v4666
        %6871 = vmatprep.subr.bf16.mxu0 %v4678
        %6872 = vmatpush1.bf16.xpose.msra.mxu0 %v4677
        %6873 = vmatprep.subr.bf16.mxu0 %v4689
        %6874 = vmatpush1.bf16.xpose.msra.mxu0 %v4688
        %6875 = vmatprep.subr.bf16.mxu0 %v4700
        %6876 = vmatpush1.bf16.xpose.msra.mxu0 %v4699
        %6877 = vmatprep.subr.bf16.mxu0 %v4711
        %6878 = vmatpush1.bf16.xpose.msra.mxu0 %v4710
        %6879 = vmatprep.subr.bf16.mxu0 %v4722
        %6880 = vmatpush1.bf16.xpose.msra.mxu0 %v4721
        %6881 = vmatprep.subr.bf16.mxu0 %v4733
        %6882 = vmatpush1.bf16.xpose.msra.mxu0 %v4732
        %6883 = vmatprep.subr.bf16.mxu0 %v4744
        %6884 = vmatpush1.bf16.xpose.msra.mxu0 %v4743
        %6885 = vmatprep.subr.bf16.mxu0 %v4755
        %6886 = vmatpush1.bf16.xpose.msra.mxu0 %v4754
        %6887 = vmatprep.mubr.bf16.mxu0 %v1610
        %6888 = vmatmul.mubr.bf16.gmra.mrb[0].mxu0 %v1609
        %v6889 = vpop.f32.mrb[0].mxu0
        %v6890 = vadd.f32 %v6817, %v6889
        %v6891 = vpop.f32.mrb[0].mxu0
        %v6892 = vadd.f32 %v6819, %v6891
        %v6893 = vpop.f32.mrb[0].mxu0
        %v6894 = vadd.f32 %v6821, %v6893
        %v6895 = vpop.f32.mrb[0].mxu0
        %v6896 = vadd.f32 %v6823, %v6895
        %6897 = vmatprep.mubr.bf16.mxu0 %v1621
        %6898 = vmatmul.mubr.bf16.gmra.mrb[0].mxu0 %v1620
        %v6899 = vpop.f32.mrb[0].mxu0
        %v6900 = vadd.f32 %v6827, %v6899
        %v6901 = vpop.f32.mrb[0].mxu0
        %v6902 = vadd.f32 %v6829, %v6901
        %v6903 = vpop.f32.mrb[0].mxu0
        %v6904 = vadd.f32 %v6831, %v6903
        %v6905 = vpop.f32.mrb[0].mxu0
        %v6906 = vadd.f32 %v6833, %v6905
        %6907 = vmatprep.mubr.bf16.mxu0 %v1632
        %6908 = vmatmul.mubr.bf16.gmra.mrb[0].mxu0 %v1631
        %v6909 = vpop.f32.mrb[0].mxu0
        %v6910 = vadd.f32 %v6837, %v6909
        %v6911 = vpop.f32.mrb[0].mxu0
        %v6912 = vadd.f32 %v6839, %v6911
        %v6913 = vpop.f32.mrb[0].mxu0
        %v6914 = vadd.f32 %v6841, %v6913
        %v6915 = vpop.f32.mrb[0].mxu0
        %v6916 = vadd.f32 %v6843, %v6915
        %6917 = vmatprep.mubr.bf16.mxu0 %v1643
        %6918 = vmatmul.mubr.bf16.gmra.mrb[0].mxu0 %v1642
        %v6919 = vpop.f32.mrb[0].mxu0
        %v6920 = vadd.f32 %v6847, %v6919
        %v6921 = vpop.f32.mrb[0].mxu0
        %v6922 = vadd.f32 %v6849, %v6921
        %v6923 = vpop.f32.mrb[0].mxu0
        %v6924 = vadd.f32 %v6851, %v6923
        %v6925 = vpop.f32.mrb[0].mxu0
        %v6926 = vadd.f32 %v6853, %v6925
        %6927 = vdwg.mxu0
        %6928 = vmatprep.subr.bf16.mxu0 %v4592
        %6929 = vmatpush1.bf16.xpose.msra.mxu0 %v4591
        %6930 = vmatprep.subr.bf16.mxu0 %v4603
        %6931 = vmatpush1.bf16.xpose.msra.mxu0 %v4602
        %6932 = vmatprep.subr.bf16.mxu0 %v4614
        %6933 = vmatpush1.bf16.xpose.msra.mxu0 %v4613
        %6934 = vmatprep.subr.bf16.mxu0 %v4625
        %6935 = vmatpush1.bf16.xpose.msra.mxu0 %v4624
        %6936 = vmatprep.subr.bf16.mxu0 %v4636
        %6937 = vmatpush1.bf16.xpose.msra.mxu0 %v4635
        %6938 = vmatprep.subr.bf16.mxu0 %v4647
        %6939 = vmatpush1.bf16.xpose.msra.mxu0 %v4646
        %6940 = vmatprep.subr.bf16.mxu0 %v4658
        %6941 = vmatpush1.bf16.xpose.msra.mxu0 %v4657
        %6942 = vmatprep.subr.bf16.mxu0 %v4669
        %6943 = vmatpush1.bf16.xpose.msra.mxu0 %v4668
        %6944 = vmatprep.subr.bf16.mxu0 %v4680
        %6945 = vmatpush1.bf16.xpose.msra.mxu0 %v4679
        %6946 = vmatprep.subr.bf16.mxu0 %v4691
        %6947 = vmatpush1.bf16.xpose.msra.mxu0 %v4690
        %6948 = vmatprep.subr.bf16.mxu0 %v4702
        %6949 = vmatpush1.bf16.xpose.msra.mxu0 %v4701
        %6950 = vmatprep.subr.bf16.mxu0 %v4713
        %6951 = vmatpush1.bf16.xpose.msra.mxu0 %v4712
        %6952 = vmatprep.subr.bf16.mxu0 %v4724
        %6953 = vmatpush1.bf16.xpose.msra.mxu0 %v4723
        %6954 = vmatprep.subr.bf16.mxu0 %v4735
        %6955 = vmatpush1.bf16.xpose.msra.mxu0 %v4734
        %6956 = vmatprep.subr.bf16.mxu0 %v4746
        %6957 = vmatpush1.bf16.xpose.msra.mxu0 %v4745
        %6958 = vmatprep.subr.bf16.mxu0 %v4757
        %6959 = vmatpush1.bf16.xpose.msra.mxu0 %v4756
        %6960 = vmatprep.mubr.bf16.mxu0 %v1612
        %6961 = vmatmul.mubr.bf16.gmra.mrb[0].mxu0 %v1611
        %v6962 = vpop.f32.mrb[0].mxu0
        %v6963 = vadd.f32 %v6890, %v6962
        %v6964 = vpop.f32.mrb[0].mxu0
        %v6965 = vadd.f32 %v6892, %v6964
        %v6966 = vpop.f32.mrb[0].mxu0
        %v6967 = vadd.f32 %v6894, %v6966
        %v6968 = vpop.f32.mrb[0].mxu0
        %v6969 = vadd.f32 %v6896, %v6968
        %6970 = vmatprep.mubr.bf16.mxu0 %v1623
        %6971 = vmatmul.mubr.bf16.gmra.mrb[0].mxu0 %v1622
        %v6972 = vpop.f32.mrb[0].mxu0
        %v6973 = vadd.f32 %v6900, %v6972
        %v6974 = vpop.f32.mrb[0].mxu0
        %v6975 = vadd.f32 %v6902, %v6974
        %v6976 = vpop.f32.mrb[0].mxu0
        %v6977 = vadd.f32 %v6904, %v6976
        %v6978 = vpop.f32.mrb[0].mxu0
        %v6979 = vadd.f32 %v6906, %v6978
        %6980 = vmatprep.mubr.bf16.mxu0 %v1634
        %6981 = vmatmul.mubr.bf16.gmra.mrb[0].mxu0 %v1633
        %v6982 = vpop.f32.mrb[0].mxu0
        %v6983 = vadd.f32 %v6910, %v6982
        %v6984 = vpop.f32.mrb[0].mxu0
        %v6985 = vadd.f32 %v6912, %v6984
        %v6986 = vpop.f32.mrb[0].mxu0
        %v6987 = vadd.f32 %v6914, %v6986
        %v6988 = vpop.f32.mrb[0].mxu0
        %v6989 = vadd.f32 %v6916, %v6988
        %6990 = vmatprep.mubr.bf16.mxu0 %v1645
        %6991 = vmatmul.mubr.bf16.gmra.mrb[0].mxu0 %v1644
        %v6992 = vpop.f32.mrb[0].mxu0
        %v6993 = vadd.f32 %v6920, %v6992
        %v6994 = vpop.f32.mrb[0].mxu0
        %v6995 = vadd.f32 %v6922, %v6994
        %v6996 = vpop.f32.mrb[0].mxu0
        %v6997 = vadd.f32 %v6924, %v6996
        %v6998 = vpop.f32.mrb[0].mxu0
        %v6999 = vadd.f32 %v6926, %v6998
        %7000 = vdwg.mxu0
        %7001 = vmatprep.subr.bf16.mxu0 %v4594
        %7002 = vmatpush1.bf16.xpose.msra.mxu0 %v4593
        %7003 = vmatprep.subr.bf16.mxu0 %v4605
        %7004 = vmatpush1.bf16.xpose.msra.mxu0 %v4604
        %7005 = vmatprep.subr.bf16.mxu0 %v4616
        %7006 = vmatpush1.bf16.xpose.msra.mxu0 %v4615
        %7007 = vmatprep.subr.bf16.mxu0 %v4627
        %7008 = vmatpush1.bf16.xpose.msra.mxu0 %v4626
        %7009 = vmatprep.subr.bf16.mxu0 %v4638
        %7010 = vmatpush1.bf16.xpose.msra.mxu0 %v4637
        %7011 = vmatprep.subr.bf16.mxu0 %v4649
        %7012 = vmatpush1.bf16.xpose.msra.mxu0 %v4648
        %7013 = vmatprep.subr.bf16.mxu0 %v4660
        %7014 = vmatpush1.bf16.xpose.msra.mxu0 %v4659
        %7015 = vmatprep.subr.bf16.mxu0 %v4671
        %7016 = vmatpush1.bf16.xpose.msra.mxu0 %v4670
        %7017 = vmatprep.subr.bf16.mxu0 %v4682
        %7018 = vmatpush1.bf16.xpose.msra.mxu0 %v4681
        %7019 = vmatprep.subr.bf16.mxu0 %v4693
        %7020 = vmatpush1.bf16.xpose.msra.mxu0 %v4692
        %7021 = vmatprep.subr.bf16.mxu0 %v4704
        %7022 = vmatpush1.bf16.xpose.msra.mxu0 %v4703
        %7023 = vmatprep.subr.bf16.mxu0 %v4715
        %7024 = vmatpush1.bf16.xpose.msra.mxu0 %v4714
        %7025 = vmatprep.subr.bf16.mxu0 %v4726
        %7026 = vmatpush1.bf16.xpose.msra.mxu0 %v4725
        %7027 = vmatprep.subr.bf16.mxu0 %v4737
        %7028 = vmatpush1.bf16.xpose.msra.mxu0 %v4736
        %7029 = vmatprep.subr.bf16.mxu0 %v4748
        %7030 = vmatpush1.bf16.xpose.msra.mxu0 %v4747
        %7031 = vmatprep.subr.bf16.mxu0 %v4759
        %7032 = vmatpush1.bf16.xpose.msra.mxu0 %v4758
        %7033 = vmatprep.mubr.bf16.mxu0 %v1614
        %7034 = vmatmul.mubr.bf16.gmra.mrb[0].mxu0 %v1613
        %v7035 = vpop.f32.mrb[0].mxu0
        %v7036 = vadd.f32 %v6963, %v7035
        %v7037 = vpop.f32.mrb[0].mxu0
        %v7038 = vadd.f32 %v6965, %v7037
        %v7039 = vpop.f32.mrb[0].mxu0
        %v7040 = vadd.f32 %v6967, %v7039
        %v7041 = vpop.f32.mrb[0].mxu0
        %v7042 = vadd.f32 %v6969, %v7041
        %7043 = vmatprep.mubr.bf16.mxu0 %v1625
        %7044 = vmatmul.mubr.bf16.gmra.mrb[0].mxu0 %v1624
        %v7045 = vpop.f32.mrb[0].mxu0
        %v7046 = vadd.f32 %v6973, %v7045
        %v7047 = vpop.f32.mrb[0].mxu0
        %v7048 = vadd.f32 %v6975, %v7047
        %v7049 = vpop.f32.mrb[0].mxu0
        %v7050 = vadd.f32 %v6977, %v7049
        %v7051 = vpop.f32.mrb[0].mxu0
        %v7052 = vadd.f32 %v6979, %v7051
        %7053 = vmatprep.mubr.bf16.mxu0 %v1636
        %7054 = vmatmul.mubr.bf16.gmra.mrb[0].mxu0 %v1635
        %v7055 = vpop.f32.mrb[0].mxu0
        %v7056 = vadd.f32 %v6983, %v7055
        %v7057 = vpop.f32.mrb[0].mxu0
        %v7058 = vadd.f32 %v6985, %v7057
        %v7059 = vpop.f32.mrb[0].mxu0
        %v7060 = vadd.f32 %v6987, %v7059
        %v7061 = vpop.f32.mrb[0].mxu0
        %v7062 = vadd.f32 %v6989, %v7061
        %7063 = vmatprep.mubr.bf16.mxu0 %v1647
        %7064 = vmatmul.mubr.bf16.gmra.mrb[0].mxu0 %v1646
        %v7065 = vpop.f32.mrb[0].mxu0
        %v7066 = vadd.f32 %v6993, %v7065
        %v7067 = vpop.f32.mrb[0].mxu0
        %v7068 = vadd.f32 %v6995, %v7067
        %v7069 = vpop.f32.mrb[0].mxu0
        %v7070 = vadd.f32 %v6997, %v7069
        %v7071 = vpop.f32.mrb[0].mxu0
        %v7072 = vadd.f32 %v6999, %v7071
        %7073 = vdwg.mxu0
        %7074 = vmatprep.subr.bf16.mxu0 %v4596
        %7075 = vmatpush1.bf16.xpose.msra.mxu0 %v4595
        %7076 = vmatprep.subr.bf16.mxu0 %v4607
        %7077 = vmatpush1.bf16.xpose.msra.mxu0 %v4606
        %7078 = vmatprep.subr.bf16.mxu0 %v4618
        %7079 = vmatpush1.bf16.xpose.msra.mxu0 %v4617
        %7080 = vmatprep.subr.bf16.mxu0 %v4629
        %7081 = vmatpush1.bf16.xpose.msra.mxu0 %v4628
        %7082 = vmatprep.subr.bf16.mxu0 %v4640
        %7083 = vmatpush1.bf16.xpose.msra.mxu0 %v4639
        %7084 = vmatprep.subr.bf16.mxu0 %v4651
        %7085 = vmatpush1.bf16.xpose.msra.mxu0 %v4650
        %7086 = vmatprep.subr.bf16.mxu0 %v4662
        %7087 = vmatpush1.bf16.xpose.msra.mxu0 %v4661
        %7088 = vmatprep.subr.bf16.mxu0 %v4673
        %7089 = vmatpush1.bf16.xpose.msra.mxu0 %v4672
        %7090 = vmatprep.subr.bf16.mxu0 %v4684
        %7091 = vmatpush1.bf16.xpose.msra.mxu0 %v4683
        %7092 = vmatprep.subr.bf16.mxu0 %v4695
        %7093 = vmatpush1.bf16.xpose.msra.mxu0 %v4694
        %7094 = vmatprep.subr.bf16.mxu0 %v4706
        %7095 = vmatpush1.bf16.xpose.msra.mxu0 %v4705
        %7096 = vmatprep.subr.bf16.mxu0 %v4717
        %7097 = vmatpush1.bf16.xpose.msra.mxu0 %v4716
        %7098 = vmatprep.subr.bf16.mxu0 %v4728
        %7099 = vmatpush1.bf16.xpose.msra.mxu0 %v4727
        %7100 = vmatprep.subr.bf16.mxu0 %v4739
        %7101 = vmatpush1.bf16.xpose.msra.mxu0 %v4738
        %7102 = vmatprep.subr.bf16.mxu0 %v4750
        %7103 = vmatpush1.bf16.xpose.msra.mxu0 %v4749
        %7104 = vmatprep.subr.bf16.mxu0 %v4761
        %7105 = vmatpush1.bf16.xpose.msra.mxu0 %v4760
        %7106 = vmatprep.mubr.bf16.mxu0 %v1616
        %7107 = vmatmul.mubr.bf16.gmra.mrb[0].mxu0 %v1615
        %v7108 = vpop.f32.mrb[0].mxu0
        %v7109 = vadd.f32 %v7036, %v7108
        %v7110 = vpop.f32.mrb[0].mxu0
        %v7111 = vadd.f32 %v7038, %v7110
        %v7112 = vpop.f32.mrb[0].mxu0
        %v7113 = vadd.f32 %v7040, %v7112
        %v7114 = vpop.f32.mrb[0].mxu0
        %v7115 = vadd.f32 %v7042, %v7114
        %7116 = vmatprep.mubr.bf16.mxu0 %v1627
        %7117 = vmatmul.mubr.bf16.gmra.mrb[0].mxu0 %v1626
        %v7118 = vpop.f32.mrb[0].mxu0
        %v7119 = vadd.f32 %v7046, %v7118
        %v7120 = vpop.f32.mrb[0].mxu0
        %v7121 = vadd.f32 %v7048, %v7120
        %v7122 = vpop.f32.mrb[0].mxu0
        %v7123 = vadd.f32 %v7050, %v7122
        %v7124 = vpop.f32.mrb[0].mxu0
        %v7125 = vadd.f32 %v7052, %v7124
        %7126 = vmatprep.mubr.bf16.mxu0 %v1638
        %7127 = vmatmul.mubr.bf16.gmra.mrb[0].mxu0 %v1637
        %v7128 = vpop.f32.mrb[0].mxu0
        %v7129 = vadd.f32 %v7056, %v7128
        %v7130 = vpop.f32.mrb[0].mxu0
        %v7131 = vadd.f32 %v7058, %v7130
        %v7132 = vpop.f32.mrb[0].mxu0
        %v7133 = vadd.f32 %v7060, %v7132
        %v7134 = vpop.f32.mrb[0].mxu0
        %v7135 = vadd.f32 %v7062, %v7134
        %7136 = vmatprep.mubr.bf16.mxu0 %v1649
        %7137 = vmatmul.mubr.bf16.gmra.mrb[0].mxu0 %v1648
        %v7138 = vpop.f32.mrb[0].mxu0
        %v7139 = vadd.f32 %v7066, %v7138
        %v7140 = vpop.f32.mrb[0].mxu0
        %v7141 = vadd.f32 %v7068, %v7140
        %v7142 = vpop.f32.mrb[0].mxu0
        %v7143 = vadd.f32 %v7070, %v7142
        %v7144 = vpop.f32.mrb[0].mxu0
        %v7145 = vadd.f32 %v7072, %v7144
        %7146 = vdwg.mxu0
        %7147 = vmatprep.subr.bf16.mxu0 0
        %7148 = vmatpush1.bf16.xpose.msra.mxu0 %v6153
        %7149 = vmatprep.subr.bf16.mxu0 0
        %7150 = vmatpush1.bf16.xpose.msra.mxu0 %v6156
        %7151 = vmatprep.subr.bf16.mxu0 0
        %7152 = vmatpush1.bf16.xpose.msra.mxu0 %v6159
        %7153 = vmatprep.subr.bf16.mxu0 0
        %7154 = vmatpush1.bf16.xpose.msra.mxu0 %v6162
        %7155 = vmatprep.subr.bf16.mxu0 0
        %7156 = vmatpush1.bf16.xpose.msra.mxu0 %v6165
        %7157 = vmatprep.subr.bf16.mxu0 0
        %7158 = vmatpush1.bf16.xpose.msra.mxu0 %v6168
        %7159 = vmatprep.subr.bf16.mxu0 0
        %7160 = vmatpush1.bf16.xpose.msra.mxu0 %v6171
        %7161 = vmatprep.subr.bf16.mxu0 0
        %7162 = vmatpush1.bf16.xpose.msra.mxu0 %v6174
        %7163 = vmatprep.subr.bf16.mxu0 0
        %7164 = vmatpush1.bf16.xpose.msra.mxu0 %v6177
        %7165 = vmatprep.subr.bf16.mxu0 0
        %7166 = vmatpush1.bf16.xpose.msra.mxu0 %v6180
        %7167 = vmatprep.subr.bf16.mxu0 0
        %7168 = vmatpush1.bf16.xpose.msra.mxu0 %v6183
        %7169 = vmatprep.subr.bf16.mxu0 0
        %7170 = vmatpush1.bf16.xpose.msra.mxu0 %v6186
        %7171 = vmatprep.subr.bf16.mxu0 0
        %7172 = vmatpush1.bf16.xpose.msra.mxu0 %v6189
        %7173 = vmatprep.subr.bf16.mxu0 0
        %7174 = vmatpush1.bf16.xpose.msra.mxu0 %v6192
        %7175 = vmatprep.subr.bf16.mxu0 0
        %7176 = vmatpush1.bf16.xpose.msra.mxu0 %v6195
        %7177 = vmatprep.subr.bf16.mxu0 0
        %7178 = vmatpush1.bf16.xpose.msra.mxu0 %v6198
        %7179 = vmatprep.mubr.bf16.mxu0 0
        %7180 = vmatmul.mubr.bf16.gmra.mrb[0].mxu0 %v6093
        %v7181 = vpop.f32.mrb[0].mxu0
        %v7182 = vadd.f32 %v7109, %v7181
        %v7183 = vpop.f32.mrb[0].mxu0
        %v7184 = vadd.f32 %v7111, %v7183
        %v7185 = vpop.f32.mrb[0].mxu0
        %v7186 = vadd.f32 %v7113, %v7185
        %v7187 = vpop.f32.mrb[0].mxu0
        %v7188 = vadd.f32 %v7115, %v7187
        %7189 = vmatprep.mubr.bf16.mxu0 0
        %7190 = vmatmul.mubr.bf16.gmra.mrb[0].mxu0 %v6096
        %v7191 = vpop.f32.mrb[0].mxu0
        %v7192 = vadd.f32 %v7119, %v7191
        %v7193 = vpop.f32.mrb[0].mxu0
        %v7194 = vadd.f32 %v7121, %v7193
        %v7195 = vpop.f32.mrb[0].mxu0
        %v7196 = vadd.f32 %v7123, %v7195
        %v7197 = vpop.f32.mrb[0].mxu0
        %v7198 = vadd.f32 %v7125, %v7197
        %7199 = vmatprep.mubr.bf16.mxu0 0
        %7200 = vmatmul.mubr.bf16.gmra.mrb[0].mxu0 %v6099
        %v7201 = vpop.f32.mrb[0].mxu0
        %v7202 = vadd.f32 %v7129, %v7201
        %v7203 = vpop.f32.mrb[0].mxu0
        %v7204 = vadd.f32 %v7131, %v7203
        %v7205 = vpop.f32.mrb[0].mxu0
        %v7206 = vadd.f32 %v7133, %v7205
        %v7207 = vpop.f32.mrb[0].mxu0
        %v7208 = vadd.f32 %v7135, %v7207
        %7209 = vmatprep.mubr.bf16.mxu0 0
        %7210 = vmatmul.mubr.bf16.gmra.mrb[0].mxu0 %v6102
        %v7211 = vpop.f32.mrb[0].mxu0
        %v7212 = vadd.f32 %v7139, %v7211
        %v7213 = vpop.f32.mrb[0].mxu0
        %v7214 = vadd.f32 %v7141, %v7213
        %v7215 = vpop.f32.mrb[0].mxu0
        %v7216 = vadd.f32 %v7143, %v7215
        %v7217 = vpop.f32.mrb[0].mxu0
        %v7218 = vadd.f32 %v7145, %v7217
        %7219 = vdwg.mxu0
        %7220 = vmatprep.subr.bf16.mxu0 %v4764
        %7221 = vmatpush1.bf16.xpose.msra.mxu0 %v4763
        %7222 = vmatprep.subr.bf16.mxu0 %v4775
        %7223 = vmatpush1.bf16.xpose.msra.mxu0 %v4774
        %7224 = vmatprep.subr.bf16.mxu0 %v4786
        %7225 = vmatpush1.bf16.xpose.msra.mxu0 %v4785
        %7226 = vmatprep.subr.bf16.mxu0 %v4797
        %7227 = vmatpush1.bf16.xpose.msra.mxu0 %v4796
        %7228 = vmatprep.subr.bf16.mxu0 %v4808
        %7229 = vmatpush1.bf16.xpose.msra.mxu0 %v4807
        %7230 = vmatprep.subr.bf16.mxu0 %v4819
        %7231 = vmatpush1.bf16.xpose.msra.mxu0 %v4818
        %7232 = vmatprep.subr.bf16.mxu0 %v4830
        %7233 = vmatpush1.bf16.xpose.msra.mxu0 %v4829
        %7234 = vmatprep.subr.bf16.mxu0 %v4841
        %7235 = vmatpush1.bf16.xpose.msra.mxu0 %v4840
        %7236 = vmatprep.subr.bf16.mxu0 %v4852
        %7237 = vmatpush1.bf16.xpose.msra.mxu0 %v4851
        %7238 = vmatprep.subr.bf16.mxu0 %v4863
        %7239 = vmatpush1.bf16.xpose.msra.mxu0 %v4862
        %7240 = vmatprep.subr.bf16.mxu0 %v4874
        %7241 = vmatpush1.bf16.xpose.msra.mxu0 %v4873
        %7242 = vmatprep.subr.bf16.mxu0 %v4885
        %7243 = vmatpush1.bf16.xpose.msra.mxu0 %v4884
        %7244 = vmatprep.subr.bf16.mxu0 %v4896
        %7245 = vmatpush1.bf16.xpose.msra.mxu0 %v4895
        %7246 = vmatprep.subr.bf16.mxu0 %v4907
        %7247 = vmatpush1.bf16.xpose.msra.mxu0 %v4906
        %7248 = vmatprep.subr.bf16.mxu0 %v4918
        %7249 = vmatpush1.bf16.xpose.msra.mxu0 %v4917
        %7250 = vmatprep.subr.bf16.mxu0 %v4929
        %7251 = vmatpush1.bf16.xpose.msra.mxu0 %v4928
        %7252 = vmatprep.mubr.bf16.mxu0 %v1608
        %7253 = vmatmul.mubr.bf16.gmra.mrb[0].mxu0 %v1607
        %v7254 = vpop.f32.mrb[0].mxu0
        %v7255 = vadd.f32 0.0, %v7254
        %v7256 = vpop.f32.mrb[0].mxu0
        %v7257 = vadd.f32 0.0, %v7256
        %v7258 = vpop.f32.mrb[0].mxu0
        %v7259 = vadd.f32 0.0, %v7258
        %v7260 = vpop.f32.mrb[0].mxu0
        %v7261 = vadd.f32 0.0, %v7260
        %7262 = vmatprep.mubr.bf16.mxu0 %v1619
        %7263 = vmatmul.mubr.bf16.gmra.mrb[0].mxu0 %v1618
        %v7264 = vpop.f32.mrb[0].mxu0
        %v7265 = vadd.f32 0.0, %v7264
        %v7266 = vpop.f32.mrb[0].mxu0
        %v7267 = vadd.f32 0.0, %v7266
        %v7268 = vpop.f32.mrb[0].mxu0
        %v7269 = vadd.f32 0.0, %v7268
        %v7270 = vpop.f32.mrb[0].mxu0
        %v7271 = vadd.f32 0.0, %v7270
        %7272 = vmatprep.mubr.bf16.mxu0 %v1630
        %7273 = vmatmul.mubr.bf16.gmra.mrb[0].mxu0 %v1629
        %v7274 = vpop.f32.mrb[0].mxu0
        %v7275 = vadd.f32 0.0, %v7274
        %v7276 = vpop.f32.mrb[0].mxu0
        %v7277 = vadd.f32 0.0, %v7276
        %v7278 = vpop.f32.mrb[0].mxu0
        %v7279 = vadd.f32 0.0, %v7278
        %v7280 = vpop.f32.mrb[0].mxu0
        %v7281 = vadd.f32 0.0, %v7280
        %7282 = vmatprep.mubr.bf16.mxu0 %v1641
        %7283 = vmatmul.mubr.bf16.gmra.mrb[0].mxu0 %v1640
        %v7284 = vpop.f32.mrb[0].mxu0
        %v7285 = vadd.f32 0.0, %v7284
        %v7286 = vpop.f32.mrb[0].mxu0
        %v7287 = vadd.f32 0.0, %v7286
        %v7288 = vpop.f32.mrb[0].mxu0
        %v7289 = vadd.f32 0.0, %v7288
        %v7290 = vpop.f32.mrb[0].mxu0
        %v7291 = vadd.f32 0.0, %v7290
        %7292 = vdwg.mxu0
        %7293 = vmatprep.subr.bf16.mxu0 %v4766
        %7294 = vmatpush1.bf16.xpose.msra.mxu0 %v4765
        %7295 = vmatprep.subr.bf16.mxu0 %v4777
        %7296 = vmatpush1.bf16.xpose.msra.mxu0 %v4776
        %7297 = vmatprep.subr.bf16.mxu0 %v4788
        %7298 = vmatpush1.bf16.xpose.msra.mxu0 %v4787
        %7299 = vmatprep.subr.bf16.mxu0 %v4799
        %7300 = vmatpush1.bf16.xpose.msra.mxu0 %v4798
        %7301 = vmatprep.subr.bf16.mxu0 %v4810
        %7302 = vmatpush1.bf16.xpose.msra.mxu0 %v4809
        %7303 = vmatprep.subr.bf16.mxu0 %v4821
        %7304 = vmatpush1.bf16.xpose.msra.mxu0 %v4820
        %7305 = vmatprep.subr.bf16.mxu0 %v4832
        %7306 = vmatpush1.bf16.xpose.msra.mxu0 %v4831
        %7307 = vmatprep.subr.bf16.mxu0 %v4843
        %7308 = vmatpush1.bf16.xpose.msra.mxu0 %v4842
        %7309 = vmatprep.subr.bf16.mxu0 %v4854
        %7310 = vmatpush1.bf16.xpose.msra.mxu0 %v4853
        %7311 = vmatprep.subr.bf16.mxu0 %v4865
        %7312 = vmatpush1.bf16.xpose.msra.mxu0 %v4864
        %7313 = vmatprep.subr.bf16.mxu0 %v4876
        %7314 = vmatpush1.bf16.xpose.msra.mxu0 %v4875
        %7315 = vmatprep.subr.bf16.mxu0 %v4887
        %7316 = vmatpush1.bf16.xpose.msra.mxu0 %v4886
        %7317 = vmatprep.subr.bf16.mxu0 %v4898
        %7318 = vmatpush1.bf16.xpose.msra.mxu0 %v4897
        %7319 = vmatprep.subr.bf16.mxu0 %v4909
        %7320 = vmatpush1.bf16.xpose.msra.mxu0 %v4908
        %7321 = vmatprep.subr.bf16.mxu0 %v4920
        %7322 = vmatpush1.bf16.xpose.msra.mxu0 %v4919
        %7323 = vmatprep.subr.bf16.mxu0 %v4931
        %7324 = vmatpush1.bf16.xpose.msra.mxu0 %v4930
        %7325 = vmatprep.mubr.bf16.mxu0 %v1610
        %7326 = vmatmul.mubr.bf16.gmra.mrb[0].mxu0 %v1609
        %v7327 = vpop.f32.mrb[0].mxu0
        %v7328 = vadd.f32 %v7255, %v7327
        %v7329 = vpop.f32.mrb[0].mxu0
        %v7330 = vadd.f32 %v7257, %v7329
        %v7331 = vpop.f32.mrb[0].mxu0
        %v7332 = vadd.f32 %v7259, %v7331
        %v7333 = vpop.f32.mrb[0].mxu0
        %v7334 = vadd.f32 %v7261, %v7333
        %7335 = vmatprep.mubr.bf16.mxu0 %v1621
        %7336 = vmatmul.mubr.bf16.gmra.mrb[0].mxu0 %v1620
        %v7337 = vpop.f32.mrb[0].mxu0
        %v7338 = vadd.f32 %v7265, %v7337
        %v7339 = vpop.f32.mrb[0].mxu0
        %v7340 = vadd.f32 %v7267, %v7339
        %v7341 = vpop.f32.mrb[0].mxu0
        %v7342 = vadd.f32 %v7269, %v7341
        %v7343 = vpop.f32.mrb[0].mxu0
        %v7344 = vadd.f32 %v7271, %v7343
        %7345 = vmatprep.mubr.bf16.mxu0 %v1632
        %7346 = vmatmul.mubr.bf16.gmra.mrb[0].mxu0 %v1631
        %v7347 = vpop.f32.mrb[0].mxu0
        %v7348 = vadd.f32 %v7275, %v7347
        %v7349 = vpop.f32.mrb[0].mxu0
        %v7350 = vadd.f32 %v7277, %v7349
        %v7351 = vpop.f32.mrb[0].mxu0
        %v7352 = vadd.f32 %v7279, %v7351
        %v7353 = vpop.f32.mrb[0].mxu0
        %v7354 = vadd.f32 %v7281, %v7353
        %7355 = vmatprep.mubr.bf16.mxu0 %v1643
        %7356 = vmatmul.mubr.bf16.gmra.mrb[0].mxu0 %v1642
        %v7357 = vpop.f32.mrb[0].mxu0
        %v7358 = vadd.f32 %v7285, %v7357
        %v7359 = vpop.f32.mrb[0].mxu0
        %v7360 = vadd.f32 %v7287, %v7359
        %v7361 = vpop.f32.mrb[0].mxu0
        %v7362 = vadd.f32 %v7289, %v7361
        %v7363 = vpop.f32.mrb[0].mxu0
        %v7364 = vadd.f32 %v7291, %v7363
        %7365 = vdwg.mxu0
        %7366 = vmatprep.subr.bf16.mxu0 %v4768
        %7367 = vmatpush1.bf16.xpose.msra.mxu0 %v4767
        %7368 = vmatprep.subr.bf16.mxu0 %v4779
        %7369 = vmatpush1.bf16.xpose.msra.mxu0 %v4778
        %7370 = vmatprep.subr.bf16.mxu0 %v4790
        %7371 = vmatpush1.bf16.xpose.msra.mxu0 %v4789
        %7372 = vmatprep.subr.bf16.mxu0 %v4801
        %7373 = vmatpush1.bf16.xpose.msra.mxu0 %v4800
        %7374 = vmatprep.subr.bf16.mxu0 %v4812
        %7375 = vmatpush1.bf16.xpose.msra.mxu0 %v4811
        %7376 = vmatprep.subr.bf16.mxu0 %v4823
        %7377 = vmatpush1.bf16.xpose.msra.mxu0 %v4822
        %7378 = vmatprep.subr.bf16.mxu0 %v4834
        %7379 = vmatpush1.bf16.xpose.msra.mxu0 %v4833
        %7380 = vmatprep.subr.bf16.mxu0 %v4845
        %7381 = vmatpush1.bf16.xpose.msra.mxu0 %v4844
        %7382 = vmatprep.subr.bf16.mxu0 %v4856
        %7383 = vmatpush1.bf16.xpose.msra.mxu0 %v4855
        %7384 = vmatprep.subr.bf16.mxu0 %v4867
        %7385 = vmatpush1.bf16.xpose.msra.mxu0 %v4866
        %7386 = vmatprep.subr.bf16.mxu0 %v4878
        %7387 = vmatpush1.bf16.xpose.msra.mxu0 %v4877
        %7388 = vmatprep.subr.bf16.mxu0 %v4889
        %7389 = vmatpush1.bf16.xpose.msra.mxu0 %v4888
        %7390 = vmatprep.subr.bf16.mxu0 %v4900
        %7391 = vmatpush1.bf16.xpose.msra.mxu0 %v4899
        %7392 = vmatprep.subr.bf16.mxu0 %v4911
        %7393 = vmatpush1.bf16.xpose.msra.mxu0 %v4910
        %7394 = vmatprep.subr.bf16.mxu0 %v4922
        %7395 = vmatpush1.bf16.xpose.msra.mxu0 %v4921
        %7396 = vmatprep.subr.bf16.mxu0 %v4933
        %7397 = vmatpush1.bf16.xpose.msra.mxu0 %v4932
        %7398 = vmatprep.mubr.bf16.mxu0 %v1612
        %7399 = vmatmul.mubr.bf16.gmra.mrb[0].mxu0 %v1611
        %v7400 = vpop.f32.mrb[0].mxu0
        %v7401 = vadd.f32 %v7328, %v7400
        %v7402 = vpop.f32.mrb[0].mxu0
        %v7403 = vadd.f32 %v7330, %v7402
        %v7404 = vpop.f32.mrb[0].mxu0
        %v7405 = vadd.f32 %v7332, %v7404
        %v7406 = vpop.f32.mrb[0].mxu0
        %v7407 = vadd.f32 %v7334, %v7406
        %7408 = vmatprep.mubr.bf16.mxu0 %v1623
        %7409 = vmatmul.mubr.bf16.gmra.mrb[0].mxu0 %v1622
        %v7410 = vpop.f32.mrb[0].mxu0
        %v7411 = vadd.f32 %v7338, %v7410
        %v7412 = vpop.f32.mrb[0].mxu0
        %v7413 = vadd.f32 %v7340, %v7412
        %v7414 = vpop.f32.mrb[0].mxu0
        %v7415 = vadd.f32 %v7342, %v7414
        %v7416 = vpop.f32.mrb[0].mxu0
        %v7417 = vadd.f32 %v7344, %v7416
        %7418 = vmatprep.mubr.bf16.mxu0 %v1634
        %7419 = vmatmul.mubr.bf16.gmra.mrb[0].mxu0 %v1633
        %v7420 = vpop.f32.mrb[0].mxu0
        %v7421 = vadd.f32 %v7348, %v7420
        %v7422 = vpop.f32.mrb[0].mxu0
        %v7423 = vadd.f32 %v7350, %v7422
        %v7424 = vpop.f32.mrb[0].mxu0
        %v7425 = vadd.f32 %v7352, %v7424
        %v7426 = vpop.f32.mrb[0].mxu0
        %v7427 = vadd.f32 %v7354, %v7426
        %7428 = vmatprep.mubr.bf16.mxu0 %v1645
        %7429 = vmatmul.mubr.bf16.gmra.mrb[0].mxu0 %v1644
        %v7430 = vpop.f32.mrb[0].mxu0
        %v7431 = vadd.f32 %v7358, %v7430
        %v7432 = vpop.f32.mrb[0].mxu0
        %v7433 = vadd.f32 %v7360, %v7432
        %v7434 = vpop.f32.mrb[0].mxu0
        %v7435 = vadd.f32 %v7362, %v7434
        %v7436 = vpop.f32.mrb[0].mxu0
        %v7437 = vadd.f32 %v7364, %v7436
        %7438 = vdwg.mxu0
        %7439 = vmatprep.subr.bf16.mxu0 %v4770
        %7440 = vmatpush1.bf16.xpose.msra.mxu0 %v4769
        %7441 = vmatprep.subr.bf16.mxu0 %v4781
        %7442 = vmatpush1.bf16.xpose.msra.mxu0 %v4780
        %7443 = vmatprep.subr.bf16.mxu0 %v4792
        %7444 = vmatpush1.bf16.xpose.msra.mxu0 %v4791
        %7445 = vmatprep.subr.bf16.mxu0 %v4803
        %7446 = vmatpush1.bf16.xpose.msra.mxu0 %v4802
        %7447 = vmatprep.subr.bf16.mxu0 %v4814
        %7448 = vmatpush1.bf16.xpose.msra.mxu0 %v4813
        %7449 = vmatprep.subr.bf16.mxu0 %v4825
        %7450 = vmatpush1.bf16.xpose.msra.mxu0 %v4824
        %7451 = vmatprep.subr.bf16.mxu0 %v4836
        %7452 = vmatpush1.bf16.xpose.msra.mxu0 %v4835
        %7453 = vmatprep.subr.bf16.mxu0 %v4847
        %7454 = vmatpush1.bf16.xpose.msra.mxu0 %v4846
        %7455 = vmatprep.subr.bf16.mxu0 %v4858
        %7456 = vmatpush1.bf16.xpose.msra.mxu0 %v4857
        %7457 = vmatprep.subr.bf16.mxu0 %v4869
        %7458 = vmatpush1.bf16.xpose.msra.mxu0 %v4868
        %7459 = vmatprep.subr.bf16.mxu0 %v4880
        %7460 = vmatpush1.bf16.xpose.msra.mxu0 %v4879
        %7461 = vmatprep.subr.bf16.mxu0 %v4891
        %7462 = vmatpush1.bf16.xpose.msra.mxu0 %v4890
        %7463 = vmatprep.subr.bf16.mxu0 %v4902
        %7464 = vmatpush1.bf16.xpose.msra.mxu0 %v4901
        %7465 = vmatprep.subr.bf16.mxu0 %v4913
        %7466 = vmatpush1.bf16.xpose.msra.mxu0 %v4912
        %7467 = vmatprep.subr.bf16.mxu0 %v4924
        %7468 = vmatpush1.bf16.xpose.msra.mxu0 %v4923
        %7469 = vmatprep.subr.bf16.mxu0 %v4935
        %7470 = vmatpush1.bf16.xpose.msra.mxu0 %v4934
        %7471 = vmatprep.mubr.bf16.mxu0 %v1614
        %7472 = vmatmul.mubr.bf16.gmra.mrb[0].mxu0 %v1613
        %v7473 = vpop.f32.mrb[0].mxu0
        %v7474 = vadd.f32 %v7401, %v7473
        %v7475 = vpop.f32.mrb[0].mxu0
        %v7476 = vadd.f32 %v7403, %v7475
        %v7477 = vpop.f32.mrb[0].mxu0
        %v7478 = vadd.f32 %v7405, %v7477
        %v7479 = vpop.f32.mrb[0].mxu0
        %v7480 = vadd.f32 %v7407, %v7479
        %7481 = vmatprep.mubr.bf16.mxu0 %v1625
        %7482 = vmatmul.mubr.bf16.gmra.mrb[0].mxu0 %v1624
        %v7483 = vpop.f32.mrb[0].mxu0
        %v7484 = vadd.f32 %v7411, %v7483
        %v7485 = vpop.f32.mrb[0].mxu0
        %v7486 = vadd.f32 %v7413, %v7485
        %v7487 = vpop.f32.mrb[0].mxu0
        %v7488 = vadd.f32 %v7415, %v7487
        %v7489 = vpop.f32.mrb[0].mxu0
        %v7490 = vadd.f32 %v7417, %v7489
        %7491 = vmatprep.mubr.bf16.mxu0 %v1636
        %7492 = vmatmul.mubr.bf16.gmra.mrb[0].mxu0 %v1635
        %v7493 = vpop.f32.mrb[0].mxu0
        %v7494 = vadd.f32 %v7421, %v7493
        %v7495 = vpop.f32.mrb[0].mxu0
        %v7496 = vadd.f32 %v7423, %v7495
        %v7497 = vpop.f32.mrb[0].mxu0
        %v7498 = vadd.f32 %v7425, %v7497
        %v7499 = vpop.f32.mrb[0].mxu0
        %v7500 = vadd.f32 %v7427, %v7499
        %7501 = vmatprep.mubr.bf16.mxu0 %v1647
        %7502 = vmatmul.mubr.bf16.gmra.mrb[0].mxu0 %v1646
        %v7503 = vpop.f32.mrb[0].mxu0
        %v7504 = vadd.f32 %v7431, %v7503
        %v7505 = vpop.f32.mrb[0].mxu0
        %v7506 = vadd.f32 %v7433, %v7505
        %v7507 = vpop.f32.mrb[0].mxu0
        %v7508 = vadd.f32 %v7435, %v7507
        %v7509 = vpop.f32.mrb[0].mxu0
        %v7510 = vadd.f32 %v7437, %v7509
        %7511 = vdwg.mxu0
        %7512 = vmatprep.subr.bf16.mxu0 %v4772
        %7513 = vmatpush1.bf16.xpose.msra.mxu0 %v4771
        %7514 = vmatprep.subr.bf16.mxu0 %v4783
        %7515 = vmatpush1.bf16.xpose.msra.mxu0 %v4782
        %7516 = vmatprep.subr.bf16.mxu0 %v4794
        %7517 = vmatpush1.bf16.xpose.msra.mxu0 %v4793
        %7518 = vmatprep.subr.bf16.mxu0 %v4805
        %7519 = vmatpush1.bf16.xpose.msra.mxu0 %v4804
        %7520 = vmatprep.subr.bf16.mxu0 %v4816
        %7521 = vmatpush1.bf16.xpose.msra.mxu0 %v4815
        %7522 = vmatprep.subr.bf16.mxu0 %v4827
        %7523 = vmatpush1.bf16.xpose.msra.mxu0 %v4826
        %7524 = vmatprep.subr.bf16.mxu0 %v4838
        %7525 = vmatpush1.bf16.xpose.msra.mxu0 %v4837
        %7526 = vmatprep.subr.bf16.mxu0 %v4849
        %7527 = vmatpush1.bf16.xpose.msra.mxu0 %v4848
        %7528 = vmatprep.subr.bf16.mxu0 %v4860
        %7529 = vmatpush1.bf16.xpose.msra.mxu0 %v4859
        %7530 = vmatprep.subr.bf16.mxu0 %v4871
        %7531 = vmatpush1.bf16.xpose.msra.mxu0 %v4870
        %7532 = vmatprep.subr.bf16.mxu0 %v4882
        %7533 = vmatpush1.bf16.xpose.msra.mxu0 %v4881
        %7534 = vmatprep.subr.bf16.mxu0 %v4893
        %7535 = vmatpush1.bf16.xpose.msra.mxu0 %v4892
        %7536 = vmatprep.subr.bf16.mxu0 %v4904
        %7537 = vmatpush1.bf16.xpose.msra.mxu0 %v4903
        %7538 = vmatprep.subr.bf16.mxu0 %v4915
        %7539 = vmatpush1.bf16.xpose.msra.mxu0 %v4914
        %7540 = vmatprep.subr.bf16.mxu0 %v4926
        %7541 = vmatpush1.bf16.xpose.msra.mxu0 %v4925
        %7542 = vmatprep.subr.bf16.mxu0 %v4937
        %7543 = vmatpush1.bf16.xpose.msra.mxu0 %v4936
        %7544 = vmatprep.mubr.bf16.mxu0 %v1616
        %7545 = vmatmul.mubr.bf16.gmra.mrb[0].mxu0 %v1615
        %v7546 = vpop.f32.mrb[0].mxu0
        %v7547 = vadd.f32 %v7474, %v7546
        %v7548 = vpop.f32.mrb[0].mxu0
        %v7549 = vadd.f32 %v7476, %v7548
        %v7550 = vpop.f32.mrb[0].mxu0
        %v7551 = vadd.f32 %v7478, %v7550
        %v7552 = vpop.f32.mrb[0].mxu0
        %v7553 = vadd.f32 %v7480, %v7552
        %7554 = vmatprep.mubr.bf16.mxu0 %v1627
        %7555 = vmatmul.mubr.bf16.gmra.mrb[0].mxu0 %v1626
        %v7556 = vpop.f32.mrb[0].mxu0
        %v7557 = vadd.f32 %v7484, %v7556
        %v7558 = vpop.f32.mrb[0].mxu0
        %v7559 = vadd.f32 %v7486, %v7558
        %v7560 = vpop.f32.mrb[0].mxu0
        %v7561 = vadd.f32 %v7488, %v7560
        %v7562 = vpop.f32.mrb[0].mxu0
        %v7563 = vadd.f32 %v7490, %v7562
        %7564 = vmatprep.mubr.bf16.mxu0 %v1638
        %7565 = vmatmul.mubr.bf16.gmra.mrb[0].mxu0 %v1637
        %v7566 = vpop.f32.mrb[0].mxu0
        %v7567 = vadd.f32 %v7494, %v7566
        %v7568 = vpop.f32.mrb[0].mxu0
        %v7569 = vadd.f32 %v7496, %v7568
        %v7570 = vpop.f32.mrb[0].mxu0
        %v7571 = vadd.f32 %v7498, %v7570
        %v7572 = vpop.f32.mrb[0].mxu0
        %v7573 = vadd.f32 %v7500, %v7572
        %7574 = vmatprep.mubr.bf16.mxu0 %v1649
        %7575 = vmatmul.mubr.bf16.gmra.mrb[0].mxu0 %v1648
        %v7576 = vpop.f32.mrb[0].mxu0
        %v7577 = vadd.f32 %v7504, %v7576
        %v7578 = vpop.f32.mrb[0].mxu0
        %v7579 = vadd.f32 %v7506, %v7578
        %v7580 = vpop.f32.mrb[0].mxu0
        %v7581 = vadd.f32 %v7508, %v7580
        %v7582 = vpop.f32.mrb[0].mxu0
        %v7583 = vadd.f32 %v7510, %v7582
        %7584 = vdwg.mxu0
        %7585 = vmatprep.subr.bf16.mxu0 0
        %7586 = vmatpush1.bf16.xpose.msra.mxu0 %v6201
        %7587 = vmatprep.subr.bf16.mxu0 0
        %7588 = vmatpush1.bf16.xpose.msra.mxu0 %v6204
        %7589 = vmatprep.subr.bf16.mxu0 0
        %7590 = vmatpush1.bf16.xpose.msra.mxu0 %v6207
        %7591 = vmatprep.subr.bf16.mxu0 0
        %7592 = vmatpush1.bf16.xpose.msra.mxu0 %v6210
        %7593 = vmatprep.subr.bf16.mxu0 0
        %7594 = vmatpush1.bf16.xpose.msra.mxu0 %v6213
        %7595 = vmatprep.subr.bf16.mxu0 0
        %7596 = vmatpush1.bf16.xpose.msra.mxu0 %v6216
        %7597 = vmatprep.subr.bf16.mxu0 0
        %7598 = vmatpush1.bf16.xpose.msra.mxu0 %v6219
        %7599 = vmatprep.subr.bf16.mxu0 0
        %7600 = vmatpush1.bf16.xpose.msra.mxu0 %v6222
        %7601 = vmatprep.subr.bf16.mxu0 0
        %7602 = vmatpush1.bf16.xpose.msra.mxu0 %v6225
        %7603 = vmatprep.subr.bf16.mxu0 0
        %7604 = vmatpush1.bf16.xpose.msra.mxu0 %v6228
        %7605 = vmatprep.subr.bf16.mxu0 0
        %7606 = vmatpush1.bf16.xpose.msra.mxu0 %v6231
        %7607 = vmatprep.subr.bf16.mxu0 0
        %7608 = vmatpush1.bf16.xpose.msra.mxu0 %v6234
        %7609 = vmatprep.subr.bf16.mxu0 0
        %7610 = vmatpush1.bf16.xpose.msra.mxu0 %v6237
        %7611 = vmatprep.subr.bf16.mxu0 0
        %7612 = vmatpush1.bf16.xpose.msra.mxu0 %v6240
        %7613 = vmatprep.subr.bf16.mxu0 0
        %7614 = vmatpush1.bf16.xpose.msra.mxu0 %v6243
        %7615 = vmatprep.subr.bf16.mxu0 0
        %7616 = vmatpush1.bf16.xpose.msra.mxu0 %v6246
        %7617 = vmatprep.mubr.bf16.mxu0 0
        %7618 = vmatmul.mubr.bf16.gmra.mrb[0].mxu0 %v6093
        %v7619 = vpop.f32.mrb[0].mxu0
        %v7620 = vadd.f32 %v7547, %v7619
        %v7621 = vpop.f32.mrb[0].mxu0
        %v7622 = vadd.f32 %v7549, %v7621
        %v7623 = vpop.f32.mrb[0].mxu0
        %v7624 = vadd.f32 %v7551, %v7623
        %v7625 = vpop.f32.mrb[0].mxu0
        %v7626 = vadd.f32 %v7553, %v7625
        %7627 = vmatprep.mubr.bf16.mxu0 0
        %7628 = vmatmul.mubr.bf16.gmra.mrb[0].mxu0 %v6096
        %v7629 = vpop.f32.mrb[0].mxu0
        %v7630 = vadd.f32 %v7557, %v7629
        %v7631 = vpop.f32.mrb[0].mxu0
        %v7632 = vadd.f32 %v7559, %v7631
        %v7633 = vpop.f32.mrb[0].mxu0
        %v7634 = vadd.f32 %v7561, %v7633
        %v7635 = vpop.f32.mrb[0].mxu0
        %v7636 = vadd.f32 %v7563, %v7635
        %7637 = vmatprep.mubr.bf16.mxu0 0
        %7638 = vmatmul.mubr.bf16.gmra.mrb[0].mxu0 %v6099
        %v7639 = vpop.f32.mrb[0].mxu0
        %v7640 = vadd.f32 %v7567, %v7639
        %v7641 = vpop.f32.mrb[0].mxu0
        %v7642 = vadd.f32 %v7569, %v7641
        %v7643 = vpop.f32.mrb[0].mxu0
        %v7644 = vadd.f32 %v7571, %v7643
        %v7645 = vpop.f32.mrb[0].mxu0
        %v7646 = vadd.f32 %v7573, %v7645
        %7647 = vmatprep.mubr.bf16.mxu0 0
        %7648 = vmatmul.mubr.bf16.gmra.mrb[0].mxu0 %v6102
        %v7649 = vpop.f32.mrb[0].mxu0
        %v7650 = vadd.f32 %v7577, %v7649
        %v7651 = vpop.f32.mrb[0].mxu0
        %v7652 = vadd.f32 %v7579, %v7651
        %v7653 = vpop.f32.mrb[0].mxu0
        %v7654 = vadd.f32 %v7581, %v7653
        %v7655 = vpop.f32.mrb[0].mxu0
        %v7656 = vadd.f32 %v7583, %v7655
        %7657 = vdwg.mxu0
        %7658 = vmatprep.subr.bf16.mxu0 %v4940
        %7659 = vmatpush1.bf16.xpose.msra.mxu0 %v4939
        %7660 = vmatprep.subr.bf16.mxu0 %v4951
        %7661 = vmatpush1.bf16.xpose.msra.mxu0 %v4950
        %7662 = vmatprep.subr.bf16.mxu0 %v4962
        %7663 = vmatpush1.bf16.xpose.msra.mxu0 %v4961
        %7664 = vmatprep.subr.bf16.mxu0 %v4973
        %7665 = vmatpush1.bf16.xpose.msra.mxu0 %v4972
        %7666 = vmatprep.subr.bf16.mxu0 %v4984
        %7667 = vmatpush1.bf16.xpose.msra.mxu0 %v4983
        %7668 = vmatprep.subr.bf16.mxu0 %v4995
        %7669 = vmatpush1.bf16.xpose.msra.mxu0 %v4994
        %7670 = vmatprep.subr.bf16.mxu0 %v5006
        %7671 = vmatpush1.bf16.xpose.msra.mxu0 %v5005
        %7672 = vmatprep.subr.bf16.mxu0 %v5017
        %7673 = vmatpush1.bf16.xpose.msra.mxu0 %v5016
        %7674 = vmatprep.subr.bf16.mxu0 %v5028
        %7675 = vmatpush1.bf16.xpose.msra.mxu0 %v5027
        %7676 = vmatprep.subr.bf16.mxu0 %v5039
        %7677 = vmatpush1.bf16.xpose.msra.mxu0 %v5038
        %7678 = vmatprep.subr.bf16.mxu0 %v5050
        %7679 = vmatpush1.bf16.xpose.msra.mxu0 %v5049
        %7680 = vmatprep.subr.bf16.mxu0 %v5061
        %7681 = vmatpush1.bf16.xpose.msra.mxu0 %v5060
        %7682 = vmatprep.subr.bf16.mxu0 %v5072
        %7683 = vmatpush1.bf16.xpose.msra.mxu0 %v5071
        %7684 = vmatprep.subr.bf16.mxu0 %v5083
        %7685 = vmatpush1.bf16.xpose.msra.mxu0 %v5082
        %7686 = vmatprep.subr.bf16.mxu0 %v5094
        %7687 = vmatpush1.bf16.xpose.msra.mxu0 %v5093
        %7688 = vmatprep.subr.bf16.mxu0 %v5105
        %7689 = vmatpush1.bf16.xpose.msra.mxu0 %v5104
        %7690 = vmatprep.mubr.bf16.mxu0 %v1608
        %7691 = vmatmul.mubr.bf16.gmra.mrb[0].mxu0 %v1607
        %v7692 = vpop.f32.mrb[0].mxu0
        %v7693 = vadd.f32 0.0, %v7692
        %v7694 = vpop.f32.mrb[0].mxu0
        %v7695 = vadd.f32 0.0, %v7694
        %v7696 = vpop.f32.mrb[0].mxu0
        %v7697 = vadd.f32 0.0, %v7696
        %v7698 = vpop.f32.mrb[0].mxu0
        %v7699 = vadd.f32 0.0, %v7698
        %7700 = vmatprep.mubr.bf16.mxu0 %v1619
        %7701 = vmatmul.mubr.bf16.gmra.mrb[0].mxu0 %v1618
        %v7702 = vpop.f32.mrb[0].mxu0
        %v7703 = vadd.f32 0.0, %v7702
        %v7704 = vpop.f32.mrb[0].mxu0
        %v7705 = vadd.f32 0.0, %v7704
        %v7706 = vpop.f32.mrb[0].mxu0
        %v7707 = vadd.f32 0.0, %v7706
        %v7708 = vpop.f32.mrb[0].mxu0
        %v7709 = vadd.f32 0.0, %v7708
        %7710 = vmatprep.mubr.bf16.mxu0 %v1630
        %7711 = vmatmul.mubr.bf16.gmra.mrb[0].mxu0 %v1629
        %v7712 = vpop.f32.mrb[0].mxu0
        %v7713 = vadd.f32 0.0, %v7712
        %v7714 = vpop.f32.mrb[0].mxu0
        %v7715 = vadd.f32 0.0, %v7714
        %v7716 = vpop.f32.mrb[0].mxu0
        %v7717 = vadd.f32 0.0, %v7716
        %v7718 = vpop.f32.mrb[0].mxu0
        %v7719 = vadd.f32 0.0, %v7718
        %7720 = vmatprep.mubr.bf16.mxu0 %v1641
        %7721 = vmatmul.mubr.bf16.gmra.mrb[0].mxu0 %v1640
        %v7722 = vpop.f32.mrb[0].mxu0
        %v7723 = vadd.f32 0.0, %v7722
        %v7724 = vpop.f32.mrb[0].mxu0
        %v7725 = vadd.f32 0.0, %v7724
        %v7726 = vpop.f32.mrb[0].mxu0
        %v7727 = vadd.f32 0.0, %v7726
        %v7728 = vpop.f32.mrb[0].mxu0
        %v7729 = vadd.f32 0.0, %v7728
        %7730 = vdwg.mxu0
        %7731 = vmatprep.subr.bf16.mxu0 %v4942
        %7732 = vmatpush1.bf16.xpose.msra.mxu0 %v4941
        %7733 = vmatprep.subr.bf16.mxu0 %v4953
        %7734 = vmatpush1.bf16.xpose.msra.mxu0 %v4952
        %7735 = vmatprep.subr.bf16.mxu0 %v4964
        %7736 = vmatpush1.bf16.xpose.msra.mxu0 %v4963
        %7737 = vmatprep.subr.bf16.mxu0 %v4975
        %7738 = vmatpush1.bf16.xpose.msra.mxu0 %v4974
        %7739 = vmatprep.subr.bf16.mxu0 %v4986
        %7740 = vmatpush1.bf16.xpose.msra.mxu0 %v4985
        %7741 = vmatprep.subr.bf16.mxu0 %v4997
        %7742 = vmatpush1.bf16.xpose.msra.mxu0 %v4996
        %7743 = vmatprep.subr.bf16.mxu0 %v5008
        %7744 = vmatpush1.bf16.xpose.msra.mxu0 %v5007
        %7745 = vmatprep.subr.bf16.mxu0 %v5019
        %7746 = vmatpush1.bf16.xpose.msra.mxu0 %v5018
        %7747 = vmatprep.subr.bf16.mxu0 %v5030
        %7748 = vmatpush1.bf16.xpose.msra.mxu0 %v5029
        %7749 = vmatprep.subr.bf16.mxu0 %v5041
        %7750 = vmatpush1.bf16.xpose.msra.mxu0 %v5040
        %7751 = vmatprep.subr.bf16.mxu0 %v5052
        %7752 = vmatpush1.bf16.xpose.msra.mxu0 %v5051
        %7753 = vmatprep.subr.bf16.mxu0 %v5063
        %7754 = vmatpush1.bf16.xpose.msra.mxu0 %v5062
        %7755 = vmatprep.subr.bf16.mxu0 %v5074
        %7756 = vmatpush1.bf16.xpose.msra.mxu0 %v5073
        %7757 = vmatprep.subr.bf16.mxu0 %v5085
        %7758 = vmatpush1.bf16.xpose.msra.mxu0 %v5084
        %7759 = vmatprep.subr.bf16.mxu0 %v5096
        %7760 = vmatpush1.bf16.xpose.msra.mxu0 %v5095
        %7761 = vmatprep.subr.bf16.mxu0 %v5107
        %7762 = vmatpush1.bf16.xpose.msra.mxu0 %v5106
        %7763 = vmatprep.mubr.bf16.mxu0 %v1610
        %7764 = vmatmul.mubr.bf16.gmra.mrb[0].mxu0 %v1609
        %v7765 = vpop.f32.mrb[0].mxu0
        %v7766 = vadd.f32 %v7693, %v7765
        %v7767 = vpop.f32.mrb[0].mxu0
        %v7768 = vadd.f32 %v7695, %v7767
        %v7769 = vpop.f32.mrb[0].mxu0
        %v7770 = vadd.f32 %v7697, %v7769
        %v7771 = vpop.f32.mrb[0].mxu0
        %v7772 = vadd.f32 %v7699, %v7771
        %7773 = vmatprep.mubr.bf16.mxu0 %v1621
        %7774 = vmatmul.mubr.bf16.gmra.mrb[0].mxu0 %v1620
        %v7775 = vpop.f32.mrb[0].mxu0
        %v7776 = vadd.f32 %v7703, %v7775
        %v7777 = vpop.f32.mrb[0].mxu0
        %v7778 = vadd.f32 %v7705, %v7777
        %v7779 = vpop.f32.mrb[0].mxu0
        %v7780 = vadd.f32 %v7707, %v7779
        %v7781 = vpop.f32.mrb[0].mxu0
        %v7782 = vadd.f32 %v7709, %v7781
        %7783 = vmatprep.mubr.bf16.mxu0 %v1632
        %7784 = vmatmul.mubr.bf16.gmra.mrb[0].mxu0 %v1631
        %v7785 = vpop.f32.mrb[0].mxu0
        %v7786 = vadd.f32 %v7713, %v7785
        %v7787 = vpop.f32.mrb[0].mxu0
        %v7788 = vadd.f32 %v7715, %v7787
        %v7789 = vpop.f32.mrb[0].mxu0
        %v7790 = vadd.f32 %v7717, %v7789
        %v7791 = vpop.f32.mrb[0].mxu0
        %v7792 = vadd.f32 %v7719, %v7791
        %7793 = vmatprep.mubr.bf16.mxu0 %v1643
        %7794 = vmatmul.mubr.bf16.gmra.mrb[0].mxu0 %v1642
        %v7795 = vpop.f32.mrb[0].mxu0
        %v7796 = vadd.f32 %v7723, %v7795
        %v7797 = vpop.f32.mrb[0].mxu0
        %v7798 = vadd.f32 %v7725, %v7797
        %v7799 = vpop.f32.mrb[0].mxu0
        %v7800 = vadd.f32 %v7727, %v7799
        %v7801 = vpop.f32.mrb[0].mxu0
        %v7802 = vadd.f32 %v7729, %v7801
        %7803 = vdwg.mxu0
        %7804 = vmatprep.subr.bf16.mxu0 %v4944
        %7805 = vmatpush1.bf16.xpose.msra.mxu0 %v4943
        %7806 = vmatprep.subr.bf16.mxu0 %v4955
        %7807 = vmatpush1.bf16.xpose.msra.mxu0 %v4954
        %7808 = vmatprep.subr.bf16.mxu0 %v4966
        %7809 = vmatpush1.bf16.xpose.msra.mxu0 %v4965
        %7810 = vmatprep.subr.bf16.mxu0 %v4977
        %7811 = vmatpush1.bf16.xpose.msra.mxu0 %v4976
        %7812 = vmatprep.subr.bf16.mxu0 %v4988
        %7813 = vmatpush1.bf16.xpose.msra.mxu0 %v4987
        %7814 = vmatprep.subr.bf16.mxu0 %v4999
        %7815 = vmatpush1.bf16.xpose.msra.mxu0 %v4998
        %7816 = vmatprep.subr.bf16.mxu0 %v5010
        %7817 = vmatpush1.bf16.xpose.msra.mxu0 %v5009
        %7818 = vmatprep.subr.bf16.mxu0 %v5021
        %7819 = vmatpush1.bf16.xpose.msra.mxu0 %v5020
        %7820 = vmatprep.subr.bf16.mxu0 %v5032
        %7821 = vmatpush1.bf16.xpose.msra.mxu0 %v5031
        %7822 = vmatprep.subr.bf16.mxu0 %v5043
        %7823 = vmatpush1.bf16.xpose.msra.mxu0 %v5042
        %7824 = vmatprep.subr.bf16.mxu0 %v5054
        %7825 = vmatpush1.bf16.xpose.msra.mxu0 %v5053
        %7826 = vmatprep.subr.bf16.mxu0 %v5065
        %7827 = vmatpush1.bf16.xpose.msra.mxu0 %v5064
        %7828 = vmatprep.subr.bf16.mxu0 %v5076
        %7829 = vmatpush1.bf16.xpose.msra.mxu0 %v5075
        %7830 = vmatprep.subr.bf16.mxu0 %v5087
        %7831 = vmatpush1.bf16.xpose.msra.mxu0 %v5086
        %7832 = vmatprep.subr.bf16.mxu0 %v5098
        %7833 = vmatpush1.bf16.xpose.msra.mxu0 %v5097
        %7834 = vmatprep.subr.bf16.mxu0 %v5109
        %7835 = vmatpush1.bf16.xpose.msra.mxu0 %v5108
        %7836 = vmatprep.mubr.bf16.mxu0 %v1612
        %7837 = vmatmul.mubr.bf16.gmra.mrb[0].mxu0 %v1611
        %v7838 = vpop.f32.mrb[0].mxu0
        %v7839 = vadd.f32 %v7766, %v7838
        %v7840 = vpop.f32.mrb[0].mxu0
        %v7841 = vadd.f32 %v7768, %v7840
        %v7842 = vpop.f32.mrb[0].mxu0
        %v7843 = vadd.f32 %v7770, %v7842
        %v7844 = vpop.f32.mrb[0].mxu0
        %v7845 = vadd.f32 %v7772, %v7844
        %7846 = vmatprep.mubr.bf16.mxu0 %v1623
        %7847 = vmatmul.mubr.bf16.gmra.mrb[0].mxu0 %v1622
        %v7848 = vpop.f32.mrb[0].mxu0
        %v7849 = vadd.f32 %v7776, %v7848
        %v7850 = vpop.f32.mrb[0].mxu0
        %v7851 = vadd.f32 %v7778, %v7850
        %v7852 = vpop.f32.mrb[0].mxu0
        %v7853 = vadd.f32 %v7780, %v7852
        %v7854 = vpop.f32.mrb[0].mxu0
        %v7855 = vadd.f32 %v7782, %v7854
        %7856 = vmatprep.mubr.bf16.mxu0 %v1634
        %7857 = vmatmul.mubr.bf16.gmra.mrb[0].mxu0 %v1633
        %v7858 = vpop.f32.mrb[0].mxu0
        %v7859 = vadd.f32 %v7786, %v7858
        %v7860 = vpop.f32.mrb[0].mxu0
        %v7861 = vadd.f32 %v7788, %v7860
        %v7862 = vpop.f32.mrb[0].mxu0
        %v7863 = vadd.f32 %v7790, %v7862
        %v7864 = vpop.f32.mrb[0].mxu0
        %v7865 = vadd.f32 %v7792, %v7864
        %7866 = vmatprep.mubr.bf16.mxu0 %v1645
        %7867 = vmatmul.mubr.bf16.gmra.mrb[0].mxu0 %v1644
        %v7868 = vpop.f32.mrb[0].mxu0
        %v7869 = vadd.f32 %v7796, %v7868
        %v7870 = vpop.f32.mrb[0].mxu0
        %v7871 = vadd.f32 %v7798, %v7870
        %v7872 = vpop.f32.mrb[0].mxu0
        %v7873 = vadd.f32 %v7800, %v7872
        %v7874 = vpop.f32.mrb[0].mxu0
        %v7875 = vadd.f32 %v7802, %v7874
        %7876 = vdwg.mxu0
        %7877 = vmatprep.subr.bf16.mxu0 %v4946
        %7878 = vmatpush1.bf16.xpose.msra.mxu0 %v4945
        %7879 = vmatprep.subr.bf16.mxu0 %v4957
        %7880 = vmatpush1.bf16.xpose.msra.mxu0 %v4956
        %7881 = vmatprep.subr.bf16.mxu0 %v4968
        %7882 = vmatpush1.bf16.xpose.msra.mxu0 %v4967
        %7883 = vmatprep.subr.bf16.mxu0 %v4979
        %7884 = vmatpush1.bf16.xpose.msra.mxu0 %v4978
        %7885 = vmatprep.subr.bf16.mxu0 %v4990
        %7886 = vmatpush1.bf16.xpose.msra.mxu0 %v4989
        %7887 = vmatprep.subr.bf16.mxu0 %v5001
        %7888 = vmatpush1.bf16.xpose.msra.mxu0 %v5000
        %7889 = vmatprep.subr.bf16.mxu0 %v5012
        %7890 = vmatpush1.bf16.xpose.msra.mxu0 %v5011
        %7891 = vmatprep.subr.bf16.mxu0 %v5023
        %7892 = vmatpush1.bf16.xpose.msra.mxu0 %v5022
        %7893 = vmatprep.subr.bf16.mxu0 %v5034
        %7894 = vmatpush1.bf16.xpose.msra.mxu0 %v5033
        %7895 = vmatprep.subr.bf16.mxu0 %v5045
        %7896 = vmatpush1.bf16.xpose.msra.mxu0 %v5044
        %7897 = vmatprep.subr.bf16.mxu0 %v5056
        %7898 = vmatpush1.bf16.xpose.msra.mxu0 %v5055
        %7899 = vmatprep.subr.bf16.mxu0 %v5067
        %7900 = vmatpush1.bf16.xpose.msra.mxu0 %v5066
        %7901 = vmatprep.subr.bf16.mxu0 %v5078
        %7902 = vmatpush1.bf16.xpose.msra.mxu0 %v5077
        %7903 = vmatprep.subr.bf16.mxu0 %v5089
        %7904 = vmatpush1.bf16.xpose.msra.mxu0 %v5088
        %7905 = vmatprep.subr.bf16.mxu0 %v5100
        %7906 = vmatpush1.bf16.xpose.msra.mxu0 %v5099
        %7907 = vmatprep.subr.bf16.mxu0 %v5111
        %7908 = vmatpush1.bf16.xpose.msra.mxu0 %v5110
        %7909 = vmatprep.mubr.bf16.mxu0 %v1614
        %7910 = vmatmul.mubr.bf16.gmra.mrb[0].mxu0 %v1613
        %v7911 = vpop.f32.mrb[0].mxu0
        %v7912 = vadd.f32 %v7839, %v7911
        %v7913 = vpop.f32.mrb[0].mxu0
        %v7914 = vadd.f32 %v7841, %v7913
        %v7915 = vpop.f32.mrb[0].mxu0
        %v7916 = vadd.f32 %v7843, %v7915
        %v7917 = vpop.f32.mrb[0].mxu0
        %v7918 = vadd.f32 %v7845, %v7917
        %7919 = vmatprep.mubr.bf16.mxu0 %v1625
        %7920 = vmatmul.mubr.bf16.gmra.mrb[0].mxu0 %v1624
        %v7921 = vpop.f32.mrb[0].mxu0
        %v7922 = vadd.f32 %v7849, %v7921
        %v7923 = vpop.f32.mrb[0].mxu0
        %v7924 = vadd.f32 %v7851, %v7923
        %v7925 = vpop.f32.mrb[0].mxu0
        %v7926 = vadd.f32 %v7853, %v7925
        %v7927 = vpop.f32.mrb[0].mxu0
        %v7928 = vadd.f32 %v7855, %v7927
        %7929 = vmatprep.mubr.bf16.mxu0 %v1636
        %7930 = vmatmul.mubr.bf16.gmra.mrb[0].mxu0 %v1635
        %v7931 = vpop.f32.mrb[0].mxu0
        %v7932 = vadd.f32 %v7859, %v7931
        %v7933 = vpop.f32.mrb[0].mxu0
        %v7934 = vadd.f32 %v7861, %v7933
        %v7935 = vpop.f32.mrb[0].mxu0
        %v7936 = vadd.f32 %v7863, %v7935
        %v7937 = vpop.f32.mrb[0].mxu0
        %v7938 = vadd.f32 %v7865, %v7937
        %7939 = vmatprep.mubr.bf16.mxu0 %v1647
        %7940 = vmatmul.mubr.bf16.gmra.mrb[0].mxu0 %v1646
        %v7941 = vpop.f32.mrb[0].mxu0
        %v7942 = vadd.f32 %v7869, %v7941
        %v7943 = vpop.f32.mrb[0].mxu0
        %v7944 = vadd.f32 %v7871, %v7943
        %v7945 = vpop.f32.mrb[0].mxu0
        %v7946 = vadd.f32 %v7873, %v7945
        %v7947 = vpop.f32.mrb[0].mxu0
        %v7948 = vadd.f32 %v7875, %v7947
        %7949 = vdwg.mxu0
        %7950 = vmatprep.subr.bf16.mxu0 %v4948
        %7951 = vmatpush1.bf16.xpose.msra.mxu0 %v4947
        %7952 = vmatprep.subr.bf16.mxu0 %v4959
        %7953 = vmatpush1.bf16.xpose.msra.mxu0 %v4958
        %7954 = vmatprep.subr.bf16.mxu0 %v4970
        %7955 = vmatpush1.bf16.xpose.msra.mxu0 %v4969
        %7956 = vmatprep.subr.bf16.mxu0 %v4981
        %7957 = vmatpush1.bf16.xpose.msra.mxu0 %v4980
        %7958 = vmatprep.subr.bf16.mxu0 %v4992
        %7959 = vmatpush1.bf16.xpose.msra.mxu0 %v4991
        %7960 = vmatprep.subr.bf16.mxu0 %v5003
        %7961 = vmatpush1.bf16.xpose.msra.mxu0 %v5002
        %7962 = vmatprep.subr.bf16.mxu0 %v5014
        %7963 = vmatpush1.bf16.xpose.msra.mxu0 %v5013
        %7964 = vmatprep.subr.bf16.mxu0 %v5025
        %7965 = vmatpush1.bf16.xpose.msra.mxu0 %v5024
        %7966 = vmatprep.subr.bf16.mxu0 %v5036
        %7967 = vmatpush1.bf16.xpose.msra.mxu0 %v5035
        %7968 = vmatprep.subr.bf16.mxu0 %v5047
        %7969 = vmatpush1.bf16.xpose.msra.mxu0 %v5046
        %7970 = vmatprep.subr.bf16.mxu0 %v5058
        %7971 = vmatpush1.bf16.xpose.msra.mxu0 %v5057
        %7972 = vmatprep.subr.bf16.mxu0 %v5069
        %7973 = vmatpush1.bf16.xpose.msra.mxu0 %v5068
        %7974 = vmatprep.subr.bf16.mxu0 %v5080
        %7975 = vmatpush1.bf16.xpose.msra.mxu0 %v5079
        %7976 = vmatprep.subr.bf16.mxu0 %v5091
        %7977 = vmatpush1.bf16.xpose.msra.mxu0 %v5090
        %7978 = vmatprep.subr.bf16.mxu0 %v5102
        %7979 = vmatpush1.bf16.xpose.msra.mxu0 %v5101
        %7980 = vmatprep.subr.bf16.mxu0 %v5113
        %7981 = vmatpush1.bf16.xpose.msra.mxu0 %v5112
        %7982 = vmatprep.mubr.bf16.mxu0 %v1616
        %7983 = vmatmul.mubr.bf16.gmra.mrb[0].mxu0 %v1615
        %v7984 = vpop.f32.mrb[0].mxu0
        %v7985 = vadd.f32 %v7912, %v7984
        %v7986 = vpop.f32.mrb[0].mxu0
        %v7987 = vadd.f32 %v7914, %v7986
        %v7988 = vpop.f32.mrb[0].mxu0
        %v7989 = vadd.f32 %v7916, %v7988
        %v7990 = vpop.f32.mrb[0].mxu0
        %v7991 = vadd.f32 %v7918, %v7990
        %7992 = vmatprep.mubr.bf16.mxu0 %v1627
        %7993 = vmatmul.mubr.bf16.gmra.mrb[0].mxu0 %v1626
        %v7994 = vpop.f32.mrb[0].mxu0
        %v7995 = vadd.f32 %v7922, %v7994
        %v7996 = vpop.f32.mrb[0].mxu0
        %v7997 = vadd.f32 %v7924, %v7996
        %v7998 = vpop.f32.mrb[0].mxu0
        %v7999 = vadd.f32 %v7926, %v7998
        %v8000 = vpop.f32.mrb[0].mxu0
        %v8001 = vadd.f32 %v7928, %v8000
        %8002 = vmatprep.mubr.bf16.mxu0 %v1638
        %8003 = vmatmul.mubr.bf16.gmra.mrb[0].mxu0 %v1637
        %v8004 = vpop.f32.mrb[0].mxu0
        %v8005 = vadd.f32 %v7932, %v8004
        %v8006 = vpop.f32.mrb[0].mxu0
        %v8007 = vadd.f32 %v7934, %v8006
        %v8008 = vpop.f32.mrb[0].mxu0
        %v8009 = vadd.f32 %v7936, %v8008
        %v8010 = vpop.f32.mrb[0].mxu0
        %v8011 = vadd.f32 %v7938, %v8010
        %8012 = vmatprep.mubr.bf16.mxu0 %v1649
        %8013 = vmatmul.mubr.bf16.gmra.mrb[0].mxu0 %v1648
        %v8014 = vpop.f32.mrb[0].mxu0
        %v8015 = vadd.f32 %v7942, %v8014
        %v8016 = vpop.f32.mrb[0].mxu0
        %v8017 = vadd.f32 %v7944, %v8016
        %v8018 = vpop.f32.mrb[0].mxu0
        %v8019 = vadd.f32 %v7946, %v8018
        %v8020 = vpop.f32.mrb[0].mxu0
        %v8021 = vadd.f32 %v7948, %v8020
        %8022 = vdwg.mxu0
        %8023 = vmatprep.subr.bf16.mxu0 0
        %8024 = vmatpush1.bf16.xpose.msra.mxu0 %v6249
        %8025 = vmatprep.subr.bf16.mxu0 0
        %8026 = vmatpush1.bf16.xpose.msra.mxu0 %v6252
        %8027 = vmatprep.subr.bf16.mxu0 0
        %8028 = vmatpush1.bf16.xpose.msra.mxu0 %v6255
        %8029 = vmatprep.subr.bf16.mxu0 0
        %8030 = vmatpush1.bf16.xpose.msra.mxu0 %v6258
        %8031 = vmatprep.subr.bf16.mxu0 0
        %8032 = vmatpush1.bf16.xpose.msra.mxu0 %v6261
        %8033 = vmatprep.subr.bf16.mxu0 0
        %8034 = vmatpush1.bf16.xpose.msra.mxu0 %v6264
        %8035 = vmatprep.subr.bf16.mxu0 0
        %8036 = vmatpush1.bf16.xpose.msra.mxu0 %v6267
        %8037 = vmatprep.subr.bf16.mxu0 0
        %8038 = vmatpush1.bf16.xpose.msra.mxu0 %v6270
        %8039 = vmatprep.subr.bf16.mxu0 0
        %8040 = vmatpush1.bf16.xpose.msra.mxu0 %v6273
        %8041 = vmatprep.subr.bf16.mxu0 0
        %8042 = vmatpush1.bf16.xpose.msra.mxu0 %v6276
        %8043 = vmatprep.subr.bf16.mxu0 0
        %8044 = vmatpush1.bf16.xpose.msra.mxu0 %v6279
        %8045 = vmatprep.subr.bf16.mxu0 0
        %8046 = vmatpush1.bf16.xpose.msra.mxu0 %v6282
        %8047 = vmatprep.subr.bf16.mxu0 0
        %8048 = vmatpush1.bf16.xpose.msra.mxu0 %v6285
        %8049 = vmatprep.subr.bf16.mxu0 0
        %8050 = vmatpush1.bf16.xpose.msra.mxu0 %v6288
        %8051 = vmatprep.subr.bf16.mxu0 0
        %8052 = vmatpush1.bf16.xpose.msra.mxu0 %v6291
        %8053 = vmatprep.subr.bf16.mxu0 0
        %8054 = vmatpush1.bf16.xpose.msra.mxu0 %v6294
        %8055 = vmatprep.mubr.bf16.mxu0 0
        %8056 = vmatmul.mubr.bf16.gmra.mrb[0].mxu0 %v6093
        %v8057 = vpop.f32.mrb[0].mxu0
        %v8058 = vadd.f32 %v7985, %v8057
        %v8059 = vpop.f32.mrb[0].mxu0
        %v8060 = vadd.f32 %v7987, %v8059
        %v8061 = vpop.f32.mrb[0].mxu0
        %v8062 = vadd.f32 %v7989, %v8061
        %v8063 = vpop.f32.mrb[0].mxu0
        %v8064 = vadd.f32 %v7991, %v8063
        %8065 = vmatprep.mubr.bf16.mxu0 0
        %8066 = vmatmul.mubr.bf16.gmra.mrb[0].mxu0 %v6096
        %v8067 = vpop.f32.mrb[0].mxu0
        %v8068 = vadd.f32 %v7995, %v8067
        %v8069 = vpop.f32.mrb[0].mxu0
        %v8070 = vadd.f32 %v7997, %v8069
        %v8071 = vpop.f32.mrb[0].mxu0
        %v8072 = vadd.f32 %v7999, %v8071
        %v8073 = vpop.f32.mrb[0].mxu0
        %v8074 = vadd.f32 %v8001, %v8073
        %8075 = vmatprep.mubr.bf16.mxu0 0
        %8076 = vmatmul.mubr.bf16.gmra.mrb[0].mxu0 %v6099
        %v8077 = vpop.f32.mrb[0].mxu0
        %v8078 = vadd.f32 %v8005, %v8077
        %v8079 = vpop.f32.mrb[0].mxu0
        %v8080 = vadd.f32 %v8007, %v8079
        %v8081 = vpop.f32.mrb[0].mxu0
        %v8082 = vadd.f32 %v8009, %v8081
        %v8083 = vpop.f32.mrb[0].mxu0
        %v8084 = vadd.f32 %v8011, %v8083
        %8085 = vmatprep.mubr.bf16.mxu0 0
        %8086 = vmatmul.mubr.bf16.gmra.mrb[0].mxu0 %v6102
        %v8087 = vpop.f32.mrb[0].mxu0
        %v8088 = vadd.f32 %v8015, %v8087
        %v8089 = vpop.f32.mrb[0].mxu0
        %v8090 = vadd.f32 %v8017, %v8089
        %v8091 = vpop.f32.mrb[0].mxu0
        %v8092 = vadd.f32 %v8019, %v8091
        %v8093 = vpop.f32.mrb[0].mxu0
        %v8094 = vadd.f32 %v8021, %v8093
        %8095 = vdwg.mxu0
        %8096 = vmatprep.subr.bf16.mxu0 %v5116
        %8097 = vmatpush1.bf16.xpose.msra.mxu0 %v5115
        %8098 = vmatprep.subr.bf16.mxu0 %v5127
        %8099 = vmatpush1.bf16.xpose.msra.mxu0 %v5126
        %8100 = vmatprep.subr.bf16.mxu0 %v5138
        %8101 = vmatpush1.bf16.xpose.msra.mxu0 %v5137
        %8102 = vmatprep.subr.bf16.mxu0 %v5149
        %8103 = vmatpush1.bf16.xpose.msra.mxu0 %v5148
        %8104 = vmatprep.subr.bf16.mxu0 %v5160
        %8105 = vmatpush1.bf16.xpose.msra.mxu0 %v5159
        %8106 = vmatprep.subr.bf16.mxu0 %v5171
        %8107 = vmatpush1.bf16.xpose.msra.mxu0 %v5170
        %8108 = vmatprep.subr.bf16.mxu0 %v5182
        %8109 = vmatpush1.bf16.xpose.msra.mxu0 %v5181
        %8110 = vmatprep.subr.bf16.mxu0 %v5193
        %8111 = vmatpush1.bf16.xpose.msra.mxu0 %v5192
        %8112 = vmatprep.subr.bf16.mxu0 %v5204
        %8113 = vmatpush1.bf16.xpose.msra.mxu0 %v5203
        %8114 = vmatprep.subr.bf16.mxu0 %v5215
        %8115 = vmatpush1.bf16.xpose.msra.mxu0 %v5214
        %8116 = vmatprep.subr.bf16.mxu0 %v5226
        %8117 = vmatpush1.bf16.xpose.msra.mxu0 %v5225
        %8118 = vmatprep.subr.bf16.mxu0 %v5237
        %8119 = vmatpush1.bf16.xpose.msra.mxu0 %v5236
        %8120 = vmatprep.subr.bf16.mxu0 %v5248
        %8121 = vmatpush1.bf16.xpose.msra.mxu0 %v5247
        %8122 = vmatprep.subr.bf16.mxu0 %v5259
        %8123 = vmatpush1.bf16.xpose.msra.mxu0 %v5258
        %8124 = vmatprep.subr.bf16.mxu0 %v5270
        %8125 = vmatpush1.bf16.xpose.msra.mxu0 %v5269
        %8126 = vmatprep.subr.bf16.mxu0 %v5281
        %8127 = vmatpush1.bf16.xpose.msra.mxu0 %v5280
        %8128 = vmatprep.mubr.bf16.mxu0 %v1608
        %8129 = vmatmul.mubr.bf16.gmra.mrb[0].mxu0 %v1607
        %v8130 = vpop.f32.mrb[0].mxu0
        %v8131 = vadd.f32 0.0, %v8130
        %v8132 = vpop.f32.mrb[0].mxu0
        %v8133 = vadd.f32 0.0, %v8132
        %v8134 = vpop.f32.mrb[0].mxu0
        %v8135 = vadd.f32 0.0, %v8134
        %v8136 = vpop.f32.mrb[0].mxu0
        %v8137 = vadd.f32 0.0, %v8136
        %8138 = vmatprep.mubr.bf16.mxu0 %v1619
        %8139 = vmatmul.mubr.bf16.gmra.mrb[0].mxu0 %v1618
        %v8140 = vpop.f32.mrb[0].mxu0
        %v8141 = vadd.f32 0.0, %v8140
        %v8142 = vpop.f32.mrb[0].mxu0
        %v8143 = vadd.f32 0.0, %v8142
        %v8144 = vpop.f32.mrb[0].mxu0
        %v8145 = vadd.f32 0.0, %v8144
        %v8146 = vpop.f32.mrb[0].mxu0
        %v8147 = vadd.f32 0.0, %v8146
        %8148 = vmatprep.mubr.bf16.mxu0 %v1630
        %8149 = vmatmul.mubr.bf16.gmra.mrb[0].mxu0 %v1629
        %v8150 = vpop.f32.mrb[0].mxu0
        %v8151 = vadd.f32 0.0, %v8150
        %v8152 = vpop.f32.mrb[0].mxu0
        %v8153 = vadd.f32 0.0, %v8152
        %v8154 = vpop.f32.mrb[0].mxu0
        %v8155 = vadd.f32 0.0, %v8154
        %v8156 = vpop.f32.mrb[0].mxu0
        %v8157 = vadd.f32 0.0, %v8156
        %8158 = vmatprep.mubr.bf16.mxu0 %v1641
        %8159 = vmatmul.mubr.bf16.gmra.mrb[0].mxu0 %v1640
        %v8160 = vpop.f32.mrb[0].mxu0
        %v8161 = vadd.f32 0.0, %v8160
        %v8162 = vpop.f32.mrb[0].mxu0
        %v8163 = vadd.f32 0.0, %v8162
        %v8164 = vpop.f32.mrb[0].mxu0
        %v8165 = vadd.f32 0.0, %v8164
        %v8166 = vpop.f32.mrb[0].mxu0
        %v8167 = vadd.f32 0.0, %v8166
        %8168 = vdwg.mxu0
        %8169 = vmatprep.subr.bf16.mxu0 %v5118
        %8170 = vmatpush1.bf16.xpose.msra.mxu0 %v5117
        %8171 = vmatprep.subr.bf16.mxu0 %v5129
        %8172 = vmatpush1.bf16.xpose.msra.mxu0 %v5128
        %8173 = vmatprep.subr.bf16.mxu0 %v5140
        %8174 = vmatpush1.bf16.xpose.msra.mxu0 %v5139
        %8175 = vmatprep.subr.bf16.mxu0 %v5151
        %8176 = vmatpush1.bf16.xpose.msra.mxu0 %v5150
        %8177 = vmatprep.subr.bf16.mxu0 %v5162
        %8178 = vmatpush1.bf16.xpose.msra.mxu0 %v5161
        %8179 = vmatprep.subr.bf16.mxu0 %v5173
        %8180 = vmatpush1.bf16.xpose.msra.mxu0 %v5172
        %8181 = vmatprep.subr.bf16.mxu0 %v5184
        %8182 = vmatpush1.bf16.xpose.msra.mxu0 %v5183
        %8183 = vmatprep.subr.bf16.mxu0 %v5195
        %8184 = vmatpush1.bf16.xpose.msra.mxu0 %v5194
        %8185 = vmatprep.subr.bf16.mxu0 %v5206
        %8186 = vmatpush1.bf16.xpose.msra.mxu0 %v5205
        %8187 = vmatprep.subr.bf16.mxu0 %v5217
        %8188 = vmatpush1.bf16.xpose.msra.mxu0 %v5216
        %8189 = vmatprep.subr.bf16.mxu0 %v5228
        %8190 = vmatpush1.bf16.xpose.msra.mxu0 %v5227
        %8191 = vmatprep.subr.bf16.mxu0 %v5239
        %8192 = vmatpush1.bf16.xpose.msra.mxu0 %v5238
        %8193 = vmatprep.subr.bf16.mxu0 %v5250
        %8194 = vmatpush1.bf16.xpose.msra.mxu0 %v5249
        %8195 = vmatprep.subr.bf16.mxu0 %v5261
        %8196 = vmatpush1.bf16.xpose.msra.mxu0 %v5260
        %8197 = vmatprep.subr.bf16.mxu0 %v5272
        %8198 = vmatpush1.bf16.xpose.msra.mxu0 %v5271
        %8199 = vmatprep.subr.bf16.mxu0 %v5283
        %8200 = vmatpush1.bf16.xpose.msra.mxu0 %v5282
        %8201 = vmatprep.mubr.bf16.mxu0 %v1610
        %8202 = vmatmul.mubr.bf16.gmra.mrb[0].mxu0 %v1609
        %v8203 = vpop.f32.mrb[0].mxu0
        %v8204 = vadd.f32 %v8131, %v8203
        %v8205 = vpop.f32.mrb[0].mxu0
        %v8206 = vadd.f32 %v8133, %v8205
        %v8207 = vpop.f32.mrb[0].mxu0
        %v8208 = vadd.f32 %v8135, %v8207
        %v8209 = vpop.f32.mrb[0].mxu0
        %v8210 = vadd.f32 %v8137, %v8209
        %8211 = vmatprep.mubr.bf16.mxu0 %v1621
        %8212 = vmatmul.mubr.bf16.gmra.mrb[0].mxu0 %v1620
        %v8213 = vpop.f32.mrb[0].mxu0
        %v8214 = vadd.f32 %v8141, %v8213
        %v8215 = vpop.f32.mrb[0].mxu0
        %v8216 = vadd.f32 %v8143, %v8215
        %v8217 = vpop.f32.mrb[0].mxu0
        %v8218 = vadd.f32 %v8145, %v8217
        %v8219 = vpop.f32.mrb[0].mxu0
        %v8220 = vadd.f32 %v8147, %v8219
        %8221 = vmatprep.mubr.bf16.mxu0 %v1632
        %8222 = vmatmul.mubr.bf16.gmra.mrb[0].mxu0 %v1631
        %v8223 = vpop.f32.mrb[0].mxu0
        %v8224 = vadd.f32 %v8151, %v8223
        %v8225 = vpop.f32.mrb[0].mxu0
        %v8226 = vadd.f32 %v8153, %v8225
        %v8227 = vpop.f32.mrb[0].mxu0
        %v8228 = vadd.f32 %v8155, %v8227
        %v8229 = vpop.f32.mrb[0].mxu0
        %v8230 = vadd.f32 %v8157, %v8229
        %8231 = vmatprep.mubr.bf16.mxu0 %v1643
        %8232 = vmatmul.mubr.bf16.gmra.mrb[0].mxu0 %v1642
        %v8233 = vpop.f32.mrb[0].mxu0
        %v8234 = vadd.f32 %v8161, %v8233
        %v8235 = vpop.f32.mrb[0].mxu0
        %v8236 = vadd.f32 %v8163, %v8235
        %v8237 = vpop.f32.mrb[0].mxu0
        %v8238 = vadd.f32 %v8165, %v8237
        %v8239 = vpop.f32.mrb[0].mxu0
        %v8240 = vadd.f32 %v8167, %v8239
        %8241 = vdwg.mxu0
        %8242 = vmatprep.subr.bf16.mxu0 %v5120
        %8243 = vmatpush1.bf16.xpose.msra.mxu0 %v5119
        %8244 = vmatprep.subr.bf16.mxu0 %v5131
        %8245 = vmatpush1.bf16.xpose.msra.mxu0 %v5130
        %8246 = vmatprep.subr.bf16.mxu0 %v5142
        %8247 = vmatpush1.bf16.xpose.msra.mxu0 %v5141
        %8248 = vmatprep.subr.bf16.mxu0 %v5153
        %8249 = vmatpush1.bf16.xpose.msra.mxu0 %v5152
        %8250 = vmatprep.subr.bf16.mxu0 %v5164
        %8251 = vmatpush1.bf16.xpose.msra.mxu0 %v5163
        %8252 = vmatprep.subr.bf16.mxu0 %v5175
        %8253 = vmatpush1.bf16.xpose.msra.mxu0 %v5174
        %8254 = vmatprep.subr.bf16.mxu0 %v5186
        %8255 = vmatpush1.bf16.xpose.msra.mxu0 %v5185
        %8256 = vmatprep.subr.bf16.mxu0 %v5197
        %8257 = vmatpush1.bf16.xpose.msra.mxu0 %v5196
        %8258 = vmatprep.subr.bf16.mxu0 %v5208
        %8259 = vmatpush1.bf16.xpose.msra.mxu0 %v5207
        %8260 = vmatprep.subr.bf16.mxu0 %v5219
        %8261 = vmatpush1.bf16.xpose.msra.mxu0 %v5218
        %8262 = vmatprep.subr.bf16.mxu0 %v5230
        %8263 = vmatpush1.bf16.xpose.msra.mxu0 %v5229
        %8264 = vmatprep.subr.bf16.mxu0 %v5241
        %8265 = vmatpush1.bf16.xpose.msra.mxu0 %v5240
        %8266 = vmatprep.subr.bf16.mxu0 %v5252
        %8267 = vmatpush1.bf16.xpose.msra.mxu0 %v5251
        %8268 = vmatprep.subr.bf16.mxu0 %v5263
        %8269 = vmatpush1.bf16.xpose.msra.mxu0 %v5262
        %8270 = vmatprep.subr.bf16.mxu0 %v5274
        %8271 = vmatpush1.bf16.xpose.msra.mxu0 %v5273
        %8272 = vmatprep.subr.bf16.mxu0 %v5285
        %8273 = vmatpush1.bf16.xpose.msra.mxu0 %v5284
        %8274 = vmatprep.mubr.bf16.mxu0 %v1612
        %8275 = vmatmul.mubr.bf16.gmra.mrb[0].mxu0 %v1611
        %v8276 = vpop.f32.mrb[0].mxu0
        %v8277 = vadd.f32 %v8204, %v8276
        %v8278 = vpop.f32.mrb[0].mxu0
        %v8279 = vadd.f32 %v8206, %v8278
        %v8280 = vpop.f32.mrb[0].mxu0
        %v8281 = vadd.f32 %v8208, %v8280
        %v8282 = vpop.f32.mrb[0].mxu0
        %v8283 = vadd.f32 %v8210, %v8282
        %8284 = vmatprep.mubr.bf16.mxu0 %v1623
        %8285 = vmatmul.mubr.bf16.gmra.mrb[0].mxu0 %v1622
        %v8286 = vpop.f32.mrb[0].mxu0
        %v8287 = vadd.f32 %v8214, %v8286
        %v8288 = vpop.f32.mrb[0].mxu0
        %v8289 = vadd.f32 %v8216, %v8288
        %v8290 = vpop.f32.mrb[0].mxu0
        %v8291 = vadd.f32 %v8218, %v8290
        %v8292 = vpop.f32.mrb[0].mxu0
        %v8293 = vadd.f32 %v8220, %v8292
        %8294 = vmatprep.mubr.bf16.mxu0 %v1634
        %8295 = vmatmul.mubr.bf16.gmra.mrb[0].mxu0 %v1633
        %v8296 = vpop.f32.mrb[0].mxu0
        %v8297 = vadd.f32 %v8224, %v8296
        %v8298 = vpop.f32.mrb[0].mxu0
        %v8299 = vadd.f32 %v8226, %v8298
        %v8300 = vpop.f32.mrb[0].mxu0
        %v8301 = vadd.f32 %v8228, %v8300
        %v8302 = vpop.f32.mrb[0].mxu0
        %v8303 = vadd.f32 %v8230, %v8302
        %8304 = vmatprep.mubr.bf16.mxu0 %v1645
        %8305 = vmatmul.mubr.bf16.gmra.mrb[0].mxu0 %v1644
        %v8306 = vpop.f32.mrb[0].mxu0
        %v8307 = vadd.f32 %v8234, %v8306
        %v8308 = vpop.f32.mrb[0].mxu0
        %v8309 = vadd.f32 %v8236, %v8308
        %v8310 = vpop.f32.mrb[0].mxu0
        %v8311 = vadd.f32 %v8238, %v8310
        %v8312 = vpop.f32.mrb[0].mxu0
        %v8313 = vadd.f32 %v8240, %v8312
        %8314 = vdwg.mxu0
        %8315 = vmatprep.subr.bf16.mxu0 %v5122
        %8316 = vmatpush1.bf16.xpose.msra.mxu0 %v5121
        %8317 = vmatprep.subr.bf16.mxu0 %v5133
        %8318 = vmatpush1.bf16.xpose.msra.mxu0 %v5132
        %8319 = vmatprep.subr.bf16.mxu0 %v5144
        %8320 = vmatpush1.bf16.xpose.msra.mxu0 %v5143
        %8321 = vmatprep.subr.bf16.mxu0 %v5155
        %8322 = vmatpush1.bf16.xpose.msra.mxu0 %v5154
        %8323 = vmatprep.subr.bf16.mxu0 %v5166
        %8324 = vmatpush1.bf16.xpose.msra.mxu0 %v5165
        %8325 = vmatprep.subr.bf16.mxu0 %v5177
        %8326 = vmatpush1.bf16.xpose.msra.mxu0 %v5176
        %8327 = vmatprep.subr.bf16.mxu0 %v5188
        %8328 = vmatpush1.bf16.xpose.msra.mxu0 %v5187
        %8329 = vmatprep.subr.bf16.mxu0 %v5199
        %8330 = vmatpush1.bf16.xpose.msra.mxu0 %v5198
        %8331 = vmatprep.subr.bf16.mxu0 %v5210
        %8332 = vmatpush1.bf16.xpose.msra.mxu0 %v5209
        %8333 = vmatprep.subr.bf16.mxu0 %v5221
        %8334 = vmatpush1.bf16.xpose.msra.mxu0 %v5220
        %8335 = vmatprep.subr.bf16.mxu0 %v5232
        %8336 = vmatpush1.bf16.xpose.msra.mxu0 %v5231
        %8337 = vmatprep.subr.bf16.mxu0 %v5243
        %8338 = vmatpush1.bf16.xpose.msra.mxu0 %v5242
        %8339 = vmatprep.subr.bf16.mxu0 %v5254
        %8340 = vmatpush1.bf16.xpose.msra.mxu0 %v5253
        %8341 = vmatprep.subr.bf16.mxu0 %v5265
        %8342 = vmatpush1.bf16.xpose.msra.mxu0 %v5264
        %8343 = vmatprep.subr.bf16.mxu0 %v5276
        %8344 = vmatpush1.bf16.xpose.msra.mxu0 %v5275
        %8345 = vmatprep.subr.bf16.mxu0 %v5287
        %8346 = vmatpush1.bf16.xpose.msra.mxu0 %v5286
        %8347 = vmatprep.mubr.bf16.mxu0 %v1614
        %8348 = vmatmul.mubr.bf16.gmra.mrb[0].mxu0 %v1613
        %v8349 = vpop.f32.mrb[0].mxu0
        %v8350 = vadd.f32 %v8277, %v8349
        %v8351 = vpop.f32.mrb[0].mxu0
        %v8352 = vadd.f32 %v8279, %v8351
        %v8353 = vpop.f32.mrb[0].mxu0
        %v8354 = vadd.f32 %v8281, %v8353
        %v8355 = vpop.f32.mrb[0].mxu0
        %v8356 = vadd.f32 %v8283, %v8355
        %8357 = vmatprep.mubr.bf16.mxu0 %v1625
        %8358 = vmatmul.mubr.bf16.gmra.mrb[0].mxu0 %v1624
        %v8359 = vpop.f32.mrb[0].mxu0
        %v8360 = vadd.f32 %v8287, %v8359
        %v8361 = vpop.f32.mrb[0].mxu0
        %v8362 = vadd.f32 %v8289, %v8361
        %v8363 = vpop.f32.mrb[0].mxu0
        %v8364 = vadd.f32 %v8291, %v8363
        %v8365 = vpop.f32.mrb[0].mxu0
        %v8366 = vadd.f32 %v8293, %v8365
        %8367 = vmatprep.mubr.bf16.mxu0 %v1636
        %8368 = vmatmul.mubr.bf16.gmra.mrb[0].mxu0 %v1635
        %v8369 = vpop.f32.mrb[0].mxu0
        %v8370 = vadd.f32 %v8297, %v8369
        %v8371 = vpop.f32.mrb[0].mxu0
        %v8372 = vadd.f32 %v8299, %v8371
        %v8373 = vpop.f32.mrb[0].mxu0
        %v8374 = vadd.f32 %v8301, %v8373
        %v8375 = vpop.f32.mrb[0].mxu0
        %v8376 = vadd.f32 %v8303, %v8375
        %8377 = vmatprep.mubr.bf16.mxu0 %v1647
        %8378 = vmatmul.mubr.bf16.gmra.mrb[0].mxu0 %v1646
        %v8379 = vpop.f32.mrb[0].mxu0
        %v8380 = vadd.f32 %v8307, %v8379
        %v8381 = vpop.f32.mrb[0].mxu0
        %v8382 = vadd.f32 %v8309, %v8381
        %v8383 = vpop.f32.mrb[0].mxu0
        %v8384 = vadd.f32 %v8311, %v8383
        %v8385 = vpop.f32.mrb[0].mxu0
        %v8386 = vadd.f32 %v8313, %v8385
        %8387 = vdwg.mxu0
        %8388 = vmatprep.subr.bf16.mxu0 %v5124
        %8389 = vmatpush1.bf16.xpose.msra.mxu0 %v5123
        %8390 = vmatprep.subr.bf16.mxu0 %v5135
        %8391 = vmatpush1.bf16.xpose.msra.mxu0 %v5134
        %8392 = vmatprep.subr.bf16.mxu0 %v5146
        %8393 = vmatpush1.bf16.xpose.msra.mxu0 %v5145
        %8394 = vmatprep.subr.bf16.mxu0 %v5157
        %8395 = vmatpush1.bf16.xpose.msra.mxu0 %v5156
        %8396 = vmatprep.subr.bf16.mxu0 %v5168
        %8397 = vmatpush1.bf16.xpose.msra.mxu0 %v5167
        %8398 = vmatprep.subr.bf16.mxu0 %v5179
        %8399 = vmatpush1.bf16.xpose.msra.mxu0 %v5178
        %8400 = vmatprep.subr.bf16.mxu0 %v5190
        %8401 = vmatpush1.bf16.xpose.msra.mxu0 %v5189
        %8402 = vmatprep.subr.bf16.mxu0 %v5201
        %8403 = vmatpush1.bf16.xpose.msra.mxu0 %v5200
        %8404 = vmatprep.subr.bf16.mxu0 %v5212
        %8405 = vmatpush1.bf16.xpose.msra.mxu0 %v5211
        %8406 = vmatprep.subr.bf16.mxu0 %v5223
        %8407 = vmatpush1.bf16.xpose.msra.mxu0 %v5222
        %8408 = vmatprep.subr.bf16.mxu0 %v5234
        %8409 = vmatpush1.bf16.xpose.msra.mxu0 %v5233
        %8410 = vmatprep.subr.bf16.mxu0 %v5245
        %8411 = vmatpush1.bf16.xpose.msra.mxu0 %v5244
        %8412 = vmatprep.subr.bf16.mxu0 %v5256
        %8413 = vmatpush1.bf16.xpose.msra.mxu0 %v5255
        %8414 = vmatprep.subr.bf16.mxu0 %v5267
        %8415 = vmatpush1.bf16.xpose.msra.mxu0 %v5266
        %8416 = vmatprep.subr.bf16.mxu0 %v5278
        %8417 = vmatpush1.bf16.xpose.msra.mxu0 %v5277
        %8418 = vmatprep.subr.bf16.mxu0 %v5289
        %8419 = vmatpush1.bf16.xpose.msra.mxu0 %v5288
        %8420 = vmatprep.mubr.bf16.mxu0 %v1616
        %8421 = vmatmul.mubr.bf16.gmra.mrb[0].mxu0 %v1615
        %v8422 = vpop.f32.mrb[0].mxu0
        %v8423 = vadd.f32 %v8350, %v8422
        %v8424 = vpop.f32.mrb[0].mxu0
        %v8425 = vadd.f32 %v8352, %v8424
        %v8426 = vpop.f32.mrb[0].mxu0
        %v8427 = vadd.f32 %v8354, %v8426
        %v8428 = vpop.f32.mrb[0].mxu0
        %v8429 = vadd.f32 %v8356, %v8428
        %8430 = vmatprep.mubr.bf16.mxu0 %v1627
        %8431 = vmatmul.mubr.bf16.gmra.mrb[0].mxu0 %v1626
        %v8432 = vpop.f32.mrb[0].mxu0
        %v8433 = vadd.f32 %v8360, %v8432
        %v8434 = vpop.f32.mrb[0].mxu0
        %v8435 = vadd.f32 %v8362, %v8434
        %v8436 = vpop.f32.mrb[0].mxu0
        %v8437 = vadd.f32 %v8364, %v8436
        %v8438 = vpop.f32.mrb[0].mxu0
        %v8439 = vadd.f32 %v8366, %v8438
        %8440 = vmatprep.mubr.bf16.mxu0 %v1638
        %8441 = vmatmul.mubr.bf16.gmra.mrb[0].mxu0 %v1637
        %v8442 = vpop.f32.mrb[0].mxu0
        %v8443 = vadd.f32 %v8370, %v8442
        %v8444 = vpop.f32.mrb[0].mxu0
        %v8445 = vadd.f32 %v8372, %v8444
        %v8446 = vpop.f32.mrb[0].mxu0
        %v8447 = vadd.f32 %v8374, %v8446
        %v8448 = vpop.f32.mrb[0].mxu0
        %v8449 = vadd.f32 %v8376, %v8448
        %8450 = vmatprep.mubr.bf16.mxu0 %v1649
        %8451 = vmatmul.mubr.bf16.gmra.mrb[0].mxu0 %v1648
        %v8452 = vpop.f32.mrb[0].mxu0
        %v8453 = vadd.f32 %v8380, %v8452
        %v8454 = vpop.f32.mrb[0].mxu0
        %v8455 = vadd.f32 %v8382, %v8454
        %v8456 = vpop.f32.mrb[0].mxu0
        %v8457 = vadd.f32 %v8384, %v8456
        %v8458 = vpop.f32.mrb[0].mxu0
        %v8459 = vadd.f32 %v8386, %v8458
        %8460 = vdwg.mxu0
        %8461 = vmatprep.subr.bf16.mxu0 0
        %8462 = vmatpush1.bf16.xpose.msra.mxu0 %v6297
        %8463 = vmatprep.subr.bf16.mxu0 0
        %8464 = vmatpush1.bf16.xpose.msra.mxu0 %v6300
        %8465 = vmatprep.subr.bf16.mxu0 0
        %8466 = vmatpush1.bf16.xpose.msra.mxu0 %v6303
        %8467 = vmatprep.subr.bf16.mxu0 0
        %8468 = vmatpush1.bf16.xpose.msra.mxu0 %v6306
        %8469 = vmatprep.subr.bf16.mxu0 0
        %8470 = vmatpush1.bf16.xpose.msra.mxu0 %v6309
        %8471 = vmatprep.subr.bf16.mxu0 0
        %8472 = vmatpush1.bf16.xpose.msra.mxu0 %v6312
        %8473 = vmatprep.subr.bf16.mxu0 0
        %8474 = vmatpush1.bf16.xpose.msra.mxu0 %v6315
        %8475 = vmatprep.subr.bf16.mxu0 0
        %8476 = vmatpush1.bf16.xpose.msra.mxu0 %v6318
        %8477 = vmatprep.subr.bf16.mxu0 0
        %8478 = vmatpush1.bf16.xpose.msra.mxu0 %v6321
        %8479 = vmatprep.subr.bf16.mxu0 0
        %8480 = vmatpush1.bf16.xpose.msra.mxu0 %v6324
        %8481 = vmatprep.subr.bf16.mxu0 0
        %8482 = vmatpush1.bf16.xpose.msra.mxu0 %v6327
        %8483 = vmatprep.subr.bf16.mxu0 0
        %8484 = vmatpush1.bf16.xpose.msra.mxu0 %v6330
        %8485 = vmatprep.subr.bf16.mxu0 0
        %8486 = vmatpush1.bf16.xpose.msra.mxu0 %v6333
        %8487 = vmatprep.subr.bf16.mxu0 0
        %8488 = vmatpush1.bf16.xpose.msra.mxu0 %v6336
        %8489 = vmatprep.subr.bf16.mxu0 0
        %8490 = vmatpush1.bf16.xpose.msra.mxu0 %v6339
        %8491 = vmatprep.subr.bf16.mxu0 0
        %8492 = vmatpush1.bf16.xpose.msra.mxu0 %v6342
        %8493 = vmatprep.mubr.bf16.mxu0 0
        %8494 = vmatmul.mubr.bf16.gmra.mrb[0].mxu0 %v6093
        %v8495 = vpop.f32.mrb[0].mxu0
        %v8496 = vadd.f32 %v8423, %v8495
        %v8497 = vpop.f32.mrb[0].mxu0
        %v8498 = vadd.f32 %v8425, %v8497
        %v8499 = vpop.f32.mrb[0].mxu0
        %v8500 = vadd.f32 %v8427, %v8499
        %v8501 = vpop.f32.mrb[0].mxu0
        %v8502 = vadd.f32 %v8429, %v8501
        %8503 = vmatprep.mubr.bf16.mxu0 0
        %8504 = vmatmul.mubr.bf16.gmra.mrb[0].mxu0 %v6096
        %v8505 = vpop.f32.mrb[0].mxu0
        %v8506 = vadd.f32 %v8433, %v8505
        %v8507 = vpop.f32.mrb[0].mxu0
        %v8508 = vadd.f32 %v8435, %v8507
        %v8509 = vpop.f32.mrb[0].mxu0
        %v8510 = vadd.f32 %v8437, %v8509
        %v8511 = vpop.f32.mrb[0].mxu0
        %v8512 = vadd.f32 %v8439, %v8511
        %8513 = vmatprep.mubr.bf16.mxu0 0
        %8514 = vmatmul.mubr.bf16.gmra.mrb[0].mxu0 %v6099
        %v8515 = vpop.f32.mrb[0].mxu0
        %v8516 = vadd.f32 %v8443, %v8515
        %v8517 = vpop.f32.mrb[0].mxu0
        %v8518 = vadd.f32 %v8445, %v8517
        %v8519 = vpop.f32.mrb[0].mxu0
        %v8520 = vadd.f32 %v8447, %v8519
        %v8521 = vpop.f32.mrb[0].mxu0
        %v8522 = vadd.f32 %v8449, %v8521
        %8523 = vmatprep.mubr.bf16.mxu0 0
        %8524 = vmatmul.mubr.bf16.gmra.mrb[0].mxu0 %v6102
        %v8525 = vpop.f32.mrb[0].mxu0
        %v8526 = vadd.f32 %v8453, %v8525
        %v8527 = vpop.f32.mrb[0].mxu0
        %v8528 = vadd.f32 %v8455, %v8527
        %v8529 = vpop.f32.mrb[0].mxu0
        %v8530 = vadd.f32 %v8457, %v8529
        %v8531 = vpop.f32.mrb[0].mxu0
        %v8532 = vadd.f32 %v8459, %v8531
        %8533 = vdwg.mxu0
        %v8534 = vadd.f32 %v6744, %v6748
        %v8535 = vadd.f32 %v8534, %v6754
        %v8536 = vadd.f32 %v8535, %v6758
        %v8537 = vadd.f32 %v8536, %v6764
        %v8538 = vadd.f32 %v8537, %v6768
        %v8539 = vadd.f32 %v8538, %v6774
        %v8540 = vadd.f32 %v8539, %v6778
        %v8541 = vrot.slane %v8540, 4
        %v8542 = vadd.f32 %v8540, %v8541
        %v8543 = vrot.slane %v8542, 2
        %v8544 = vadd.f32 %v8542, %v8543
        %v8545 = vrot.slane %v8544, 1
        %v8546 = vadd.f32 %v8544, %v8545
        %v8547 = vadd.f32 %v6746, %v6750
        %v8548 = vadd.f32 %v8547, %v6756
        %v8549 = vadd.f32 %v8548, %v6760
        %v8550 = vadd.f32 %v8549, %v6766
        %v8551 = vadd.f32 %v8550, %v6770
        %v8552 = vadd.f32 %v8551, %v6776
        %v8553 = vadd.f32 %v8552, %v6780
        %v8554 = vrot.slane %v8553, 4
        %v8555 = vadd.f32 %v8553, %v8554
        %v8556 = vrot.slane %v8555, 2
        %v8557 = vadd.f32 %v8555, %v8556
        %v8558 = vrot.slane %v8557, 1
        %v8559 = vadd.f32 %v8557, %v8558
        %v8560 = vadd.f32 %v7182, %v7186
        %v8561 = vadd.f32 %v8560, %v7192
        %v8562 = vadd.f32 %v8561, %v7196
        %v8563 = vadd.f32 %v8562, %v7202
        %v8564 = vadd.f32 %v8563, %v7206
        %v8565 = vadd.f32 %v8564, %v7212
        %v8566 = vadd.f32 %v8565, %v7216
        %v8567 = vrot.slane %v8566, 4
        %v8568 = vadd.f32 %v8566, %v8567
        %v8569 = vrot.slane %v8568, 2
        %v8570 = vadd.f32 %v8568, %v8569
        %v8571 = vrot.slane %v8570, 1
        %v8572 = vadd.f32 %v8570, %v8571
        %v8573 = vadd.f32 %v7184, %v7188
        %v8574 = vadd.f32 %v8573, %v7194
        %v8575 = vadd.f32 %v8574, %v7198
        %v8576 = vadd.f32 %v8575, %v7204
        %v8577 = vadd.f32 %v8576, %v7208
        %v8578 = vadd.f32 %v8577, %v7214
        %v8579 = vadd.f32 %v8578, %v7218
        %v8580 = vrot.slane %v8579, 4
        %v8581 = vadd.f32 %v8579, %v8580
        %v8582 = vrot.slane %v8581, 2
        %v8583 = vadd.f32 %v8581, %v8582
        %v8584 = vrot.slane %v8583, 1
        %v8585 = vadd.f32 %v8583, %v8584
        %v8586 = vadd.f32 %v7620, %v7624
        %v8587 = vadd.f32 %v8586, %v7630
        %v8588 = vadd.f32 %v8587, %v7634
        %v8589 = vadd.f32 %v8588, %v7640
        %v8590 = vadd.f32 %v8589, %v7644
        %v8591 = vadd.f32 %v8590, %v7650
        %v8592 = vadd.f32 %v8591, %v7654
        %v8593 = vrot.slane %v8592, 4
        %v8594 = vadd.f32 %v8592, %v8593
        %v8595 = vrot.slane %v8594, 2
        %v8596 = vadd.f32 %v8594, %v8595
        %v8597 = vrot.slane %v8596, 1
        %v8598 = vadd.f32 %v8596, %v8597
        %v8599 = vadd.f32 %v7622, %v7626
        %v8600 = vadd.f32 %v8599, %v7632
        %v8601 = vadd.f32 %v8600, %v7636
        %v8602 = vadd.f32 %v8601, %v7642
        %v8603 = vadd.f32 %v8602, %v7646
        %v8604 = vadd.f32 %v8603, %v7652
        %v8605 = vadd.f32 %v8604, %v7656
        %v8606 = vrot.slane %v8605, 4
        %v8607 = vadd.f32 %v8605, %v8606
        %v8608 = vrot.slane %v8607, 2
        %v8609 = vadd.f32 %v8607, %v8608
        %v8610 = vrot.slane %v8609, 1
        %v8611 = vadd.f32 %v8609, %v8610
        %v8612 = vadd.f32 %v8058, %v8062
        %v8613 = vadd.f32 %v8612, %v8068
        %v8614 = vadd.f32 %v8613, %v8072
        %v8615 = vadd.f32 %v8614, %v8078
        %v8616 = vadd.f32 %v8615, %v8082
        %v8617 = vadd.f32 %v8616, %v8088
        %v8618 = vadd.f32 %v8617, %v8092
        %v8619 = vrot.slane %v8618, 4
        %v8620 = vadd.f32 %v8618, %v8619
        %v8621 = vrot.slane %v8620, 2
        %v8622 = vadd.f32 %v8620, %v8621
        %v8623 = vrot.slane %v8622, 1
        %v8624 = vadd.f32 %v8622, %v8623
        %v8625 = vadd.f32 %v8060, %v8064
        %v8626 = vadd.f32 %v8625, %v8070
        %v8627 = vadd.f32 %v8626, %v8074
        %v8628 = vadd.f32 %v8627, %v8080
        %v8629 = vadd.f32 %v8628, %v8084
        %v8630 = vadd.f32 %v8629, %v8090
        %v8631 = vadd.f32 %v8630, %v8094
        %v8632 = vrot.slane %v8631, 4
        %v8633 = vadd.f32 %v8631, %v8632
        %v8634 = vrot.slane %v8633, 2
        %v8635 = vadd.f32 %v8633, %v8634
        %v8636 = vrot.slane %v8635, 1
        %v8637 = vadd.f32 %v8635, %v8636
        %v8638 = vadd.f32 %v8496, %v8500
        %v8639 = vadd.f32 %v8638, %v8506
        %v8640 = vadd.f32 %v8639, %v8510
        %v8641 = vadd.f32 %v8640, %v8516
        %v8642 = vadd.f32 %v8641, %v8520
        %v8643 = vadd.f32 %v8642, %v8526
        %v8644 = vadd.f32 %v8643, %v8530
        %v8645 = vrot.slane %v8644, 4
        %v8646 = vadd.f32 %v8644, %v8645
        %v8647 = vrot.slane %v8646, 2
        %v8648 = vadd.f32 %v8646, %v8647
        %v8649 = vrot.slane %v8648, 1
        %v8650 = vadd.f32 %v8648, %v8649
        %v8651 = vadd.f32 %v8498, %v8502
        %v8652 = vadd.f32 %v8651, %v8508
        %v8653 = vadd.f32 %v8652, %v8512
        %v8654 = vadd.f32 %v8653, %v8518
        %v8655 = vadd.f32 %v8654, %v8522
        %v8656 = vadd.f32 %v8655, %v8528
        %v8657 = vadd.f32 %v8656, %v8532
        %v8658 = vrot.slane %v8657, 4
        %v8659 = vadd.f32 %v8657, %v8658
        %v8660 = vrot.slane %v8659, 2
        %v8661 = vadd.f32 %v8659, %v8660
        %v8662 = vrot.slane %v8661, 1
        %v8663 = vadd.f32 %v8661, %v8662
        %v8664 = vmul.f32 %v8546, 0.020408163
        %v8665 = vmul.f32 %v8559, 0.020408163
        %v8666 = vmul.f32 %v8572, 0.020408163
        %v8667 = vmul.f32 %v8585, 0.020408163
        %v8668 = vmul.f32 %v8598, 0.020408163
        %v8669 = vmul.f32 %v8611, 0.020408163
        %v8670 = vmul.f32 %v8624, 0.020408163
        %v8671 = vmul.f32 %v8637, 0.020408163
        %v8672 = vmul.f32 %v8650, 0.020408163
        %v8673 = vmul.f32 %v8663, 0.020408163
        %v8674 = vsub.f32 %v6744, %v8664
        %v8675 = vsub.f32 %v6746, %v8665
        %v8676 = vsub.f32 %v7182, %v8666
        %v8677 = vsub.f32 %v7184, %v8667
        %v8678 = vsub.f32 %v7620, %v8668
        %v8679 = vsub.f32 %v7622, %v8669
        %v8680 = vsub.f32 %v8058, %v8670
        %v8681 = vsub.f32 %v8060, %v8671
        %v8682 = vsub.f32 %v8496, %v8672
        %v8683 = vsub.f32 %v8498, %v8673
        %v8684 = vsub.f32 %v6748, %v8664
        %v8685 = vsub.f32 %v6750, %v8665
        %v8686 = vsub.f32 %v7186, %v8666
        %v8687 = vsub.f32 %v7188, %v8667
        %v8688 = vsub.f32 %v7624, %v8668
        %v8689 = vsub.f32 %v7626, %v8669
        %v8690 = vsub.f32 %v8062, %v8670
        %v8691 = vsub.f32 %v8064, %v8671
        %v8692 = vsub.f32 %v8500, %v8672
        %v8693 = vsub.f32 %v8502, %v8673
        %v8694 = vsub.f32 %v6754, %v8664
        %v8695 = vsub.f32 %v6756, %v8665
        %v8696 = vsub.f32 %v7192, %v8666
        %v8697 = vsub.f32 %v7194, %v8667
        %v8698 = vsub.f32 %v7630, %v8668
        %v8699 = vsub.f32 %v7632, %v8669
        %v8700 = vsub.f32 %v8068, %v8670
        %v8701 = vsub.f32 %v8070, %v8671
        %v8702 = vsub.f32 %v8506, %v8672
        %v8703 = vsub.f32 %v8508, %v8673
        %v8704 = vsub.f32 %v6758, %v8664
        %v8705 = vsub.f32 %v6760, %v8665
        %v8706 = vsub.f32 %v7196, %v8666
        %v8707 = vsub.f32 %v7198, %v8667
        %v8708 = vsub.f32 %v7634, %v8668
        %v8709 = vsub.f32 %v7636, %v8669
        %v8710 = vsub.f32 %v8072, %v8670
        %v8711 = vsub.f32 %v8074, %v8671
        %v8712 = vsub.f32 %v8510, %v8672
        %v8713 = vsub.f32 %v8512, %v8673
        %v8714 = vsub.f32 %v6764, %v8664
        %v8715 = vsub.f32 %v6766, %v8665
        %v8716 = vsub.f32 %v7202, %v8666
        %v8717 = vsub.f32 %v7204, %v8667
        %v8718 = vsub.f32 %v7640, %v8668
        %v8719 = vsub.f32 %v7642, %v8669
        %v8720 = vsub.f32 %v8078, %v8670
        %v8721 = vsub.f32 %v8080, %v8671
        %v8722 = vsub.f32 %v8516, %v8672
        %v8723 = vsub.f32 %v8518, %v8673
        %v8724 = vsub.f32 %v6768, %v8664
        %v8725 = vsub.f32 %v6770, %v8665
        %v8726 = vsub.f32 %v7206, %v8666
        %v8727 = vsub.f32 %v7208, %v8667
        %v8728 = vsub.f32 %v7644, %v8668
        %v8729 = vsub.f32 %v7646, %v8669
        %v8730 = vsub.f32 %v8082, %v8670
        %v8731 = vsub.f32 %v8084, %v8671
        %v8732 = vsub.f32 %v8520, %v8672
        %v8733 = vsub.f32 %v8522, %v8673
        %v8734 = vsub.f32 %v6774, %v8664
        %v8735 = vsub.f32 %v6776, %v8665
        %v8736 = vsub.f32 %v7212, %v8666
        %v8737 = vsub.f32 %v7214, %v8667
        %v8738 = vsub.f32 %v7650, %v8668
        %v8739 = vsub.f32 %v7652, %v8669
        %v8740 = vsub.f32 %v8088, %v8670
        %v8741 = vsub.f32 %v8090, %v8671
        %v8742 = vsub.f32 %v8526, %v8672
        %v8743 = vsub.f32 %v8528, %v8673
        %v8744 = vsub.f32 %v6778, %v8664
        %v8745 = vsub.f32 %v6780, %v8665
        %v8746 = vsub.f32 %v7216, %v8666
        %v8747 = vsub.f32 %v7218, %v8667
        %v8748 = vsub.f32 %v7654, %v8668
        %v8749 = vsub.f32 %v7656, %v8669
        %v8750 = vsub.f32 %v8092, %v8670
        %v8751 = vsub.f32 %v8094, %v8671
        %v8752 = vsub.f32 %v8530, %v8672
        %v8753 = vsub.f32 %v8532, %v8673
        %v8754 = vmul.f32 %v8674, %v8674
        %v8755 = vmul.f32 %v8675, %v8675
        %v8756 = vmul.f32 %v8676, %v8676
        %v8757 = vmul.f32 %v8677, %v8677
        %v8758 = vmul.f32 %v8678, %v8678
        %v8759 = vmul.f32 %v8679, %v8679
        %v8760 = vmul.f32 %v8680, %v8680
        %v8761 = vmul.f32 %v8681, %v8681
        %v8762 = vmul.f32 %v8682, %v8682
        %v8763 = vmul.f32 %v8683, %v8683
        %v8764 = vmul.f32 %v8684, %v8684
        %v8765 = vmul.f32 %v8685, %v8685
        %v8766 = vmul.f32 %v8686, %v8686
        %v8767 = vmul.f32 %v8687, %v8687
        %v8768 = vmul.f32 %v8688, %v8688
        %v8769 = vmul.f32 %v8689, %v8689
        %v8770 = vmul.f32 %v8690, %v8690
        %v8771 = vmul.f32 %v8691, %v8691
        %v8772 = vmul.f32 %v8692, %v8692
        %v8773 = vmul.f32 %v8693, %v8693
        %v8774 = vmul.f32 %v8694, %v8694
        %v8775 = vmul.f32 %v8695, %v8695
        %v8776 = vmul.f32 %v8696, %v8696
        %v8777 = vmul.f32 %v8697, %v8697
        %v8778 = vmul.f32 %v8698, %v8698
        %v8779 = vmul.f32 %v8699, %v8699
        %v8780 = vmul.f32 %v8700, %v8700
        %v8781 = vmul.f32 %v8701, %v8701
        %v8782 = vmul.f32 %v8702, %v8702
        %v8783 = vmul.f32 %v8703, %v8703
        %v8784 = vmul.f32 %v8704, %v8704
        %v8785 = vmul.f32 %v8705, %v8705
        %v8786 = vmul.f32 %v8706, %v8706
        %v8787 = vmul.f32 %v8707, %v8707
        %v8788 = vmul.f32 %v8708, %v8708
        %v8789 = vmul.f32 %v8709, %v8709
        %v8790 = vmul.f32 %v8710, %v8710
        %v8791 = vmul.f32 %v8711, %v8711
        %v8792 = vmul.f32 %v8712, %v8712
        %v8793 = vmul.f32 %v8713, %v8713
        %v8794 = vmul.f32 %v8714, %v8714
        %v8795 = vmul.f32 %v8715, %v8715
        %v8796 = vmul.f32 %v8716, %v8716
        %v8797 = vmul.f32 %v8717, %v8717
        %v8798 = vmul.f32 %v8718, %v8718
        %v8799 = vmul.f32 %v8719, %v8719
        %v8800 = vmul.f32 %v8720, %v8720
        %v8801 = vmul.f32 %v8721, %v8721
        %v8802 = vmul.f32 %v8722, %v8722
        %v8803 = vmul.f32 %v8723, %v8723
        %v8804 = vmul.f32 %v8724, %v8724
        %v8805 = vmul.f32 %v8725, %v8725
        %v8806 = vmul.f32 %v8726, %v8726
        %v8807 = vmul.f32 %v8727, %v8727
        %v8808 = vmul.f32 %v8728, %v8728
        %v8809 = vmul.f32 %v8729, %v8729
        %v8810 = vmul.f32 %v8730, %v8730
        %v8811 = vmul.f32 %v8731, %v8731
        %v8812 = vmul.f32 %v8732, %v8732
        %v8813 = vmul.f32 %v8733, %v8733
        %v8814 = vmul.f32 %v8734, %v8734
        %v8815 = vmul.f32 %v8735, %v8735
        %v8816 = vmul.f32 %v8736, %v8736
        %v8817 = vmul.f32 %v8737, %v8737
        %v8818 = vmul.f32 %v8738, %v8738
        %v8819 = vmul.f32 %v8739, %v8739
        %v8820 = vmul.f32 %v8740, %v8740
        %v8821 = vmul.f32 %v8741, %v8741
        %v8822 = vmul.f32 %v8742, %v8742
        %v8823 = vmul.f32 %v8743, %v8743
        %v8824 = vmul.f32 %v8744, %v8744
        %v8825 = vmul.f32 %v8745, %v8745
        %v8826 = vmul.f32 %v8746, %v8746
        %v8827 = vmul.f32 %v8747, %v8747
        %v8828 = vmul.f32 %v8748, %v8748
        %v8829 = vmul.f32 %v8749, %v8749
        %v8830 = vmul.f32 %v8750, %v8750
        %v8831 = vmul.f32 %v8751, %v8751
        %v8832 = vmul.f32 %v8752, %v8752
        %v8833 = vmul.f32 %v8753, %v8753
        %v8834 = vadd.f32 %v8754, %v8764
        %v8835 = vadd.f32 %v8834, %v8774
        %v8836 = vadd.f32 %v8835, %v8784
        %v8837 = vadd.f32 %v8836, %v8794
        %v8838 = vadd.f32 %v8837, %v8804
        %v8839 = vadd.f32 %v8838, %v8814
        %v8840 = vadd.f32 %v8839, %v8824
        %v8841 = vrot.slane %v8840, 4
        %v8842 = vadd.f32 %v8840, %v8841
        %v8843 = vrot.slane %v8842, 2
        %v8844 = vadd.f32 %v8842, %v8843
        %v8845 = vrot.slane %v8844, 1
        %v8846 = vadd.f32 %v8844, %v8845
        %v8847 = vadd.f32 %v8755, %v8765
        %v8848 = vadd.f32 %v8847, %v8775
        %v8849 = vadd.f32 %v8848, %v8785
        %v8850 = vadd.f32 %v8849, %v8795
        %v8851 = vadd.f32 %v8850, %v8805
        %v8852 = vadd.f32 %v8851, %v8815
        %v8853 = vadd.f32 %v8852, %v8825
        %v8854 = vrot.slane %v8853, 4
        %v8855 = vadd.f32 %v8853, %v8854
        %v8856 = vrot.slane %v8855, 2
        %v8857 = vadd.f32 %v8855, %v8856
        %v8858 = vrot.slane %v8857, 1
        %v8859 = vadd.f32 %v8857, %v8858
        %v8860 = vadd.f32 %v8756, %v8766
        %v8861 = vadd.f32 %v8860, %v8776
        %v8862 = vadd.f32 %v8861, %v8786
        %v8863 = vadd.f32 %v8862, %v8796
        %v8864 = vadd.f32 %v8863, %v8806
        %v8865 = vadd.f32 %v8864, %v8816
        %v8866 = vadd.f32 %v8865, %v8826
        %v8867 = vrot.slane %v8866, 4
        %v8868 = vadd.f32 %v8866, %v8867
        %v8869 = vrot.slane %v8868, 2
        %v8870 = vadd.f32 %v8868, %v8869
        %v8871 = vrot.slane %v8870, 1
        %v8872 = vadd.f32 %v8870, %v8871
        %v8873 = vadd.f32 %v8757, %v8767
        %v8874 = vadd.f32 %v8873, %v8777
        %v8875 = vadd.f32 %v8874, %v8787
        %v8876 = vadd.f32 %v8875, %v8797
        %v8877 = vadd.f32 %v8876, %v8807
        %v8878 = vadd.f32 %v8877, %v8817
        %v8879 = vadd.f32 %v8878, %v8827
        %v8880 = vrot.slane %v8879, 4
        %v8881 = vadd.f32 %v8879, %v8880
        %v8882 = vrot.slane %v8881, 2
        %v8883 = vadd.f32 %v8881, %v8882
        %v8884 = vrot.slane %v8883, 1
        %v8885 = vadd.f32 %v8883, %v8884
        %v8886 = vadd.f32 %v8758, %v8768
        %v8887 = vadd.f32 %v8886, %v8778
        %v8888 = vadd.f32 %v8887, %v8788
        %v8889 = vadd.f32 %v8888, %v8798
        %v8890 = vadd.f32 %v8889, %v8808
        %v8891 = vadd.f32 %v8890, %v8818
        %v8892 = vadd.f32 %v8891, %v8828
        %v8893 = vrot.slane %v8892, 4
        %v8894 = vadd.f32 %v8892, %v8893
        %v8895 = vrot.slane %v8894, 2
        %v8896 = vadd.f32 %v8894, %v8895
        %v8897 = vrot.slane %v8896, 1
        %v8898 = vadd.f32 %v8896, %v8897
        %v8899 = vadd.f32 %v8759, %v8769
        %v8900 = vadd.f32 %v8899, %v8779
        %v8901 = vadd.f32 %v8900, %v8789
        %v8902 = vadd.f32 %v8901, %v8799
        %v8903 = vadd.f32 %v8902, %v8809
        %v8904 = vadd.f32 %v8903, %v8819
        %v8905 = vadd.f32 %v8904, %v8829
        %v8906 = vrot.slane %v8905, 4
        %v8907 = vadd.f32 %v8905, %v8906
        %v8908 = vrot.slane %v8907, 2
        %v8909 = vadd.f32 %v8907, %v8908
        %v8910 = vrot.slane %v8909, 1
        %v8911 = vadd.f32 %v8909, %v8910
        %v8912 = vadd.f32 %v8760, %v8770
        %v8913 = vadd.f32 %v8912, %v8780
        %v8914 = vadd.f32 %v8913, %v8790
        %v8915 = vadd.f32 %v8914, %v8800
        %v8916 = vadd.f32 %v8915, %v8810
        %v8917 = vadd.f32 %v8916, %v8820
        %v8918 = vadd.f32 %v8917, %v8830
        %v8919 = vrot.slane %v8918, 4
        %v8920 = vadd.f32 %v8918, %v8919
        %v8921 = vrot.slane %v8920, 2
        %v8922 = vadd.f32 %v8920, %v8921
        %v8923 = vrot.slane %v8922, 1
        %v8924 = vadd.f32 %v8922, %v8923
        %v8925 = vadd.f32 %v8761, %v8771
        %v8926 = vadd.f32 %v8925, %v8781
        %v8927 = vadd.f32 %v8926, %v8791
        %v8928 = vadd.f32 %v8927, %v8801
        %v8929 = vadd.f32 %v8928, %v8811
        %v8930 = vadd.f32 %v8929, %v8821
        %v8931 = vadd.f32 %v8930, %v8831
        %v8932 = vrot.slane %v8931, 4
        %v8933 = vadd.f32 %v8931, %v8932
        %v8934 = vrot.slane %v8933, 2
        %v8935 = vadd.f32 %v8933, %v8934
        %v8936 = vrot.slane %v8935, 1
        %v8937 = vadd.f32 %v8935, %v8936
        %v8938 = vadd.f32 %v8762, %v8772
        %v8939 = vadd.f32 %v8938, %v8782
        %v8940 = vadd.f32 %v8939, %v8792
        %v8941 = vadd.f32 %v8940, %v8802
        %v8942 = vadd.f32 %v8941, %v8812
        %v8943 = vadd.f32 %v8942, %v8822
        %v8944 = vadd.f32 %v8943, %v8832
        %v8945 = vrot.slane %v8944, 4
        %v8946 = vadd.f32 %v8944, %v8945
        %v8947 = vrot.slane %v8946, 2
        %v8948 = vadd.f32 %v8946, %v8947
        %v8949 = vrot.slane %v8948, 1
        %v8950 = vadd.f32 %v8948, %v8949
        %v8951 = vadd.f32 %v8763, %v8773
        %v8952 = vadd.f32 %v8951, %v8783
        %v8953 = vadd.f32 %v8952, %v8793
        %v8954 = vadd.f32 %v8953, %v8803
        %v8955 = vadd.f32 %v8954, %v8813
        %v8956 = vadd.f32 %v8955, %v8823
        %v8957 = vadd.f32 %v8956, %v8833
        %v8958 = vrot.slane %v8957, 4
        %v8959 = vadd.f32 %v8957, %v8958
        %v8960 = vrot.slane %v8959, 2
        %v8961 = vadd.f32 %v8959, %v8960
        %v8962 = vrot.slane %v8961, 1
        %v8963 = vadd.f32 %v8961, %v8962
        %v8964 = vmul.f32 %v8664, 15.0
        %v8965 = vmul.f32 %v8665, 15.0
        %v8966 = vmul.f32 %v8666, 15.0
        %v8967 = vmul.f32 %v8667, 15.0
        %v8968 = vmul.f32 %v8668, 15.0
        %v8969 = vmul.f32 %v8669, 15.0
        %v8970 = vmul.f32 %v8670, 15.0
        %v8971 = vmul.f32 %v8671, 15.0
        %v8972 = vmul.f32 %v8672, 15.0
        %v8973 = vmul.f32 %v8673, 15.0
        %v8974 = vmul.f32 %v8964, %v8664
        %v8975 = vmul.f32 %v8965, %v8665
        %v8976 = vmul.f32 %v8966, %v8666
        %v8977 = vmul.f32 %v8967, %v8667
        %v8978 = vmul.f32 %v8968, %v8668
        %v8979 = vmul.f32 %v8969, %v8669
        %v8980 = vmul.f32 %v8970, %v8670
        %v8981 = vmul.f32 %v8971, %v8671
        %v8982 = vmul.f32 %v8972, %v8672
        %v8983 = vmul.f32 %v8973, %v8673
        %v8984 = vsub.f32 %v8846, %v8974
        %v8985 = vsub.f32 %v8859, %v8975
        %v8986 = vsub.f32 %v8872, %v8976
        %v8987 = vsub.f32 %v8885, %v8977
        %v8988 = vsub.f32 %v8898, %v8978
        %v8989 = vsub.f32 %v8911, %v8979
        %v8990 = vsub.f32 %v8924, %v8980
        %v8991 = vsub.f32 %v8937, %v8981
        %v8992 = vsub.f32 %v8950, %v8982
        %v8993 = vsub.f32 %v8963, %v8983
        %v8994 = vmul.f32 %v8984, 0.020408163
        %v8995 = vmul.f32 %v8985, 0.020408163
        %v8996 = vmul.f32 %v8986, 0.020408163
        %v8997 = vmul.f32 %v8987, 0.020408163
        %v8998 = vmul.f32 %v8988, 0.020408163
        %v8999 = vmul.f32 %v8989, 0.020408163
        %v9000 = vmul.f32 %v8990, 0.020408163
        %v9001 = vmul.f32 %v8991, 0.020408163
        %v9002 = vmul.f32 %v8992, 0.020408163
        %v9003 = vmul.f32 %v8993, 0.020408163
        %v9004 = vadd.f32 %v8994, 1e-05
        %v9005 = vadd.f32 %v8995, 1e-05
        %v9006 = vadd.f32 %v8996, 1e-05
        %v9007 = vadd.f32 %v8997, 1e-05
        %v9008 = vadd.f32 %v8998, 1e-05
        %v9009 = vadd.f32 %v8999, 1e-05
        %v9010 = vadd.f32 %v9000, 1e-05
        %v9011 = vadd.f32 %v9001, 1e-05
        %v9012 = vadd.f32 %v9002, 1e-05
        %v9013 = vadd.f32 %v9003, 1e-05
        %v9014 = vrsqrt.pop %v9004
        %v9015 = vrsqrt.pop %v9005
        %v9016 = vrsqrt.pop %v9006
        %v9017 = vrsqrt.pop %v9007
        %v9018 = vrsqrt.pop %v9008
        %v9019 = vrsqrt.pop %v9009
        %v9020 = vrsqrt.pop %v9010
        %v9021 = vrsqrt.pop %v9011
        %v9022 = vrsqrt.pop %v9012
        %v9023 = vrsqrt.pop %v9013
        %v9024 = vld [vmem:[%s453] sm:$0xff]
        %v9025 = vld [vmem:[%s453 + $0x8] sm:$0x3]
        %v9028 = vlaneseq
        %v9029 = vshrl.u32 %v9028, 7
        %v9030 = vsub.s32 0, %v9029
        %v9031 = vrot.slane %v9024, %v9030
        %v9032 = vlaneseq
        %v9033 = vshrl.u32 %v9032, 7
        %v9034 = vsub.s32 1, %v9033
        %v9035 = vrot.slane %v9024, %v9034
        %v9036 = vlaneseq
        %v9037 = vshrl.u32 %v9036, 7
        %v9038 = vsub.s32 2, %v9037
        %v9039 = vrot.slane %v9024, %v9038
        %v9040 = vlaneseq
        %v9041 = vshrl.u32 %v9040, 7
        %v9042 = vsub.s32 3, %v9041
        %v9043 = vrot.slane %v9024, %v9042
        %v9044 = vlaneseq
        %v9045 = vshrl.u32 %v9044, 7
        %v9046 = vsub.s32 4, %v9045
        %v9047 = vrot.slane %v9024, %v9046
        %v9048 = vlaneseq
        %v9049 = vshrl.u32 %v9048, 7
        %v9050 = vsub.s32 5, %v9049
        %v9051 = vrot.slane %v9024, %v9050
        %v9052 = vlaneseq
        %v9053 = vshrl.u32 %v9052, 7
        %v9054 = vsub.s32 6, %v9053
        %v9055 = vrot.slane %v9024, %v9054
        %v9056 = vlaneseq
        %v9057 = vshrl.u32 %v9056, 7
        %v9058 = vsub.s32 7, %v9057
        %v9059 = vrot.slane %v9024, %v9058
        %v9060 = vlaneseq
        %v9061 = vshrl.u32 %v9060, 7
        %v9062 = vsub.s32 0, %v9061
        %v9063 = vrot.slane %v9025, %v9062
        %v9064 = vlaneseq
        %v9065 = vshrl.u32 %v9064, 7
        %v9066 = vsub.s32 1, %v9065
        %v9067 = vrot.slane %v9025, %v9066
        %v9078 = vmul.f32 %v9014, %v9031
        %v9079 = vmul.f32 %v9015, %v9035
        %v9080 = vmul.f32 %v9016, %v9039
        %v9081 = vmul.f32 %v9017, %v9043
        %v9082 = vmul.f32 %v9018, %v9047
        %v9083 = vmul.f32 %v9019, %v9051
        %v9084 = vmul.f32 %v9020, %v9055
        %v9085 = vmul.f32 %v9021, %v9059
        %v9086 = vmul.f32 %v9022, %v9063
        %v9087 = vmul.f32 %v9023, %v9067
        %v9088 = vlaneseq
        %v9089 = vshrl.u32 %v9088, 7
        %v9090 = vsub.s32 0, %v9089
        %v9091 = vrot.slane %v9078, %v9090
        %v9092 = vlaneseq
        %v9093 = vshrl.u32 %v9092, 7
        %v9094 = vsub.s32 0, %v9093
        %v9095 = vrot.slane %v9079, %v9094
        %v9096 = vlaneseq
        %v9097 = vshrl.u32 %v9096, 7
        %v9098 = vsub.s32 0, %v9097
        %v9099 = vrot.slane %v9080, %v9098
        %v9100 = vlaneseq
        %v9101 = vshrl.u32 %v9100, 7
        %v9102 = vsub.s32 0, %v9101
        %v9103 = vrot.slane %v9081, %v9102
        %v9104 = vlaneseq
        %v9105 = vshrl.u32 %v9104, 7
        %v9106 = vsub.s32 0, %v9105
        %v9107 = vrot.slane %v9082, %v9106
        %v9108 = vlaneseq
        %v9109 = vshrl.u32 %v9108, 7
        %v9110 = vsub.s32 0, %v9109
        %v9111 = vrot.slane %v9083, %v9110
        %v9112 = vlaneseq
        %v9113 = vshrl.u32 %v9112, 7
        %v9114 = vsub.s32 0, %v9113
        %v9115 = vrot.slane %v9084, %v9114
        %v9116 = vlaneseq
        %v9117 = vshrl.u32 %v9116, 7
        %v9118 = vsub.s32 0, %v9117
        %v9119 = vrot.slane %v9085, %v9118
        %v9120 = vlaneseq
        %v9121 = vshrl.u32 %v9120, 7
        %v9122 = vsub.s32 0, %v9121
        %v9123 = vrot.slane %v9086, %v9122
        %v9124 = vlaneseq
        %v9125 = vshrl.u32 %v9124, 7
        %v9126 = vsub.s32 0, %v9125
        %v9127 = vrot.slane %v9087, %v9126
        %v9128 = vmul.f32 %v8674, %v9091
        %v9129 = vmul.f32 %v8675, %v9095
        %v9130 = vmul.f32 %v8676, %v9099
        %v9131 = vmul.f32 %v8677, %v9103
        %v9132 = vmul.f32 %v8678, %v9107
        %v9133 = vmul.f32 %v8679, %v9111
        %v9134 = vmul.f32 %v8680, %v9115
        %v9135 = vmul.f32 %v8681, %v9119
        %v9136 = vmul.f32 %v8682, %v9123
        %v9137 = vmul.f32 %v8683, %v9127
        %v9138 = vmul.f32 %v8684, %v9091
        %v9139 = vmul.f32 %v8685, %v9095
        %v9140 = vmul.f32 %v8686, %v9099
        %v9141 = vmul.f32 %v8687, %v9103
        %v9142 = vmul.f32 %v8688, %v9107
        %v9143 = vmul.f32 %v8689, %v9111
        %v9144 = vmul.f32 %v8690, %v9115
        %v9145 = vmul.f32 %v8691, %v9119
        %v9146 = vmul.f32 %v8692, %v9123
        %v9147 = vmul.f32 %v8693, %v9127
        %v9148 = vmul.f32 %v8694, %v9091
        %v9149 = vmul.f32 %v8695, %v9095
        %v9150 = vmul.f32 %v8696, %v9099
        %v9151 = vmul.f32 %v8697, %v9103
        %v9152 = vmul.f32 %v8698, %v9107
        %v9153 = vmul.f32 %v8699, %v9111
        %v9154 = vmul.f32 %v8700, %v9115
        %v9155 = vmul.f32 %v8701, %v9119
        %v9156 = vmul.f32 %v8702, %v9123
        %v9157 = vmul.f32 %v8703, %v9127
        %v9158 = vmul.f32 %v8704, %v9091
        %v9159 = vmul.f32 %v8705, %v9095
        %v9160 = vmul.f32 %v8706, %v9099
        %v9161 = vmul.f32 %v8707, %v9103
        %v9162 = vmul.f32 %v8708, %v9107
        %v9163 = vmul.f32 %v8709, %v9111
        %v9164 = vmul.f32 %v8710, %v9115
        %v9165 = vmul.f32 %v8711, %v9119
        %v9166 = vmul.f32 %v8712, %v9123
        %v9167 = vmul.f32 %v8713, %v9127
        %v9168 = vmul.f32 %v8714, %v9091
        %v9169 = vmul.f32 %v8715, %v9095
        %v9170 = vmul.f32 %v8716, %v9099
        %v9171 = vmul.f32 %v8717, %v9103
        %v9172 = vmul.f32 %v8718, %v9107
        %v9173 = vmul.f32 %v8719, %v9111
        %v9174 = vmul.f32 %v8720, %v9115
        %v9175 = vmul.f32 %v8721, %v9119
        %v9176 = vmul.f32 %v8722, %v9123
        %v9177 = vmul.f32 %v8723, %v9127
        %v9178 = vmul.f32 %v8724, %v9091
        %v9179 = vmul.f32 %v8725, %v9095
        %v9180 = vmul.f32 %v8726, %v9099
        %v9181 = vmul.f32 %v8727, %v9103
        %v9182 = vmul.f32 %v8728, %v9107
        %v9183 = vmul.f32 %v8729, %v9111
        %v9184 = vmul.f32 %v8730, %v9115
        %v9185 = vmul.f32 %v8731, %v9119
        %v9186 = vmul.f32 %v8732, %v9123
        %v9187 = vmul.f32 %v8733, %v9127
        %v9188 = vmul.f32 %v8734, %v9091
        %v9189 = vmul.f32 %v8735, %v9095
        %v9190 = vmul.f32 %v8736, %v9099
        %v9191 = vmul.f32 %v8737, %v9103
        %v9192 = vmul.f32 %v8738, %v9107
        %v9193 = vmul.f32 %v8739, %v9111
        %v9194 = vmul.f32 %v8740, %v9115
        %v9195 = vmul.f32 %v8741, %v9119
        %v9196 = vmul.f32 %v8742, %v9123
        %v9197 = vmul.f32 %v8743, %v9127
        %v9198 = vmul.f32 %v8744, %v9091
        %v9199 = vmul.f32 %v8745, %v9095
        %v9200 = vmul.f32 %v8746, %v9099
        %v9201 = vmul.f32 %v8747, %v9103
        %v9202 = vmul.f32 %v8748, %v9107
        %v9203 = vmul.f32 %v8749, %v9111
        %v9204 = vmul.f32 %v8750, %v9115
        %v9205 = vmul.f32 %v8751, %v9119
        %v9206 = vmul.f32 %v8752, %v9123
        %v9207 = vmul.f32 %v8753, %v9127
        %v9208 = vld [vmem:[%s458] sm:$0xff]
        %v9209 = vld [vmem:[%s458 + $0x8] sm:$0x3]
        %v9212 = vlaneseq
        %v9213 = vshrl.u32 %v9212, 7
        %v9214 = vsub.s32 0, %v9213
        %v9215 = vrot.slane %v9208, %v9214
        %v9216 = vlaneseq
        %v9217 = vshrl.u32 %v9216, 7
        %v9218 = vsub.s32 1, %v9217
        %v9219 = vrot.slane %v9208, %v9218
        %v9220 = vlaneseq
        %v9221 = vshrl.u32 %v9220, 7
        %v9222 = vsub.s32 2, %v9221
        %v9223 = vrot.slane %v9208, %v9222
        %v9224 = vlaneseq
        %v9225 = vshrl.u32 %v9224, 7
        %v9226 = vsub.s32 3, %v9225
        %v9227 = vrot.slane %v9208, %v9226
        %v9228 = vlaneseq
        %v9229 = vshrl.u32 %v9228, 7
        %v9230 = vsub.s32 4, %v9229
        %v9231 = vrot.slane %v9208, %v9230
        %v9232 = vlaneseq
        %v9233 = vshrl.u32 %v9232, 7
        %v9234 = vsub.s32 5, %v9233
        %v9235 = vrot.slane %v9208, %v9234
        %v9236 = vlaneseq
        %v9237 = vshrl.u32 %v9236, 7
        %v9238 = vsub.s32 6, %v9237
        %v9239 = vrot.slane %v9208, %v9238
        %v9240 = vlaneseq
        %v9241 = vshrl.u32 %v9240, 7
        %v9242 = vsub.s32 7, %v9241
        %v9243 = vrot.slane %v9208, %v9242
        %v9244 = vlaneseq
        %v9245 = vshrl.u32 %v9244, 7
        %v9246 = vsub.s32 0, %v9245
        %v9247 = vrot.slane %v9209, %v9246
        %v9248 = vlaneseq
        %v9249 = vshrl.u32 %v9248, 7
        %v9250 = vsub.s32 1, %v9249
        %v9251 = vrot.slane %v9209, %v9250
        %v9262 = vadd.f32 %v9128, %v9215
        %v9263 = vadd.f32 %v9129, %v9219
        %v9264 = vadd.f32 %v9130, %v9223
        %v9265 = vadd.f32 %v9131, %v9227
        %v9266 = vadd.f32 %v9132, %v9231
        %v9267 = vadd.f32 %v9133, %v9235
        %v9268 = vadd.f32 %v9134, %v9239
        %v9269 = vadd.f32 %v9135, %v9243
        %v9270 = vadd.f32 %v9136, %v9247
        %v9271 = vadd.f32 %v9137, %v9251
        %v9272 = vadd.f32 %v9138, %v9215
        %v9273 = vadd.f32 %v9139, %v9219
        %v9274 = vadd.f32 %v9140, %v9223
        %v9275 = vadd.f32 %v9141, %v9227
        %v9276 = vadd.f32 %v9142, %v9231
        %v9277 = vadd.f32 %v9143, %v9235
        %v9278 = vadd.f32 %v9144, %v9239
        %v9279 = vadd.f32 %v9145, %v9243
        %v9280 = vadd.f32 %v9146, %v9247
        %v9281 = vadd.f32 %v9147, %v9251
        %v9282 = vadd.f32 %v9148, %v9215
        %v9283 = vadd.f32 %v9149, %v9219
        %v9284 = vadd.f32 %v9150, %v9223
        %v9285 = vadd.f32 %v9151, %v9227
        %v9286 = vadd.f32 %v9152, %v9231
        %v9287 = vadd.f32 %v9153, %v9235
        %v9288 = vadd.f32 %v9154, %v9239
        %v9289 = vadd.f32 %v9155, %v9243
        %v9290 = vadd.f32 %v9156, %v9247
        %v9291 = vadd.f32 %v9157, %v9251
        %v9292 = vadd.f32 %v9158, %v9215
        %v9293 = vadd.f32 %v9159, %v9219
        %v9294 = vadd.f32 %v9160, %v9223
        %v9295 = vadd.f32 %v9161, %v9227
        %v9296 = vadd.f32 %v9162, %v9231
        %v9297 = vadd.f32 %v9163, %v9235
        %v9298 = vadd.f32 %v9164, %v9239
        %v9299 = vadd.f32 %v9165, %v9243
        %v9300 = vadd.f32 %v9166, %v9247
        %v9301 = vadd.f32 %v9167, %v9251
        %v9302 = vadd.f32 %v9168, %v9215
        %v9303 = vadd.f32 %v9169, %v9219
        %v9304 = vadd.f32 %v9170, %v9223
        %v9305 = vadd.f32 %v9171, %v9227
        %v9306 = vadd.f32 %v9172, %v9231
        %v9307 = vadd.f32 %v9173, %v9235
        %v9308 = vadd.f32 %v9174, %v9239
        %v9309 = vadd.f32 %v9175, %v9243
        %v9310 = vadd.f32 %v9176, %v9247
        %v9311 = vadd.f32 %v9177, %v9251
        %v9312 = vadd.f32 %v9178, %v9215
        %v9313 = vadd.f32 %v9179, %v9219
        %v9314 = vadd.f32 %v9180, %v9223
        %v9315 = vadd.f32 %v9181, %v9227
        %v9316 = vadd.f32 %v9182, %v9231
        %v9317 = vadd.f32 %v9183, %v9235
        %v9318 = vadd.f32 %v9184, %v9239
        %v9319 = vadd.f32 %v9185, %v9243
        %v9320 = vadd.f32 %v9186, %v9247
        %v9321 = vadd.f32 %v9187, %v9251
        %v9322 = vadd.f32 %v9188, %v9215
        %v9323 = vadd.f32 %v9189, %v9219
        %v9324 = vadd.f32 %v9190, %v9223
        %v9325 = vadd.f32 %v9191, %v9227
        %v9326 = vadd.f32 %v9192, %v9231
        %v9327 = vadd.f32 %v9193, %v9235
        %v9328 = vadd.f32 %v9194, %v9239
        %v9329 = vadd.f32 %v9195, %v9243
        %v9330 = vadd.f32 %v9196, %v9247
        %v9331 = vadd.f32 %v9197, %v9251
        %v9332 = vadd.f32 %v9198, %v9215
        %v9333 = vadd.f32 %v9199, %v9219
        %v9334 = vadd.f32 %v9200, %v9223
        %v9335 = vadd.f32 %v9201, %v9227
        %v9336 = vadd.f32 %v9202, %v9231
        %v9337 = vadd.f32 %v9203, %v9235
        %v9338 = vadd.f32 %v9204, %v9239
        %v9339 = vadd.f32 %v9205, %v9243
        %v9340 = vadd.f32 %v9206, %v9247
        %v9341 = vadd.f32 %v9207, %v9251
        %v9342 = vld [vmem:[%s405] sm:$0xff]
        %v9343 = vld [vmem:[%s405 + $0x8] sm:$0xff]
        %v9344 = vld [vmem:[%s405 + $0x10] sm:$0xff]
        %v9345 = vld [vmem:[%s405 + $0x18] sm:$0xff]
        %v9346 = vld [vmem:[%s405 + $0x20] sm:$0xff]
        %v9347 = vld [vmem:[%s405 + $0x28] sm:$0xff]
        %v9348 = vld [vmem:[%s405 + $0x30] sm:$0xff]
        %v9349 = vld [vmem:[%s405 + $0x38] sm:$0xff]
        %v9350 = vld [vmem:[%s405 + $0x40] sm:$0xff]
        %v9351 = vld [vmem:[%s405 + $0x48] sm:$0xff]
        %v9352 = vld [vmem:[%s405 + $0x50] sm:$0xff]
        %v9353 = vld [vmem:[%s405 + $0x58] sm:$0xff]
        %v9354 = vld [vmem:[%s405 + $0x60] sm:$0xff]
        %v9355 = vld [vmem:[%s405 + $0x68] sm:$0xff]
        %v9356 = vld [vmem:[%s405 + $0x70] sm:$0xff]
        %v9357 = vld [vmem:[%s405 + $0x78] sm:$0xff]
        %v9358 = vld [vmem:[%s405 + $0x80] sm:$0xff]
        %v9359 = vld [vmem:[%s405 + $0x88] sm:$0xff]
        %v9360 = vld [vmem:[%s405 + $0x90] sm:$0xff]
        %v9361 = vld [vmem:[%s405 + $0x98] sm:$0xff]
        %v9362 = vld [vmem:[%s405 + $0xa0] sm:$0xff]
        %v9363 = vld [vmem:[%s405 + $0xa8] sm:$0xff]
        %v9364 = vld [vmem:[%s405 + $0xb0] sm:$0xff]
        %v9365 = vld [vmem:[%s405 + $0xb8] sm:$0xff]
        %v9366 = vld [vmem:[%s405 + $0xc0] sm:$0xff]
        %v9367 = vld [vmem:[%s405 + $0xc8] sm:$0xff]
        %v9368 = vld [vmem:[%s405 + $0xd0] sm:$0xff]
        %v9369 = vld [vmem:[%s405 + $0xd8] sm:$0xff]
        %v9370 = vld [vmem:[%s405 + $0xe0] sm:$0xff]
        %v9371 = vld [vmem:[%s405 + $0xe8] sm:$0xff]
        %v9372 = vld [vmem:[%s405 + $0xf0] sm:$0xff]
        %v9373 = vld [vmem:[%s405 + $0xf8] sm:$0xff]
        %v9374 = vld [vmem:[%s405 + $0x100] sm:$0xff]
        %v9375 = vld [vmem:[%s405 + $0x108] sm:$0xff]
        %v9376 = vld [vmem:[%s405 + $0x110] sm:$0xff]
        %v9377 = vld [vmem:[%s405 + $0x118] sm:$0xff]
        %v9378 = vld [vmem:[%s405 + $0x120] sm:$0xff]
        %v9379 = vld [vmem:[%s405 + $0x128] sm:$0xff]
        %v9380 = vld [vmem:[%s405 + $0x130] sm:$0xff]
        %v9381 = vld [vmem:[%s405 + $0x138] sm:$0xff]
        %v9382 = vld [vmem:[%s405 + $0x140] sm:$0xff]
        %v9383 = vld [vmem:[%s405 + $0x148] sm:$0xff]
        %v9384 = vld [vmem:[%s405 + $0x150] sm:$0xff]
        %v9385 = vld [vmem:[%s405 + $0x158] sm:$0xff]
        %v9386 = vld [vmem:[%s405 + $0x160] sm:$0xff]
        %v9387 = vld [vmem:[%s405 + $0x168] sm:$0xff]
        %v9388 = vld [vmem:[%s405 + $0x170] sm:$0xff]
        %v9389 = vld [vmem:[%s405 + $0x178] sm:$0xff]
        %v9390 = vld [vmem:[%s405 + $0x180] sm:$0xff]
        %v9391 = vld [vmem:[%s405 + $0x188] sm:$0xff]
        %v9392 = vld [vmem:[%s405 + $0x190] sm:$0xff]
        %v9393 = vld [vmem:[%s405 + $0x198] sm:$0xff]
        %v9394 = vld [vmem:[%s405 + $0x1a0] sm:$0xff]
        %v9395 = vld [vmem:[%s405 + $0x1a8] sm:$0xff]
        %v9396 = vld [vmem:[%s405 + $0x1b0] sm:$0xff]
        %v9397 = vld [vmem:[%s405 + $0x1b8] sm:$0xff]
        %v9398 = vld [vmem:[%s405 + $0x1c0] sm:$0xff]
        %v9399 = vld [vmem:[%s405 + $0x1c8] sm:$0xff]
        %v9400 = vld [vmem:[%s405 + $0x1d0] sm:$0xff]
        %v9401 = vld [vmem:[%s405 + $0x1d8] sm:$0xff]
        %v9402 = vld [vmem:[%s405 + $0x1e0] sm:$0xff]
        %v9403 = vld [vmem:[%s405 + $0x1e8] sm:$0xff]
        %v9404 = vld [vmem:[%s405 + $0x1f0] sm:$0xff]
        %v9405 = vld [vmem:[%s405 + $0x1f8] sm:$0xff]
        %v9406 = vld [vmem:[%s405 + $0x200] sm:$0xff]
        %v9407 = vld [vmem:[%s405 + $0x208] sm:$0xff]
        %v9408 = vld [vmem:[%s405 + $0x210] sm:$0xff]
        %v9409 = vld [vmem:[%s405 + $0x218] sm:$0xff]
        %v9410 = vld [vmem:[%s405 + $0x220] sm:$0xff]
        %v9411 = vld [vmem:[%s405 + $0x228] sm:$0xff]
        %v9412 = vld [vmem:[%s405 + $0x230] sm:$0xff]
        %v9413 = vld [vmem:[%s405 + $0x238] sm:$0xff]
        %v9414 = vld [vmem:[%s405 + $0x240] sm:$0xff]
        %v9415 = vld [vmem:[%s405 + $0x248] sm:$0xff]
        %v9416 = vld [vmem:[%s405 + $0x250] sm:$0xff]
        %v9417 = vld [vmem:[%s405 + $0x258] sm:$0xff]
        %v9418 = vld [vmem:[%s405 + $0x260] sm:$0xff]
        %v9419 = vld [vmem:[%s405 + $0x268] sm:$0xff]
        %v9420 = vld [vmem:[%s405 + $0x270] sm:$0xff]
        %v9421 = vld [vmem:[%s405 + $0x278] sm:$0xff]
        %v9422 = vadd.f32 %v9262, %v9342
        %v9423 = vadd.f32 %v9263, %v9343
        %v9424 = vadd.f32 %v9264, %v9344
        %v9425 = vadd.f32 %v9265, %v9345
        %v9426 = vadd.f32 %v9266, %v9346
        %v9427 = vadd.f32 %v9267, %v9347
        %v9428 = vadd.f32 %v9268, %v9348
        %v9429 = vadd.f32 %v9269, %v9349
        %v9430 = vadd.f32 %v9270, %v9350
        %v9431 = vadd.f32 %v9271, %v9351
        %v9432 = vadd.f32 %v9272, %v9352
        %v9433 = vadd.f32 %v9273, %v9353
        %v9434 = vadd.f32 %v9274, %v9354
        %v9435 = vadd.f32 %v9275, %v9355
        %v9436 = vadd.f32 %v9276, %v9356
        %v9437 = vadd.f32 %v9277, %v9357
        %v9438 = vadd.f32 %v9278, %v9358
        %v9439 = vadd.f32 %v9279, %v9359
        %v9440 = vadd.f32 %v9280, %v9360
        %v9441 = vadd.f32 %v9281, %v9361
        %v9442 = vadd.f32 %v9282, %v9362
        %v9443 = vadd.f32 %v9283, %v9363
        %v9444 = vadd.f32 %v9284, %v9364
        %v9445 = vadd.f32 %v9285, %v9365
        %v9446 = vadd.f32 %v9286, %v9366
        %v9447 = vadd.f32 %v9287, %v9367
        %v9448 = vadd.f32 %v9288, %v9368
        %v9449 = vadd.f32 %v9289, %v9369
        %v9450 = vadd.f32 %v9290, %v9370
        %v9451 = vadd.f32 %v9291, %v9371
        %v9452 = vadd.f32 %v9292, %v9372
        %v9453 = vadd.f32 %v9293, %v9373
        %v9454 = vadd.f32 %v9294, %v9374
        %v9455 = vadd.f32 %v9295, %v9375
        %v9456 = vadd.f32 %v9296, %v9376
        %v9457 = vadd.f32 %v9297, %v9377
        %v9458 = vadd.f32 %v9298, %v9378
        %v9459 = vadd.f32 %v9299, %v9379
        %v9460 = vadd.f32 %v9300, %v9380
        %v9461 = vadd.f32 %v9301, %v9381
        %v9462 = vadd.f32 %v9302, %v9382
        %v9463 = vadd.f32 %v9303, %v9383
        %v9464 = vadd.f32 %v9304, %v9384
        %v9465 = vadd.f32 %v9305, %v9385
        %v9466 = vadd.f32 %v9306, %v9386
        %v9467 = vadd.f32 %v9307, %v9387
        %v9468 = vadd.f32 %v9308, %v9388
        %v9469 = vadd.f32 %v9309, %v9389
        %v9470 = vadd.f32 %v9310, %v9390
        %v9471 = vadd.f32 %v9311, %v9391
        %v9472 = vadd.f32 %v9312, %v9392
        %v9473 = vadd.f32 %v9313, %v9393
        %v9474 = vadd.f32 %v9314, %v9394
        %v9475 = vadd.f32 %v9315, %v9395
        %v9476 = vadd.f32 %v9316, %v9396
        %v9477 = vadd.f32 %v9317, %v9397
        %v9478 = vadd.f32 %v9318, %v9398
        %v9479 = vadd.f32 %v9319, %v9399
        %v9480 = vadd.f32 %v9320, %v9400
        %v9481 = vadd.f32 %v9321, %v9401
        %v9482 = vadd.f32 %v9322, %v9402
        %v9483 = vadd.f32 %v9323, %v9403
        %v9484 = vadd.f32 %v9324, %v9404
        %v9485 = vadd.f32 %v9325, %v9405
        %v9486 = vadd.f32 %v9326, %v9406
        %v9487 = vadd.f32 %v9327, %v9407
        %v9488 = vadd.f32 %v9328, %v9408
        %v9489 = vadd.f32 %v9329, %v9409
        %v9490 = vadd.f32 %v9330, %v9410
        %v9491 = vadd.f32 %v9331, %v9411
        %v9492 = vadd.f32 %v9332, %v9412
        %v9493 = vadd.f32 %v9333, %v9413
        %v9494 = vadd.f32 %v9334, %v9414
        %v9495 = vadd.f32 %v9335, %v9415
        %v9496 = vadd.f32 %v9336, %v9416
        %v9497 = vadd.f32 %v9337, %v9417
        %v9498 = vadd.f32 %v9338, %v9418
        %v9499 = vadd.f32 %v9339, %v9419
        %v9500 = vadd.f32 %v9340, %v9420
        %v9501 = vadd.f32 %v9341, %v9421
        %v9502 = vmax.f32 %v9422, 0.0
        %v9503 = vmax.f32 %v9423, 0.0
        %v9504 = vmax.f32 %v9424, 0.0
        %v9505 = vmax.f32 %v9425, 0.0
        %v9506 = vmax.f32 %v9426, 0.0
        %v9507 = vmax.f32 %v9427, 0.0
        %v9508 = vmax.f32 %v9428, 0.0
        %v9509 = vmax.f32 %v9429, 0.0
        %v9510 = vmax.f32 %v9430, 0.0
        %v9511 = vmax.f32 %v9431, 0.0
        %v9512 = vmax.f32 %v9432, 0.0
        %v9513 = vmax.f32 %v9433, 0.0
        %v9514 = vmax.f32 %v9434, 0.0
        %v9515 = vmax.f32 %v9435, 0.0
        %v9516 = vmax.f32 %v9436, 0.0
        %v9517 = vmax.f32 %v9437, 0.0
        %v9518 = vmax.f32 %v9438, 0.0
        %v9519 = vmax.f32 %v9439, 0.0
        %v9520 = vmax.f32 %v9440, 0.0
        %v9521 = vmax.f32 %v9441, 0.0
        %v9522 = vmax.f32 %v9442, 0.0
        %v9523 = vmax.f32 %v9443, 0.0
        %v9524 = vmax.f32 %v9444, 0.0
        %v9525 = vmax.f32 %v9445, 0.0
        %v9526 = vmax.f32 %v9446, 0.0
        %v9527 = vmax.f32 %v9447, 0.0
        %v9528 = vmax.f32 %v9448, 0.0
        %v9529 = vmax.f32 %v9449, 0.0
        %v9530 = vmax.f32 %v9450, 0.0
        %v9531 = vmax.f32 %v9451, 0.0
        %v9532 = vmax.f32 %v9452, 0.0
        %v9533 = vmax.f32 %v9453, 0.0
        %v9534 = vmax.f32 %v9454, 0.0
        %v9535 = vmax.f32 %v9455, 0.0
        %v9536 = vmax.f32 %v9456, 0.0
        %v9537 = vmax.f32 %v9457, 0.0
        %v9538 = vmax.f32 %v9458, 0.0
        %v9539 = vmax.f32 %v9459, 0.0
        %v9540 = vmax.f32 %v9460, 0.0
        %v9541 = vmax.f32 %v9461, 0.0
        %v9542 = vmax.f32 %v9462, 0.0
        %v9543 = vmax.f32 %v9463, 0.0
        %v9544 = vmax.f32 %v9464, 0.0
        %v9545 = vmax.f32 %v9465, 0.0
        %v9546 = vmax.f32 %v9466, 0.0
        %v9547 = vmax.f32 %v9467, 0.0
        %v9548 = vmax.f32 %v9468, 0.0
        %v9549 = vmax.f32 %v9469, 0.0
        %v9550 = vmax.f32 %v9470, 0.0
        %v9551 = vmax.f32 %v9471, 0.0
        %v9552 = vmax.f32 %v9472, 0.0
        %v9553 = vmax.f32 %v9473, 0.0
        %v9554 = vmax.f32 %v9474, 0.0
        %v9555 = vmax.f32 %v9475, 0.0
        %v9556 = vmax.f32 %v9476, 0.0
        %v9557 = vmax.f32 %v9477, 0.0
        %v9558 = vmax.f32 %v9478, 0.0
        %v9559 = vmax.f32 %v9479, 0.0
        %v9560 = vmax.f32 %v9480, 0.0
        %v9561 = vmax.f32 %v9481, 0.0
        %v9562 = vmax.f32 %v9482, 0.0
        %v9563 = vmax.f32 %v9483, 0.0
        %v9564 = vmax.f32 %v9484, 0.0
        %v9565 = vmax.f32 %v9485, 0.0
        %v9566 = vmax.f32 %v9486, 0.0
        %v9567 = vmax.f32 %v9487, 0.0
        %v9568 = vmax.f32 %v9488, 0.0
        %v9569 = vmax.f32 %v9489, 0.0
        %v9570 = vmax.f32 %v9490, 0.0
        %v9571 = vmax.f32 %v9491, 0.0
        %v9572 = vmax.f32 %v9492, 0.0
        %v9573 = vmax.f32 %v9493, 0.0
        %v9574 = vmax.f32 %v9494, 0.0
        %v9575 = vmax.f32 %v9495, 0.0
        %v9576 = vmax.f32 %v9496, 0.0
        %v9577 = vmax.f32 %v9497, 0.0
        %v9578 = vmax.f32 %v9498, 0.0
        %v9579 = vmax.f32 %v9499, 0.0
        %v9580 = vmax.f32 %v9500, 0.0
        %v9581 = vmax.f32 %v9501, 0.0
        %9582 = vst [vmem:[%s442] sm:$0xff] %v9502
        %9583 = vst [vmem:[%s442 + $0x8] sm:$0xff] %v9503
        %9584 = vst [vmem:[%s442 + $0x10] sm:$0xff] %v9504
        %9585 = vst [vmem:[%s442 + $0x18] sm:$0xff] %v9505
        %9586 = vst [vmem:[%s442 + $0x20] sm:$0xff] %v9506
        %9587 = vst [vmem:[%s442 + $0x28] sm:$0xff] %v9507
        %9588 = vst [vmem:[%s442 + $0x30] sm:$0xff] %v9508
        %9589 = vst [vmem:[%s442 + $0x38] sm:$0xff] %v9509
        %9590 = vst [vmem:[%s442 + $0x40] sm:$0xff] %v9510
        %9591 = vst [vmem:[%s442 + $0x48] sm:$0xff] %v9511
        %9592 = vst [vmem:[%s442 + $0x50] sm:$0xff] %v9512
        %9593 = vst [vmem:[%s442 + $0x58] sm:$0xff] %v9513
        %9594 = vst [vmem:[%s442 + $0x60] sm:$0xff] %v9514
        %9595 = vst [vmem:[%s442 + $0x68] sm:$0xff] %v9515
        %9596 = vst [vmem:[%s442 + $0x70] sm:$0xff] %v9516
        %9597 = vst [vmem:[%s442 + $0x78] sm:$0xff] %v9517
        %9598 = vst [vmem:[%s442 + $0x80] sm:$0xff] %v9518
        %9599 = vst [vmem:[%s442 + $0x88] sm:$0xff] %v9519
        %9600 = vst [vmem:[%s442 + $0x90] sm:$0xff] %v9520
        %9601 = vst [vmem:[%s442 + $0x98] sm:$0xff] %v9521
        %9602 = vst [vmem:[%s442 + $0xa0] sm:$0xff] %v9522
        %9603 = vst [vmem:[%s442 + $0xa8] sm:$0xff] %v9523
        %9604 = vst [vmem:[%s442 + $0xb0] sm:$0xff] %v9524
        %9605 = vst [vmem:[%s442 + $0xb8] sm:$0xff] %v9525
        %9606 = vst [vmem:[%s442 + $0xc0] sm:$0xff] %v9526
        %9607 = vst [vmem:[%s442 + $0xc8] sm:$0xff] %v9527
        %9608 = vst [vmem:[%s442 + $0xd0] sm:$0xff] %v9528
        %9609 = vst [vmem:[%s442 + $0xd8] sm:$0xff] %v9529
        %9610 = vst [vmem:[%s442 + $0xe0] sm:$0xff] %v9530
        %9611 = vst [vmem:[%s442 + $0xe8] sm:$0xff] %v9531
        %9612 = vst [vmem:[%s442 + $0xf0] sm:$0xff] %v9532
        %9613 = vst [vmem:[%s442 + $0xf8] sm:$0xff] %v9533
        %9614 = vst [vmem:[%s442 + $0x100] sm:$0xff] %v9534
        %9615 = vst [vmem:[%s442 + $0x108] sm:$0xff] %v9535
        %9616 = vst [vmem:[%s442 + $0x110] sm:$0xff] %v9536
        %9617 = vst [vmem:[%s442 + $0x118] sm:$0xff] %v9537
        %9618 = vst [vmem:[%s442 + $0x120] sm:$0xff] %v9538
        %9619 = vst [vmem:[%s442 + $0x128] sm:$0xff] %v9539
        %9620 = vst [vmem:[%s442 + $0x130] sm:$0xff] %v9540
        %9621 = vst [vmem:[%s442 + $0x138] sm:$0xff] %v9541
        %9622 = vst [vmem:[%s442 + $0x140] sm:$0xff] %v9542
        %9623 = vst [vmem:[%s442 + $0x148] sm:$0xff] %v9543
        %9624 = vst [vmem:[%s442 + $0x150] sm:$0xff] %v9544
        %9625 = vst [vmem:[%s442 + $0x158] sm:$0xff] %v9545
        %9626 = vst [vmem:[%s442 + $0x160] sm:$0xff] %v9546
        %9627 = vst [vmem:[%s442 + $0x168] sm:$0xff] %v9547
        %9628 = vst [vmem:[%s442 + $0x170] sm:$0xff] %v9548
        %9629 = vst [vmem:[%s442 + $0x178] sm:$0xff] %v9549
        %9630 = vst [vmem:[%s442 + $0x180] sm:$0xff] %v9550
        %9631 = vst [vmem:[%s442 + $0x188] sm:$0xff] %v9551
        %9632 = vst [vmem:[%s442 + $0x190] sm:$0xff] %v9552
        %9633 = vst [vmem:[%s442 + $0x198] sm:$0xff] %v9553
        %9634 = vst [vmem:[%s442 + $0x1a0] sm:$0xff] %v9554
        %9635 = vst [vmem:[%s442 + $0x1a8] sm:$0xff] %v9555
        %9636 = vst [vmem:[%s442 + $0x1b0] sm:$0xff] %v9556
        %9637 = vst [vmem:[%s442 + $0x1b8] sm:$0xff] %v9557
        %9638 = vst [vmem:[%s442 + $0x1c0] sm:$0xff] %v9558
        %9639 = vst [vmem:[%s442 + $0x1c8] sm:$0xff] %v9559
        %9640 = vst [vmem:[%s442 + $0x1d0] sm:$0xff] %v9560
        %9641 = vst [vmem:[%s442 + $0x1d8] sm:$0xff] %v9561
        %9642 = vst [vmem:[%s442 + $0x1e0] sm:$0xff] %v9562
        %9643 = vst [vmem:[%s442 + $0x1e8] sm:$0xff] %v9563
        %9644 = vst [vmem:[%s442 + $0x1f0] sm:$0xff] %v9564
        %9645 = vst [vmem:[%s442 + $0x1f8] sm:$0xff] %v9565
        %9646 = vst [vmem:[%s442 + $0x200] sm:$0xff] %v9566
        %9647 = vst [vmem:[%s442 + $0x208] sm:$0xff] %v9567
        %9648 = vst [vmem:[%s442 + $0x210] sm:$0xff] %v9568
        %9649 = vst [vmem:[%s442 + $0x218] sm:$0xff] %v9569
        %9650 = vst [vmem:[%s442 + $0x220] sm:$0xff] %v9570
        %9651 = vst [vmem:[%s442 + $0x228] sm:$0xff] %v9571
        %9652 = vst [vmem:[%s442 + $0x230] sm:$0xff] %v9572
        %9653 = vst [vmem:[%s442 + $0x238] sm:$0xff] %v9573
        %9654 = vst [vmem:[%s442 + $0x240] sm:$0xff] %v9574
        %9655 = vst [vmem:[%s442 + $0x248] sm:$0xff] %v9575
        %9656 = vst [vmem:[%s442 + $0x250] sm:$0xff] %v9576
        %9657 = vst [vmem:[%s442 + $0x258] sm:$0xff] %v9577
        %9658 = vst [vmem:[%s442 + $0x260] sm:$0xff] %v9578
        %9659 = vst [vmem:[%s442 + $0x268] sm:$0xff] %v9579
        %9660 = vst [vmem:[%s442 + $0x270] sm:$0xff] %v9580
        %9661 = vst [vmem:[%s442 + $0x278] sm:$0xff] %v9581
        %s9662 = sand.u32 %s149, 1
        %s9663 = sand.u32 %s149, 1
        %s9664 = smul.addr %s9663, 640
        %s9665 = scalar_lea.vmem [#allocation3], %s9664
        // Predicated region
        $region64: #{conv_bn_add_relu.1} parent=58 // pred_check
          %p9666 = pneg %p159
        $region65: #{conv_bn_add_relu.1} parent=58 // pred_check_branch
          %9668 = sbr.rel (%p9666) target = $region67
        $region66: #{conv_bn_add_relu.1} parent=58 // pred_region
          %s9669 = smul.u32 10, %s16
          %s9670 = smul.addr %s9669, 8
          %s9671 = scalar_lea.vmem %s5, %s9670
          // Predicated region
          $region68: #{conv_bn_add_relu.1} parent=66 // pred_check
            _
          $region69: #{conv_bn_add_relu.1} parent=66 // pred_check_branch
            %9673 = sbr.rel (0) target = $region71
          $region70: #{conv_bn_add_relu.1} parent=66 // pred_region
            // Predicated region
            $region72: #{conv_bn_add_relu.1} parent=70 // pred_check
              _
            $region73: #{conv_bn_add_relu.1} parent=70 // pred_check_branch
              %9675 = sbr.rel (0) target = $region75
            $region74: #{conv_bn_add_relu.1} parent=70 // pred_region
              loop: start=0, step=1, limit=1
              $region76: #{conv_bn_add_relu.1} parent=74 // loop_pre_header
                _
              $region77: #{conv_bn_add_relu.1} parent=74 // loop_header
                %s9677 = sphi 0, %s9681
                %p9678 = scmp.ge.s32.totalorder %s9677, 1
                %s9682 = sphi %s9665, %s9665
                %s9683 = sphi %s9671, %s9671
              $region78: #{conv_bn_add_relu.1} parent=74 // loop_header_branch
                %9680 = sbr.rel (%p9678) target = $region82
              $region79: #{conv_bn_add_relu.1} parent=74 // loop_body
                %v9684 = vld [vmem:[%s9682] sm:$0xff]
                %9685 = vst [vmem:[%s9683] sm:$0xff] %v9684
                %v9686 = vld [vmem:[%s9682 + $0x8] sm:$0xff]
                %9687 = vst [vmem:[%s9683 + $0x8] sm:$0xff] %v9686
                %v9688 = vld [vmem:[%s9682 + $0x10] sm:$0xff]
                %9689 = vst [vmem:[%s9683 + $0x10] sm:$0xff] %v9688
                %v9690 = vld [vmem:[%s9682 + $0x18] sm:$0xff]
                %9691 = vst [vmem:[%s9683 + $0x18] sm:$0xff] %v9690
                %v9692 = vld [vmem:[%s9682 + $0x20] sm:$0xff]
                %9693 = vst [vmem:[%s9683 + $0x20] sm:$0xff] %v9692
                %v9694 = vld [vmem:[%s9682 + $0x28] sm:$0xff]
                %9695 = vst [vmem:[%s9683 + $0x28] sm:$0xff] %v9694
                %v9696 = vld [vmem:[%s9682 + $0x30] sm:$0xff]
                %9697 = vst [vmem:[%s9683 + $0x30] sm:$0xff] %v9696
                %v9698 = vld [vmem:[%s9682 + $0x38] sm:$0xff]
                %9699 = vst [vmem:[%s9683 + $0x38] sm:$0xff] %v9698
                %v9700 = vld [vmem:[%s9682 + $0x40] sm:$0xff]
                %9701 = vst [vmem:[%s9683 + $0x40] sm:$0xff] %v9700
                %v9702 = vld [vmem:[%s9682 + $0x48] sm:$0xff]
                %9703 = vst [vmem:[%s9683 + $0x48] sm:$0xff] %v9702
                %v9704 = vld [vmem:[%s9682 + $0x50] sm:$0xff]
                %9705 = vst [vmem:[%s9683 + $0xa0] sm:$0xff] %v9704
                %v9706 = vld [vmem:[%s9682 + $0x58] sm:$0xff]
                %9707 = vst [vmem:[%s9683 + $0xa8] sm:$0xff] %v9706
                %v9708 = vld [vmem:[%s9682 + $0x60] sm:$0xff]
                %9709 = vst [vmem:[%s9683 + $0xb0] sm:$0xff] %v9708
                %v9710 = vld [vmem:[%s9682 + $0x68] sm:$0xff]
                %9711 = vst [vmem:[%s9683 + $0xb8] sm:$0xff] %v9710
                %v9712 = vld [vmem:[%s9682 + $0x70] sm:$0xff]
                %9713 = vst [vmem:[%s9683 + $0xc0] sm:$0xff] %v9712
                %v9714 = vld [vmem:[%s9682 + $0x78] sm:$0xff]
                %9715 = vst [vmem:[%s9683 + $0xc8] sm:$0xff] %v9714
                %v9716 = vld [vmem:[%s9682 + $0x80] sm:$0xff]
                %9717 = vst [vmem:[%s9683 + $0xd0] sm:$0xff] %v9716
                %v9718 = vld [vmem:[%s9682 + $0x88] sm:$0xff]
                %9719 = vst [vmem:[%s9683 + $0xd8] sm:$0xff] %v9718
                %v9720 = vld [vmem:[%s9682 + $0x90] sm:$0xff]
                %9721 = vst [vmem:[%s9683 + $0xe0] sm:$0xff] %v9720
                %v9722 = vld [vmem:[%s9682 + $0x98] sm:$0xff]
                %9723 = vst [vmem:[%s9683 + $0xe8] sm:$0xff] %v9722
                %v9724 = vld [vmem:[%s9682 + $0xa0] sm:$0xff]
                %9725 = vst [vmem:[%s9683 + $0x140] sm:$0xff] %v9724
                %v9726 = vld [vmem:[%s9682 + $0xa8] sm:$0xff]
                %9727 = vst [vmem:[%s9683 + $0x148] sm:$0xff] %v9726
                %v9728 = vld [vmem:[%s9682 + $0xb0] sm:$0xff]
                %9729 = vst [vmem:[%s9683 + $0x150] sm:$0xff] %v9728
                %v9730 = vld [vmem:[%s9682 + $0xb8] sm:$0xff]
                %9731 = vst [vmem:[%s9683 + $0x158] sm:$0xff] %v9730
                %v9732 = vld [vmem:[%s9682 + $0xc0] sm:$0xff]
                %9733 = vst [vmem:[%s9683 + $0x160] sm:$0xff] %v9732
                %v9734 = vld [vmem:[%s9682 + $0xc8] sm:$0xff]
                %9735 = vst [vmem:[%s9683 + $0x168] sm:$0xff] %v9734
                %v9736 = vld [vmem:[%s9682 + $0xd0] sm:$0xff]
                %9737 = vst [vmem:[%s9683 + $0x170] sm:$0xff] %v9736
                %v9738 = vld [vmem:[%s9682 + $0xd8] sm:$0xff]
                %9739 = vst [vmem:[%s9683 + $0x178] sm:$0xff] %v9738
                %v9740 = vld [vmem:[%s9682 + $0xe0] sm:$0xff]
                %9741 = vst [vmem:[%s9683 + $0x180] sm:$0xff] %v9740
                %v9742 = vld [vmem:[%s9682 + $0xe8] sm:$0xff]
                %9743 = vst [vmem:[%s9683 + $0x188] sm:$0xff] %v9742
                %v9744 = vld [vmem:[%s9682 + $0xf0] sm:$0xff]
                %9745 = vst [vmem:[%s9683 + $0x1e0] sm:$0xff] %v9744
                %v9746 = vld [vmem:[%s9682 + $0xf8] sm:$0xff]
                %9747 = vst [vmem:[%s9683 + $0x1e8] sm:$0xff] %v9746
                %v9748 = vld [vmem:[%s9682 + $0x100] sm:$0xff]
                %9749 = vst [vmem:[%s9683 + $0x1f0] sm:$0xff] %v9748
                %v9750 = vld [vmem:[%s9682 + $0x108] sm:$0xff]
                %9751 = vst [vmem:[%s9683 + $0x1f8] sm:$0xff] %v9750
                %v9752 = vld [vmem:[%s9682 + $0x110] sm:$0xff]
                %9753 = vst [vmem:[%s9683 + $0x200] sm:$0xff] %v9752
                %v9754 = vld [vmem:[%s9682 + $0x118] sm:$0xff]
                %9755 = vst [vmem:[%s9683 + $0x208] sm:$0xff] %v9754
                %v9756 = vld [vmem:[%s9682 + $0x120] sm:$0xff]
                %9757 = vst [vmem:[%s9683 + $0x210] sm:$0xff] %v9756
                %v9758 = vld [vmem:[%s9682 + $0x128] sm:$0xff]
                %9759 = vst [vmem:[%s9683 + $0x218] sm:$0xff] %v9758
                %v9760 = vld [vmem:[%s9682 + $0x130] sm:$0xff]
                %9761 = vst [vmem:[%s9683 + $0x220] sm:$0xff] %v9760
                %v9762 = vld [vmem:[%s9682 + $0x138] sm:$0xff]
                %9763 = vst [vmem:[%s9683 + $0x228] sm:$0xff] %v9762
                %v9764 = vld [vmem:[%s9682 + $0x140] sm:$0xff]
                %9765 = vst [vmem:[%s9683 + $0x280] sm:$0xff] %v9764
                %v9766 = vld [vmem:[%s9682 + $0x148] sm:$0xff]
                %9767 = vst [vmem:[%s9683 + $0x288] sm:$0xff] %v9766
                %v9768 = vld [vmem:[%s9682 + $0x150] sm:$0xff]
                %9769 = vst [vmem:[%s9683 + $0x290] sm:$0xff] %v9768
                %v9770 = vld [vmem:[%s9682 + $0x158] sm:$0xff]
                %9771 = vst [vmem:[%s9683 + $0x298] sm:$0xff] %v9770
                %v9772 = vld [vmem:[%s9682 + $0x160] sm:$0xff]
                %9773 = vst [vmem:[%s9683 + $0x2a0] sm:$0xff] %v9772
                %v9774 = vld [vmem:[%s9682 + $0x168] sm:$0xff]
                %9775 = vst [vmem:[%s9683 + $0x2a8] sm:$0xff] %v9774
                %v9776 = vld [vmem:[%s9682 + $0x170] sm:$0xff]
                %9777 = vst [vmem:[%s9683 + $0x2b0] sm:$0xff] %v9776
                %v9778 = vld [vmem:[%s9682 + $0x178] sm:$0xff]
                %9779 = vst [vmem:[%s9683 + $0x2b8] sm:$0xff] %v9778
                %v9780 = vld [vmem:[%s9682 + $0x180] sm:$0xff]
                %9781 = vst [vmem:[%s9683 + $0x2c0] sm:$0xff] %v9780
                %v9782 = vld [vmem:[%s9682 + $0x188] sm:$0xff]
                %9783 = vst [vmem:[%s9683 + $0x2c8] sm:$0xff] %v9782
                %v9784 = vld [vmem:[%s9682 + $0x190] sm:$0xff]
                %9785 = vst [vmem:[%s9683 + $0x320] sm:$0xff] %v9784
                %v9786 = vld [vmem:[%s9682 + $0x198] sm:$0xff]
                %9787 = vst [vmem:[%s9683 + $0x328] sm:$0xff] %v9786
                %v9788 = vld [vmem:[%s9682 + $0x1a0] sm:$0xff]
                %9789 = vst [vmem:[%s9683 + $0x330] sm:$0xff] %v9788
                %v9790 = vld [vmem:[%s9682 + $0x1a8] sm:$0xff]
                %9791 = vst [vmem:[%s9683 + $0x338] sm:$0xff] %v9790
                %v9792 = vld [vmem:[%s9682 + $0x1b0] sm:$0xff]
                %9793 = vst [vmem:[%s9683 + $0x340] sm:$0xff] %v9792
                %v9794 = vld [vmem:[%s9682 + $0x1b8] sm:$0xff]
                %9795 = vst [vmem:[%s9683 + $0x348] sm:$0xff] %v9794
                %v9796 = vld [vmem:[%s9682 + $0x1c0] sm:$0xff]
                %9797 = vst [vmem:[%s9683 + $0x350] sm:$0xff] %v9796
                %v9798 = vld [vmem:[%s9682 + $0x1c8] sm:$0xff]
                %9799 = vst [vmem:[%s9683 + $0x358] sm:$0xff] %v9798
                %v9800 = vld [vmem:[%s9682 + $0x1d0] sm:$0xff]
                %9801 = vst [vmem:[%s9683 + $0x360] sm:$0xff] %v9800
                %v9802 = vld [vmem:[%s9682 + $0x1d8] sm:$0xff]
                %9803 = vst [vmem:[%s9683 + $0x368] sm:$0xff] %v9802
                %v9804 = vld [vmem:[%s9682 + $0x1e0] sm:$0xff]
                %9805 = vst [vmem:[%s9683 + $0x3c0] sm:$0xff] %v9804
                %v9806 = vld [vmem:[%s9682 + $0x1e8] sm:$0xff]
                %9807 = vst [vmem:[%s9683 + $0x3c8] sm:$0xff] %v9806
                %v9808 = vld [vmem:[%s9682 + $0x1f0] sm:$0xff]
                %9809 = vst [vmem:[%s9683 + $0x3d0] sm:$0xff] %v9808
                %v9810 = vld [vmem:[%s9682 + $0x1f8] sm:$0xff]
                %9811 = vst [vmem:[%s9683 + $0x3d8] sm:$0xff] %v9810
                %v9812 = vld [vmem:[%s9682 + $0x200] sm:$0xff]
                %9813 = vst [vmem:[%s9683 + $0x3e0] sm:$0xff] %v9812
                %v9814 = vld [vmem:[%s9682 + $0x208] sm:$0xff]
                %9815 = vst [vmem:[%s9683 + $0x3e8] sm:$0xff] %v9814
                %v9816 = vld [vmem:[%s9682 + $0x210] sm:$0xff]
                %9817 = vst [vmem:[%s9683 + $0x3f0] sm:$0xff] %v9816
                %v9818 = vld [vmem:[%s9682 + $0x218] sm:$0xff]
                %9819 = vst [vmem:[%s9683 + $0x3f8] sm:$0xff] %v9818
                %v9820 = vld [vmem:[%s9682 + $0x220] sm:$0xff]
                %9821 = vst [vmem:[%s9683 + $0x400] sm:$0xff] %v9820
                %v9822 = vld [vmem:[%s9682 + $0x228] sm:$0xff]
                %9823 = vst [vmem:[%s9683 + $0x408] sm:$0xff] %v9822
                %v9824 = vld [vmem:[%s9682 + $0x230] sm:$0xff]
                %9825 = vst [vmem:[%s9683 + $0x460] sm:$0xff] %v9824
                %v9826 = vld [vmem:[%s9682 + $0x238] sm:$0xff]
                %9827 = vst [vmem:[%s9683 + $0x468] sm:$0xff] %v9826
                %v9828 = vld [vmem:[%s9682 + $0x240] sm:$0xff]
                %9829 = vst [vmem:[%s9683 + $0x470] sm:$0xff] %v9828
                %v9830 = vld [vmem:[%s9682 + $0x248] sm:$0xff]
                %9831 = vst [vmem:[%s9683 + $0x478] sm:$0xff] %v9830
                %v9832 = vld [vmem:[%s9682 + $0x250] sm:$0xff]
                %9833 = vst [vmem:[%s9683 + $0x480] sm:$0xff] %v9832
                %v9834 = vld [vmem:[%s9682 + $0x258] sm:$0xff]
                %9835 = vst [vmem:[%s9683 + $0x488] sm:$0xff] %v9834
                %v9836 = vld [vmem:[%s9682 + $0x260] sm:$0xff]
                %9837 = vst [vmem:[%s9683 + $0x490] sm:$0xff] %v9836
                %v9838 = vld [vmem:[%s9682 + $0x268] sm:$0xff]
                %9839 = vst [vmem:[%s9683 + $0x498] sm:$0xff] %v9838
                %v9840 = vld [vmem:[%s9682 + $0x270] sm:$0xff]
                %9841 = vst [vmem:[%s9683 + $0x4a0] sm:$0xff] %v9840
                %v9842 = vld [vmem:[%s9682 + $0x278] sm:$0xff]
                %9843 = vst [vmem:[%s9683 + $0x4a8] sm:$0xff] %v9842
              $region80: #{conv_bn_add_relu.1} parent=74 // loop_footer
                %s9681 = sadd.s32 1, %s9677
              $region81: #{conv_bn_add_relu.1} parent=74 // loop_footer_branch
                %9676 = sbr.rel target = $region77
              $region82: #{conv_bn_add_relu.1} parent=74 // loop_exit
                _
            $region75: #{conv_bn_add_relu.1} parent=70 // pred_fallthru
              _
            // Predicated region
            $region83: #{conv_bn_add_relu.1} parent=70 // pred_check
              _
            $region84: #{conv_bn_add_relu.1} parent=70 // pred_check_branch
              %9845 = sbr.rel target = $region86
            $region85: #{conv_bn_add_relu.1} parent=70 // pred_region
              _
            $region86: #{conv_bn_add_relu.1} parent=70 // pred_fallthru
              _
          $region71: #{conv_bn_add_relu.1} parent=66 // pred_fallthru
            _
          %9846 = vnop
        $region67: #{conv_bn_add_relu.1} parent=58 // pred_fallthru
          _
      $region59: #{conv_bn_add_relu.1} parent=5 // pred_fallthru
        _
      %p9847 = scmp.le.s32.totalorder 2, %s11
      // Predicated region
      $region87: #{conv_bn_add_relu.1} parent=5 // pred_check
        %p9848 = pneg %p9847
      $region88: #{conv_bn_add_relu.1} parent=5 // pred_check_branch
        %9850 = sbr.rel (%p9848) target = $region90
      $region89: #{conv_bn_add_relu.1} parent=5 // pred_region
        %s9851 = ssub.s32 %s11, 2
        // Predicated region
        $region91: #{conv_bn_add_relu.1} parent=89 // pred_check
          %p9852 = pneg %p165
        $region92: #{conv_bn_add_relu.1} parent=89 // pred_check_branch
          %9854 = sbr.rel (%p9852) target = $region94
        $region93: #{conv_bn_add_relu.1} parent=89 // pred_region
          %s9855 = sand.u32 %s150, 1
          %s9856 = sand.u32 %s150, 1
          %s9857 = smul.addr %s9856, 640
          %s9858 = scalar_lea.vmem [#allocation3], %s9857
        $region94: #{conv_bn_add_relu.1} parent=89 // pred_fallthru
          _
      $region90: #{conv_bn_add_relu.1} parent=5 // pred_fallthru
        _
    $region6: #{conv_bn_add_relu.1} parent=1 // loop_footer
      %s15 = sadd.s32 1, %s11
    $region7: #{conv_bn_add_relu.1} parent=1 // loop_footer_branch
      %10 = sbr.rel target = $region3
    $region8: #{conv_bn_add_relu.1} parent=1 // loop_exit
      _

</llo_original>
